<compile_context>
chip_gen: v5e
topology: v5e:2x2
jax: 0.10.0
libtpu: 0.0.40
codegen_flags: <defaults>
</compile_context>

<pallas_src>
import functools

import jax
import jax.numpy as jnp
from jax import lax
from jax.experimental import pallas as pl
from jax.experimental.pallas import tpu as pltpu

K_DIM = 128        # rank of the SDP relaxation (lane-friendly, >= sqrt(2N)+1)
N_SWEEPS = 16      # fixed number of mixing-method sweeps
BM = 8             # SAT problems solved per grid step (lane-stacked)


def _round_up(x, m):
  return ((x + m - 1) // m) * m


# ----------------------------------------------------------------------------
# Pallas kernel: SATNet mixing-method coordinate descent, BM problems / step.
# ----------------------------------------------------------------------------
def _satnet_mixing_kernel(rows_ref,                      # scalar-prefetch SMEM
                          c_ref, vin_ref, mexp_ref,      # VMEM inputs
                          o_ref,                         # VMEM output
                          v_ref,                         # VMEM scratch (n_row, BM*K)
                          *, n_sweeps, max_free, bm, k):
  blk = pl.program_id(0)
  # Fresh per-block state (required for "parallel" grid semantics).
  v_ref[...] = vin_ref[0]

  def coord_update(i):
    """One Gauss-Seidel coordinate step on row i, all bm problems at once."""
    c_row = c_ref[pl.ds(i, 1), :]                        # (1, n_row), diag==0
    # One wide MXU matvec shared by the BM lane-stacked problems.
    g = jnp.dot(c_row, v_ref[...],
                preferred_element_type=jnp.float32)      # (1, BM*K)
    v_old = v_ref[pl.ds(i, 1), :]                        # (1, BM*K)
    m_row = mexp_ref[0, pl.ds(i, 1), :]                  # (1, BM*K) 0/1 mask
    pieces = []
    for p in range(bm):                                  # static, unrolled
      gp = g[:, p * k:(p + 1) * k]                       # (1, K) vreg slice
      vop = v_old[:, p * k:(p + 1) * k]
      n2 = jnp.sum(gp * gp, axis=-1, keepdims=True)      # (1, 1)
      ok = (n2 > 1e-12).astype(jnp.float32)              # guard: keep v if g~0
      scale = ok * lax.rsqrt(n2 + 1e-30)
      pieces.append((1.0 - ok) * vop - scale * gp)       # normalized target
    vtgt = jnp.concatenate(pieces, axis=-1)              # (1, BM*K)
    # Single fused blend + store; clamped lanes (m==0) keep v_old exactly.
    v_ref[pl.ds(i, 1), :] = v_old + m_row * (vtgt - v_old)

  def step_pair(j, carry):
    # Manual 2x unroll: both coordinate steps live in one basic block so the
    # scheduler can hoist the second step's independent loads under the first
    # step's normalize/blend tail.
    coord_update(rows_ref[blk, 2 * j])
    coord_update(rows_ref[blk, 2 * j + 1])
    return carry

  def sweep(_, carry):
    # Static trip count -> full LLO scheduler visibility across iterations.
    return lax.fori_loop(0, max_free // 2, step_pair, carry)

  lax.fori_loop(0, n_sweeps, sweep, 0)

  # Epilogue (once per block): emit v_i . v_truth per problem as (n_row, BM);
  # arccos decode happens on the host.
  dots = []
  for p in range(bm):
    vp = v_ref[:, p * k:(p + 1) * k]                     # (n_row, K)
    v0p = v_ref[0:1, p * k:(p + 1) * k]                  # (1, K) truth vector
    dots.append(jnp.sum(vp * v0p, axis=-1, keepdims=True))
  o_ref[0] = jnp.concatenate(dots, axis=-1)


def _satnet_pallas(rows, C, v_init_blk, mexp_blk, *, n_sweeps, max_free, bm):
  n_blocks, n_row, bmk = v_init_blk.shape
  k = bmk // bm
  kernel = functools.partial(_satnet_mixing_kernel, n_sweeps=n_sweeps,
                             max_free=max_free, bm=bm, k=k)
  return pl.pallas_call(
      kernel,
      out_shape=jax.ShapeDtypeStruct((n_blocks, n_row, bm), jnp.float32),
      grid_spec=pltpu.PrefetchScalarGridSpec(
          num_scalar_prefetch=1,                         # rows -> SMEM
          grid=(n_blocks,),
          in_specs=[
              pl.BlockSpec((n_row, n_row), lambda b, rows: (0, 0)),      # C
              pl.BlockSpec((1, n_row, bmk), lambda b, rows: (b, 0, 0)),  # V init
              pl.BlockSpec((1, n_row, bmk), lambda b, rows: (b, 0, 0)),  # mask
          ],
          out_specs=pl.BlockSpec((1, n_row, bm), lambda b, rows: (b, 0, 0)),
          scratch_shapes=[pltpu.VMEM((n_row, bmk), jnp.float32)],
      ),
      compiler_params=pltpu.CompilerParams(
          dimension_semantics=("parallel",)),            # megacore-friendly
  )(rows, C, v_init_blk, mexp_blk)


# ----------------------------------------------------------------------------
# SATNet(n, m, aux) forward (host glue around the kernel).
# ----------------------------------------------------------------------------
def satnet_forward(S, z, is_input, key, *, aux, max_free=None,
                   n_sweeps=N_SWEEPS, bm=BM):
  """z, is_input: (B, n) in [0,1].  Returns decoded probs for the n vars."""
  B0, n = z.shape
  n_real = 1 + n + aux                      # truth var + declared vars + aux
  n_row = _round_up(n_real, 8)              # shrunk contraction (multiple of 8)
  k = K_DIM

  # Static upper bound on the per-block union of free rows.
  if max_free is None:
    max_free = n + aux
  max_free = min(max_free, n_row)
  max_free = _round_up(max(max_free, 2), 2)  # even for the 2x-unrolled loop

  # Pad the batch of independent SAT problems to a multiple of BM with fully
  # clamped dummies (they add no free rows and their outputs are sliced off).
  B = _round_up(max(B0, bm), bm)
  pad = B - B0
  if pad:
    z = jnp.concatenate([z, jnp.zeros((pad, n), z.dtype)], axis=0)
    is_input = jnp.concatenate(
        [is_input, jnp.ones((pad, n), is_input.dtype)], axis=0)
  n_blocks = B // bm

  z_full = jnp.concatenate(
      [jnp.ones((B, 1), jnp.float32), z.astype(jnp.float32),
       jnp.zeros((B, aux), jnp.float32)], axis=-1)
  in_full = jnp.concatenate(
      [jnp.ones((B, 1), jnp.float32), is_input.astype(jnp.float32),
       jnp.zeros((B, aux), jnp.float32)], axis=-1)
  zp = jnp.zeros((B, n_row), jnp.float32).at[:, :n_real].set(z_full)
  ip = jnp.zeros((B, n_row), jnp.float32).at[:, :n_real].set(in_full)

  k1, k2 = jax.random.split(key)
  r_in = jax.random.normal(k1, (B, n_row, k), dtype=jnp.float32)
  r_in = r_in.at[..., 0].set(0.0)                       # orthogonal to v_true
  r_in = r_in / (jnp.linalg.norm(r_in, axis=-1, keepdims=True) + 1e-12)
  r_free = jax.random.normal(k2, (B, n_row, k), dtype=jnp.float32)
  r_free = r_free / (jnp.linalg.norm(r_free, axis=-1, keepdims=True) + 1e-12)

  e0 = jnp.zeros((k,), jnp.float32).at[0].set(1.0)
  v_known = (-jnp.cos(jnp.pi * zp))[..., None] * e0 \
            + (jnp.sin(jnp.pi * zp))[..., None] * r_in
  v_init = jnp.where(ip[..., None] > 0.5, v_known, r_free)   # (B, n_row, K)

  idx = jnp.arange(n_row)
  free = ((ip < 0.5) & (idx[None, :] >= 1) & (idx[None, :] < n_real))  # bool

  # Block layout: BM problems lane-stacked per grid step.
  v_init_blk = v_init.reshape(n_blocks, bm, n_row, k) \
                     .transpose(0, 2, 1, 3).reshape(n_blocks, n_row, bm * k)
  free_blk = free.reshape(n_blocks, bm, n_row).transpose(0, 2, 1)  # (nb,nr,bm)
  # Pre-expanded mask (review opt #3): blend becomes one fused FMA per step.
  mexp_blk = jnp.repeat(free_blk.astype(jnp.float32), k, axis=-1)  # (nb,nr,bm*k)

  # Static-trip free-row schedule (review opt #1): per-block union of free
  # rows, ascending, padded with row 0 (always clamped -> guaranteed no-op).
  any_free = jnp.any(free.reshape(n_blocks, bm, n_row), axis=1)    # (nb, n_row)
  key_order = jnp.where(any_free, idx[None, :], idx[None, :] + n_row)
  order = jnp.argsort(key_order, axis=-1)[:, :max_free]
  keep = jnp.take_along_axis(any_free, order, axis=-1)
  rows = jnp.where(keep, order, 0).astype(jnp.int32)               # (nb, mf)

  Sp = jnp.zeros((n_row, S.shape[1]), jnp.float32).at[:n_real, :].set(S)
  C = Sp @ Sp.T
  C = C - jnp.diag(jnp.diagonal(C))       # fold self-term removal into C

  dots = _satnet_pallas(rows, C, v_init_blk, mexp_blk,
                        n_sweeps=n_sweeps, max_free=max_free, bm=bm)
  dots = dots.transpose(0, 2, 1).reshape(B, n_row)          # (B, n_row)
  z_out = jnp.arccos(jnp.clip(-dots, -1.0, 1.0)) / jnp.pi
  return z_out[:B0, 1:1 + n]


# ----------------------------------------------------------------------------
# SATConvTranspose
# ----------------------------------------------------------------------------
def sat_conv_transpose(S, aux, out_n, x_in, key, mask_img=None, mask=None):
  B = x_in.shape[0]
  if mask is None:
    mask = jnp.zeros((B, out_n), jnp.float32)
  is_input = jnp.concatenate([mask, jnp.ones_like(x_in)], axis=-1)
  if mask_img is None:
    z = jnp.concatenate([jnp.zeros((B, out_n), jnp.float32), x_in], axis=-1)
  else:
    z = jnp.concatenate([mask_img, x_in], axis=-1)
  out = satnet_forward(S, z, is_input, key, aux=aux, max_free=out_n + aux)
  return out[:, :out_n]


# ----------------------------------------------------------------------------
# HierarchicalGenerator
# ----------------------------------------------------------------------------
class HierarchicalGeneratorPallas:

  def __init__(self, key, num_class=10, num_patches=16, m=200, aux=50,
               hidden_dim=30):
    self.num_class = num_class
    self.num_patches = num_patches
    self.hidden_dim = hidden_dim
    self.aux = aux
    k1, k2 = jax.random.split(key)
    n1 = (num_class + 16) + hidden_dim           # SATNet(56, m, aux)
    n2 = hidden_dim + 49                         # SATNet(79, m, aux)
    # Deterministic synthetic SATNet clause matrices S (1 truth + n + aux, m).
    self.S1 = jax.random.normal(k1, (1 + n1 + aux, m), jnp.float32) / jnp.sqrt(m)
    self.S2 = jax.random.normal(k2, (1 + n2 + aux, m), jnp.float32) / jnp.sqrt(m)

  def __call__(self, img, mask, label, key):
    # img, mask: (b, 1, 28, 28) float; label: (b,) int
    b = label.shape[0]
    P = self.num_patches
    s = int(P ** 0.5)
    label_oh = jax.nn.one_hot(label, self.num_class, dtype=jnp.float32)
    img2, mask2 = img[:, 0], mask[:, 0]

    # torch .unfold(1,7,7).unfold(2,7,7).reshape(b,16,49).permute(1,0,2)
    def to_patches(x):
      return x.reshape(b, s, 7, s, 7).transpose(0, 1, 3, 2, 4) \
              .reshape(b, P, 49).transpose(1, 0, 2)

    img_p = to_patches(img2)       # (16, b, 49)
    mask_p = to_patches(mask2)     # (16, b, 49)

    pos = jnp.eye(P, dtype=jnp.float32)
    x1 = jnp.concatenate(
        [jnp.broadcast_to(label_oh[None], (P, b, self.num_class)),
         jnp.broadcast_to(pos[:, None, :], (P, b, P))],
        axis=-1).reshape(P * b, self.num_class + P)

    k1, k2 = jax.random.split(key)
    # The 16 per-patch SAT solves are independent -> batch them into one
    # pallas_call per layer (BM problems per grid step).
    inter = sat_conv_transpose(self.S1, self.aux, self.hidden_dim, x1, k1)
    y = sat_conv_transpose(self.S2, self.aux, 49, inter, k2,
                           mask_img=img_p.reshape(P * b, 49),
                           mask=mask_p.reshape(P * b, 49))

    y = y.reshape(P, b, 49).transpose(1, 0, 2)                   # (b,16,49)
    y = y.reshape(b, s, s, 7, 7).transpose(0, 1, 3, 2, 4).reshape(b, 28, 28)
    return y[:, None]                                            # (b,1,28,28)


if __name__ == "__main__":
  key = jax.random.PRNGKey(0)
  kp, ki, km, kl, kr = jax.random.split(key, 5)
  b = 2
  model = HierarchicalGeneratorPallas(kp)
  img = jax.random.uniform(ki, (b, 1, 28, 28), dtype=jnp.float32)
  mask = (jax.random.uniform(km, (b, 1, 28, 28)) > 0.5).astype(jnp.float32)
  label = jax.random.randint(kl, (b,), 0, 10)

  fwd = jax.jit(model.__call__)
  out = jax.block_until_ready(fwd(img, mask, label, kr))
  assert out.shape == (b, 1, 28, 28), out.shape
  assert bool(jnp.all(jnp.isfinite(out)))
  print("KERNEL_OK")
</pallas_src>

<mosaic_0001>
module attributes {stable_mosaic.version = 11 : i64} {
  func.func @_satnet_mixing_kernel(%arg0: i32, %arg1: memref<4x80xi32, #tpu.memory_space<smem>>, %arg2: memref<112x112xf32, #tpu.memory_space<vmem>>, %arg3: memref<1x112x1024xf32, #tpu.memory_space<vmem>>, %arg4: memref<1x112x1024xf32, #tpu.memory_space<vmem>>, %arg5: memref<1x112x8xf32, #tpu.memory_space<vmem>>, %arg6: memref<112x1024xf32, #tpu.memory_space<vmem>>) attributes {dimension_semantics = [#tpu.dimension_semantics<parallel>], iteration_bounds = array<i64: 4>, scalar_prefetch = 1 : i64, scratch_operands = 1 : i64, tpu.core_type = #tpu.core_type<tc>, window_params = [{pipeline_mode = #tpu.pipeline_mode<synchronous>, transform_indices = @transform_0, window_bounds = array<i64: 112, 112>}, {transform_indices = @transform_1, window_bounds = array<i64: 1, 112, 1024>}, {transform_indices = @transform_2, window_bounds = array<i64: 1, 112, 1024>}, {transform_indices = @transform_3, window_bounds = array<i64: 1, 112, 8>}]} {
    %c0 = arith.constant 0 : index
    %c0_0 = arith.constant 0 : index
    %c0_1 = arith.constant 0 : index
    %0 = vector.load %arg3[%c0, %c0_0, %c0_1] : memref<1x112x1024xf32, #tpu.memory_space<vmem>>, vector<1x112x1024xf32>
    %1 = vector.shape_cast %0 : vector<1x112x1024xf32> to vector<112x1024xf32>
    %c0_2 = arith.constant 0 : index
    %c0_3 = arith.constant 0 : index
    %2 = vector.load %arg6[%c0_2, %c0_3] : memref<112x1024xf32, #tpu.memory_space<vmem>>, vector<112x1024xf32>
    tpu.vector_store %arg6[%c0_2, %c0_3], %1 {strides = array<i32>} : memref<112x1024xf32, #tpu.memory_space<vmem>>, vector<112x1024xf32>,
    %c0_i32 = arith.constant 0 : i32
    %c16_i32 = arith.constant 16 : i32
    %3 = arith.addi %c0_i32, %c16_i32 : i32
    %c1_i32 = arith.constant 1 : i32
    scf.for %arg7 = %c0_i32 to %3 step %c1_i32  : i32 {
      %c0_i32_39 = arith.constant 0 : i32
      %c40_i32 = arith.constant 40 : i32
      %56 = arith.addi %c0_i32_39, %c40_i32 : i32
      %c1_i32_40 = arith.constant 1 : i32
      scf.for %arg8 = %c0_i32_39 to %56 step %c1_i32_40  : i32 {
        %c2_i32 = arith.constant 2 : i32
        %57 = arith.muli %c2_i32, %arg8 : i32
        %58 = arith.index_cast %arg0 : i32 to index
        %59 = arith.index_cast %57 : i32 to index
        %60 = memref.load %arg1[%58, %59] : memref<4x80xi32, #tpu.memory_space<smem>>
        %61 = arith.index_cast %60 : i32 to index
        %c0_42 = arith.constant 0 : index
        %62 = vector.load %arg2[%61, %c0_42] : memref<112x112xf32, #tpu.memory_space<vmem>>, vector<1x112xf32>
        %c0_43 = arith.constant 0 : index
        %c0_44 = arith.constant 0 : index
        %63 = vector.load %arg6[%c0_43, %c0_44] : memref<112x1024xf32, #tpu.memory_space<vmem>>, vector<112x1024xf32>
        %cst_45 = arith.constant dense<0.000000e+00> : vector<1x1024xf32>
        %64 = tpu.matmul %62, %63, %cst_45 {dimension_numbers = #tpu.dot_dimension_numbers<[1], [0], [0], [1], [0, 0, 1, 1], [], []>} : vector<1x112xf32>, vector<112x1024xf32>, vector<1x1024xf32> -> vector<1x1024xf32>
        %65 = arith.index_cast %60 : i32 to index
        %c0_46 = arith.constant 0 : index
        %66 = vector.load %arg6[%65, %c0_46] : memref<112x1024xf32, #tpu.memory_space<vmem>>, vector<1x1024xf32>
        %c0_47 = arith.constant 0 : index
        %67 = arith.index_cast %60 : i32 to index
        %c0_48 = arith.constant 0 : index
        %68 = vector.load %arg4[%c0_47, %67, %c0_48] : memref<1x112x1024xf32, #tpu.memory_space<vmem>>, vector<1x1x1024xf32>
        %69 = vector.shape_cast %68 : vector<1x1x1024xf32> to vector<1x1024xf32>
        %70 = vector.extract_strided_slice %64 {offsets = [0, 0], sizes = [1, 128], strides = [1, 1]} : vector<1x1024xf32> to vector<1x128xf32>
        %71 = vector.extract_strided_slice %66 {offsets = [0, 0], sizes = [1, 128], strides = [1, 1]} : vector<1x1024xf32> to vector<1x128xf32>
        %72 = arith.mulf %70, %70 : vector<1x128xf32>
        %cst_49 = arith.constant dense<0.000000e+00> : vector<1xf32>
        %73 = vector.multi_reduction <add>, %72, %cst_49 [1] : vector<1x128xf32> to vector<1xf32>
        %74 = vector.shape_cast %73 : vector<1xf32> to vector<1x1xf32>
        %cst_50 = arith.constant 9.99999996E-13 : f32
        %75 = vector.broadcast %cst_50 : f32 to vector<1x1xf32>
        %76 = arith.cmpf ogt, %74, %75 : vector<1x1xf32>
        %77 = arith.extui %76 : vector<1x1xi1> to vector<1x1xi32>
        %78 = arith.sitofp %77 : vector<1x1xi32> to vector<1x1xf32>
        %cst_51 = arith.constant 1.000000e-30 : f32
        %79 = vector.broadcast %cst_51 : f32 to vector<1x1xf32>
        %80 = arith.addf %74, %79 : vector<1x1xf32>
        %81 = math.rsqrt %80 : vector<1x1xf32>
        %82 = arith.mulf %78, %81 : vector<1x1xf32>
        %cst_52 = arith.constant 1.000000e+00 : f32
        %83 = vector.broadcast %cst_52 : f32 to vector<1x1xf32>
        %84 = arith.subf %83, %78 : vector<1x1xf32>
        %85 = vector.broadcast %84 : vector<1x1xf32> to vector<1x128xf32>
        %86 = arith.mulf %85, %71 : vector<1x128xf32>
        %87 = vector.broadcast %82 : vector<1x1xf32> to vector<1x128xf32>
        %88 = arith.mulf %87, %70 : vector<1x128xf32>
        %89 = arith.subf %86, %88 : vector<1x128xf32>
        %90 = vector.extract_strided_slice %64 {offsets = [0, 128], sizes = [1, 128], strides = [1, 1]} : vector<1x1024xf32> to vector<1x128xf32>
        %91 = vector.extract_strided_slice %66 {offsets = [0, 128], sizes = [1, 128], strides = [1, 1]} : vector<1x1024xf32> to vector<1x128xf32>
        %92 = arith.mulf %90, %90 : vector<1x128xf32>
        %cst_53 = arith.constant dense<0.000000e+00> : vector<1xf32>
        %93 = vector.multi_reduction <add>, %92, %cst_53 [1] : vector<1x128xf32> to vector<1xf32>
        %94 = vector.shape_cast %93 : vector<1xf32> to vector<1x1xf32>
        %cst_54 = arith.constant 9.99999996E-13 : f32
        %95 = vector.broadcast %cst_54 : f32 to vector<1x1xf32>
        %96 = arith.cmpf ogt, %94, %95 : vector<1x1xf32>
        %97 = arith.extui %96 : vector<1x1xi1> to vector<1x1xi32>
        %98 = arith.sitofp %97 : vector<1x1xi32> to vector<1x1xf32>
        %cst_55 = arith.constant 1.000000e-30 : f32
        %99 = vector.broadcast %cst_55 : f32 to vector<1x1xf32>
        %100 = arith.addf %94, %99 : vector<1x1xf32>
        %101 = math.rsqrt %100 : vector<1x1xf32>
        %102 = arith.mulf %98, %101 : vector<1x1xf32>
        %cst_56 = arith.constant 1.000000e+00 : f32
        %103 = vector.broadcast %cst_56 : f32 to vector<1x1xf32>
        %104 = arith.subf %103, %98 : vector<1x1xf32>
        %105 = vector.broadcast %104 : vector<1x1xf32> to vector<1x128xf32>
        %106 = arith.mulf %105, %91 : vector<1x128xf32>
        %107 = vector.broadcast %102 : vector<1x1xf32> to vector<1x128xf32>
        %108 = arith.mulf %107, %90 : vector<1x128xf32>
        %109 = arith.subf %106, %108 : vector<1x128xf32>
        %110 = vector.extract_strided_slice %64 {offsets = [0, 256], sizes = [1, 128], strides = [1, 1]} : vector<1x1024xf32> to vector<1x128xf32>
        %111 = vector.extract_strided_slice %66 {offsets = [0, 256], sizes = [1, 128], strides = [1, 1]} : vector<1x1024xf32> to vector<1x128xf32>
        %112 = arith.mulf %110, %110 : vector<1x128xf32>
        %cst_57 = arith.constant dense<0.000000e+00> : vector<1xf32>
        %113 = vector.multi_reduction <add>, %112, %cst_57 [1] : vector<1x128xf32> to vector<1xf32>
        %114 = vector.shape_cast %113 : vector<1xf32> to vector<1x1xf32>
        %cst_58 = arith.constant 9.99999996E-13 : f32
        %115 = vector.broadcast %cst_58 : f32 to vector<1x1xf32>
        %116 = arith.cmpf ogt, %114, %115 : vector<1x1xf32>
        %117 = arith.extui %116 : vector<1x1xi1> to vector<1x1xi32>
        %118 = arith.sitofp %117 : vector<1x1xi32> to vector<1x1xf32>
        %cst_59 = arith.constant 1.000000e-30 : f32
        %119 = vector.broadcast %cst_59 : f32 to vector<1x1xf32>
        %120 = arith.addf %114, %119 : vector<1x1xf32>
        %121 = math.rsqrt %120 : vector<1x1xf32>
        %122 = arith.mulf %118, %121 : vector<1x1xf32>
        %cst_60 = arith.constant 1.000000e+00 : f32
        %123 = vector.broadcast %cst_60 : f32 to vector<1x1xf32>
        %124 = arith.subf %123, %118 : vector<1x1xf32>
        %125 = vector.broadcast %124 : vector<1x1xf32> to vector<1x128xf32>
        %126 = arith.mulf %125, %111 : vector<1x128xf32>
        %127 = vector.broadcast %122 : vector<1x1xf32> to vector<1x128xf32>
        %128 = arith.mulf %127, %110 : vector<1x128xf32>
        %129 = arith.subf %126, %128 : vector<1x128xf32>
        %130 = vector.extract_strided_slice %64 {offsets = [0, 384], sizes = [1, 128], strides = [1, 1]} : vector<1x1024xf32> to vector<1x128xf32>
        %131 = vector.extract_strided_slice %66 {offsets = [0, 384], sizes = [1, 128], strides = [1, 1]} : vector<1x1024xf32> to vector<1x128xf32>
        %132 = arith.mulf %130, %130 : vector<1x128xf32>
        %cst_61 = arith.constant dense<0.000000e+00> : vector<1xf32>
        %133 = vector.multi_reduction <add>, %132, %cst_61 [1] : vector<1x128xf32> to vector<1xf32>
        %134 = vector.shape_cast %133 : vector<1xf32> to vector<1x1xf32>
        %cst_62 = arith.constant 9.99999996E-13 : f32
        %135 = vector.broadcast %cst_62 : f32 to vector<1x1xf32>
        %136 = arith.cmpf ogt, %134, %135 : vector<1x1xf32>
        %137 = arith.extui %136 : vector<1x1xi1> to vector<1x1xi32>
        %138 = arith.sitofp %137 : vector<1x1xi32> to vector<1x1xf32>
        %cst_63 = arith.constant 1.000000e-30 : f32
        %139 = vector.broadcast %cst_63 : f32 to vector<1x1xf32>
        %140 = arith.addf %134, %139 : vector<1x1xf32>
        %141 = math.rsqrt %140 : vector<1x1xf32>
        %142 = arith.mulf %138, %141 : vector<1x1xf32>
        %cst_64 = arith.constant 1.000000e+00 : f32
        %143 = vector.broadcast %cst_64 : f32 to vector<1x1xf32>
        %144 = arith.subf %143, %138 : vector<1x1xf32>
        %145 = vector.broadcast %144 : vector<1x1xf32> to vector<1x128xf32>
        %146 = arith.mulf %145, %131 : vector<1x128xf32>
        %147 = vector.broadcast %142 : vector<1x1xf32> to vector<1x128xf32>
        %148 = arith.mulf %147, %130 : vector<1x128xf32>
        %149 = arith.subf %146, %148 : vector<1x128xf32>
        %150 = vector.extract_strided_slice %64 {offsets = [0, 512], sizes = [1, 128], strides = [1, 1]} : vector<1x1024xf32> to vector<1x128xf32>
        %151 = vector.extract_strided_slice %66 {offsets = [0, 512], sizes = [1, 128], strides = [1, 1]} : vector<1x1024xf32> to vector<1x128xf32>
        %152 = arith.mulf %150, %150 : vector<1x128xf32>
        %cst_65 = arith.constant dense<0.000000e+00> : vector<1xf32>
        %153 = vector.multi_reduction <add>, %152, %cst_65 [1] : vector<1x128xf32> to vector<1xf32>
        %154 = vector.shape_cast %153 : vector<1xf32> to vector<1x1xf32>
        %cst_66 = arith.constant 9.99999996E-13 : f32
        %155 = vector.broadcast %cst_66 : f32 to vector<1x1xf32>
        %156 = arith.cmpf ogt, %154, %155 : vector<1x1xf32>
        %157 = arith.extui %156 : vector<1x1xi1> to vector<1x1xi32>
        %158 = arith.sitofp %157 : vector<1x1xi32> to vector<1x1xf32>
        %cst_67 = arith.constant 1.000000e-30 : f32
        %159 = vector.broadcast %cst_67 : f32 to vector<1x1xf32>
        %160 = arith.addf %154, %159 : vector<1x1xf32>
        %161 = math.rsqrt %160 : vector<1x1xf32>
        %162 = arith.mulf %158, %161 : vector<1x1xf32>
        %cst_68 = arith.constant 1.000000e+00 : f32
        %163 = vector.broadcast %cst_68 : f32 to vector<1x1xf32>
        %164 = arith.subf %163, %158 : vector<1x1xf32>
        %165 = vector.broadcast %164 : vector<1x1xf32> to vector<1x128xf32>
        %166 = arith.mulf %165, %151 : vector<1x128xf32>
        %167 = vector.broadcast %162 : vector<1x1xf32> to vector<1x128xf32>
        %168 = arith.mulf %167, %150 : vector<1x128xf32>
        %169 = arith.subf %166, %168 : vector<1x128xf32>
        %170 = vector.extract_strided_slice %64 {offsets = [0, 640], sizes = [1, 128], strides = [1, 1]} : vector<1x1024xf32> to vector<1x128xf32>
        %171 = vector.extract_strided_slice %66 {offsets = [0, 640], sizes = [1, 128], strides = [1, 1]} : vector<1x1024xf32> to vector<1x128xf32>
        %172 = arith.mulf %170, %170 : vector<1x128xf32>
        %cst_69 = arith.constant dense<0.000000e+00> : vector<1xf32>
        %173 = vector.multi_reduction <add>, %172, %cst_69 [1] : vector<1x128xf32> to vector<1xf32>
        %174 = vector.shape_cast %173 : vector<1xf32> to vector<1x1xf32>
        %cst_70 = arith.constant 9.99999996E-13 : f32
        %175 = vector.broadcast %cst_70 : f32 to vector<1x1xf32>
        %176 = arith.cmpf ogt, %174, %175 : vector<1x1xf32>
        %177 = arith.extui %176 : vector<1x1xi1> to vector<1x1xi32>
        %178 = arith.sitofp %177 : vector<1x1xi32> to vector<1x1xf32>
        %cst_71 = arith.constant 1.000000e-30 : f32
        %179 = vector.broadcast %cst_71 : f32 to vector<1x1xf32>
        %180 = arith.addf %174, %179 : vector<1x1xf32>
        %181 = math.rsqrt %180 : vector<1x1xf32>
        %182 = arith.mulf %178, %181 : vector<1x1xf32>
        %cst_72 = arith.constant 1.000000e+00 : f32
        %183 = vector.broadcast %cst_72 : f32 to vector<1x1xf32>
        %184 = arith.subf %183, %178 : vector<1x1xf32>
        %185 = vector.broadcast %184 : vector<1x1xf32> to vector<1x128xf32>
        %186 = arith.mulf %185, %171 : vector<1x128xf32>
        %187 = vector.broadcast %182 : vector<1x1xf32> to vector<1x128xf32>
        %188 = arith.mulf %187, %170 : vector<1x128xf32>
        %189 = arith.subf %186, %188 : vector<1x128xf32>
        %190 = vector.extract_strided_slice %64 {offsets = [0, 768], sizes = [1, 128], strides = [1, 1]} : vector<1x1024xf32> to vector<1x128xf32>
        %191 = vector.extract_strided_slice %66 {offsets = [0, 768], sizes = [1, 128], strides = [1, 1]} : vector<1x1024xf32> to vector<1x128xf32>
        %192 = arith.mulf %190, %190 : vector<1x128xf32>
        %cst_73 = arith.constant dense<0.000000e+00> : vector<1xf32>
        %193 = vector.multi_reduction <add>, %192, %cst_73 [1] : vector<1x128xf32> to vector<1xf32>
        %194 = vector.shape_cast %193 : vector<1xf32> to vector<1x1xf32>
        %cst_74 = arith.constant 9.99999996E-13 : f32
        %195 = vector.broadcast %cst_74 : f32 to vector<1x1xf32>
        %196 = arith.cmpf ogt, %194, %195 : vector<1x1xf32>
        %197 = arith.extui %196 : vector<1x1xi1> to vector<1x1xi32>
        %198 = arith.sitofp %197 : vector<1x1xi32> to vector<1x1xf32>
        %cst_75 = arith.constant 1.000000e-30 : f32
        %199 = vector.broadcast %cst_75 : f32 to vector<1x1xf32>
        %200 = arith.addf %194, %199 : vector<1x1xf32>
        %201 = math.rsqrt %200 : vector<1x1xf32>
        %202 = arith.mulf %198, %201 : vector<1x1xf32>
        %cst_76 = arith.constant 1.000000e+00 : f32
        %203 = vector.broadcast %cst_76 : f32 to vector<1x1xf32>
        %204 = arith.subf %203, %198 : vector<1x1xf32>
        %205 = vector.broadcast %204 : vector<1x1xf32> to vector<1x128xf32>
        %206 = arith.mulf %205, %191 : vector<1x128xf32>
        %207 = vector.broadcast %202 : vector<1x1xf32> to vector<1x128xf32>
        %208 = arith.mulf %207, %190 : vector<1x128xf32>
        %209 = arith.subf %206, %208 : vector<1x128xf32>
        %210 = vector.extract_strided_slice %64 {offsets = [0, 896], sizes = [1, 128], strides = [1, 1]} : vector<1x1024xf32> to vector<1x128xf32>
        %211 = vector.extract_strided_slice %66 {offsets = [0, 896], sizes = [1, 128], strides = [1, 1]} : vector<1x1024xf32> to vector<1x128xf32>
        %212 = arith.mulf %210, %210 : vector<1x128xf32>
        %cst_77 = arith.constant dense<0.000000e+00> : vector<1xf32>
        %213 = vector.multi_reduction <add>, %212, %cst_77 [1] : vector<1x128xf32> to vector<1xf32>
        %214 = vector.shape_cast %213 : vector<1xf32> to vector<1x1xf32>
        %cst_78 = arith.constant 9.99999996E-13 : f32
        %215 = vector.broadcast %cst_78 : f32 to vector<1x1xf32>
        %216 = arith.cmpf ogt, %214, %215 : vector<1x1xf32>
        %217 = arith.extui %216 : vector<1x1xi1> to vector<1x1xi32>
        %218 = arith.sitofp %217 : vector<1x1xi32> to vector<1x1xf32>
        %cst_79 = arith.constant 1.000000e-30 : f32
        %219 = vector.broadcast %cst_79 : f32 to vector<1x1xf32>
        %220 = arith.addf %214, %219 : vector<1x1xf32>
        %221 = math.rsqrt %220 : vector<1x1xf32>
        %222 = arith.mulf %218, %221 : vector<1x1xf32>
        %cst_80 = arith.constant 1.000000e+00 : f32
        %223 = vector.broadcast %cst_80 : f32 to vector<1x1xf32>
        %224 = arith.subf %223, %218 : vector<1x1xf32>
        %225 = vector.broadcast %224 : vector<1x1xf32> to vector<1x128xf32>
        %226 = arith.mulf %225, %211 : vector<1x128xf32>
        %227 = vector.broadcast %222 : vector<1x1xf32> to vector<1x128xf32>
        %228 = arith.mulf %227, %210 : vector<1x128xf32>
        %229 = arith.subf %226, %228 : vector<1x128xf32>
        %230 = tpu.concatenate %89, %109, %129, %149, %169, %189, %209, %229 in 1 : vector<1x128xf32>, vector<1x128xf32>, vector<1x128xf32>, vector<1x128xf32>, vector<1x128xf32>, vector<1x128xf32>, vector<1x128xf32>, vector<1x128xf32> -> vector<1x1024xf32>
        %231 = arith.subf %230, %66 : vector<1x1024xf32>
        %232 = arith.mulf %69, %231 : vector<1x1024xf32>
        %233 = arith.addf %66, %232 : vector<1x1024xf32>
        %234 = arith.index_cast %60 : i32 to index
        %c0_81 = arith.constant 0 : index
        %235 = vector.load %arg6[%234, %c0_81] : memref<112x1024xf32, #tpu.memory_space<vmem>>, vector<1x1024xf32>
        tpu.vector_store %arg6[%234, %c0_81], %233 {strides = array<i32>} : memref<112x1024xf32, #tpu.memory_space<vmem>>, vector<1x1024xf32>,
        %c2_i32_82 = arith.constant 2 : i32
        %236 = arith.muli %c2_i32_82, %arg8 : i32
        %c1_i32_83 = arith.constant 1 : i32
        %237 = arith.addi %236, %c1_i32_83 : i32
        %238 = arith.index_cast %arg0 : i32 to index
        %239 = arith.index_cast %237 : i32 to index
        %240 = memref.load %arg1[%238, %239] : memref<4x80xi32, #tpu.memory_space<smem>>
        %241 = arith.index_cast %240 : i32 to index
        %c0_84 = arith.constant 0 : index
        %242 = vector.load %arg2[%241, %c0_84] : memref<112x112xf32, #tpu.memory_space<vmem>>, vector<1x112xf32>
        %c0_85 = arith.constant 0 : index
        %c0_86 = arith.constant 0 : index
        %243 = vector.load %arg6[%c0_85, %c0_86] : memref<112x1024xf32, #tpu.memory_space<vmem>>, vector<112x1024xf32>
        %cst_87 = arith.constant dense<0.000000e+00> : vector<1x1024xf32>
        %244 = tpu.matmul %242, %243, %cst_87 {dimension_numbers = #tpu.dot_dimension_numbers<[1], [0], [0], [1], [0, 0, 1, 1], [], []>} : vector<1x112xf32>, vector<112x1024xf32>, vector<1x1024xf32> -> vector<1x1024xf32>
        %245 = arith.index_cast %240 : i32 to index
        %c0_88 = arith.constant 0 : index
        %246 = vector.load %arg6[%245, %c0_88] : memref<112x1024xf32, #tpu.memory_space<vmem>>, vector<1x1024xf32>
        %c0_89 = arith.constant 0 : index
        %247 = arith.index_cast %240 : i32 to index
        %c0_90 = arith.constant 0 : index
        %248 = vector.load %arg4[%c0_89, %247, %c0_90] : memref<1x112x1024xf32, #tpu.memory_space<vmem>>, vector<1x1x1024xf32>
        %249 = vector.shape_cast %248 : vector<1x1x1024xf32> to vector<1x1024xf32>
        %250 = vector.extract_strided_slice %244 {offsets = [0, 0], sizes = [1, 128], strides = [1, 1]} : vector<1x1024xf32> to vector<1x128xf32>
        %251 = vector.extract_strided_slice %246 {offsets = [0, 0], sizes = [1, 128], strides = [1, 1]} : vector<1x1024xf32> to vector<1x128xf32>
        %252 = arith.mulf %250, %250 : vector<1x128xf32>
        %cst_91 = arith.constant dense<0.000000e+00> : vector<1xf32>
        %253 = vector.multi_reduction <add>, %252, %cst_91 [1] : vector<1x128xf32> to vector<1xf32>
        %254 = vector.shape_cast %253 : vector<1xf32> to vector<1x1xf32>
        %cst_92 = arith.constant 9.99999996E-13 : f32
        %255 = vector.broadcast %cst_92 : f32 to vector<1x1xf32>
        %256 = arith.cmpf ogt, %254, %255 : vector<1x1xf32>
        %257 = arith.extui %256 : vector<1x1xi1> to vector<1x1xi32>
        %258 = arith.sitofp %257 : vector<1x1xi32> to vector<1x1xf32>
        %cst_93 = arith.constant 1.000000e-30 : f32
        %259 = vector.broadcast %cst_93 : f32 to vector<1x1xf32>
        %260 = arith.addf %254, %259 : vector<1x1xf32>
        %261 = math.rsqrt %260 : vector<1x1xf32>
        %262 = arith.mulf %258, %261 : vector<1x1xf32>
        %cst_94 = arith.constant 1.000000e+00 : f32
        %263 = vector.broadcast %cst_94 : f32 to vector<1x1xf32>
        %264 = arith.subf %263, %258 : vector<1x1xf32>
        %265 = vector.broadcast %264 : vector<1x1xf32> to vector<1x128xf32>
        %266 = arith.mulf %265, %251 : vector<1x128xf32>
        %267 = vector.broadcast %262 : vector<1x1xf32> to vector<1x128xf32>
        %268 = arith.mulf %267, %250 : vector<1x128xf32>
        %269 = arith.subf %266, %268 : vector<1x128xf32>
        %270 = vector.extract_strided_slice %244 {offsets = [0, 128], sizes = [1, 128], strides = [1, 1]} : vector<1x1024xf32> to vector<1x128xf32>
        %271 = vector.extract_strided_slice %246 {offsets = [0, 128], sizes = [1, 128], strides = [1, 1]} : vector<1x1024xf32> to vector<1x128xf32>
        %272 = arith.mulf %270, %270 : vector<1x128xf32>
        %cst_95 = arith.constant dense<0.000000e+00> : vector<1xf32>
        %273 = vector.multi_reduction <add>, %272, %cst_95 [1] : vector<1x128xf32> to vector<1xf32>
        %274 = vector.shape_cast %273 : vector<1xf32> to vector<1x1xf32>
        %cst_96 = arith.constant 9.99999996E-13 : f32
        %275 = vector.broadcast %cst_96 : f32 to vector<1x1xf32>
        %276 = arith.cmpf ogt, %274, %275 : vector<1x1xf32>
        %277 = arith.extui %276 : vector<1x1xi1> to vector<1x1xi32>
        %278 = arith.sitofp %277 : vector<1x1xi32> to vector<1x1xf32>
        %cst_97 = arith.constant 1.000000e-30 : f32
        %279 = vector.broadcast %cst_97 : f32 to vector<1x1xf32>
        %280 = arith.addf %274, %279 : vector<1x1xf32>
        %281 = math.rsqrt %280 : vector<1x1xf32>
        %282 = arith.mulf %278, %281 : vector<1x1xf32>
        %cst_98 = arith.constant 1.000000e+00 : f32
        %283 = vector.broadcast %cst_98 : f32 to vector<1x1xf32>
        %284 = arith.subf %283, %278 : vector<1x1xf32>
        %285 = vector.broadcast %284 : vector<1x1xf32> to vector<1x128xf32>
        %286 = arith.mulf %285, %271 : vector<1x128xf32>
        %287 = vector.broadcast %282 : vector<1x1xf32> to vector<1x128xf32>
        %288 = arith.mulf %287, %270 : vector<1x128xf32>
        %289 = arith.subf %286, %288 : vector<1x128xf32>
        %290 = vector.extract_strided_slice %244 {offsets = [0, 256], sizes = [1, 128], strides = [1, 1]} : vector<1x1024xf32> to vector<1x128xf32>
        %291 = vector.extract_strided_slice %246 {offsets = [0, 256], sizes = [1, 128], strides = [1, 1]} : vector<1x1024xf32> to vector<1x128xf32>
        %292 = arith.mulf %290, %290 : vector<1x128xf32>
        %cst_99 = arith.constant dense<0.000000e+00> : vector<1xf32>
        %293 = vector.multi_reduction <add>, %292, %cst_99 [1] : vector<1x128xf32> to vector<1xf32>
        %294 = vector.shape_cast %293 : vector<1xf32> to vector<1x1xf32>
        %cst_100 = arith.constant 9.99999996E-13 : f32
        %295 = vector.broadcast %cst_100 : f32 to vector<1x1xf32>
        %296 = arith.cmpf ogt, %294, %295 : vector<1x1xf32>
        %297 = arith.extui %296 : vector<1x1xi1> to vector<1x1xi32>
        %298 = arith.sitofp %297 : vector<1x1xi32> to vector<1x1xf32>
        %cst_101 = arith.constant 1.000000e-30 : f32
        %299 = vector.broadcast %cst_101 : f32 to vector<1x1xf32>
        %300 = arith.addf %294, %299 : vector<1x1xf32>
        %301 = math.rsqrt %300 : vector<1x1xf32>
        %302 = arith.mulf %298, %301 : vector<1x1xf32>
        %cst_102 = arith.constant 1.000000e+00 : f32
        %303 = vector.broadcast %cst_102 : f32 to vector<1x1xf32>
        %304 = arith.subf %303, %298 : vector<1x1xf32>
        %305 = vector.broadcast %304 : vector<1x1xf32> to vector<1x128xf32>
        %306 = arith.mulf %305, %291 : vector<1x128xf32>
        %307 = vector.broadcast %302 : vector<1x1xf32> to vector<1x128xf32>
        %308 = arith.mulf %307, %290 : vector<1x128xf32>
        %309 = arith.subf %306, %308 : vector<1x128xf32>
        %310 = vector.extract_strided_slice %244 {offsets = [0, 384], sizes = [1, 128], strides = [1, 1]} : vector<1x1024xf32> to vector<1x128xf32>
        %311 = vector.extract_strided_slice %246 {offsets = [0, 384], sizes = [1, 128], strides = [1, 1]} : vector<1x1024xf32> to vector<1x128xf32>
        %312 = arith.mulf %310, %310 : vector<1x128xf32>
        %cst_103 = arith.constant dense<0.000000e+00> : vector<1xf32>
        %313 = vector.multi_reduction <add>, %312, %cst_103 [1] : vector<1x128xf32> to vector<1xf32>
        %314 = vector.shape_cast %313 : vector<1xf32> to vector<1x1xf32>
        %cst_104 = arith.constant 9.99999996E-13 : f32
        %315 = vector.broadcast %cst_104 : f32 to vector<1x1xf32>
        %316 = arith.cmpf ogt, %314, %315 : vector<1x1xf32>
        %317 = arith.extui %316 : vector<1x1xi1> to vector<1x1xi32>
        %318 = arith.sitofp %317 : vector<1x1xi32> to vector<1x1xf32>
        %cst_105 = arith.constant 1.000000e-30 : f32
        %319 = vector.broadcast %cst_105 : f32 to vector<1x1xf32>
        %320 = arith.addf %314, %319 : vector<1x1xf32>
        %321 = math.rsqrt %320 : vector<1x1xf32>
        %322 = arith.mulf %318, %321 : vector<1x1xf32>
        %cst_106 = arith.constant 1.000000e+00 : f32
        %323 = vector.broadcast %cst_106 : f32 to vector<1x1xf32>
        %324 = arith.subf %323, %318 : vector<1x1xf32>
        %325 = vector.broadcast %324 : vector<1x1xf32> to vector<1x128xf32>
        %326 = arith.mulf %325, %311 : vector<1x128xf32>
        %327 = vector.broadcast %322 : vector<1x1xf32> to vector<1x128xf32>
        %328 = arith.mulf %327, %310 : vector<1x128xf32>
        %329 = arith.subf %326, %328 : vector<1x128xf32>
        %330 = vector.extract_strided_slice %244 {offsets = [0, 512], sizes = [1, 128], strides = [1, 1]} : vector<1x1024xf32> to vector<1x128xf32>
        %331 = vector.extract_strided_slice %246 {offsets = [0, 512], sizes = [1, 128], strides = [1, 1]} : vector<1x1024xf32> to vector<1x128xf32>
        %332 = arith.mulf %330, %330 : vector<1x128xf32>
        %cst_107 = arith.constant dense<0.000000e+00> : vector<1xf32>
        %333 = vector.multi_reduction <add>, %332, %cst_107 [1] : vector<1x128xf32> to vector<1xf32>
        %334 = vector.shape_cast %333 : vector<1xf32> to vector<1x1xf32>
        %cst_108 = arith.constant 9.99999996E-13 : f32
        %335 = vector.broadcast %cst_108 : f32 to vector<1x1xf32>
        %336 = arith.cmpf ogt, %334, %335 : vector<1x1xf32>
        %337 = arith.extui %336 : vector<1x1xi1> to vector<1x1xi32>
        %338 = arith.sitofp %337 : vector<1x1xi32> to vector<1x1xf32>
        %cst_109 = arith.constant 1.000000e-30 : f32
        %339 = vector.broadcast %cst_109 : f32 to vector<1x1xf32>
        %340 = arith.addf %334, %339 : vector<1x1xf32>
        %341 = math.rsqrt %340 : vector<1x1xf32>
        %342 = arith.mulf %338, %341 : vector<1x1xf32>
        %cst_110 = arith.constant 1.000000e+00 : f32
        %343 = vector.broadcast %cst_110 : f32 to vector<1x1xf32>
        %344 = arith.subf %343, %338 : vector<1x1xf32>
        %345 = vector.broadcast %344 : vector<1x1xf32> to vector<1x128xf32>
        %346 = arith.mulf %345, %331 : vector<1x128xf32>
        %347 = vector.broadcast %342 : vector<1x1xf32> to vector<1x128xf32>
        %348 = arith.mulf %347, %330 : vector<1x128xf32>
        %349 = arith.subf %346, %348 : vector<1x128xf32>
        %350 = vector.extract_strided_slice %244 {offsets = [0, 640], sizes = [1, 128], strides = [1, 1]} : vector<1x1024xf32> to vector<1x128xf32>
        %351 = vector.extract_strided_slice %246 {offsets = [0, 640], sizes = [1, 128], strides = [1, 1]} : vector<1x1024xf32> to vector<1x128xf32>
        %352 = arith.mulf %350, %350 : vector<1x128xf32>
        %cst_111 = arith.constant dense<0.000000e+00> : vector<1xf32>
        %353 = vector.multi_reduction <add>, %352, %cst_111 [1] : vector<1x128xf32> to vector<1xf32>
        %354 = vector.shape_cast %353 : vector<1xf32> to vector<1x1xf32>
        %cst_112 = arith.constant 9.99999996E-13 : f32
        %355 = vector.broadcast %cst_112 : f32 to vector<1x1xf32>
        %356 = arith.cmpf ogt, %354, %355 : vector<1x1xf32>
        %357 = arith.extui %356 : vector<1x1xi1> to vector<1x1xi32>
        %358 = arith.sitofp %357 : vector<1x1xi32> to vector<1x1xf32>
        %cst_113 = arith.constant 1.000000e-30 : f32
        %359 = vector.broadcast %cst_113 : f32 to vector<1x1xf32>
        %360 = arith.addf %354, %359 : vector<1x1xf32>
        %361 = math.rsqrt %360 : vector<1x1xf32>
        %362 = arith.mulf %358, %361 : vector<1x1xf32>
        %cst_114 = arith.constant 1.000000e+00 : f32
        %363 = vector.broadcast %cst_114 : f32 to vector<1x1xf32>
        %364 = arith.subf %363, %358 : vector<1x1xf32>
        %365 = vector.broadcast %364 : vector<1x1xf32> to vector<1x128xf32>
        %366 = arith.mulf %365, %351 : vector<1x128xf32>
        %367 = vector.broadcast %362 : vector<1x1xf32> to vector<1x128xf32>
        %368 = arith.mulf %367, %350 : vector<1x128xf32>
        %369 = arith.subf %366, %368 : vector<1x128xf32>
        %370 = vector.extract_strided_slice %244 {offsets = [0, 768], sizes = [1, 128], strides = [1, 1]} : vector<1x1024xf32> to vector<1x128xf32>
        %371 = vector.extract_strided_slice %246 {offsets = [0, 768], sizes = [1, 128], strides = [1, 1]} : vector<1x1024xf32> to vector<1x128xf32>
        %372 = arith.mulf %370, %370 : vector<1x128xf32>
        %cst_115 = arith.constant dense<0.000000e+00> : vector<1xf32>
        %373 = vector.multi_reduction <add>, %372, %cst_115 [1] : vector<1x128xf32> to vector<1xf32>
        %374 = vector.shape_cast %373 : vector<1xf32> to vector<1x1xf32>
        %cst_116 = arith.constant 9.99999996E-13 : f32
        %375 = vector.broadcast %cst_116 : f32 to vector<1x1xf32>
        %376 = arith.cmpf ogt, %374, %375 : vector<1x1xf32>
        %377 = arith.extui %376 : vector<1x1xi1> to vector<1x1xi32>
        %378 = arith.sitofp %377 : vector<1x1xi32> to vector<1x1xf32>
        %cst_117 = arith.constant 1.000000e-30 : f32
        %379 = vector.broadcast %cst_117 : f32 to vector<1x1xf32>
        %380 = arith.addf %374, %379 : vector<1x1xf32>
        %381 = math.rsqrt %380 : vector<1x1xf32>
        %382 = arith.mulf %378, %381 : vector<1x1xf32>
        %cst_118 = arith.constant 1.000000e+00 : f32
        %383 = vector.broadcast %cst_118 : f32 to vector<1x1xf32>
        %384 = arith.subf %383, %378 : vector<1x1xf32>
        %385 = vector.broadcast %384 : vector<1x1xf32> to vector<1x128xf32>
        %386 = arith.mulf %385, %371 : vector<1x128xf32>
        %387 = vector.broadcast %382 : vector<1x1xf32> to vector<1x128xf32>
        %388 = arith.mulf %387, %370 : vector<1x128xf32>
        %389 = arith.subf %386, %388 : vector<1x128xf32>
        %390 = vector.extract_strided_slice %244 {offsets = [0, 896], sizes = [1, 128], strides = [1, 1]} : vector<1x1024xf32> to vector<1x128xf32>
        %391 = vector.extract_strided_slice %246 {offsets = [0, 896], sizes = [1, 128], strides = [1, 1]} : vector<1x1024xf32> to vector<1x128xf32>
        %392 = arith.mulf %390, %390 : vector<1x128xf32>
        %cst_119 = arith.constant dense<0.000000e+00> : vector<1xf32>
        %393 = vector.multi_reduction <add>, %392, %cst_119 [1] : vector<1x128xf32> to vector<1xf32>
        %394 = vector.shape_cast %393 : vector<1xf32> to vector<1x1xf32>
        %cst_120 = arith.constant 9.99999996E-13 : f32
        %395 = vector.broadcast %cst_120 : f32 to vector<1x1xf32>
        %396 = arith.cmpf ogt, %394, %395 : vector<1x1xf32>
        %397 = arith.extui %396 : vector<1x1xi1> to vector<1x1xi32>
        %398 = arith.sitofp %397 : vector<1x1xi32> to vector<1x1xf32>
        %cst_121 = arith.constant 1.000000e-30 : f32
        %399 = vector.broadcast %cst_121 : f32 to vector<1x1xf32>
        %400 = arith.addf %394, %399 : vector<1x1xf32>
        %401 = math.rsqrt %400 : vector<1x1xf32>
        %402 = arith.mulf %398, %401 : vector<1x1xf32>
        %cst_122 = arith.constant 1.000000e+00 : f32
        %403 = vector.broadcast %cst_122 : f32 to vector<1x1xf32>
        %404 = arith.subf %403, %398 : vector<1x1xf32>
        %405 = vector.broadcast %404 : vector<1x1xf32> to vector<1x128xf32>
        %406 = arith.mulf %405, %391 : vector<1x128xf32>
        %407 = vector.broadcast %402 : vector<1x1xf32> to vector<1x128xf32>
        %408 = arith.mulf %407, %390 : vector<1x128xf32>
        %409 = arith.subf %406, %408 : vector<1x128xf32>
        %410 = tpu.concatenate %269, %289, %309, %329, %349, %369, %389, %409 in 1 : vector<1x128xf32>, vector<1x128xf32>, vector<1x128xf32>, vector<1x128xf32>, vector<1x128xf32>, vector<1x128xf32>, vector<1x128xf32>, vector<1x128xf32> -> vector<1x1024xf32>
        %411 = arith.subf %410, %246 : vector<1x1024xf32>
        %412 = arith.mulf %249, %411 : vector<1x1024xf32>
        %413 = arith.addf %246, %412 : vector<1x1024xf32>
        %414 = arith.index_cast %240 : i32 to index
        %c0_123 = arith.constant 0 : index
        %415 = vector.load %arg6[%414, %c0_123] : memref<112x1024xf32, #tpu.memory_space<vmem>>, vector<1x1024xf32>
        tpu.vector_store %arg6[%414, %c0_123], %413 {strides = array<i32>} : memref<112x1024xf32, #tpu.memory_space<vmem>>, vector<1x1024xf32>,
      }
      %c40_i32_41 = arith.constant 40 : i32
    }
    %c0_4 = arith.constant 0 : index
    %c0_5 = arith.constant 0 : index
    %4 = vector.load %arg6[%c0_4, %c0_5] : memref<112x1024xf32, #tpu.memory_space<vmem>>, vector<112x128xf32>
    %c0_6 = arith.constant 0 : index
    %c0_7 = arith.constant 0 : index
    %5 = vector.load %arg6[%c0_6, %c0_7] : memref<112x1024xf32, #tpu.memory_space<vmem>>, vector<1x128xf32>
    %6 = vector.broadcast %5 : vector<1x128xf32> to vector<112x128xf32>
    %7 = arith.mulf %4, %6 : vector<112x128xf32>
    %cst = arith.constant dense<0.000000e+00> : vector<112xf32>
    %8 = vector.multi_reduction <add>, %7, %cst [1] : vector<112x128xf32> to vector<112xf32>
    %9 = vector.shape_cast %8 : vector<112xf32> to vector<112x1xf32>
    %c0_8 = arith.constant 0 : index
    %c128 = arith.constant 128 : index
    %10 = vector.load %arg6[%c0_8, %c128] : memref<112x1024xf32, #tpu.memory_space<vmem>>, vector<112x128xf32>
    %c0_9 = arith.constant 0 : index
    %c128_10 = arith.constant 128 : index
    %11 = vector.load %arg6[%c0_9, %c128_10] : memref<112x1024xf32, #tpu.memory_space<vmem>>, vector<1x128xf32>
    %12 = vector.broadcast %11 : vector<1x128xf32> to vector<112x128xf32>
    %13 = arith.mulf %10, %12 : vector<112x128xf32>
    %cst_11 = arith.constant dense<0.000000e+00> : vector<112xf32>
    %14 = vector.multi_reduction <add>, %13, %cst_11 [1] : vector<112x128xf32> to vector<112xf32>
    %15 = vector.shape_cast %14 : vector<112xf32> to vector<112x1xf32>
    %c0_12 = arith.constant 0 : index
    %c256 = arith.constant 256 : index
    %16 = vector.load %arg6[%c0_12, %c256] : memref<112x1024xf32, #tpu.memory_space<vmem>>, vector<112x128xf32>
    %c0_13 = arith.constant 0 : index
    %c256_14 = arith.constant 256 : index
    %17 = vector.load %arg6[%c0_13, %c256_14] : memref<112x1024xf32, #tpu.memory_space<vmem>>, vector<1x128xf32>
    %18 = vector.broadcast %17 : vector<1x128xf32> to vector<112x128xf32>
    %19 = arith.mulf %16, %18 : vector<112x128xf32>
    %cst_15 = arith.constant dense<0.000000e+00> : vector<112xf32>
    %20 = vector.multi_reduction <add>, %19, %cst_15 [1] : vector<112x128xf32> to vector<112xf32>
    %21 = vector.shape_cast %20 : vector<112xf32> to vector<112x1xf32>
    %c0_16 = arith.constant 0 : index
    %c384 = arith.constant 384 : index
    %22 = vector.load %arg6[%c0_16, %c384] : memref<112x1024xf32, #tpu.memory_space<vmem>>, vector<112x128xf32>
    %c0_17 = arith.constant 0 : index
    %c384_18 = arith.constant 384 : index
    %23 = vector.load %arg6[%c0_17, %c384_18] : memref<112x1024xf32, #tpu.memory_space<vmem>>, vector<1x128xf32>
    %24 = vector.broadcast %23 : vector<1x128xf32> to vector<112x128xf32>
    %25 = arith.mulf %22, %24 : vector<112x128xf32>
    %cst_19 = arith.constant dense<0.000000e+00> : vector<112xf32>
    %26 = vector.multi_reduction <add>, %25, %cst_19 [1] : vector<112x128xf32> to vector<112xf32>
    %27 = vector.shape_cast %26 : vector<112xf32> to vector<112x1xf32>
    %c0_20 = arith.constant 0 : index
    %c512 = arith.constant 512 : index
    %28 = vector.load %arg6[%c0_20, %c512] : memref<112x1024xf32, #tpu.memory_space<vmem>>, vector<112x128xf32>
    %c0_21 = arith.constant 0 : index
    %c512_22 = arith.constant 512 : index
    %29 = vector.load %arg6[%c0_21, %c512_22] : memref<112x1024xf32, #tpu.memory_space<vmem>>, vector<1x128xf32>
    %30 = vector.broadcast %29 : vector<1x128xf32> to vector<112x128xf32>
    %31 = arith.mulf %28, %30 : vector<112x128xf32>
    %cst_23 = arith.constant dense<0.000000e+00> : vector<112xf32>
    %32 = vector.multi_reduction <add>, %31, %cst_23 [1] : vector<112x128xf32> to vector<112xf32>
    %33 = vector.shape_cast %32 : vector<112xf32> to vector<112x1xf32>
    %c0_24 = arith.constant 0 : index
    %c640 = arith.constant 640 : index
    %34 = vector.load %arg6[%c0_24, %c640] : memref<112x1024xf32, #tpu.memory_space<vmem>>, vector<112x128xf32>
    %c0_25 = arith.constant 0 : index
    %c640_26 = arith.constant 640 : index
    %35 = vector.load %arg6[%c0_25, %c640_26] : memref<112x1024xf32, #tpu.memory_space<vmem>>, vector<1x128xf32>
    %36 = vector.broadcast %35 : vector<1x128xf32> to vector<112x128xf32>
    %37 = arith.mulf %34, %36 : vector<112x128xf32>
    %cst_27 = arith.constant dense<0.000000e+00> : vector<112xf32>
    %38 = vector.multi_reduction <add>, %37, %cst_27 [1] : vector<112x128xf32> to vector<112xf32>
    %39 = vector.shape_cast %38 : vector<112xf32> to vector<112x1xf32>
    %c0_28 = arith.constant 0 : index
    %c768 = arith.constant 768 : index
    %40 = vector.load %arg6[%c0_28, %c768] : memref<112x1024xf32, #tpu.memory_space<vmem>>, vector<112x128xf32>
    %c0_29 = arith.constant 0 : index
    %c768_30 = arith.constant 768 : index
    %41 = vector.load %arg6[%c0_29, %c768_30] : memref<112x1024xf32, #tpu.memory_space<vmem>>, vector<1x128xf32>
    %42 = vector.broadcast %41 : vector<1x128xf32> to vector<112x128xf32>
    %43 = arith.mulf %40, %42 : vector<112x128xf32>
    %cst_31 = arith.constant dense<0.000000e+00> : vector<112xf32>
    %44 = vector.multi_reduction <add>, %43, %cst_31 [1] : vector<112x128xf32> to vector<112xf32>
    %45 = vector.shape_cast %44 : vector<112xf32> to vector<112x1xf32>
    %c0_32 = arith.constant 0 : index
    %c896 = arith.constant 896 : index
    %46 = vector.load %arg6[%c0_32, %c896] : memref<112x1024xf32, #tpu.memory_space<vmem>>, vector<112x128xf32>
    %c0_33 = arith.constant 0 : index
    %c896_34 = arith.constant 896 : index
    %47 = vector.load %arg6[%c0_33, %c896_34] : memref<112x1024xf32, #tpu.memory_space<vmem>>, vector<1x128xf32>
    %48 = vector.broadcast %47 : vector<1x128xf32> to vector<112x128xf32>
    %49 = arith.mulf %46, %48 : vector<112x128xf32>
    %cst_35 = arith.constant dense<0.000000e+00> : vector<112xf32>
    %50 = vector.multi_reduction <add>, %49, %cst_35 [1] : vector<112x128xf32> to vector<112xf32>
    %51 = vector.shape_cast %50 : vector<112xf32> to vector<112x1xf32>
    %52 = tpu.concatenate %9, %15, %21, %27, %33, %39, %45, %51 in 1 : vector<112x1xf32>, vector<112x1xf32>, vector<112x1xf32>, vector<112x1xf32>, vector<112x1xf32>, vector<112x1xf32>, vector<112x1xf32>, vector<112x1xf32> -> vector<112x8xf32>
    %c0_36 = arith.constant 0 : index
    %c0_37 = arith.constant 0 : index
    %c0_38 = arith.constant 0 : index
    %53 = vector.load %arg5[%c0_36, %c0_37, %c0_38] : memref<1x112x8xf32, #tpu.memory_space<vmem>>, vector<1x112x8xf32>
    %54 = vector.shape_cast %53 : vector<1x112x8xf32> to vector<112x8xf32>
    %55 = vector.shape_cast %52 : vector<112x8xf32> to vector<1x112x8xf32>
    tpu.vector_store %arg5[%c0_36, %c0_37, %c0_38], %55 {strides = array<i32>} : memref<1x112x8xf32, #tpu.memory_space<vmem>>, vector<1x112x8xf32>,
    return
  }
  func.func @transform_0(%arg0: i32, %arg1: memref<4x80xi32, #tpu.memory_space<smem>>) -> (i32, i32) {
    %c0_i32 = arith.constant 0 : i32
    %c0_i32_0 = arith.constant 0 : i32
    %c0_i32_1 = arith.constant 0 : i32
    return %c0_i32, %c0_i32_0 : i32, i32
  }
  func.func @transform_1(%arg0: i32, %arg1: memref<4x80xi32, #tpu.memory_space<smem>>) -> (i32, i32, i32) {
    %c0_i32 = arith.constant 0 : i32
    %c0_i32_0 = arith.constant 0 : i32
    %c0_i32_1 = arith.constant 0 : i32
    return %arg0, %c0_i32, %c0_i32_0 : i32, i32, i32
  }
  func.func @transform_2(%arg0: i32, %arg1: memref<4x80xi32, #tpu.memory_space<smem>>) -> (i32, i32, i32) {
    %c0_i32 = arith.constant 0 : i32
    %c0_i32_0 = arith.constant 0 : i32
    %c0_i32_1 = arith.constant 0 : i32
    return %arg0, %c0_i32, %c0_i32_0 : i32, i32, i32
  }
  func.func @transform_3(%arg0: i32, %arg1: memref<4x80xi32, #tpu.memory_space<smem>>) -> (i32, i32, i32) {
    %c0_i32 = arith.constant 0 : i32
    %c0_i32_0 = arith.constant 0 : i32
    %c0_i32_1 = arith.constant 0 : i32
    return %arg0, %c0_i32, %c0_i32_0 : i32, i32, i32
  }
}

module attributes {stable_mosaic.version = 11 : i64} {
  func.func @_satnet_mixing_kernel(%arg0: i32, %arg1: memref<4x100xi32, #tpu.memory_space<smem>>, %arg2: memref<136x136xf32, #tpu.memory_space<vmem>>, %arg3: memref<1x136x1024xf32, #tpu.memory_space<vmem>>, %arg4: memref<1x136x1024xf32, #tpu.memory_space<vmem>>, %arg5: memref<1x136x8xf32, #tpu.memory_space<vmem>>, %arg6: memref<136x1024xf32, #tpu.memory_space<vmem>>) attributes {dimension_semantics = [#tpu.dimension_semantics<parallel>], iteration_bounds = array<i64: 4>, scalar_prefetch = 1 : i64, scratch_operands = 1 : i64, tpu.core_type = #tpu.core_type<tc>, window_params = [{pipeline_mode = #tpu.pipeline_mode<synchronous>, transform_indices = @transform_0, window_bounds = array<i64: 136, 136>}, {transform_indices = @transform_1, window_bounds = array<i64: 1, 136, 1024>}, {transform_indices = @transform_2, window_bounds = array<i64: 1, 136, 1024>}, {transform_indices = @transform_3, window_bounds = array<i64: 1, 136, 8>}]} {
    %c0 = arith.constant 0 : index
    %c0_0 = arith.constant 0 : index
    %c0_1 = arith.constant 0 : index
    %0 = vector.load %arg3[%c0, %c0_0, %c0_1] : memref<1x136x1024xf32, #tpu.memory_space<vmem>>, vector<1x136x1024xf32>
    %1 = vector.shape_cast %0 : vector<1x136x1024xf32> to vector<136x1024xf32>
    %c0_2 = arith.constant 0 : index
    %c0_3 = arith.constant 0 : index
    %2 = vector.load %arg6[%c0_2, %c0_3] : memref<136x1024xf32, #tpu.memory_space<vmem>>, vector<136x1024xf32>
    tpu.vector_store %arg6[%c0_2, %c0_3], %1 {strides = array<i32>} : memref<136x1024xf32, #tpu.memory_space<vmem>>, vector<136x1024xf32>,
    %c0_i32 = arith.constant 0 : i32
    %c16_i32 = arith.constant 16 : i32
    %3 = arith.addi %c0_i32, %c16_i32 : i32
    %c1_i32 = arith.constant 1 : i32
    scf.for %arg7 = %c0_i32 to %3 step %c1_i32  : i32 {
      %c0_i32_39 = arith.constant 0 : i32
      %c50_i32 = arith.constant 50 : i32
      %56 = arith.addi %c0_i32_39, %c50_i32 : i32
      %c1_i32_40 = arith.constant 1 : i32
      scf.for %arg8 = %c0_i32_39 to %56 step %c1_i32_40  : i32 {
        %c2_i32 = arith.constant 2 : i32
        %57 = arith.muli %c2_i32, %arg8 : i32
        %58 = arith.index_cast %arg0 : i32 to index
        %59 = arith.index_cast %57 : i32 to index
        %60 = memref.load %arg1[%58, %59] : memref<4x100xi32, #tpu.memory_space<smem>>
        %61 = arith.index_cast %60 : i32 to index
        %c0_42 = arith.constant 0 : index
        %62 = vector.load %arg2[%61, %c0_42] : memref<136x136xf32, #tpu.memory_space<vmem>>, vector<1x136xf32>
        %c0_43 = arith.constant 0 : index
        %c0_44 = arith.constant 0 : index
        %63 = vector.load %arg6[%c0_43, %c0_44] : memref<136x1024xf32, #tpu.memory_space<vmem>>, vector<136x1024xf32>
        %cst_45 = arith.constant dense<0.000000e+00> : vector<1x1024xf32>
        %64 = tpu.matmul %62, %63, %cst_45 {dimension_numbers = #tpu.dot_dimension_numbers<[1], [0], [0], [1], [0, 0, 1, 1], [], []>} : vector<1x136xf32>, vector<136x1024xf32>, vector<1x1024xf32> -> vector<1x1024xf32>
        %65 = arith.index_cast %60 : i32 to index
        %c0_46 = arith.constant 0 : index
        %66 = vector.load %arg6[%65, %c0_46] : memref<136x1024xf32, #tpu.memory_space<vmem>>, vector<1x1024xf32>
        %c0_47 = arith.constant 0 : index
        %67 = arith.index_cast %60 : i32 to index
        %c0_48 = arith.constant 0 : index
        %68 = vector.load %arg4[%c0_47, %67, %c0_48] : memref<1x136x1024xf32, #tpu.memory_space<vmem>>, vector<1x1x1024xf32>
        %69 = vector.shape_cast %68 : vector<1x1x1024xf32> to vector<1x1024xf32>
        %70 = vector.extract_strided_slice %64 {offsets = [0, 0], sizes = [1, 128], strides = [1, 1]} : vector<1x1024xf32> to vector<1x128xf32>
        %71 = vector.extract_strided_slice %66 {offsets = [0, 0], sizes = [1, 128], strides = [1, 1]} : vector<1x1024xf32> to vector<1x128xf32>
        %72 = arith.mulf %70, %70 : vector<1x128xf32>
        %cst_49 = arith.constant dense<0.000000e+00> : vector<1xf32>
        %73 = vector.multi_reduction <add>, %72, %cst_49 [1] : vector<1x128xf32> to vector<1xf32>
        %74 = vector.shape_cast %73 : vector<1xf32> to vector<1x1xf32>
        %cst_50 = arith.constant 9.99999996E-13 : f32
        %75 = vector.broadcast %cst_50 : f32 to vector<1x1xf32>
        %76 = arith.cmpf ogt, %74, %75 : vector<1x1xf32>
        %77 = arith.extui %76 : vector<1x1xi1> to vector<1x1xi32>
        %78 = arith.sitofp %77 : vector<1x1xi32> to vector<1x1xf32>
        %cst_51 = arith.constant 1.000000e-30 : f32
        %79 = vector.broadcast %cst_51 : f32 to vector<1x1xf32>
        %80 = arith.addf %74, %79 : vector<1x1xf32>
        %81 = math.rsqrt %80 : vector<1x1xf32>
        %82 = arith.mulf %78, %81 : vector<1x1xf32>
        %cst_52 = arith.constant 1.000000e+00 : f32
        %83 = vector.broadcast %cst_52 : f32 to vector<1x1xf32>
        %84 = arith.subf %83, %78 : vector<1x1xf32>
        %85 = vector.broadcast %84 : vector<1x1xf32> to vector<1x128xf32>
        %86 = arith.mulf %85, %71 : vector<1x128xf32>
        %87 = vector.broadcast %82 : vector<1x1xf32> to vector<1x128xf32>
        %88 = arith.mulf %87, %70 : vector<1x128xf32>
        %89 = arith.subf %86, %88 : vector<1x128xf32>
        %90 = vector.extract_strided_slice %64 {offsets = [0, 128], sizes = [1, 128], strides = [1, 1]} : vector<1x1024xf32> to vector<1x128xf32>
        %91 = vector.extract_strided_slice %66 {offsets = [0, 128], sizes = [1, 128], strides = [1, 1]} : vector<1x1024xf32> to vector<1x128xf32>
        %92 = arith.mulf %90, %90 : vector<1x128xf32>
        %cst_53 = arith.constant dense<0.000000e+00> : vector<1xf32>
        %93 = vector.multi_reduction <add>, %92, %cst_53 [1] : vector<1x128xf32> to vector<1xf32>
        %94 = vector.shape_cast %93 : vector<1xf32> to vector<1x1xf32>
        %cst_54 = arith.constant 9.99999996E-13 : f32
        %95 = vector.broadcast %cst_54 : f32 to vector<1x1xf32>
        %96 = arith.cmpf ogt, %94, %95 : vector<1x1xf32>
        %97 = arith.extui %96 : vector<1x1xi1> to vector<1x1xi32>
        %98 = arith.sitofp %97 : vector<1x1xi32> to vector<1x1xf32>
        %cst_55 = arith.constant 1.000000e-30 : f32
        %99 = vector.broadcast %cst_55 : f32 to vector<1x1xf32>
        %100 = arith.addf %94, %99 : vector<1x1xf32>
        %101 = math.rsqrt %100 : vector<1x1xf32>
        %102 = arith.mulf %98, %101 : vector<1x1xf32>
        %cst_56 = arith.constant 1.000000e+00 : f32
        %103 = vector.broadcast %cst_56 : f32 to vector<1x1xf32>
        %104 = arith.subf %103, %98 : vector<1x1xf32>
        %105 = vector.broadcast %104 : vector<1x1xf32> to vector<1x128xf32>
        %106 = arith.mulf %105, %91 : vector<1x128xf32>
        %107 = vector.broadcast %102 : vector<1x1xf32> to vector<1x128xf32>
        %108 = arith.mulf %107, %90 : vector<1x128xf32>
        %109 = arith.subf %106, %108 : vector<1x128xf32>
        %110 = vector.extract_strided_slice %64 {offsets = [0, 256], sizes = [1, 128], strides = [1, 1]} : vector<1x1024xf32> to vector<1x128xf32>
        %111 = vector.extract_strided_slice %66 {offsets = [0, 256], sizes = [1, 128], strides = [1, 1]} : vector<1x1024xf32> to vector<1x128xf32>
        %112 = arith.mulf %110, %110 : vector<1x128xf32>
        %cst_57 = arith.constant dense<0.000000e+00> : vector<1xf32>
        %113 = vector.multi_reduction <add>, %112, %cst_57 [1] : vector<1x128xf32> to vector<1xf32>
        %114 = vector.shape_cast %113 : vector<1xf32> to vector<1x1xf32>
        %cst_58 = arith.constant 9.99999996E-13 : f32
        %115 = vector.broadcast %cst_58 : f32 to vector<1x1xf32>
        %116 = arith.cmpf ogt, %114, %115 : vector<1x1xf32>
        %117 = arith.extui %116 : vector<1x1xi1> to vector<1x1xi32>
        %118 = arith.sitofp %117 : vector<1x1xi32> to vector<1x1xf32>
        %cst_59 = arith.constant 1.000000e-30 : f32
        %119 = vector.broadcast %cst_59 : f32 to vector<1x1xf32>
        %120 = arith.addf %114, %119 : vector<1x1xf32>
        %121 = math.rsqrt %120 : vector<1x1xf32>
        %122 = arith.mulf %118, %121 : vector<1x1xf32>
        %cst_60 = arith.constant 1.000000e+00 : f32
        %123 = vector.broadcast %cst_60 : f32 to vector<1x1xf32>
        %124 = arith.subf %123, %118 : vector<1x1xf32>
        %125 = vector.broadcast %124 : vector<1x1xf32> to vector<1x128xf32>
        %126 = arith.mulf %125, %111 : vector<1x128xf32>
        %127 = vector.broadcast %122 : vector<1x1xf32> to vector<1x128xf32>
        %128 = arith.mulf %127, %110 : vector<1x128xf32>
        %129 = arith.subf %126, %128 : vector<1x128xf32>
        %130 = vector.extract_strided_slice %64 {offsets = [0, 384], sizes = [1, 128], strides = [1, 1]} : vector<1x1024xf32> to vector<1x128xf32>
        %131 = vector.extract_strided_slice %66 {offsets = [0, 384], sizes = [1, 128], strides = [1, 1]} : vector<1x1024xf32> to vector<1x128xf32>
        %132 = arith.mulf %130, %130 : vector<1x128xf32>
        %cst_61 = arith.constant dense<0.000000e+00> : vector<1xf32>
        %133 = vector.multi_reduction <add>, %132, %cst_61 [1] : vector<1x128xf32> to vector<1xf32>
        %134 = vector.shape_cast %133 : vector<1xf32> to vector<1x1xf32>
        %cst_62 = arith.constant 9.99999996E-13 : f32
        %135 = vector.broadcast %cst_62 : f32 to vector<1x1xf32>
        %136 = arith.cmpf ogt, %134, %135 : vector<1x1xf32>
        %137 = arith.extui %136 : vector<1x1xi1> to vector<1x1xi32>
        %138 = arith.sitofp %137 : vector<1x1xi32> to vector<1x1xf32>
        %cst_63 = arith.constant 1.000000e-30 : f32
        %139 = vector.broadcast %cst_63 : f32 to vector<1x1xf32>
        %140 = arith.addf %134, %139 : vector<1x1xf32>
        %141 = math.rsqrt %140 : vector<1x1xf32>
        %142 = arith.mulf %138, %141 : vector<1x1xf32>
        %cst_64 = arith.constant 1.000000e+00 : f32
        %143 = vector.broadcast %cst_64 : f32 to vector<1x1xf32>
        %144 = arith.subf %143, %138 : vector<1x1xf32>
        %145 = vector.broadcast %144 : vector<1x1xf32> to vector<1x128xf32>
        %146 = arith.mulf %145, %131 : vector<1x128xf32>
        %147 = vector.broadcast %142 : vector<1x1xf32> to vector<1x128xf32>
        %148 = arith.mulf %147, %130 : vector<1x128xf32>
        %149 = arith.subf %146, %148 : vector<1x128xf32>
        %150 = vector.extract_strided_slice %64 {offsets = [0, 512], sizes = [1, 128], strides = [1, 1]} : vector<1x1024xf32> to vector<1x128xf32>
        %151 = vector.extract_strided_slice %66 {offsets = [0, 512], sizes = [1, 128], strides = [1, 1]} : vector<1x1024xf32> to vector<1x128xf32>
        %152 = arith.mulf %150, %150 : vector<1x128xf32>
        %cst_65 = arith.constant dense<0.000000e+00> : vector<1xf32>
        %153 = vector.multi_reduction <add>, %152, %cst_65 [1] : vector<1x128xf32> to vector<1xf32>
        %154 = vector.shape_cast %153 : vector<1xf32> to vector<1x1xf32>
        %cst_66 = arith.constant 9.99999996E-13 : f32
        %155 = vector.broadcast %cst_66 : f32 to vector<1x1xf32>
        %156 = arith.cmpf ogt, %154, %155 : vector<1x1xf32>
        %157 = arith.extui %156 : vector<1x1xi1> to vector<1x1xi32>
        %158 = arith.sitofp %157 : vector<1x1xi32> to vector<1x1xf32>
        %cst_67 = arith.constant 1.000000e-30 : f32
        %159 = vector.broadcast %cst_67 : f32 to vector<1x1xf32>
        %160 = arith.addf %154, %159 : vector<1x1xf32>
        %161 = math.rsqrt %160 : vector<1x1xf32>
        %162 = arith.mulf %158, %161 : vector<1x1xf32>
        %cst_68 = arith.constant 1.000000e+00 : f32
        %163 = vector.broadcast %cst_68 : f32 to vector<1x1xf32>
        %164 = arith.subf %163, %158 : vector<1x1xf32>
        %165 = vector.broadcast %164 : vector<1x1xf32> to vector<1x128xf32>
        %166 = arith.mulf %165, %151 : vector<1x128xf32>
        %167 = vector.broadcast %162 : vector<1x1xf32> to vector<1x128xf32>
        %168 = arith.mulf %167, %150 : vector<1x128xf32>
        %169 = arith.subf %166, %168 : vector<1x128xf32>
        %170 = vector.extract_strided_slice %64 {offsets = [0, 640], sizes = [1, 128], strides = [1, 1]} : vector<1x1024xf32> to vector<1x128xf32>
        %171 = vector.extract_strided_slice %66 {offsets = [0, 640], sizes = [1, 128], strides = [1, 1]} : vector<1x1024xf32> to vector<1x128xf32>
        %172 = arith.mulf %170, %170 : vector<1x128xf32>
        %cst_69 = arith.constant dense<0.000000e+00> : vector<1xf32>
        %173 = vector.multi_reduction <add>, %172, %cst_69 [1] : vector<1x128xf32> to vector<1xf32>
        %174 = vector.shape_cast %173 : vector<1xf32> to vector<1x1xf32>
        %cst_70 = arith.constant 9.99999996E-13 : f32
        %175 = vector.broadcast %cst_70 : f32 to vector<1x1xf32>
        %176 = arith.cmpf ogt, %174, %175 : vector<1x1xf32>
        %177 = arith.extui %176 : vector<1x1xi1> to vector<1x1xi32>
        %178 = arith.sitofp %177 : vector<1x1xi32> to vector<1x1xf32>
        %cst_71 = arith.constant 1.000000e-30 : f32
        %179 = vector.broadcast %cst_71 : f32 to vector<1x1xf32>
        %180 = arith.addf %174, %179 : vector<1x1xf32>
        %181 = math.rsqrt %180 : vector<1x1xf32>
        %182 = arith.mulf %178, %181 : vector<1x1xf32>
        %cst_72 = arith.constant 1.000000e+00 : f32
        %183 = vector.broadcast %cst_72 : f32 to vector<1x1xf32>
        %184 = arith.subf %183, %178 : vector<1x1xf32>
        %185 = vector.broadcast %184 : vector<1x1xf32> to vector<1x128xf32>
        %186 = arith.mulf %185, %171 : vector<1x128xf32>
        %187 = vector.broadcast %182 : vector<1x1xf32> to vector<1x128xf32>
        %188 = arith.mulf %187, %170 : vector<1x128xf32>
        %189 = arith.subf %186, %188 : vector<1x128xf32>
        %190 = vector.extract_strided_slice %64 {offsets = [0, 768], sizes = [1, 128], strides = [1, 1]} : vector<1x1024xf32> to vector<1x128xf32>
        %191 = vector.extract_strided_slice %66 {offsets = [0, 768], sizes = [1, 128], strides = [1, 1]} : vector<1x1024xf32> to vector<1x128xf32>
        %192 = arith.mulf %190, %190 : vector<1x128xf32>
        %cst_73 = arith.constant dense<0.000000e+00> : vector<1xf32>
        %193 = vector.multi_reduction <add>, %192, %cst_73 [1] : vector<1x128xf32> to vector<1xf32>
        %194 = vector.shape_cast %193 : vector<1xf32> to vector<1x1xf32>
        %cst_74 = arith.constant 9.99999996E-13 : f32
        %195 = vector.broadcast %cst_74 : f32 to vector<1x1xf32>
        %196 = arith.cmpf ogt, %194, %195 : vector<1x1xf32>
        %197 = arith.extui %196 : vector<1x1xi1> to vector<1x1xi32>
        %198 = arith.sitofp %197 : vector<1x1xi32> to vector<1x1xf32>
        %cst_75 = arith.constant 1.000000e-30 : f32
        %199 = vector.broadcast %cst_75 : f32 to vector<1x1xf32>
        %200 = arith.addf %194, %199 : vector<1x1xf32>
        %201 = math.rsqrt %200 : vector<1x1xf32>
        %202 = arith.mulf %198, %201 : vector<1x1xf32>
        %cst_76 = arith.constant 1.000000e+00 : f32
        %203 = vector.broadcast %cst_76 : f32 to vector<1x1xf32>
        %204 = arith.subf %203, %198 : vector<1x1xf32>
        %205 = vector.broadcast %204 : vector<1x1xf32> to vector<1x128xf32>
        %206 = arith.mulf %205, %191 : vector<1x128xf32>
        %207 = vector.broadcast %202 : vector<1x1xf32> to vector<1x128xf32>
        %208 = arith.mulf %207, %190 : vector<1x128xf32>
        %209 = arith.subf %206, %208 : vector<1x128xf32>
        %210 = vector.extract_strided_slice %64 {offsets = [0, 896], sizes = [1, 128], strides = [1, 1]} : vector<1x1024xf32> to vector<1x128xf32>
        %211 = vector.extract_strided_slice %66 {offsets = [0, 896], sizes = [1, 128], strides = [1, 1]} : vector<1x1024xf32> to vector<1x128xf32>
        %212 = arith.mulf %210, %210 : vector<1x128xf32>
        %cst_77 = arith.constant dense<0.000000e+00> : vector<1xf32>
        %213 = vector.multi_reduction <add>, %212, %cst_77 [1] : vector<1x128xf32> to vector<1xf32>
        %214 = vector.shape_cast %213 : vector<1xf32> to vector<1x1xf32>
        %cst_78 = arith.constant 9.99999996E-13 : f32
        %215 = vector.broadcast %cst_78 : f32 to vector<1x1xf32>
        %216 = arith.cmpf ogt, %214, %215 : vector<1x1xf32>
        %217 = arith.extui %216 : vector<1x1xi1> to vector<1x1xi32>
        %218 = arith.sitofp %217 : vector<1x1xi32> to vector<1x1xf32>
        %cst_79 = arith.constant 1.000000e-30 : f32
        %219 = vector.broadcast %cst_79 : f32 to vector<1x1xf32>
        %220 = arith.addf %214, %219 : vector<1x1xf32>
        %221 = math.rsqrt %220 : vector<1x1xf32>
        %222 = arith.mulf %218, %221 : vector<1x1xf32>
        %cst_80 = arith.constant 1.000000e+00 : f32
        %223 = vector.broadcast %cst_80 : f32 to vector<1x1xf32>
        %224 = arith.subf %223, %218 : vector<1x1xf32>
        %225 = vector.broadcast %224 : vector<1x1xf32> to vector<1x128xf32>
        %226 = arith.mulf %225, %211 : vector<1x128xf32>
        %227 = vector.broadcast %222 : vector<1x1xf32> to vector<1x128xf32>
        %228 = arith.mulf %227, %210 : vector<1x128xf32>
        %229 = arith.subf %226, %228 : vector<1x128xf32>
        %230 = tpu.concatenate %89, %109, %129, %149, %169, %189, %209, %229 in 1 : vector<1x128xf32>, vector<1x128xf32>, vector<1x128xf32>, vector<1x128xf32>, vector<1x128xf32>, vector<1x128xf32>, vector<1x128xf32>, vector<1x128xf32> -> vector<1x1024xf32>
        %231 = arith.subf %230, %66 : vector<1x1024xf32>
        %232 = arith.mulf %69, %231 : vector<1x1024xf32>
        %233 = arith.addf %66, %232 : vector<1x1024xf32>
        %234 = arith.index_cast %60 : i32 to index
        %c0_81 = arith.constant 0 : index
        %235 = vector.load %arg6[%234, %c0_81] : memref<136x1024xf32, #tpu.memory_space<vmem>>, vector<1x1024xf32>
        tpu.vector_store %arg6[%234, %c0_81], %233 {strides = array<i32>} : memref<136x1024xf32, #tpu.memory_space<vmem>>, vector<1x1024xf32>,
        %c2_i32_82 = arith.constant 2 : i32
        %236 = arith.muli %c2_i32_82, %arg8 : i32
        %c1_i32_83 = arith.constant 1 : i32
        %237 = arith.addi %236, %c1_i32_83 : i32
        %238 = arith.index_cast %arg0 : i32 to index
        %239 = arith.index_cast %237 : i32 to index
        %240 = memref.load %arg1[%238, %239] : memref<4x100xi32, #tpu.memory_space<smem>>
        %241 = arith.index_cast %240 : i32 to index
        %c0_84 = arith.constant 0 : index
        %242 = vector.load %arg2[%241, %c0_84] : memref<136x136xf32, #tpu.memory_space<vmem>>, vector<1x136xf32>
        %c0_85 = arith.constant 0 : index
        %c0_86 = arith.constant 0 : index
        %243 = vector.load %arg6[%c0_85, %c0_86] : memref<136x1024xf32, #tpu.memory_space<vmem>>, vector<136x1024xf32>
        %cst_87 = arith.constant dense<0.000000e+00> : vector<1x1024xf32>
        %244 = tpu.matmul %242, %243, %cst_87 {dimension_numbers = #tpu.dot_dimension_numbers<[1], [0], [0], [1], [0, 0, 1, 1], [], []>} : vector<1x136xf32>, vector<136x1024xf32>, vector<1x1024xf32> -> vector<1x1024xf32>
        %245 = arith.index_cast %240 : i32 to index
        %c0_88 = arith.constant 0 : index
        %246 = vector.load %arg6[%245, %c0_88] : memref<136x1024xf32, #tpu.memory_space<vmem>>, vector<1x1024xf32>
        %c0_89 = arith.constant 0 : index
        %247 = arith.index_cast %240 : i32 to index
        %c0_90 = arith.constant 0 : index
        %248 = vector.load %arg4[%c0_89, %247, %c0_90] : memref<1x136x1024xf32, #tpu.memory_space<vmem>>, vector<1x1x1024xf32>
        %249 = vector.shape_cast %248 : vector<1x1x1024xf32> to vector<1x1024xf32>
        %250 = vector.extract_strided_slice %244 {offsets = [0, 0], sizes = [1, 128], strides = [1, 1]} : vector<1x1024xf32> to vector<1x128xf32>
        %251 = vector.extract_strided_slice %246 {offsets = [0, 0], sizes = [1, 128], strides = [1, 1]} : vector<1x1024xf32> to vector<1x128xf32>
        %252 = arith.mulf %250, %250 : vector<1x128xf32>
        %cst_91 = arith.constant dense<0.000000e+00> : vector<1xf32>
        %253 = vector.multi_reduction <add>, %252, %cst_91 [1] : vector<1x128xf32> to vector<1xf32>
        %254 = vector.shape_cast %253 : vector<1xf32> to vector<1x1xf32>
        %cst_92 = arith.constant 9.99999996E-13 : f32
        %255 = vector.broadcast %cst_92 : f32 to vector<1x1xf32>
        %256 = arith.cmpf ogt, %254, %255 : vector<1x1xf32>
        %257 = arith.extui %256 : vector<1x1xi1> to vector<1x1xi32>
        %258 = arith.sitofp %257 : vector<1x1xi32> to vector<1x1xf32>
        %cst_93 = arith.constant 1.000000e-30 : f32
        %259 = vector.broadcast %cst_93 : f32 to vector<1x1xf32>
        %260 = arith.addf %254, %259 : vector<1x1xf32>
        %261 = math.rsqrt %260 : vector<1x1xf32>
        %262 = arith.mulf %258, %261 : vector<1x1xf32>
        %cst_94 = arith.constant 1.000000e+00 : f32
        %263 = vector.broadcast %cst_94 : f32 to vector<1x1xf32>
        %264 = arith.subf %263, %258 : vector<1x1xf32>
        %265 = vector.broadcast %264 : vector<1x1xf32> to vector<1x128xf32>
        %266 = arith.mulf %265, %251 : vector<1x128xf32>
        %267 = vector.broadcast %262 : vector<1x1xf32> to vector<1x128xf32>
        %268 = arith.mulf %267, %250 : vector<1x128xf32>
        %269 = arith.subf %266, %268 : vector<1x128xf32>
        %270 = vector.extract_strided_slice %244 {offsets = [0, 128], sizes = [1, 128], strides = [1, 1]} : vector<1x1024xf32> to vector<1x128xf32>
        %271 = vector.extract_strided_slice %246 {offsets = [0, 128], sizes = [1, 128], strides = [1, 1]} : vector<1x1024xf32> to vector<1x128xf32>
        %272 = arith.mulf %270, %270 : vector<1x128xf32>
        %cst_95 = arith.constant dense<0.000000e+00> : vector<1xf32>
        %273 = vector.multi_reduction <add>, %272, %cst_95 [1] : vector<1x128xf32> to vector<1xf32>
        %274 = vector.shape_cast %273 : vector<1xf32> to vector<1x1xf32>
        %cst_96 = arith.constant 9.99999996E-13 : f32
        %275 = vector.broadcast %cst_96 : f32 to vector<1x1xf32>
        %276 = arith.cmpf ogt, %274, %275 : vector<1x1xf32>
        %277 = arith.extui %276 : vector<1x1xi1> to vector<1x1xi32>
        %278 = arith.sitofp %277 : vector<1x1xi32> to vector<1x1xf32>
        %cst_97 = arith.constant 1.000000e-30 : f32
        %279 = vector.broadcast %cst_97 : f32 to vector<1x1xf32>
        %280 = arith.addf %274, %279 : vector<1x1xf32>
        %281 = math.rsqrt %280 : vector<1x1xf32>
        %282 = arith.mulf %278, %281 : vector<1x1xf32>
        %cst_98 = arith.constant 1.000000e+00 : f32
        %283 = vector.broadcast %cst_98 : f32 to vector<1x1xf32>
        %284 = arith.subf %283, %278 : vector<1x1xf32>
        %285 = vector.broadcast %284 : vector<1x1xf32> to vector<1x128xf32>
        %286 = arith.mulf %285, %271 : vector<1x128xf32>
        %287 = vector.broadcast %282 : vector<1x1xf32> to vector<1x128xf32>
        %288 = arith.mulf %287, %270 : vector<1x128xf32>
        %289 = arith.subf %286, %288 : vector<1x128xf32>
        %290 = vector.extract_strided_slice %244 {offsets = [0, 256], sizes = [1, 128], strides = [1, 1]} : vector<1x1024xf32> to vector<1x128xf32>
        %291 = vector.extract_strided_slice %246 {offsets = [0, 256], sizes = [1, 128], strides = [1, 1]} : vector<1x1024xf32> to vector<1x128xf32>
        %292 = arith.mulf %290, %290 : vector<1x128xf32>
        %cst_99 = arith.constant dense<0.000000e+00> : vector<1xf32>
        %293 = vector.multi_reduction <add>, %292, %cst_99 [1] : vector<1x128xf32> to vector<1xf32>
        %294 = vector.shape_cast %293 : vector<1xf32> to vector<1x1xf32>
        %cst_100 = arith.constant 9.99999996E-13 : f32
        %295 = vector.broadcast %cst_100 : f32 to vector<1x1xf32>
        %296 = arith.cmpf ogt, %294, %295 : vector<1x1xf32>
        %297 = arith.extui %296 : vector<1x1xi1> to vector<1x1xi32>
        %298 = arith.sitofp %297 : vector<1x1xi32> to vector<1x1xf32>
        %cst_101 = arith.constant 1.000000e-30 : f32
        %299 = vector.broadcast %cst_101 : f32 to vector<1x1xf32>
        %300 = arith.addf %294, %299 : vector<1x1xf32>
        %301 = math.rsqrt %300 : vector<1x1xf32>
        %302 = arith.mulf %298, %301 : vector<1x1xf32>
        %cst_102 = arith.constant 1.000000e+00 : f32
        %303 = vector.broadcast %cst_102 : f32 to vector<1x1xf32>
        %304 = arith.subf %303, %298 : vector<1x1xf32>
        %305 = vector.broadcast %304 : vector<1x1xf32> to vector<1x128xf32>
        %306 = arith.mulf %305, %291 : vector<1x128xf32>
        %307 = vector.broadcast %302 : vector<1x1xf32> to vector<1x128xf32>
        %308 = arith.mulf %307, %290 : vector<1x128xf32>
        %309 = arith.subf %306, %308 : vector<1x128xf32>
        %310 = vector.extract_strided_slice %244 {offsets = [0, 384], sizes = [1, 128], strides = [1, 1]} : vector<1x1024xf32> to vector<1x128xf32>
        %311 = vector.extract_strided_slice %246 {offsets = [0, 384], sizes = [1, 128], strides = [1, 1]} : vector<1x1024xf32> to vector<1x128xf32>
        %312 = arith.mulf %310, %310 : vector<1x128xf32>
        %cst_103 = arith.constant dense<0.000000e+00> : vector<1xf32>
        %313 = vector.multi_reduction <add>, %312, %cst_103 [1] : vector<1x128xf32> to vector<1xf32>
        %314 = vector.shape_cast %313 : vector<1xf32> to vector<1x1xf32>
        %cst_104 = arith.constant 9.99999996E-13 : f32
        %315 = vector.broadcast %cst_104 : f32 to vector<1x1xf32>
        %316 = arith.cmpf ogt, %314, %315 : vector<1x1xf32>
        %317 = arith.extui %316 : vector<1x1xi1> to vector<1x1xi32>
        %318 = arith.sitofp %317 : vector<1x1xi32> to vector<1x1xf32>
        %cst_105 = arith.constant 1.000000e-30 : f32
        %319 = vector.broadcast %cst_105 : f32 to vector<1x1xf32>
        %320 = arith.addf %314, %319 : vector<1x1xf32>
        %321 = math.rsqrt %320 : vector<1x1xf32>
        %322 = arith.mulf %318, %321 : vector<1x1xf32>
        %cst_106 = arith.constant 1.000000e+00 : f32
        %323 = vector.broadcast %cst_106 : f32 to vector<1x1xf32>
        %324 = arith.subf %323, %318 : vector<1x1xf32>
        %325 = vector.broadcast %324 : vector<1x1xf32> to vector<1x128xf32>
        %326 = arith.mulf %325, %311 : vector<1x128xf32>
        %327 = vector.broadcast %322 : vector<1x1xf32> to vector<1x128xf32>
        %328 = arith.mulf %327, %310 : vector<1x128xf32>
        %329 = arith.subf %326, %328 : vector<1x128xf32>
        %330 = vector.extract_strided_slice %244 {offsets = [0, 512], sizes = [1, 128], strides = [1, 1]} : vector<1x1024xf32> to vector<1x128xf32>
        %331 = vector.extract_strided_slice %246 {offsets = [0, 512], sizes = [1, 128], strides = [1, 1]} : vector<1x1024xf32> to vector<1x128xf32>
        %332 = arith.mulf %330, %330 : vector<1x128xf32>
        %cst_107 = arith.constant dense<0.000000e+00> : vector<1xf32>
        %333 = vector.multi_reduction <add>, %332, %cst_107 [1] : vector<1x128xf32> to vector<1xf32>
        %334 = vector.shape_cast %333 : vector<1xf32> to vector<1x1xf32>
        %cst_108 = arith.constant 9.99999996E-13 : f32
        %335 = vector.broadcast %cst_108 : f32 to vector<1x1xf32>
        %336 = arith.cmpf ogt, %334, %335 : vector<1x1xf32>
        %337 = arith.extui %336 : vector<1x1xi1> to vector<1x1xi32>
        %338 = arith.sitofp %337 : vector<1x1xi32> to vector<1x1xf32>
        %cst_109 = arith.constant 1.000000e-30 : f32
        %339 = vector.broadcast %cst_109 : f32 to vector<1x1xf32>
        %340 = arith.addf %334, %339 : vector<1x1xf32>
        %341 = math.rsqrt %340 : vector<1x1xf32>
        %342 = arith.mulf %338, %341 : vector<1x1xf32>
        %cst_110 = arith.constant 1.000000e+00 : f32
        %343 = vector.broadcast %cst_110 : f32 to vector<1x1xf32>
        %344 = arith.subf %343, %338 : vector<1x1xf32>
        %345 = vector.broadcast %344 : vector<1x1xf32> to vector<1x128xf32>
        %346 = arith.mulf %345, %331 : vector<1x128xf32>
        %347 = vector.broadcast %342 : vector<1x1xf32> to vector<1x128xf32>
        %348 = arith.mulf %347, %330 : vector<1x128xf32>
        %349 = arith.subf %346, %348 : vector<1x128xf32>
        %350 = vector.extract_strided_slice %244 {offsets = [0, 640], sizes = [1, 128], strides = [1, 1]} : vector<1x1024xf32> to vector<1x128xf32>
        %351 = vector.extract_strided_slice %246 {offsets = [0, 640], sizes = [1, 128], strides = [1, 1]} : vector<1x1024xf32> to vector<1x128xf32>
        %352 = arith.mulf %350, %350 : vector<1x128xf32>
        %cst_111 = arith.constant dense<0.000000e+00> : vector<1xf32>
        %353 = vector.multi_reduction <add>, %352, %cst_111 [1] : vector<1x128xf32> to vector<1xf32>
        %354 = vector.shape_cast %353 : vector<1xf32> to vector<1x1xf32>
        %cst_112 = arith.constant 9.99999996E-13 : f32
        %355 = vector.broadcast %cst_112 : f32 to vector<1x1xf32>
        %356 = arith.cmpf ogt, %354, %355 : vector<1x1xf32>
        %357 = arith.extui %356 : vector<1x1xi1> to vector<1x1xi32>
        %358 = arith.sitofp %357 : vector<1x1xi32> to vector<1x1xf32>
        %cst_113 = arith.constant 1.000000e-30 : f32
        %359 = vector.broadcast %cst_113 : f32 to vector<1x1xf32>
        %360 = arith.addf %354, %359 : vector<1x1xf32>
        %361 = math.rsqrt %360 : vector<1x1xf32>
        %362 = arith.mulf %358, %361 : vector<1x1xf32>
        %cst_114 = arith.constant 1.000000e+00 : f32
        %363 = vector.broadcast %cst_114 : f32 to vector<1x1xf32>
        %364 = arith.subf %363, %358 : vector<1x1xf32>
        %365 = vector.broadcast %364 : vector<1x1xf32> to vector<1x128xf32>
        %366 = arith.mulf %365, %351 : vector<1x128xf32>
        %367 = vector.broadcast %362 : vector<1x1xf32> to vector<1x128xf32>
        %368 = arith.mulf %367, %350 : vector<1x128xf32>
        %369 = arith.subf %366, %368 : vector<1x128xf32>
        %370 = vector.extract_strided_slice %244 {offsets = [0, 768], sizes = [1, 128], strides = [1, 1]} : vector<1x1024xf32> to vector<1x128xf32>
        %371 = vector.extract_strided_slice %246 {offsets = [0, 768], sizes = [1, 128], strides = [1, 1]} : vector<1x1024xf32> to vector<1x128xf32>
        %372 = arith.mulf %370, %370 : vector<1x128xf32>
        %cst_115 = arith.constant dense<0.000000e+00> : vector<1xf32>
        %373 = vector.multi_reduction <add>, %372, %cst_115 [1] : vector<1x128xf32> to vector<1xf32>
        %374 = vector.shape_cast %373 : vector<1xf32> to vector<1x1xf32>
        %cst_116 = arith.constant 9.99999996E-13 : f32
        %375 = vector.broadcast %cst_116 : f32 to vector<1x1xf32>
        %376 = arith.cmpf ogt, %374, %375 : vector<1x1xf32>
        %377 = arith.extui %376 : vector<1x1xi1> to vector<1x1xi32>
        %378 = arith.sitofp %377 : vector<1x1xi32> to vector<1x1xf32>
        %cst_117 = arith.constant 1.000000e-30 : f32
        %379 = vector.broadcast %cst_117 : f32 to vector<1x1xf32>
        %380 = arith.addf %374, %379 : vector<1x1xf32>
        %381 = math.rsqrt %380 : vector<1x1xf32>
        %382 = arith.mulf %378, %381 : vector<1x1xf32>
        %cst_118 = arith.constant 1.000000e+00 : f32
        %383 = vector.broadcast %cst_118 : f32 to vector<1x1xf32>
        %384 = arith.subf %383, %378 : vector<1x1xf32>
        %385 = vector.broadcast %384 : vector<1x1xf32> to vector<1x128xf32>
        %386 = arith.mulf %385, %371 : vector<1x128xf32>
        %387 = vector.broadcast %382 : vector<1x1xf32> to vector<1x128xf32>
        %388 = arith.mulf %387, %370 : vector<1x128xf32>
        %389 = arith.subf %386, %388 : vector<1x128xf32>
        %390 = vector.extract_strided_slice %244 {offsets = [0, 896], sizes = [1, 128], strides = [1, 1]} : vector<1x1024xf32> to vector<1x128xf32>
        %391 = vector.extract_strided_slice %246 {offsets = [0, 896], sizes = [1, 128], strides = [1, 1]} : vector<1x1024xf32> to vector<1x128xf32>
        %392 = arith.mulf %390, %390 : vector<1x128xf32>
        %cst_119 = arith.constant dense<0.000000e+00> : vector<1xf32>
        %393 = vector.multi_reduction <add>, %392, %cst_119 [1] : vector<1x128xf32> to vector<1xf32>
        %394 = vector.shape_cast %393 : vector<1xf32> to vector<1x1xf32>
        %cst_120 = arith.constant 9.99999996E-13 : f32
        %395 = vector.broadcast %cst_120 : f32 to vector<1x1xf32>
        %396 = arith.cmpf ogt, %394, %395 : vector<1x1xf32>
        %397 = arith.extui %396 : vector<1x1xi1> to vector<1x1xi32>
        %398 = arith.sitofp %397 : vector<1x1xi32> to vector<1x1xf32>
        %cst_121 = arith.constant 1.000000e-30 : f32
        %399 = vector.broadcast %cst_121 : f32 to vector<1x1xf32>
        %400 = arith.addf %394, %399 : vector<1x1xf32>
        %401 = math.rsqrt %400 : vector<1x1xf32>
        %402 = arith.mulf %398, %401 : vector<1x1xf32>
        %cst_122 = arith.constant 1.000000e+00 : f32
        %403 = vector.broadcast %cst_122 : f32 to vector<1x1xf32>
        %404 = arith.subf %403, %398 : vector<1x1xf32>
        %405 = vector.broadcast %404 : vector<1x1xf32> to vector<1x128xf32>
        %406 = arith.mulf %405, %391 : vector<1x128xf32>
        %407 = vector.broadcast %402 : vector<1x1xf32> to vector<1x128xf32>
        %408 = arith.mulf %407, %390 : vector<1x128xf32>
        %409 = arith.subf %406, %408 : vector<1x128xf32>
        %410 = tpu.concatenate %269, %289, %309, %329, %349, %369, %389, %409 in 1 : vector<1x128xf32>, vector<1x128xf32>, vector<1x128xf32>, vector<1x128xf32>, vector<1x128xf32>, vector<1x128xf32>, vector<1x128xf32>, vector<1x128xf32> -> vector<1x1024xf32>
        %411 = arith.subf %410, %246 : vector<1x1024xf32>
        %412 = arith.mulf %249, %411 : vector<1x1024xf32>
        %413 = arith.addf %246, %412 : vector<1x1024xf32>
        %414 = arith.index_cast %240 : i32 to index
        %c0_123 = arith.constant 0 : index
        %415 = vector.load %arg6[%414, %c0_123] : memref<136x1024xf32, #tpu.memory_space<vmem>>, vector<1x1024xf32>
        tpu.vector_store %arg6[%414, %c0_123], %413 {strides = array<i32>} : memref<136x1024xf32, #tpu.memory_space<vmem>>, vector<1x1024xf32>,
      }
      %c50_i32_41 = arith.constant 50 : i32
    }
    %c0_4 = arith.constant 0 : index
    %c0_5 = arith.constant 0 : index
    %4 = vector.load %arg6[%c0_4, %c0_5] : memref<136x1024xf32, #tpu.memory_space<vmem>>, vector<136x128xf32>
    %c0_6 = arith.constant 0 : index
    %c0_7 = arith.constant 0 : index
    %5 = vector.load %arg6[%c0_6, %c0_7] : memref<136x1024xf32, #tpu.memory_space<vmem>>, vector<1x128xf32>
    %6 = vector.broadcast %5 : vector<1x128xf32> to vector<136x128xf32>
    %7 = arith.mulf %4, %6 : vector<136x128xf32>
    %cst = arith.constant dense<0.000000e+00> : vector<136xf32>
    %8 = vector.multi_reduction <add>, %7, %cst [1] : vector<136x128xf32> to vector<136xf32>
    %9 = vector.shape_cast %8 : vector<136xf32> to vector<136x1xf32>
    %c0_8 = arith.constant 0 : index
    %c128 = arith.constant 128 : index
    %10 = vector.load %arg6[%c0_8, %c128] : memref<136x1024xf32, #tpu.memory_space<vmem>>, vector<136x128xf32>
    %c0_9 = arith.constant 0 : index
    %c128_10 = arith.constant 128 : index
    %11 = vector.load %arg6[%c0_9, %c128_10] : memref<136x1024xf32, #tpu.memory_space<vmem>>, vector<1x128xf32>
    %12 = vector.broadcast %11 : vector<1x128xf32> to vector<136x128xf32>
    %13 = arith.mulf %10, %12 : vector<136x128xf32>
    %cst_11 = arith.constant dense<0.000000e+00> : vector<136xf32>
    %14 = vector.multi_reduction <add>, %13, %cst_11 [1] : vector<136x128xf32> to vector<136xf32>
    %15 = vector.shape_cast %14 : vector<136xf32> to vector<136x1xf32>
    %c0_12 = arith.constant 0 : index
    %c256 = arith.constant 256 : index
    %16 = vector.load %arg6[%c0_12, %c256] : memref<136x1024xf32, #tpu.memory_space<vmem>>, vector<136x128xf32>
    %c0_13 = arith.constant 0 : index
    %c256_14 = arith.constant 256 : index
    %17 = vector.load %arg6[%c0_13, %c256_14] : memref<136x1024xf32, #tpu.memory_space<vmem>>, vector<1x128xf32>
    %18 = vector.broadcast %17 : vector<1x128xf32> to vector<136x128xf32>
    %19 = arith.mulf %16, %18 : vector<136x128xf32>
    %cst_15 = arith.constant dense<0.000000e+00> : vector<136xf32>
    %20 = vector.multi_reduction <add>, %19, %cst_15 [1] : vector<136x128xf32> to vector<136xf32>
    %21 = vector.shape_cast %20 : vector<136xf32> to vector<136x1xf32>
    %c0_16 = arith.constant 0 : index
    %c384 = arith.constant 384 : index
    %22 = vector.load %arg6[%c0_16, %c384] : memref<136x1024xf32, #tpu.memory_space<vmem>>, vector<136x128xf32>
    %c0_17 = arith.constant 0 : index
    %c384_18 = arith.constant 384 : index
    %23 = vector.load %arg6[%c0_17, %c384_18] : memref<136x1024xf32, #tpu.memory_space<vmem>>, vector<1x128xf32>
    %24 = vector.broadcast %23 : vector<1x128xf32> to vector<136x128xf32>
    %25 = arith.mulf %22, %24 : vector<136x128xf32>
    %cst_19 = arith.constant dense<0.000000e+00> : vector<136xf32>
    %26 = vector.multi_reduction <add>, %25, %cst_19 [1] : vector<136x128xf32> to vector<136xf32>
    %27 = vector.shape_cast %26 : vector<136xf32> to vector<136x1xf32>
    %c0_20 = arith.constant 0 : index
    %c512 = arith.constant 512 : index
    %28 = vector.load %arg6[%c0_20, %c512] : memref<136x1024xf32, #tpu.memory_space<vmem>>, vector<136x128xf32>
    %c0_21 = arith.constant 0 : index
    %c512_22 = arith.constant 512 : index
    %29 = vector.load %arg6[%c0_21, %c512_22] : memref<136x1024xf32, #tpu.memory_space<vmem>>, vector<1x128xf32>
    %30 = vector.broadcast %29 : vector<1x128xf32> to vector<136x128xf32>
    %31 = arith.mulf %28, %30 : vector<136x128xf32>
    %cst_23 = arith.constant dense<0.000000e+00> : vector<136xf32>
    %32 = vector.multi_reduction <add>, %31, %cst_23 [1] : vector<136x128xf32> to vector<136xf32>
    %33 = vector.shape_cast %32 : vector<136xf32> to vector<136x1xf32>
    %c0_24 = arith.constant 0 : index
    %c640 = arith.constant 640 : index
    %34 = vector.load %arg6[%c0_24, %c640] : memref<136x1024xf32, #tpu.memory_space<vmem>>, vector<136x128xf32>
    %c0_25 = arith.constant 0 : index
    %c640_26 = arith.constant 640 : index
    %35 = vector.load %arg6[%c0_25, %c640_26] : memref<136x1024xf32, #tpu.memory_space<vmem>>, vector<1x128xf32>
    %36 = vector.broadcast %35 : vector<1x128xf32> to vector<136x128xf32>
    %37 = arith.mulf %34, %36 : vector<136x128xf32>
    %cst_27 = arith.constant dense<0.000000e+00> : vector<136xf32>
    %38 = vector.multi_reduction <add>, %37, %cst_27 [1] : vector<136x128xf32> to vector<136xf32>
    %39 = vector.shape_cast %38 : vector<136xf32> to vector<136x1xf32>
    %c0_28 = arith.constant 0 : index
    %c768 = arith.constant 768 : index
    %40 = vector.load %arg6[%c0_28, %c768] : memref<136x1024xf32, #tpu.memory_space<vmem>>, vector<136x128xf32>
    %c0_29 = arith.constant 0 : index
    %c768_30 = arith.constant 768 : index
    %41 = vector.load %arg6[%c0_29, %c768_30] : memref<136x1024xf32, #tpu.memory_space<vmem>>, vector<1x128xf32>
    %42 = vector.broadcast %41 : vector<1x128xf32> to vector<136x128xf32>
    %43 = arith.mulf %40, %42 : vector<136x128xf32>
    %cst_31 = arith.constant dense<0.000000e+00> : vector<136xf32>
    %44 = vector.multi_reduction <add>, %43, %cst_31 [1] : vector<136x128xf32> to vector<136xf32>
    %45 = vector.shape_cast %44 : vector<136xf32> to vector<136x1xf32>
    %c0_32 = arith.constant 0 : index
    %c896 = arith.constant 896 : index
    %46 = vector.load %arg6[%c0_32, %c896] : memref<136x1024xf32, #tpu.memory_space<vmem>>, vector<136x128xf32>
    %c0_33 = arith.constant 0 : index
    %c896_34 = arith.constant 896 : index
    %47 = vector.load %arg6[%c0_33, %c896_34] : memref<136x1024xf32, #tpu.memory_space<vmem>>, vector<1x128xf32>
    %48 = vector.broadcast %47 : vector<1x128xf32> to vector<136x128xf32>
    %49 = arith.mulf %46, %48 : vector<136x128xf32>
    %cst_35 = arith.constant dense<0.000000e+00> : vector<136xf32>
    %50 = vector.multi_reduction <add>, %49, %cst_35 [1] : vector<136x128xf32> to vector<136xf32>
    %51 = vector.shape_cast %50 : vector<136xf32> to vector<136x1xf32>
    %52 = tpu.concatenate %9, %15, %21, %27, %33, %39, %45, %51 in 1 : vector<136x1xf32>, vector<136x1xf32>, vector<136x1xf32>, vector<136x1xf32>, vector<136x1xf32>, vector<136x1xf32>, vector<136x1xf32>, vector<136x1xf32> -> vector<136x8xf32>
    %c0_36 = arith.constant 0 : index
    %c0_37 = arith.constant 0 : index
    %c0_38 = arith.constant 0 : index
    %53 = vector.load %arg5[%c0_36, %c0_37, %c0_38] : memref<1x136x8xf32, #tpu.memory_space<vmem>>, vector<1x136x8xf32>
    %54 = vector.shape_cast %53 : vector<1x136x8xf32> to vector<136x8xf32>
    %55 = vector.shape_cast %52 : vector<136x8xf32> to vector<1x136x8xf32>
    tpu.vector_store %arg5[%c0_36, %c0_37, %c0_38], %55 {strides = array<i32>} : memref<1x136x8xf32, #tpu.memory_space<vmem>>, vector<1x136x8xf32>,
    return
  }
  func.func @transform_0(%arg0: i32, %arg1: memref<4x100xi32, #tpu.memory_space<smem>>) -> (i32, i32) {
    %c0_i32 = arith.constant 0 : i32
    %c0_i32_0 = arith.constant 0 : i32
    %c0_i32_1 = arith.constant 0 : i32
    return %c0_i32, %c0_i32_0 : i32, i32
  }
  func.func @transform_1(%arg0: i32, %arg1: memref<4x100xi32, #tpu.memory_space<smem>>) -> (i32, i32, i32) {
    %c0_i32 = arith.constant 0 : i32
    %c0_i32_0 = arith.constant 0 : i32
    %c0_i32_1 = arith.constant 0 : i32
    return %arg0, %c0_i32, %c0_i32_0 : i32, i32, i32
  }
  func.func @transform_2(%arg0: i32, %arg1: memref<4x100xi32, #tpu.memory_space<smem>>) -> (i32, i32, i32) {
    %c0_i32 = arith.constant 0 : i32
    %c0_i32_0 = arith.constant 0 : i32
    %c0_i32_1 = arith.constant 0 : i32
    return %arg0, %c0_i32, %c0_i32_0 : i32, i32, i32
  }
  func.func @transform_3(%arg0: i32, %arg1: memref<4x100xi32, #tpu.memory_space<smem>>) -> (i32, i32, i32) {
    %c0_i32 = arith.constant 0 : i32
    %c0_i32_0 = arith.constant 0 : i32
    %c0_i32_1 = arith.constant 0 : i32
    return %arg0, %c0_i32, %c0_i32_0 : i32, i32, i32
  }
}

</mosaic_0001>

<llo_original>
// kernel: squeeze.21
$region0: #{squeeze.21}
  %s0 = inlined_call_operand.vmem [shape: f32[2,28,28], index: 0, kind: input, shape index: {}]
  %s1 = inlined_call_operand.vmem [shape: f32[2,4,7,4,7], index: 1, kind: output, shape index: {}]
  $region1: #{squeeze.21} parent=0
    #allocation0 [shape = 'u8[229376]{0}', space=vmem, size = 0x38000, scoped, tag = 'scoped mem for output reshape']
    %v2 = vld [vmem:[%s0] sm:$0xff]
    %vm3 = vcmask 56320
    %4 = vst.msk [vmem:[#allocation0] ss:$8 sm:$0xf] %vm3, %v2
    %5 = vst.msk [vmem:[#allocation0] ss:$8 sm:$0xf0] %vm3, %v2
    %s6 = scalar_lea.vmem %s0, 8
    %v7 = vld [vmem:[%s6] sm:$0xff]
    %vm8 = vcmask 56320
    %s9 = scalar_lea.vmem [#allocation0], 64
    %10 = vst.msk [vmem:[%s9] ss:$8 sm:$0xf] %vm8, %v7
    %s11 = scalar_lea.vmem [#allocation0], 64
    %12 = vst.msk [vmem:[%s11] ss:$8 sm:$0xf0] %vm8, %v7
    %s13 = scalar_lea.vmem %s0, 16
    %v14 = vld [vmem:[%s13] sm:$0xff]
    %vm15 = vcmask 56320
    %s16 = scalar_lea.vmem [#allocation0], 128
    %17 = vst.msk [vmem:[%s16] ss:$8 sm:$0xf] %vm15, %v14
    %s18 = scalar_lea.vmem [#allocation0], 128
    %19 = vst.msk [vmem:[%s18] ss:$8 sm:$0xf0] %vm15, %v14
    %s20 = scalar_lea.vmem %s0, 24
    %v21 = vld [vmem:[%s20] sm:$0xf]
    %vm22 = vcmask 56320
    %s23 = scalar_lea.vmem [#allocation0], 192
    %24 = vst.msk [vmem:[%s23] ss:$8 sm:$0xf] %vm22, %v21
    %s25 = scalar_lea.vmem %s0, 32
    %v26 = vld [vmem:[%s25] sm:$0xff]
    %vm27 = vcmask 56320
    %s28 = scalar_lea.vmem [#allocation0], 224
    %29 = vst.msk [vmem:[%s28] ss:$8 sm:$0xf] %vm27, %v26
    %s30 = scalar_lea.vmem [#allocation0], 224
    %31 = vst.msk [vmem:[%s30] ss:$8 sm:$0xf0] %vm27, %v26
    %s32 = scalar_lea.vmem %s0, 40
    %v33 = vld [vmem:[%s32] sm:$0xff]
    %vm34 = vcmask 56320
    %s35 = scalar_lea.vmem [#allocation0], 288
    %36 = vst.msk [vmem:[%s35] ss:$8 sm:$0xf] %vm34, %v33
    %s37 = scalar_lea.vmem [#allocation0], 288
    %38 = vst.msk [vmem:[%s37] ss:$8 sm:$0xf0] %vm34, %v33
    %s39 = scalar_lea.vmem %s0, 48
    %v40 = vld [vmem:[%s39] sm:$0xff]
    %vm41 = vcmask 56320
    %s42 = scalar_lea.vmem [#allocation0], 352
    %43 = vst.msk [vmem:[%s42] ss:$8 sm:$0xf] %vm41, %v40
    %s44 = scalar_lea.vmem [#allocation0], 352
    %45 = vst.msk [vmem:[%s44] ss:$8 sm:$0xf0] %vm41, %v40
    %s46 = scalar_lea.vmem %s0, 56
    %v47 = vld [vmem:[%s46] sm:$0xf]
    %vm48 = vcmask 56320
    %s49 = scalar_lea.vmem [#allocation0], 416
    %50 = vst.msk [vmem:[%s49] ss:$8 sm:$0xf] %vm48, %v47
    %v51 = vld [vmem:[%s0] sm:$0xff]
    %52 = vrot.lane.b32.xlu0 %v51, 121
    %v53 = vpop.permute.xlu0 %52
    %vm54 = vcmask 56320
    %s55 = scalar_lea.vmem [#allocation0], 1
    %56 = vst.msk [vmem:[%s55] ss:$8 sm:$0xf] %vm54, %v53
    %s57 = scalar_lea.vmem [#allocation0], 1
    %58 = vst.msk [vmem:[%s57] ss:$8 sm:$0xf0] %vm54, %v53
    %s59 = scalar_lea.vmem %s0, 8
    %v60 = vld [vmem:[%s59] sm:$0xff]
    %61 = vrot.lane.b32.xlu0 %v60, 121
    %v62 = vpop.permute.xlu0 %61
    %vm63 = vcmask 56320
    %s64 = scalar_lea.vmem [#allocation0], 65
    %65 = vst.msk [vmem:[%s64] ss:$8 sm:$0xf] %vm63, %v62
    %s66 = scalar_lea.vmem [#allocation0], 65
    %67 = vst.msk [vmem:[%s66] ss:$8 sm:$0xf0] %vm63, %v62
    %s68 = scalar_lea.vmem %s0, 16
    %v69 = vld [vmem:[%s68] sm:$0xff]
    %70 = vrot.lane.b32.xlu0 %v69, 121
    %v71 = vpop.permute.xlu0 %70
    %vm72 = vcmask 56320
    %s73 = scalar_lea.vmem [#allocation0], 129
    %74 = vst.msk [vmem:[%s73] ss:$8 sm:$0xf] %vm72, %v71
    %s75 = scalar_lea.vmem [#allocation0], 129
    %76 = vst.msk [vmem:[%s75] ss:$8 sm:$0xf0] %vm72, %v71
    %s77 = scalar_lea.vmem %s0, 24
    %v78 = vld.sshfl [vmem:[%s77] sm:$0xff pattern:$0xba983210]
    %79 = vrot.lane.b32.xlu0 %v78, 121
    %v80 = vpop.permute.xlu0 %79
    %vm81 = vcmask 56320
    %s82 = scalar_lea.vmem [#allocation0], 193
    %83 = vst.msk [vmem:[%s82] ss:$8 sm:$0xf] %vm81, %v80
    %s84 = scalar_lea.vmem [#allocation0], 193
    %85 = vst.msk [vmem:[%s84] ss:$8 sm:$0xf0] %vm81, %v80
    %s86 = scalar_lea.vmem %s0, 36
    %v87 = vld [vmem:[%s86] sm:$0xff]
    %88 = vrot.lane.b32.xlu0 %v87, 121
    %v89 = vpop.permute.xlu0 %88
    %vm90 = vcmask 56320
    %s91 = scalar_lea.vmem [#allocation0], 257
    %92 = vst.msk [vmem:[%s91] ss:$8 sm:$0xf] %vm90, %v89
    %s93 = scalar_lea.vmem [#allocation0], 257
    %94 = vst.msk [vmem:[%s93] ss:$8 sm:$0xf0] %vm90, %v89
    %s95 = scalar_lea.vmem %s0, 44
    %v96 = vld [vmem:[%s95] sm:$0xff]
    %97 = vrot.lane.b32.xlu0 %v96, 121
    %v98 = vpop.permute.xlu0 %97
    %vm99 = vcmask 56320
    %s100 = scalar_lea.vmem [#allocation0], 321
    %101 = vst.msk [vmem:[%s100] ss:$8 sm:$0xf] %vm99, %v98
    %s102 = scalar_lea.vmem [#allocation0], 321
    %103 = vst.msk [vmem:[%s102] ss:$8 sm:$0xf0] %vm99, %v98
    %s104 = scalar_lea.vmem %s0, 52
    %v105 = vld [vmem:[%s104] sm:$0xff]
    %106 = vrot.lane.b32.xlu0 %v105, 121
    %v107 = vpop.permute.xlu0 %106
    %vm108 = vcmask 56320
    %s109 = scalar_lea.vmem [#allocation0], 385
    %110 = vst.msk [vmem:[%s109] ss:$8 sm:$0xf] %vm108, %v107
    %s111 = scalar_lea.vmem [#allocation0], 385
    %112 = vst.msk [vmem:[%s111] ss:$8 sm:$0xf0] %vm108, %v107
    %v113 = vld [vmem:[%s0] sm:$0xff]
    %114 = vrot.lane.b32.xlu0 %v113, 114
    %v115 = vpop.permute.xlu0 %114
    %vm116 = vcmask 56320
    %s117 = scalar_lea.vmem [#allocation0], 2
    %118 = vst.msk [vmem:[%s117] ss:$8 sm:$0xf] %vm116, %v115
    %s119 = scalar_lea.vmem [#allocation0], 2
    %120 = vst.msk [vmem:[%s119] ss:$8 sm:$0xf0] %vm116, %v115
    %s121 = scalar_lea.vmem %s0, 8
    %v122 = vld [vmem:[%s121] sm:$0xff]
    %123 = vrot.lane.b32.xlu0 %v122, 114
    %v124 = vpop.permute.xlu0 %123
    %vm125 = vcmask 56320
    %s126 = scalar_lea.vmem [#allocation0], 66
    %127 = vst.msk [vmem:[%s126] ss:$8 sm:$0xf] %vm125, %v124
    %s128 = scalar_lea.vmem [#allocation0], 66
    %129 = vst.msk [vmem:[%s128] ss:$8 sm:$0xf0] %vm125, %v124
    %s130 = scalar_lea.vmem %s0, 16
    %v131 = vld [vmem:[%s130] sm:$0xff]
    %132 = vrot.lane.b32.xlu0 %v131, 114
    %v133 = vpop.permute.xlu0 %132
    %vm134 = vcmask 56320
    %s135 = scalar_lea.vmem [#allocation0], 130
    %136 = vst.msk [vmem:[%s135] ss:$8 sm:$0xf] %vm134, %v133
    %s137 = scalar_lea.vmem [#allocation0], 130
    %138 = vst.msk [vmem:[%s137] ss:$8 sm:$0xf0] %vm134, %v133
    %s139 = scalar_lea.vmem %s0, 24
    %v140 = vld.sshfl [vmem:[%s139] sm:$0xff pattern:$0xba983210]
    %141 = vrot.lane.b32.xlu0 %v140, 114
    %v142 = vpop.permute.xlu0 %141
    %vm143 = vcmask 56320
    %s144 = scalar_lea.vmem [#allocation0], 194
    %145 = vst.msk [vmem:[%s144] ss:$8 sm:$0xf] %vm143, %v142
    %s146 = scalar_lea.vmem [#allocation0], 194
    %147 = vst.msk [vmem:[%s146] ss:$8 sm:$0xf0] %vm143, %v142
    %s148 = scalar_lea.vmem %s0, 36
    %v149 = vld [vmem:[%s148] sm:$0xff]
    %150 = vrot.lane.b32.xlu0 %v149, 114
    %v151 = vpop.permute.xlu0 %150
    %vm152 = vcmask 56320
    %s153 = scalar_lea.vmem [#allocation0], 258
    %154 = vst.msk [vmem:[%s153] ss:$8 sm:$0xf] %vm152, %v151
    %s155 = scalar_lea.vmem [#allocation0], 258
    %156 = vst.msk [vmem:[%s155] ss:$8 sm:$0xf0] %vm152, %v151
    %s157 = scalar_lea.vmem %s0, 44
    %v158 = vld [vmem:[%s157] sm:$0xff]
    %159 = vrot.lane.b32.xlu0 %v158, 114
    %v160 = vpop.permute.xlu0 %159
    %vm161 = vcmask 56320
    %s162 = scalar_lea.vmem [#allocation0], 322
    %163 = vst.msk [vmem:[%s162] ss:$8 sm:$0xf] %vm161, %v160
    %s164 = scalar_lea.vmem [#allocation0], 322
    %165 = vst.msk [vmem:[%s164] ss:$8 sm:$0xf0] %vm161, %v160
    %s166 = scalar_lea.vmem %s0, 52
    %v167 = vld [vmem:[%s166] sm:$0xff]
    %168 = vrot.lane.b32.xlu0 %v167, 114
    %v169 = vpop.permute.xlu0 %168
    %vm170 = vcmask 56320
    %s171 = scalar_lea.vmem [#allocation0], 386
    %172 = vst.msk [vmem:[%s171] ss:$8 sm:$0xf] %vm170, %v169
    %s173 = scalar_lea.vmem [#allocation0], 386
    %174 = vst.msk [vmem:[%s173] ss:$8 sm:$0xf0] %vm170, %v169
    %v175 = vld [vmem:[%s0] sm:$0xff]
    %176 = vrot.lane.b32.xlu0 %v175, 107
    %v177 = vpop.permute.xlu0 %176
    %vm178 = vcmask 56320
    %s179 = scalar_lea.vmem [#allocation0], 3
    %180 = vst.msk [vmem:[%s179] ss:$8 sm:$0xf] %vm178, %v177
    %s181 = scalar_lea.vmem [#allocation0], 3
    %182 = vst.msk [vmem:[%s181] ss:$8 sm:$0xf0] %vm178, %v177
    %s183 = scalar_lea.vmem %s0, 8
    %v184 = vld [vmem:[%s183] sm:$0xff]
    %185 = vrot.lane.b32.xlu0 %v184, 107
    %v186 = vpop.permute.xlu0 %185
    %vm187 = vcmask 56320
    %s188 = scalar_lea.vmem [#allocation0], 67
    %189 = vst.msk [vmem:[%s188] ss:$8 sm:$0xf] %vm187, %v186
    %s190 = scalar_lea.vmem [#allocation0], 67
    %191 = vst.msk [vmem:[%s190] ss:$8 sm:$0xf0] %vm187, %v186
    %s192 = scalar_lea.vmem %s0, 16
    %v193 = vld [vmem:[%s192] sm:$0xff]
    %194 = vrot.lane.b32.xlu0 %v193, 107
    %v195 = vpop.permute.xlu0 %194
    %vm196 = vcmask 56320
    %s197 = scalar_lea.vmem [#allocation0], 131
    %198 = vst.msk [vmem:[%s197] ss:$8 sm:$0xf] %vm196, %v195
    %s199 = scalar_lea.vmem [#allocation0], 131
    %200 = vst.msk [vmem:[%s199] ss:$8 sm:$0xf0] %vm196, %v195
    %s201 = scalar_lea.vmem %s0, 24
    %v202 = vld.sshfl [vmem:[%s201] sm:$0xff pattern:$0xba983210]
    %203 = vrot.lane.b32.xlu0 %v202, 107
    %v204 = vpop.permute.xlu0 %203
    %vm205 = vcmask 56320
    %s206 = scalar_lea.vmem [#allocation0], 195
    %207 = vst.msk [vmem:[%s206] ss:$8 sm:$0xf] %vm205, %v204
    %s208 = scalar_lea.vmem [#allocation0], 195
    %209 = vst.msk [vmem:[%s208] ss:$8 sm:$0xf0] %vm205, %v204
    %s210 = scalar_lea.vmem %s0, 36
    %v211 = vld [vmem:[%s210] sm:$0xff]
    %212 = vrot.lane.b32.xlu0 %v211, 107
    %v213 = vpop.permute.xlu0 %212
    %vm214 = vcmask 56320
    %s215 = scalar_lea.vmem [#allocation0], 259
    %216 = vst.msk [vmem:[%s215] ss:$8 sm:$0xf] %vm214, %v213
    %s217 = scalar_lea.vmem [#allocation0], 259
    %218 = vst.msk [vmem:[%s217] ss:$8 sm:$0xf0] %vm214, %v213
    %s219 = scalar_lea.vmem %s0, 44
    %v220 = vld [vmem:[%s219] sm:$0xff]
    %221 = vrot.lane.b32.xlu0 %v220, 107
    %v222 = vpop.permute.xlu0 %221
    %vm223 = vcmask 56320
    %s224 = scalar_lea.vmem [#allocation0], 323
    %225 = vst.msk [vmem:[%s224] ss:$8 sm:$0xf] %vm223, %v222
    %s226 = scalar_lea.vmem [#allocation0], 323
    %227 = vst.msk [vmem:[%s226] ss:$8 sm:$0xf0] %vm223, %v222
    %s228 = scalar_lea.vmem %s0, 52
    %v229 = vld [vmem:[%s228] sm:$0xff]
    %230 = vrot.lane.b32.xlu0 %v229, 107
    %v231 = vpop.permute.xlu0 %230
    %vm232 = vcmask 56320
    %s233 = scalar_lea.vmem [#allocation0], 387
    %234 = vst.msk [vmem:[%s233] ss:$8 sm:$0xf] %vm232, %v231
    %s235 = scalar_lea.vmem [#allocation0], 387
    %236 = vst.msk [vmem:[%s235] ss:$8 sm:$0xf0] %vm232, %v231
    %s238 = ssub.s32 16, 1
    %v239 = vld [vmem:[#allocation0] sm:%s238]
    %s241 = ssub.s32 16, 1
    %242 = vst [vmem:[%s1] sm:%s241] %v239
    %s243 = scalar_lea.vmem [#allocation0], 8
    %v244 = vld [vmem:[%s243] sm:%s238]
    %s246 = ssub.s32 16, 1
    %s247 = scalar_lea.vmem %s1, 4
    %248 = vst [vmem:[%s247] sm:%s246] %v244
    %s249 = scalar_lea.vmem [#allocation0], 16
    %v250 = vld [vmem:[%s249] sm:%s238]
    %s252 = ssub.s32 16, 1
    %s253 = scalar_lea.vmem %s1, 8
    %254 = vst [vmem:[%s253] sm:%s252] %v250
    %s255 = scalar_lea.vmem [#allocation0], 24
    %v256 = vld [vmem:[%s255] sm:%s238]
    %s258 = ssub.s32 16, 1
    %s259 = scalar_lea.vmem %s1, 12
    %260 = vst [vmem:[%s259] sm:%s258] %v256
    %s261 = scalar_lea.vmem [#allocation0], 32
    %v262 = vld [vmem:[%s261] sm:%s238]
    %s264 = ssub.s32 16, 1
    %s265 = scalar_lea.vmem %s1, 16
    %266 = vst [vmem:[%s265] sm:%s264] %v262
    %s267 = scalar_lea.vmem [#allocation0], 40
    %v268 = vld [vmem:[%s267] sm:%s238]
    %s270 = ssub.s32 16, 1
    %s271 = scalar_lea.vmem %s1, 20
    %272 = vst [vmem:[%s271] sm:%s270] %v268
    %s273 = scalar_lea.vmem [#allocation0], 48
    %v274 = vld [vmem:[%s273] sm:%s238]
    %s276 = ssub.s32 16, 1
    %s277 = scalar_lea.vmem %s1, 24
    %278 = vst [vmem:[%s277] sm:%s276] %v274
    %s279 = scalar_lea.vmem [#allocation0], 56
    %v280 = vld [vmem:[%s279] sm:%s238]
    %s282 = ssub.s32 16, 1
    %s283 = scalar_lea.vmem %s1, 28
    %284 = vst [vmem:[%s283] sm:%s282] %v280
    %s285 = scalar_lea.vmem [#allocation0], 64
    %v286 = vld [vmem:[%s285] sm:%s238]
    %s288 = ssub.s32 16, 1
    %s289 = scalar_lea.vmem %s1, 32
    %290 = vst [vmem:[%s289] sm:%s288] %v286
    %s291 = scalar_lea.vmem [#allocation0], 72
    %v292 = vld [vmem:[%s291] sm:%s238]
    %s294 = ssub.s32 16, 1
    %s295 = scalar_lea.vmem %s1, 36
    %296 = vst [vmem:[%s295] sm:%s294] %v292
    %s297 = scalar_lea.vmem [#allocation0], 80
    %v298 = vld [vmem:[%s297] sm:%s238]
    %s300 = ssub.s32 16, 1
    %s301 = scalar_lea.vmem %s1, 40
    %302 = vst [vmem:[%s301] sm:%s300] %v298
    %s303 = scalar_lea.vmem [#allocation0], 88
    %v304 = vld [vmem:[%s303] sm:%s238]
    %s306 = ssub.s32 16, 1
    %s307 = scalar_lea.vmem %s1, 44
    %308 = vst [vmem:[%s307] sm:%s306] %v304
    %s309 = scalar_lea.vmem [#allocation0], 96
    %v310 = vld [vmem:[%s309] sm:%s238]
    %s312 = ssub.s32 16, 1
    %s313 = scalar_lea.vmem %s1, 48
    %314 = vst [vmem:[%s313] sm:%s312] %v310
    %s315 = scalar_lea.vmem [#allocation0], 104
    %v316 = vld [vmem:[%s315] sm:%s238]
    %s318 = ssub.s32 16, 1
    %s319 = scalar_lea.vmem %s1, 52
    %320 = vst [vmem:[%s319] sm:%s318] %v316
    %s321 = scalar_lea.vmem [#allocation0], 112
    %v322 = vld [vmem:[%s321] sm:%s238]
    %s324 = ssub.s32 16, 1
    %s325 = scalar_lea.vmem %s1, 56
    %326 = vst [vmem:[%s325] sm:%s324] %v322
    %s327 = scalar_lea.vmem [#allocation0], 120
    %v328 = vld [vmem:[%s327] sm:%s238]
    %s330 = ssub.s32 16, 1
    %s331 = scalar_lea.vmem %s1, 60
    %332 = vst [vmem:[%s331] sm:%s330] %v328
    %s333 = scalar_lea.vmem [#allocation0], 128
    %v334 = vld [vmem:[%s333] sm:%s238]
    %s336 = ssub.s32 16, 1
    %s337 = scalar_lea.vmem %s1, 64
    %338 = vst [vmem:[%s337] sm:%s336] %v334
    %s339 = scalar_lea.vmem [#allocation0], 136
    %v340 = vld [vmem:[%s339] sm:%s238]
    %s342 = ssub.s32 16, 1
    %s343 = scalar_lea.vmem %s1, 68
    %344 = vst [vmem:[%s343] sm:%s342] %v340
    %s345 = scalar_lea.vmem [#allocation0], 144
    %v346 = vld [vmem:[%s345] sm:%s238]
    %s348 = ssub.s32 16, 1
    %s349 = scalar_lea.vmem %s1, 72
    %350 = vst [vmem:[%s349] sm:%s348] %v346
    %s351 = scalar_lea.vmem [#allocation0], 152
    %v352 = vld [vmem:[%s351] sm:%s238]
    %s354 = ssub.s32 16, 1
    %s355 = scalar_lea.vmem %s1, 76
    %356 = vst [vmem:[%s355] sm:%s354] %v352
    %s357 = scalar_lea.vmem [#allocation0], 160
    %v358 = vld [vmem:[%s357] sm:%s238]
    %s360 = ssub.s32 16, 1
    %s361 = scalar_lea.vmem %s1, 80
    %362 = vst [vmem:[%s361] sm:%s360] %v358
    %s363 = scalar_lea.vmem [#allocation0], 168
    %v364 = vld [vmem:[%s363] sm:%s238]
    %s366 = ssub.s32 16, 1
    %s367 = scalar_lea.vmem %s1, 84
    %368 = vst [vmem:[%s367] sm:%s366] %v364
    %s369 = scalar_lea.vmem [#allocation0], 176
    %v370 = vld [vmem:[%s369] sm:%s238]
    %s372 = ssub.s32 16, 1
    %s373 = scalar_lea.vmem %s1, 88
    %374 = vst [vmem:[%s373] sm:%s372] %v370
    %s375 = scalar_lea.vmem [#allocation0], 184
    %v376 = vld [vmem:[%s375] sm:%s238]
    %s378 = ssub.s32 16, 1
    %s379 = scalar_lea.vmem %s1, 92
    %380 = vst [vmem:[%s379] sm:%s378] %v376
    %s381 = scalar_lea.vmem [#allocation0], 192
    %v382 = vld [vmem:[%s381] sm:%s238]
    %s384 = ssub.s32 16, 1
    %s385 = scalar_lea.vmem %s1, 96
    %386 = vst [vmem:[%s385] sm:%s384] %v382
    %s387 = scalar_lea.vmem [#allocation0], 200
    %v388 = vld [vmem:[%s387] sm:%s238]
    %s390 = ssub.s32 16, 1
    %s391 = scalar_lea.vmem %s1, 100
    %392 = vst [vmem:[%s391] sm:%s390] %v388
    %s393 = scalar_lea.vmem [#allocation0], 208
    %v394 = vld [vmem:[%s393] sm:%s238]
    %s396 = ssub.s32 16, 1
    %s397 = scalar_lea.vmem %s1, 104
    %398 = vst [vmem:[%s397] sm:%s396] %v394
    %s399 = scalar_lea.vmem [#allocation0], 216
    %v400 = vld [vmem:[%s399] sm:%s238]
    %s402 = ssub.s32 16, 1
    %s403 = scalar_lea.vmem %s1, 108
    %404 = vst [vmem:[%s403] sm:%s402] %v400
    %s405 = scalar_lea.vmem [#allocation0], 224
    %v406 = vld [vmem:[%s405] sm:%s238]
    %s408 = ssub.s32 16, 1
    %s409 = scalar_lea.vmem %s1, 112
    %410 = vst [vmem:[%s409] sm:%s408] %v406
    %s411 = scalar_lea.vmem [#allocation0], 232
    %v412 = vld [vmem:[%s411] sm:%s238]
    %s414 = ssub.s32 16, 1
    %s415 = scalar_lea.vmem %s1, 116
    %416 = vst [vmem:[%s415] sm:%s414] %v412
    %s417 = scalar_lea.vmem [#allocation0], 240
    %v418 = vld [vmem:[%s417] sm:%s238]
    %s420 = ssub.s32 16, 1
    %s421 = scalar_lea.vmem %s1, 120
    %422 = vst [vmem:[%s421] sm:%s420] %v418
    %s423 = scalar_lea.vmem [#allocation0], 248
    %v424 = vld [vmem:[%s423] sm:%s238]
    %s426 = ssub.s32 16, 1
    %s427 = scalar_lea.vmem %s1, 124
    %428 = vst [vmem:[%s427] sm:%s426] %v424
    %s429 = scalar_lea.vmem [#allocation0], 256
    %v430 = vld [vmem:[%s429] sm:%s238]
    %s432 = ssub.s32 16, 1
    %s433 = scalar_lea.vmem %s1, 128
    %434 = vst [vmem:[%s433] sm:%s432] %v430
    %s435 = scalar_lea.vmem [#allocation0], 264
    %v436 = vld [vmem:[%s435] sm:%s238]
    %s438 = ssub.s32 16, 1
    %s439 = scalar_lea.vmem %s1, 132
    %440 = vst [vmem:[%s439] sm:%s438] %v436
    %s441 = scalar_lea.vmem [#allocation0], 272
    %v442 = vld [vmem:[%s441] sm:%s238]
    %s444 = ssub.s32 16, 1
    %s445 = scalar_lea.vmem %s1, 136
    %446 = vst [vmem:[%s445] sm:%s444] %v442
    %s447 = scalar_lea.vmem [#allocation0], 280
    %v448 = vld [vmem:[%s447] sm:%s238]
    %s450 = ssub.s32 16, 1
    %s451 = scalar_lea.vmem %s1, 140
    %452 = vst [vmem:[%s451] sm:%s450] %v448
    %s453 = scalar_lea.vmem [#allocation0], 288
    %v454 = vld [vmem:[%s453] sm:%s238]
    %s456 = ssub.s32 16, 1
    %s457 = scalar_lea.vmem %s1, 144
    %458 = vst [vmem:[%s457] sm:%s456] %v454
    %s459 = scalar_lea.vmem [#allocation0], 296
    %v460 = vld [vmem:[%s459] sm:%s238]
    %s462 = ssub.s32 16, 1
    %s463 = scalar_lea.vmem %s1, 148
    %464 = vst [vmem:[%s463] sm:%s462] %v460
    %s465 = scalar_lea.vmem [#allocation0], 304
    %v466 = vld [vmem:[%s465] sm:%s238]
    %s468 = ssub.s32 16, 1
    %s469 = scalar_lea.vmem %s1, 152
    %470 = vst [vmem:[%s469] sm:%s468] %v466
    %s471 = scalar_lea.vmem [#allocation0], 312
    %v472 = vld [vmem:[%s471] sm:%s238]
    %s474 = ssub.s32 16, 1
    %s475 = scalar_lea.vmem %s1, 156
    %476 = vst [vmem:[%s475] sm:%s474] %v472
    %s477 = scalar_lea.vmem [#allocation0], 320
    %v478 = vld [vmem:[%s477] sm:%s238]
    %s480 = ssub.s32 16, 1
    %s481 = scalar_lea.vmem %s1, 160
    %482 = vst [vmem:[%s481] sm:%s480] %v478
    %s483 = scalar_lea.vmem [#allocation0], 328
    %v484 = vld [vmem:[%s483] sm:%s238]
    %s486 = ssub.s32 16, 1
    %s487 = scalar_lea.vmem %s1, 164
    %488 = vst [vmem:[%s487] sm:%s486] %v484
    %s489 = scalar_lea.vmem [#allocation0], 336
    %v490 = vld [vmem:[%s489] sm:%s238]
    %s492 = ssub.s32 16, 1
    %s493 = scalar_lea.vmem %s1, 168
    %494 = vst [vmem:[%s493] sm:%s492] %v490
    %s495 = scalar_lea.vmem [#allocation0], 344
    %v496 = vld [vmem:[%s495] sm:%s238]
    %s498 = ssub.s32 16, 1
    %s499 = scalar_lea.vmem %s1, 172
    %500 = vst [vmem:[%s499] sm:%s498] %v496
    %s501 = scalar_lea.vmem [#allocation0], 352
    %v502 = vld [vmem:[%s501] sm:%s238]
    %s504 = ssub.s32 16, 1
    %s505 = scalar_lea.vmem %s1, 176
    %506 = vst [vmem:[%s505] sm:%s504] %v502
    %s507 = scalar_lea.vmem [#allocation0], 360
    %v508 = vld [vmem:[%s507] sm:%s238]
    %s510 = ssub.s32 16, 1
    %s511 = scalar_lea.vmem %s1, 180
    %512 = vst [vmem:[%s511] sm:%s510] %v508
    %s513 = scalar_lea.vmem [#allocation0], 368
    %v514 = vld [vmem:[%s513] sm:%s238]
    %s516 = ssub.s32 16, 1
    %s517 = scalar_lea.vmem %s1, 184
    %518 = vst [vmem:[%s517] sm:%s516] %v514
    %s519 = scalar_lea.vmem [#allocation0], 376
    %v520 = vld [vmem:[%s519] sm:%s238]
    %s522 = ssub.s32 16, 1
    %s523 = scalar_lea.vmem %s1, 188
    %524 = vst [vmem:[%s523] sm:%s522] %v520
    %s525 = scalar_lea.vmem [#allocation0], 384
    %v526 = vld [vmem:[%s525] sm:%s238]
    %s528 = ssub.s32 16, 1
    %s529 = scalar_lea.vmem %s1, 192
    %530 = vst [vmem:[%s529] sm:%s528] %v526
    %s531 = scalar_lea.vmem [#allocation0], 392
    %v532 = vld [vmem:[%s531] sm:%s238]
    %s534 = ssub.s32 16, 1
    %s535 = scalar_lea.vmem %s1, 196
    %536 = vst [vmem:[%s535] sm:%s534] %v532
    %s537 = scalar_lea.vmem [#allocation0], 400
    %v538 = vld [vmem:[%s537] sm:%s238]
    %s540 = ssub.s32 16, 1
    %s541 = scalar_lea.vmem %s1, 200
    %542 = vst [vmem:[%s541] sm:%s540] %v538
    %s543 = scalar_lea.vmem [#allocation0], 408
    %v544 = vld [vmem:[%s543] sm:%s238]
    %s546 = ssub.s32 16, 1
    %s547 = scalar_lea.vmem %s1, 204
    %548 = vst [vmem:[%s547] sm:%s546] %v544
    %s549 = scalar_lea.vmem [#allocation0], 416
    %v550 = vld [vmem:[%s549] sm:%s238]
    %s552 = ssub.s32 16, 1
    %s553 = scalar_lea.vmem %s1, 208
    %554 = vst [vmem:[%s553] sm:%s552] %v550
    %s555 = scalar_lea.vmem [#allocation0], 424
    %v556 = vld [vmem:[%s555] sm:%s238]
    %s558 = ssub.s32 16, 1
    %s559 = scalar_lea.vmem %s1, 212
    %560 = vst [vmem:[%s559] sm:%s558] %v556
    %s561 = scalar_lea.vmem [#allocation0], 432
    %v562 = vld [vmem:[%s561] sm:%s238]
    %s564 = ssub.s32 16, 1
    %s565 = scalar_lea.vmem %s1, 216
    %566 = vst [vmem:[%s565] sm:%s564] %v562
    %s567 = scalar_lea.vmem [#allocation0], 440
    %v568 = vld [vmem:[%s567] sm:%s238]
    %s570 = ssub.s32 16, 1
    %s571 = scalar_lea.vmem %s1, 220
    %572 = vst [vmem:[%s571] sm:%s570] %v568

// kernel: a_call__.2
$region0: #{a_call__.2}
  #allocation0 [shape = 'u32[]', space=smem, size = 0x4, offset = 0x4, fixed_abs, tag = 'smem constant byte address 0x4 - core index']
  #allocation1 [shape = 'u32[72,128]{1,0:T(1,128)}', space=vmem, size = 0x9000, scoped, tag = 'internal scratch']
  #allocation2 [shape = 'f32[112,1024]{1,0:T(8,128)}', space=vmem, size = 0x70000, scoped, tag = 'scratch operand']
  #allocation3 [shape = 's32[1]{0}', space=sflag, size = 0x4, scoped, tag = 'scoped memory for a_call__.2']
  #allocation4 [shape = 'u8[2048]{0}', space=smem, size = 0x800, scoped, tag = 'prefetched SMEM operand 0']
  %s0 = inlined_call_operand.vmem [shape: s32[4,80], index: 0, kind: input, shape index: {}]
  %s1 = inlined_call_operand.vmem [shape: f32[112,112], index: 1, kind: input, shape index: {}]
  %s2 = inlined_call_operand.vmem [shape: f32[4,112,1024], index: 2, kind: input, shape index: {}]
  %s3 = inlined_call_operand.vmem [shape: f32[4,112,1024], index: 3, kind: input, shape index: {}]
  %s4 = inlined_call_operand.vmem [shape: f32[4,112,8], index: 4, kind: output, shape index: {}]
  %s5 = sld [smem:[#allocation0]]
  $region59: #{a_call__.2} parent=0
    _
  %s7 = ssub.s32 1, %s5
  %s8 = scalar_select 0, %s7, %s5
  %s10 = sshll.u32 %s0, 4
  %s11 = int_to_ptr.vmem [resolvable:$true] %s10
  %13 = dma.vmem_to_smem %s11, 64, [#allocation4], [#allocation3]
  %15 = dma.done [#allocation3], 64
  %16 = sfence
  loop: start=0, step=1, limit=6
  $region2: #{a_call__.2} parent=0 // loop_pre_header
    _
  $region3: #{a_call__.2} parent=0 // loop_header
    %s18 = sphi 0, %s22
    %p19 = scmp.ge.s32.totalorder %s18, 6
    %s26 = sphi 0, %s26
    %s28 = sphi 0, %s26
    %s29 = sphi 0, %s28
    %s43 = sphi 0, %s29
    %s49 = sphi 0, %s51
    %s52 = sphi 0, %s49
    %s53 = sphi 0, %s52
    %s69 = sphi 0, %s53
    %s75 = sphi 0, %s77
    %s78 = sphi 0, %s75
    %s79 = sphi 0, %s78
    %s95 = sphi 0, %s79
    %s101 = sphi 0, %s103
    %s104 = sphi 0, %s101
    %s105 = sphi 0, %s104
    %s121 = sphi 0, %s105
  $region4: #{a_call__.2} parent=0 // loop_header_branch
    %21 = sbr.rel (%p19) target = $region8
  $region5: #{a_call__.2} parent=0 // loop_body
    %s23 = ssub.s32 %s18, 1
    %s24 = ssub.s32 %s18, 2
    %s25 = sadd.s32 %s18, 1
    %s27 = sadd.s32 %s26, 1
    %p30 = scmp.eq.s32.totalorder %s18, 3
    %p31 = scmp.ne.s32.totalorder %s26, %s28
    %p32 = scmp.eq.s32.totalorder %s18, 0
    %p33 = por %p31, %p32
    %p34 = scmp.ne.s32.totalorder %s26, %s28
    %p35 = scmp.eq.s32.totalorder %s23, 3
    %p36 = por %p34, %p35
    %p37 = scmp.ne.s32.totalorder %s28, %s29
    %p38 = scmp.eq.s32.totalorder %s23, 0
    %p39 = por %p37, %p38
    %p40 = scmp.ne.s32.totalorder %s28, %s29
    %p41 = scmp.eq.s32.totalorder %s24, 3
    %p42 = por %p40, %p41
    %p44 = scmp.ne.s32.totalorder %s29, %s43
    %p45 = scmp.eq.s32.totalorder %s24, 0
    %p46 = por %p44, %p45
    %s47 = ssub.s32 %s18, %s25
    %p48 = scmp.eq.s32.totalorder %s47, 0
    %s50 = sadd.s32 %s49, 1
    %s51 = scalar_select %p48, %s49, %s50
    %p54 = pneg %p48
    %p55 = scmp.eq.s32.totalorder %s18, 3
    %p56 = por %p54, %p55
    %p57 = scmp.ne.s32.totalorder %s49, %s52
    %p58 = scmp.eq.s32.totalorder %s18, 0
    %p59 = por %p57, %p58
    %p60 = scmp.ne.s32.totalorder %s49, %s52
    %p61 = scmp.eq.s32.totalorder %s23, 3
    %p62 = por %p60, %p61
    %p63 = scmp.ne.s32.totalorder %s52, %s53
    %p64 = scmp.eq.s32.totalorder %s23, 0
    %p65 = por %p63, %p64
    %p66 = scmp.ne.s32.totalorder %s52, %s53
    %p67 = scmp.eq.s32.totalorder %s24, 3
    %p68 = por %p66, %p67
    %p70 = scmp.ne.s32.totalorder %s53, %s69
    %p71 = scmp.eq.s32.totalorder %s24, 0
    %p72 = por %p70, %p71
    %s73 = ssub.s32 %s18, %s25
    %p74 = scmp.eq.s32.totalorder %s73, 0
    %s76 = sadd.s32 %s75, 1
    %s77 = scalar_select %p74, %s75, %s76
    %p80 = pneg %p74
    %p81 = scmp.eq.s32.totalorder %s18, 3
    %p82 = por %p80, %p81
    %p83 = scmp.ne.s32.totalorder %s75, %s78
    %p84 = scmp.eq.s32.totalorder %s18, 0
    %p85 = por %p83, %p84
    %p86 = scmp.ne.s32.totalorder %s75, %s78
    %p87 = scmp.eq.s32.totalorder %s23, 3
    %p88 = por %p86, %p87
    %p89 = scmp.ne.s32.totalorder %s78, %s79
    %p90 = scmp.eq.s32.totalorder %s23, 0
    %p91 = por %p89, %p90
    %p92 = scmp.ne.s32.totalorder %s78, %s79
    %p93 = scmp.eq.s32.totalorder %s24, 3
    %p94 = por %p92, %p93
    %p96 = scmp.ne.s32.totalorder %s79, %s95
    %p97 = scmp.eq.s32.totalorder %s24, 0
    %p98 = por %p96, %p97
    %s99 = ssub.s32 %s18, %s25
    %p100 = scmp.eq.s32.totalorder %s99, 0
    %s102 = sadd.s32 %s101, 1
    %s103 = scalar_select %p100, %s101, %s102
    %p106 = pneg %p100
    %p107 = scmp.eq.s32.totalorder %s18, 3
    %p108 = por %p106, %p107
    %p109 = scmp.ne.s32.totalorder %s101, %s104
    %p110 = scmp.eq.s32.totalorder %s18, 0
    %p111 = por %p109, %p110
    %p112 = scmp.ne.s32.totalorder %s101, %s104
    %p113 = scmp.eq.s32.totalorder %s23, 3
    %p114 = por %p112, %p113
    %p115 = scmp.ne.s32.totalorder %s104, %s105
    %p116 = scmp.eq.s32.totalorder %s23, 0
    %p117 = por %p115, %p116
    %p118 = scmp.ne.s32.totalorder %s104, %s105
    %p119 = scmp.eq.s32.totalorder %s24, 3
    %p120 = por %p118, %p119
    %p122 = scmp.ne.s32.totalorder %s105, %s121
    %p123 = scmp.eq.s32.totalorder %s24, 0
    %p124 = por %p122, %p123
    %p125 = scmp.le.s32.totalorder 1, %s18
    %p126 = scmp.lt.s32.totalorder %s18, 5
    %p127 = pnand %p125, %p126
    %p128 = pneg %p127
    // Predicated region
    $region9: #{a_call__.2} parent=5 // pred_check
      _
    $region10: #{a_call__.2} parent=5 // pred_check_branch
      %130 = sbr.rel (%p127) target = $region12
    $region11: #{a_call__.2} parent=5 // pred_region
      %s131 = ssub.s32 %s18, 1
      // Predicated region
      $region13: #{a_call__.2} parent=11 // pred_check
        %p132 = pneg %p39
      $region14: #{a_call__.2} parent=11 // pred_check_branch
        %134 = sbr.rel (%p132) target = $region16
      $region15: #{a_call__.2} parent=11 // pred_region
        _
      $region16: #{a_call__.2} parent=11 // pred_fallthru
        _
    $region12: #{a_call__.2} parent=5 // pred_fallthru
      _
    %p135 = scmp.lt.s32.totalorder %s18, 4
    // Predicated region
    $region17: #{a_call__.2} parent=5 // pred_check
      %p136 = pneg %p135
    $region18: #{a_call__.2} parent=5 // pred_check_branch
      %138 = sbr.rel (%p136) target = $region20
    $region19: #{a_call__.2} parent=5 // pred_region
      // Predicated region
      $region21: #{a_call__.2} parent=19 // pred_check
        %p139 = pneg %p59
      $region22: #{a_call__.2} parent=19 // pred_check_branch
        %141 = sbr.rel (%p139) target = $region24
      $region23: #{a_call__.2} parent=19 // pred_region
        %p142 = scmp.lt.s32.totalorder %s18, 3
        %s143 = scalar_select %p142, %s18, 3
        %s144 = smul.addr %s143, 112
        %s145 = smul.addr %s144, 8
        %s146 = scalar_lea.vmem %s2, %s145
      $region24: #{a_call__.2} parent=19 // pred_fallthru
        _
      // Predicated region
      $region25: #{a_call__.2} parent=19 // pred_check
        %p147 = pneg %p85
      $region26: #{a_call__.2} parent=19 // pred_check_branch
        %149 = sbr.rel (%p147) target = $region28
      $region27: #{a_call__.2} parent=19 // pred_region
        %p150 = scmp.lt.s32.totalorder %s18, 3
        %s151 = scalar_select %p150, %s18, 3
        %s152 = smul.addr %s151, 112
        %s153 = smul.addr %s152, 8
        %s154 = scalar_lea.vmem %s3, %s153
      $region28: #{a_call__.2} parent=19 // pred_fallthru
        _
    $region20: #{a_call__.2} parent=5 // pred_fallthru
      _
    %p155 = scmp.le.s32.totalorder 1, %s18
    %p156 = scmp.lt.s32.totalorder %s18, 5
    %p157 = pnand %p155, %p156
    %p158 = pneg %p157
    // Predicated region
    $region29: #{a_call__.2} parent=5 // pred_check
      _
    $region30: #{a_call__.2} parent=5 // pred_check_branch
      %160 = sbr.rel (%p157) target = $region32
    $region31: #{a_call__.2} parent=5 // pred_region
      %s161 = ssub.s32 %s18, 1
      %p162 = pneg %p39
      %p163 = pneg %p36
      %p164 = scmp.lt.s32.totalorder %s23, 3
      %s165 = scalar_select %p164, %s23, 3
      %s166 = smul.addr %s165, 112
      %s167 = smul.addr %s166, 8
      %s168 = scalar_lea.vmem %s2, %s167
      %p169 = pneg %p65
      %p170 = pneg %p62
      %p171 = scmp.lt.s32.totalorder %s23, 3
      %s172 = scalar_select %p171, %s23, 3
      %s173 = smul.addr %s172, 112
      %s174 = smul.addr %s173, 8
      %s175 = scalar_lea.vmem %s3, %s174
      %p176 = pneg %p91
      %p177 = pneg %p88
      %p178 = pneg %p117
      %p179 = pneg %p114
      %p180 = scmp.lt.s32.totalorder %s23, 3
      %s181 = scalar_select %p180, %s23, 3
      %s182 = smul.addr %s181, 14
      %s183 = smul.addr %s182, 8
      %s184 = scalar_lea.vmem %s4, %s183
      %p185 = scmp.lt.s32.totalorder %s23, 3
      %s186 = scalar_select %p185, %s23, 3
      %s187 = smul.addr %s186, 112
      %s188 = smul.addr %s187, 8
      %s189 = scalar_lea.vmem %s2, %s188
      %p190 = scmp.lt.s32.totalorder %s23, 3
      %s191 = scalar_select %p190, %s23, 3
      %s192 = smul.addr %s191, 112
      %s193 = smul.addr %s192, 8
      %s194 = scalar_lea.vmem %s3, %s193
      %p195 = scmp.lt.s32.totalorder %s23, 3
      %s196 = scalar_select %p195, %s23, 3
      %s197 = smul.addr %s196, 14
      %s198 = smul.addr %s197, 8
      %s199 = scalar_lea.vmem %s4, %s198
      %v200 = vld [vmem:[%s189] sm:$0xff]
      %v201 = vld [vmem:[%s189 + $0x8] sm:$0xff]
      %v202 = vld [vmem:[%s189 + $0x10] sm:$0xff]
      %v203 = vld [vmem:[%s189 + $0x18] sm:$0xff]
      %v204 = vld [vmem:[%s189 + $0x20] sm:$0xff]
      %v205 = vld [vmem:[%s189 + $0x28] sm:$0xff]
      %v206 = vld [vmem:[%s189 + $0x30] sm:$0xff]
      %v207 = vld [vmem:[%s189 + $0x38] sm:$0xff]
      %v208 = vld [vmem:[%s189 + $0x40] sm:$0xff]
      %v209 = vld [vmem:[%s189 + $0x48] sm:$0xff]
      %v210 = vld [vmem:[%s189 + $0x50] sm:$0xff]
      %v211 = vld [vmem:[%s189 + $0x58] sm:$0xff]
      %v212 = vld [vmem:[%s189 + $0x60] sm:$0xff]
      %v213 = vld [vmem:[%s189 + $0x68] sm:$0xff]
      %v214 = vld [vmem:[%s189 + $0x70] sm:$0xff]
      %v215 = vld [vmem:[%s189 + $0x78] sm:$0xff]
      %v216 = vld [vmem:[%s189 + $0x80] sm:$0xff]
      %v217 = vld [vmem:[%s189 + $0x88] sm:$0xff]
      %v218 = vld [vmem:[%s189 + $0x90] sm:$0xff]
      %v219 = vld [vmem:[%s189 + $0x98] sm:$0xff]
      %v220 = vld [vmem:[%s189 + $0xa0] sm:$0xff]
      %v221 = vld [vmem:[%s189 + $0xa8] sm:$0xff]
      %v222 = vld [vmem:[%s189 + $0xb0] sm:$0xff]
      %v223 = vld [vmem:[%s189 + $0xb8] sm:$0xff]
      %v224 = vld [vmem:[%s189 + $0xc0] sm:$0xff]
      %v225 = vld [vmem:[%s189 + $0xc8] sm:$0xff]
      %v226 = vld [vmem:[%s189 + $0xd0] sm:$0xff]
      %v227 = vld [vmem:[%s189 + $0xd8] sm:$0xff]
      %v228 = vld [vmem:[%s189 + $0xe0] sm:$0xff]
      %v229 = vld [vmem:[%s189 + $0xe8] sm:$0xff]
      %v230 = vld [vmem:[%s189 + $0xf0] sm:$0xff]
      %v231 = vld [vmem:[%s189 + $0xf8] sm:$0xff]
      %v232 = vld [vmem:[%s189 + $0x100] sm:$0xff]
      %v233 = vld [vmem:[%s189 + $0x108] sm:$0xff]
      %v234 = vld [vmem:[%s189 + $0x110] sm:$0xff]
      %v235 = vld [vmem:[%s189 + $0x118] sm:$0xff]
      %v236 = vld [vmem:[%s189 + $0x120] sm:$0xff]
      %v237 = vld [vmem:[%s189 + $0x128] sm:$0xff]
      %v238 = vld [vmem:[%s189 + $0x130] sm:$0xff]
      %v239 = vld [vmem:[%s189 + $0x138] sm:$0xff]
      %v240 = vld [vmem:[%s189 + $0x140] sm:$0xff]
      %v241 = vld [vmem:[%s189 + $0x148] sm:$0xff]
      %v242 = vld [vmem:[%s189 + $0x150] sm:$0xff]
      %v243 = vld [vmem:[%s189 + $0x158] sm:$0xff]
      %v244 = vld [vmem:[%s189 + $0x160] sm:$0xff]
      %v245 = vld [vmem:[%s189 + $0x168] sm:$0xff]
      %v246 = vld [vmem:[%s189 + $0x170] sm:$0xff]
      %v247 = vld [vmem:[%s189 + $0x178] sm:$0xff]
      %v248 = vld [vmem:[%s189 + $0x180] sm:$0xff]
      %v249 = vld [vmem:[%s189 + $0x188] sm:$0xff]
      %v250 = vld [vmem:[%s189 + $0x190] sm:$0xff]
      %v251 = vld [vmem:[%s189 + $0x198] sm:$0xff]
      %v252 = vld [vmem:[%s189 + $0x1a0] sm:$0xff]
      %v253 = vld [vmem:[%s189 + $0x1a8] sm:$0xff]
      %v254 = vld [vmem:[%s189 + $0x1b0] sm:$0xff]
      %v255 = vld [vmem:[%s189 + $0x1b8] sm:$0xff]
      %v256 = vld [vmem:[%s189 + $0x1c0] sm:$0xff]
      %v257 = vld [vmem:[%s189 + $0x1c8] sm:$0xff]
      %v258 = vld [vmem:[%s189 + $0x1d0] sm:$0xff]
      %v259 = vld [vmem:[%s189 + $0x1d8] sm:$0xff]
      %v260 = vld [vmem:[%s189 + $0x1e0] sm:$0xff]
      %v261 = vld [vmem:[%s189 + $0x1e8] sm:$0xff]
      %v262 = vld [vmem:[%s189 + $0x1f0] sm:$0xff]
      %v263 = vld [vmem:[%s189 + $0x1f8] sm:$0xff]
      %v264 = vld [vmem:[%s189 + $0x200] sm:$0xff]
      %v265 = vld [vmem:[%s189 + $0x208] sm:$0xff]
      %v266 = vld [vmem:[%s189 + $0x210] sm:$0xff]
      %v267 = vld [vmem:[%s189 + $0x218] sm:$0xff]
      %v268 = vld [vmem:[%s189 + $0x220] sm:$0xff]
      %v269 = vld [vmem:[%s189 + $0x228] sm:$0xff]
      %v270 = vld [vmem:[%s189 + $0x230] sm:$0xff]
      %v271 = vld [vmem:[%s189 + $0x238] sm:$0xff]
      %v272 = vld [vmem:[%s189 + $0x240] sm:$0xff]
      %v273 = vld [vmem:[%s189 + $0x248] sm:$0xff]
      %v274 = vld [vmem:[%s189 + $0x250] sm:$0xff]
      %v275 = vld [vmem:[%s189 + $0x258] sm:$0xff]
      %v276 = vld [vmem:[%s189 + $0x260] sm:$0xff]
      %v277 = vld [vmem:[%s189 + $0x268] sm:$0xff]
      %v278 = vld [vmem:[%s189 + $0x270] sm:$0xff]
      %v279 = vld [vmem:[%s189 + $0x278] sm:$0xff]
      %v280 = vld [vmem:[%s189 + $0x280] sm:$0xff]
      %v281 = vld [vmem:[%s189 + $0x288] sm:$0xff]
      %v282 = vld [vmem:[%s189 + $0x290] sm:$0xff]
      %v283 = vld [vmem:[%s189 + $0x298] sm:$0xff]
      %v284 = vld [vmem:[%s189 + $0x2a0] sm:$0xff]
      %v285 = vld [vmem:[%s189 + $0x2a8] sm:$0xff]
      %v286 = vld [vmem:[%s189 + $0x2b0] sm:$0xff]
      %v287 = vld [vmem:[%s189 + $0x2b8] sm:$0xff]
      %v288 = vld [vmem:[%s189 + $0x2c0] sm:$0xff]
      %v289 = vld [vmem:[%s189 + $0x2c8] sm:$0xff]
      %v290 = vld [vmem:[%s189 + $0x2d0] sm:$0xff]
      %v291 = vld [vmem:[%s189 + $0x2d8] sm:$0xff]
      %v292 = vld [vmem:[%s189 + $0x2e0] sm:$0xff]
      %v293 = vld [vmem:[%s189 + $0x2e8] sm:$0xff]
      %v294 = vld [vmem:[%s189 + $0x2f0] sm:$0xff]
      %v295 = vld [vmem:[%s189 + $0x2f8] sm:$0xff]
      %v296 = vld [vmem:[%s189 + $0x300] sm:$0xff]
      %v297 = vld [vmem:[%s189 + $0x308] sm:$0xff]
      %v298 = vld [vmem:[%s189 + $0x310] sm:$0xff]
      %v299 = vld [vmem:[%s189 + $0x318] sm:$0xff]
      %v300 = vld [vmem:[%s189 + $0x320] sm:$0xff]
      %v301 = vld [vmem:[%s189 + $0x328] sm:$0xff]
      %v302 = vld [vmem:[%s189 + $0x330] sm:$0xff]
      %v303 = vld [vmem:[%s189 + $0x338] sm:$0xff]
      %v304 = vld [vmem:[%s189 + $0x340] sm:$0xff]
      %v305 = vld [vmem:[%s189 + $0x348] sm:$0xff]
      %v306 = vld [vmem:[%s189 + $0x350] sm:$0xff]
      %v307 = vld [vmem:[%s189 + $0x358] sm:$0xff]
      %v308 = vld [vmem:[%s189 + $0x360] sm:$0xff]
      %v309 = vld [vmem:[%s189 + $0x368] sm:$0xff]
      %v310 = vld [vmem:[%s189 + $0x370] sm:$0xff]
      %v311 = vld [vmem:[%s189 + $0x378] sm:$0xff]
      %312 = vst [vmem:[#allocation2] sm:$0xff] %v200
      %313 = vst [vmem:[#allocation2 + $0x8] sm:$0xff] %v201
      %314 = vst [vmem:[#allocation2 + $0x10] sm:$0xff] %v202
      %315 = vst [vmem:[#allocation2 + $0x18] sm:$0xff] %v203
      %316 = vst [vmem:[#allocation2 + $0x20] sm:$0xff] %v204
      %317 = vst [vmem:[#allocation2 + $0x28] sm:$0xff] %v205
      %318 = vst [vmem:[#allocation2 + $0x30] sm:$0xff] %v206
      %319 = vst [vmem:[#allocation2 + $0x38] sm:$0xff] %v207
      %320 = vst [vmem:[#allocation2 + $0x40] sm:$0xff] %v208
      %321 = vst [vmem:[#allocation2 + $0x48] sm:$0xff] %v209
      %322 = vst [vmem:[#allocation2 + $0x50] sm:$0xff] %v210
      %323 = vst [vmem:[#allocation2 + $0x58] sm:$0xff] %v211
      %324 = vst [vmem:[#allocation2 + $0x60] sm:$0xff] %v212
      %325 = vst [vmem:[#allocation2 + $0x68] sm:$0xff] %v213
      %326 = vst [vmem:[#allocation2 + $0x70] sm:$0xff] %v214
      %327 = vst [vmem:[#allocation2 + $0x78] sm:$0xff] %v215
      %328 = vst [vmem:[#allocation2 + $0x80] sm:$0xff] %v216
      %329 = vst [vmem:[#allocation2 + $0x88] sm:$0xff] %v217
      %330 = vst [vmem:[#allocation2 + $0x90] sm:$0xff] %v218
      %331 = vst [vmem:[#allocation2 + $0x98] sm:$0xff] %v219
      %332 = vst [vmem:[#allocation2 + $0xa0] sm:$0xff] %v220
      %333 = vst [vmem:[#allocation2 + $0xa8] sm:$0xff] %v221
      %334 = vst [vmem:[#allocation2 + $0xb0] sm:$0xff] %v222
      %335 = vst [vmem:[#allocation2 + $0xb8] sm:$0xff] %v223
      %336 = vst [vmem:[#allocation2 + $0xc0] sm:$0xff] %v224
      %337 = vst [vmem:[#allocation2 + $0xc8] sm:$0xff] %v225
      %338 = vst [vmem:[#allocation2 + $0xd0] sm:$0xff] %v226
      %339 = vst [vmem:[#allocation2 + $0xd8] sm:$0xff] %v227
      %340 = vst [vmem:[#allocation2 + $0xe0] sm:$0xff] %v228
      %341 = vst [vmem:[#allocation2 + $0xe8] sm:$0xff] %v229
      %342 = vst [vmem:[#allocation2 + $0xf0] sm:$0xff] %v230
      %343 = vst [vmem:[#allocation2 + $0xf8] sm:$0xff] %v231
      %344 = vst [vmem:[#allocation2 + $0x100] sm:$0xff] %v232
      %345 = vst [vmem:[#allocation2 + $0x108] sm:$0xff] %v233
      %346 = vst [vmem:[#allocation2 + $0x110] sm:$0xff] %v234
      %347 = vst [vmem:[#allocation2 + $0x118] sm:$0xff] %v235
      %348 = vst [vmem:[#allocation2 + $0x120] sm:$0xff] %v236
      %349 = vst [vmem:[#allocation2 + $0x128] sm:$0xff] %v237
      %350 = vst [vmem:[#allocation2 + $0x130] sm:$0xff] %v238
      %351 = vst [vmem:[#allocation2 + $0x138] sm:$0xff] %v239
      %352 = vst [vmem:[#allocation2 + $0x140] sm:$0xff] %v240
      %353 = vst [vmem:[#allocation2 + $0x148] sm:$0xff] %v241
      %354 = vst [vmem:[#allocation2 + $0x150] sm:$0xff] %v242
      %355 = vst [vmem:[#allocation2 + $0x158] sm:$0xff] %v243
      %356 = vst [vmem:[#allocation2 + $0x160] sm:$0xff] %v244
      %357 = vst [vmem:[#allocation2 + $0x168] sm:$0xff] %v245
      %358 = vst [vmem:[#allocation2 + $0x170] sm:$0xff] %v246
      %359 = vst [vmem:[#allocation2 + $0x178] sm:$0xff] %v247
      %360 = vst [vmem:[#allocation2 + $0x180] sm:$0xff] %v248
      %361 = vst [vmem:[#allocation2 + $0x188] sm:$0xff] %v249
      %362 = vst [vmem:[#allocation2 + $0x190] sm:$0xff] %v250
      %363 = vst [vmem:[#allocation2 + $0x198] sm:$0xff] %v251
      %364 = vst [vmem:[#allocation2 + $0x1a0] sm:$0xff] %v252
      %365 = vst [vmem:[#allocation2 + $0x1a8] sm:$0xff] %v253
      %366 = vst [vmem:[#allocation2 + $0x1b0] sm:$0xff] %v254
      %367 = vst [vmem:[#allocation2 + $0x1b8] sm:$0xff] %v255
      %368 = vst [vmem:[#allocation2 + $0x1c0] sm:$0xff] %v256
      %369 = vst [vmem:[#allocation2 + $0x1c8] sm:$0xff] %v257
      %370 = vst [vmem:[#allocation2 + $0x1d0] sm:$0xff] %v258
      %371 = vst [vmem:[#allocation2 + $0x1d8] sm:$0xff] %v259
      %372 = vst [vmem:[#allocation2 + $0x1e0] sm:$0xff] %v260
      %373 = vst [vmem:[#allocation2 + $0x1e8] sm:$0xff] %v261
      %374 = vst [vmem:[#allocation2 + $0x1f0] sm:$0xff] %v262
      %375 = vst [vmem:[#allocation2 + $0x1f8] sm:$0xff] %v263
      %376 = vst [vmem:[#allocation2 + $0x200] sm:$0xff] %v264
      %377 = vst [vmem:[#allocation2 + $0x208] sm:$0xff] %v265
      %378 = vst [vmem:[#allocation2 + $0x210] sm:$0xff] %v266
      %379 = vst [vmem:[#allocation2 + $0x218] sm:$0xff] %v267
      %380 = vst [vmem:[#allocation2 + $0x220] sm:$0xff] %v268
      %381 = vst [vmem:[#allocation2 + $0x228] sm:$0xff] %v269
      %382 = vst [vmem:[#allocation2 + $0x230] sm:$0xff] %v270
      %383 = vst [vmem:[#allocation2 + $0x238] sm:$0xff] %v271
      %384 = vst [vmem:[#allocation2 + $0x240] sm:$0xff] %v272
      %385 = vst [vmem:[#allocation2 + $0x248] sm:$0xff] %v273
      %386 = vst [vmem:[#allocation2 + $0x250] sm:$0xff] %v274
      %387 = vst [vmem:[#allocation2 + $0x258] sm:$0xff] %v275
      %388 = vst [vmem:[#allocation2 + $0x260] sm:$0xff] %v276
      %389 = vst [vmem:[#allocation2 + $0x268] sm:$0xff] %v277
      %390 = vst [vmem:[#allocation2 + $0x270] sm:$0xff] %v278
      %391 = vst [vmem:[#allocation2 + $0x278] sm:$0xff] %v279
      %392 = vst [vmem:[#allocation2 + $0x280] sm:$0xff] %v280
      %393 = vst [vmem:[#allocation2 + $0x288] sm:$0xff] %v281
      %394 = vst [vmem:[#allocation2 + $0x290] sm:$0xff] %v282
      %395 = vst [vmem:[#allocation2 + $0x298] sm:$0xff] %v283
      %396 = vst [vmem:[#allocation2 + $0x2a0] sm:$0xff] %v284
      %397 = vst [vmem:[#allocation2 + $0x2a8] sm:$0xff] %v285
      %398 = vst [vmem:[#allocation2 + $0x2b0] sm:$0xff] %v286
      %399 = vst [vmem:[#allocation2 + $0x2b8] sm:$0xff] %v287
      %400 = vst [vmem:[#allocation2 + $0x2c0] sm:$0xff] %v288
      %401 = vst [vmem:[#allocation2 + $0x2c8] sm:$0xff] %v289
      %402 = vst [vmem:[#allocation2 + $0x2d0] sm:$0xff] %v290
      %403 = vst [vmem:[#allocation2 + $0x2d8] sm:$0xff] %v291
      %404 = vst [vmem:[#allocation2 + $0x2e0] sm:$0xff] %v292
      %405 = vst [vmem:[#allocation2 + $0x2e8] sm:$0xff] %v293
      %406 = vst [vmem:[#allocation2 + $0x2f0] sm:$0xff] %v294
      %407 = vst [vmem:[#allocation2 + $0x2f8] sm:$0xff] %v295
      %408 = vst [vmem:[#allocation2 + $0x300] sm:$0xff] %v296
      %409 = vst [vmem:[#allocation2 + $0x308] sm:$0xff] %v297
      %410 = vst [vmem:[#allocation2 + $0x310] sm:$0xff] %v298
      %411 = vst [vmem:[#allocation2 + $0x318] sm:$0xff] %v299
      %412 = vst [vmem:[#allocation2 + $0x320] sm:$0xff] %v300
      %413 = vst [vmem:[#allocation2 + $0x328] sm:$0xff] %v301
      %414 = vst [vmem:[#allocation2 + $0x330] sm:$0xff] %v302
      %415 = vst [vmem:[#allocation2 + $0x338] sm:$0xff] %v303
      %416 = vst [vmem:[#allocation2 + $0x340] sm:$0xff] %v304
      %417 = vst [vmem:[#allocation2 + $0x348] sm:$0xff] %v305
      %418 = vst [vmem:[#allocation2 + $0x350] sm:$0xff] %v306
      %419 = vst [vmem:[#allocation2 + $0x358] sm:$0xff] %v307
      %420 = vst [vmem:[#allocation2 + $0x360] sm:$0xff] %v308
      %421 = vst [vmem:[#allocation2 + $0x368] sm:$0xff] %v309
      %422 = vst [vmem:[#allocation2 + $0x370] sm:$0xff] %v310
      %423 = vst [vmem:[#allocation2 + $0x378] sm:$0xff] %v311
      loop: start=0, step=1, limit=16
      $region33: #{a_call__.2} parent=31 // loop_pre_header
        _
      $region34: #{a_call__.2} parent=31 // loop_header
        %s425 = sphi 0, %s429
        %p426 = scmp.ge.s32.totalorder %s425, 16
      $region35: #{a_call__.2} parent=31 // loop_header_branch
        %428 = sbr.rel (%p426) target = $region39
      $region36: #{a_call__.2} parent=31 // loop_body
        loop: start=0, step=1, limit=40
        $region40: #{a_call__.2} parent=36 // loop_pre_header
          _
        $region41: #{a_call__.2} parent=36 // loop_header
          %s431 = sphi 0, %s435
          %p432 = scmp.ge.s32.totalorder %s431, 40
        $region42: #{a_call__.2} parent=36 // loop_header_branch
          %434 = sbr.rel (%p432) target = $region46
        $region43: #{a_call__.2} parent=36 // loop_body
          %s436 = smul.u32 %s431, 2
          %s437 = sshra.s32 %s436, 7
          %s438 = sand.u32 %s436, 127
          %s439 = sadd.s32 %s437, %s23
          %s440 = smul.u32 %s439, 128
          %s441 = sshra.s32 %s436, 7
          %s442 = sand.u32 %s436, 127
          %s443 = sadd.s32 %s440, %s442
          %s444 = sld [smem:[#allocation4 + %s443]]
          %s445 = scalar_lea.vmem %s1, %s444
          %v446 = vld [vmem:[%s445] sm:$0x1]
          %v447 = vld [vmem:[#allocation2] sm:$0xff]
          %v448 = vld [vmem:[#allocation2 + $0x8] sm:$0xff]
          %v449 = vld [vmem:[#allocation2 + $0x10] sm:$0xff]
          %v450 = vld [vmem:[#allocation2 + $0x18] sm:$0xff]
          %v451 = vld [vmem:[#allocation2 + $0x20] sm:$0xff]
          %v452 = vld [vmem:[#allocation2 + $0x28] sm:$0xff]
          %v453 = vld [vmem:[#allocation2 + $0x30] sm:$0xff]
          %v454 = vld [vmem:[#allocation2 + $0x38] sm:$0xff]
          %v455 = vld [vmem:[#allocation2 + $0x40] sm:$0xff]
          %v456 = vld [vmem:[#allocation2 + $0x48] sm:$0xff]
          %v457 = vld [vmem:[#allocation2 + $0x50] sm:$0xff]
          %v458 = vld [vmem:[#allocation2 + $0x58] sm:$0xff]
          %v459 = vld [vmem:[#allocation2 + $0x60] sm:$0xff]
          %v460 = vld [vmem:[#allocation2 + $0x68] sm:$0xff]
          %v461 = vld [vmem:[#allocation2 + $0x70] sm:$0xff]
          %v462 = vld [vmem:[#allocation2 + $0x78] sm:$0xff]
          %v463 = vld [vmem:[#allocation2 + $0x80] sm:$0xff]
          %v464 = vld [vmem:[#allocation2 + $0x88] sm:$0xff]
          %v465 = vld [vmem:[#allocation2 + $0x90] sm:$0xff]
          %v466 = vld [vmem:[#allocation2 + $0x98] sm:$0xff]
          %v467 = vld [vmem:[#allocation2 + $0xa0] sm:$0xff]
          %v468 = vld [vmem:[#allocation2 + $0xa8] sm:$0xff]
          %v469 = vld [vmem:[#allocation2 + $0xb0] sm:$0xff]
          %v470 = vld [vmem:[#allocation2 + $0xb8] sm:$0xff]
          %v471 = vld [vmem:[#allocation2 + $0xc0] sm:$0xff]
          %v472 = vld [vmem:[#allocation2 + $0xc8] sm:$0xff]
          %v473 = vld [vmem:[#allocation2 + $0xd0] sm:$0xff]
          %v474 = vld [vmem:[#allocation2 + $0xd8] sm:$0xff]
          %v475 = vld [vmem:[#allocation2 + $0xe0] sm:$0xff]
          %v476 = vld [vmem:[#allocation2 + $0xe8] sm:$0xff]
          %v477 = vld [vmem:[#allocation2 + $0xf0] sm:$0xff]
          %v478 = vld [vmem:[#allocation2 + $0xf8] sm:$0xff]
          %v479 = vld [vmem:[#allocation2 + $0x100] sm:$0xff]
          %v480 = vld [vmem:[#allocation2 + $0x108] sm:$0xff]
          %v481 = vld [vmem:[#allocation2 + $0x110] sm:$0xff]
          %v482 = vld [vmem:[#allocation2 + $0x118] sm:$0xff]
          %v483 = vld [vmem:[#allocation2 + $0x120] sm:$0xff]
          %v484 = vld [vmem:[#allocation2 + $0x128] sm:$0xff]
          %v485 = vld [vmem:[#allocation2 + $0x130] sm:$0xff]
          %v486 = vld [vmem:[#allocation2 + $0x138] sm:$0xff]
          %v487 = vld [vmem:[#allocation2 + $0x140] sm:$0xff]
          %v488 = vld [vmem:[#allocation2 + $0x148] sm:$0xff]
          %v489 = vld [vmem:[#allocation2 + $0x150] sm:$0xff]
          %v490 = vld [vmem:[#allocation2 + $0x158] sm:$0xff]
          %v491 = vld [vmem:[#allocation2 + $0x160] sm:$0xff]
          %v492 = vld [vmem:[#allocation2 + $0x168] sm:$0xff]
          %v493 = vld [vmem:[#allocation2 + $0x170] sm:$0xff]
          %v494 = vld [vmem:[#allocation2 + $0x178] sm:$0xff]
          %v495 = vld [vmem:[#allocation2 + $0x180] sm:$0xff]
          %v496 = vld [vmem:[#allocation2 + $0x188] sm:$0xff]
          %v497 = vld [vmem:[#allocation2 + $0x190] sm:$0xff]
          %v498 = vld [vmem:[#allocation2 + $0x198] sm:$0xff]
          %v499 = vld [vmem:[#allocation2 + $0x1a0] sm:$0xff]
          %v500 = vld [vmem:[#allocation2 + $0x1a8] sm:$0xff]
          %v501 = vld [vmem:[#allocation2 + $0x1b0] sm:$0xff]
          %v502 = vld [vmem:[#allocation2 + $0x1b8] sm:$0xff]
          %v503 = vld [vmem:[#allocation2 + $0x1c0] sm:$0xff]
          %v504 = vld [vmem:[#allocation2 + $0x1c8] sm:$0xff]
          %v505 = vld [vmem:[#allocation2 + $0x1d0] sm:$0xff]
          %v506 = vld [vmem:[#allocation2 + $0x1d8] sm:$0xff]
          %v507 = vld [vmem:[#allocation2 + $0x1e0] sm:$0xff]
          %v508 = vld [vmem:[#allocation2 + $0x1e8] sm:$0xff]
          %v509 = vld [vmem:[#allocation2 + $0x1f0] sm:$0xff]
          %v510 = vld [vmem:[#allocation2 + $0x1f8] sm:$0xff]
          %v511 = vld [vmem:[#allocation2 + $0x200] sm:$0xff]
          %v512 = vld [vmem:[#allocation2 + $0x208] sm:$0xff]
          %v513 = vld [vmem:[#allocation2 + $0x210] sm:$0xff]
          %v514 = vld [vmem:[#allocation2 + $0x218] sm:$0xff]
          %v515 = vld [vmem:[#allocation2 + $0x220] sm:$0xff]
          %v516 = vld [vmem:[#allocation2 + $0x228] sm:$0xff]
          %v517 = vld [vmem:[#allocation2 + $0x230] sm:$0xff]
          %v518 = vld [vmem:[#allocation2 + $0x238] sm:$0xff]
          %v519 = vld [vmem:[#allocation2 + $0x240] sm:$0xff]
          %v520 = vld [vmem:[#allocation2 + $0x248] sm:$0xff]
          %v521 = vld [vmem:[#allocation2 + $0x250] sm:$0xff]
          %v522 = vld [vmem:[#allocation2 + $0x258] sm:$0xff]
          %v523 = vld [vmem:[#allocation2 + $0x260] sm:$0xff]
          %v524 = vld [vmem:[#allocation2 + $0x268] sm:$0xff]
          %v525 = vld [vmem:[#allocation2 + $0x270] sm:$0xff]
          %v526 = vld [vmem:[#allocation2 + $0x278] sm:$0xff]
          %v527 = vld [vmem:[#allocation2 + $0x280] sm:$0xff]
          %v528 = vld [vmem:[#allocation2 + $0x288] sm:$0xff]
          %v529 = vld [vmem:[#allocation2 + $0x290] sm:$0xff]
          %v530 = vld [vmem:[#allocation2 + $0x298] sm:$0xff]
          %v531 = vld [vmem:[#allocation2 + $0x2a0] sm:$0xff]
          %v532 = vld [vmem:[#allocation2 + $0x2a8] sm:$0xff]
          %v533 = vld [vmem:[#allocation2 + $0x2b0] sm:$0xff]
          %v534 = vld [vmem:[#allocation2 + $0x2b8] sm:$0xff]
          %v535 = vld [vmem:[#allocation2 + $0x2c0] sm:$0xff]
          %v536 = vld [vmem:[#allocation2 + $0x2c8] sm:$0xff]
          %v537 = vld [vmem:[#allocation2 + $0x2d0] sm:$0xff]
          %v538 = vld [vmem:[#allocation2 + $0x2d8] sm:$0xff]
          %v539 = vld [vmem:[#allocation2 + $0x2e0] sm:$0xff]
          %v540 = vld [vmem:[#allocation2 + $0x2e8] sm:$0xff]
          %v541 = vld [vmem:[#allocation2 + $0x2f0] sm:$0xff]
          %v542 = vld [vmem:[#allocation2 + $0x2f8] sm:$0xff]
          %v543 = vld [vmem:[#allocation2 + $0x300] sm:$0xff]
          %v544 = vld [vmem:[#allocation2 + $0x308] sm:$0xff]
          %v545 = vld [vmem:[#allocation2 + $0x310] sm:$0xff]
          %v546 = vld [vmem:[#allocation2 + $0x318] sm:$0xff]
          %v547 = vld [vmem:[#allocation2 + $0x320] sm:$0xff]
          %v548 = vld [vmem:[#allocation2 + $0x328] sm:$0xff]
          %v549 = vld [vmem:[#allocation2 + $0x330] sm:$0xff]
          %v550 = vld [vmem:[#allocation2 + $0x338] sm:$0xff]
          %v551 = vld [vmem:[#allocation2 + $0x340] sm:$0xff]
          %v552 = vld [vmem:[#allocation2 + $0x348] sm:$0xff]
          %v553 = vld [vmem:[#allocation2 + $0x350] sm:$0xff]
          %v554 = vld [vmem:[#allocation2 + $0x358] sm:$0xff]
          %v555 = vld [vmem:[#allocation2 + $0x360] sm:$0xff]
          %v556 = vld [vmem:[#allocation2 + $0x368] sm:$0xff]
          %v557 = vld [vmem:[#allocation2 + $0x370] sm:$0xff]
          %v558 = vld [vmem:[#allocation2 + $0x378] sm:$0xff]
          %vm559 = vcmask 916480
          %v561 = vsel %vm559, %v446, 0
          %563 = vmatpush.msra.mxu0 0.0
          %564 = vmatpush.msra.mxu0 0.0
          %565 = vmatpush.msra.mxu0 %v551
          %566 = vmatpush.msra.mxu0 %v543
          %567 = vmatpush.msra.mxu0 %v535
          %568 = vmatpush.msra.mxu0 %v527
          %569 = vmatpush.msra.mxu0 %v519
          %570 = vmatpush.msra.mxu0 %v511
          %571 = vmatpush.msra.mxu0 %v503
          %572 = vmatpush.msra.mxu0 %v495
          %573 = vmatpush.msra.mxu0 %v487
          %574 = vmatpush.msra.mxu0 %v479
          %575 = vmatpush.msra.mxu0 %v471
          %576 = vmatpush.msra.mxu0 %v463
          %577 = vmatpush.msra.mxu0 %v455
          %578 = vmatpush.msra.mxu0 %v447
          %579 = vmatmul.f32.gmra.mxu0 %v561
          %v580 = vpop.f32.mrf.mxu0
          %v581 = vadd.f32 0.0, %v580
          %582 = vdwg.mxu0
          %583 = vmatpush.msra.mxu0 0.0
          %584 = vmatpush.msra.mxu0 0.0
          %585 = vmatpush.msra.mxu0 %v552
          %586 = vmatpush.msra.mxu0 %v544
          %587 = vmatpush.msra.mxu0 %v536
          %588 = vmatpush.msra.mxu0 %v528
          %589 = vmatpush.msra.mxu0 %v520
          %590 = vmatpush.msra.mxu0 %v512
          %591 = vmatpush.msra.mxu0 %v504
          %592 = vmatpush.msra.mxu0 %v496
          %593 = vmatpush.msra.mxu0 %v488
          %594 = vmatpush.msra.mxu0 %v480
          %595 = vmatpush.msra.mxu0 %v472
          %596 = vmatpush.msra.mxu0 %v464
          %597 = vmatpush.msra.mxu0 %v456
          %598 = vmatpush.msra.mxu0 %v448
          %599 = vmatmul.f32.gmra.mxu0 %v561
          %v600 = vpop.f32.mrf.mxu0
          %v601 = vadd.f32 0.0, %v600
          %602 = vdwg.mxu0
          %603 = vmatpush.msra.mxu0 0.0
          %604 = vmatpush.msra.mxu0 0.0
          %605 = vmatpush.msra.mxu0 %v553
          %606 = vmatpush.msra.mxu0 %v545
          %607 = vmatpush.msra.mxu0 %v537
          %608 = vmatpush.msra.mxu0 %v529
          %609 = vmatpush.msra.mxu0 %v521
          %610 = vmatpush.msra.mxu0 %v513
          %611 = vmatpush.msra.mxu0 %v505
          %612 = vmatpush.msra.mxu0 %v497
          %613 = vmatpush.msra.mxu0 %v489
          %614 = vmatpush.msra.mxu0 %v481
          %615 = vmatpush.msra.mxu0 %v473
          %616 = vmatpush.msra.mxu0 %v465
          %617 = vmatpush.msra.mxu0 %v457
          %618 = vmatpush.msra.mxu0 %v449
          %619 = vmatmul.f32.gmra.mxu0 %v561
          %v620 = vpop.f32.mrf.mxu0
          %v621 = vadd.f32 0.0, %v620
          %622 = vdwg.mxu0
          %623 = vmatpush.msra.mxu0 0.0
          %624 = vmatpush.msra.mxu0 0.0
          %625 = vmatpush.msra.mxu0 %v554
          %626 = vmatpush.msra.mxu0 %v546
          %627 = vmatpush.msra.mxu0 %v538
          %628 = vmatpush.msra.mxu0 %v530
          %629 = vmatpush.msra.mxu0 %v522
          %630 = vmatpush.msra.mxu0 %v514
          %631 = vmatpush.msra.mxu0 %v506
          %632 = vmatpush.msra.mxu0 %v498
          %633 = vmatpush.msra.mxu0 %v490
          %634 = vmatpush.msra.mxu0 %v482
          %635 = vmatpush.msra.mxu0 %v474
          %636 = vmatpush.msra.mxu0 %v466
          %637 = vmatpush.msra.mxu0 %v458
          %638 = vmatpush.msra.mxu0 %v450
          %639 = vmatmul.f32.gmra.mxu0 %v561
          %v640 = vpop.f32.mrf.mxu0
          %v641 = vadd.f32 0.0, %v640
          %642 = vdwg.mxu0
          %643 = vmatpush.msra.mxu0 0.0
          %644 = vmatpush.msra.mxu0 0.0
          %645 = vmatpush.msra.mxu0 %v555
          %646 = vmatpush.msra.mxu0 %v547
          %647 = vmatpush.msra.mxu0 %v539
          %648 = vmatpush.msra.mxu0 %v531
          %649 = vmatpush.msra.mxu0 %v523
          %650 = vmatpush.msra.mxu0 %v515
          %651 = vmatpush.msra.mxu0 %v507
          %652 = vmatpush.msra.mxu0 %v499
          %653 = vmatpush.msra.mxu0 %v491
          %654 = vmatpush.msra.mxu0 %v483
          %655 = vmatpush.msra.mxu0 %v475
          %656 = vmatpush.msra.mxu0 %v467
          %657 = vmatpush.msra.mxu0 %v459
          %658 = vmatpush.msra.mxu0 %v451
          %659 = vmatmul.f32.gmra.mxu0 %v561
          %v660 = vpop.f32.mrf.mxu0
          %v661 = vadd.f32 0.0, %v660
          %662 = vdwg.mxu0
          %663 = vmatpush.msra.mxu0 0.0
          %664 = vmatpush.msra.mxu0 0.0
          %665 = vmatpush.msra.mxu0 %v556
          %666 = vmatpush.msra.mxu0 %v548
          %667 = vmatpush.msra.mxu0 %v540
          %668 = vmatpush.msra.mxu0 %v532
          %669 = vmatpush.msra.mxu0 %v524
          %670 = vmatpush.msra.mxu0 %v516
          %671 = vmatpush.msra.mxu0 %v508
          %672 = vmatpush.msra.mxu0 %v500
          %673 = vmatpush.msra.mxu0 %v492
          %674 = vmatpush.msra.mxu0 %v484
          %675 = vmatpush.msra.mxu0 %v476
          %676 = vmatpush.msra.mxu0 %v468
          %677 = vmatpush.msra.mxu0 %v460
          %678 = vmatpush.msra.mxu0 %v452
          %679 = vmatmul.f32.gmra.mxu0 %v561
          %v680 = vpop.f32.mrf.mxu0
          %v681 = vadd.f32 0.0, %v680
          %682 = vdwg.mxu0
          %683 = vmatpush.msra.mxu0 0.0
          %684 = vmatpush.msra.mxu0 0.0
          %685 = vmatpush.msra.mxu0 %v557
          %686 = vmatpush.msra.mxu0 %v549
          %687 = vmatpush.msra.mxu0 %v541
          %688 = vmatpush.msra.mxu0 %v533
          %689 = vmatpush.msra.mxu0 %v525
          %690 = vmatpush.msra.mxu0 %v517
          %691 = vmatpush.msra.mxu0 %v509
          %692 = vmatpush.msra.mxu0 %v501
          %693 = vmatpush.msra.mxu0 %v493
          %694 = vmatpush.msra.mxu0 %v485
          %695 = vmatpush.msra.mxu0 %v477
          %696 = vmatpush.msra.mxu0 %v469
          %697 = vmatpush.msra.mxu0 %v461
          %698 = vmatpush.msra.mxu0 %v453
          %699 = vmatmul.f32.gmra.mxu0 %v561
          %v700 = vpop.f32.mrf.mxu0
          %v701 = vadd.f32 0.0, %v700
          %702 = vdwg.mxu0
          %703 = vmatpush.msra.mxu0 0.0
          %704 = vmatpush.msra.mxu0 0.0
          %705 = vmatpush.msra.mxu0 %v558
          %706 = vmatpush.msra.mxu0 %v550
          %707 = vmatpush.msra.mxu0 %v542
          %708 = vmatpush.msra.mxu0 %v534
          %709 = vmatpush.msra.mxu0 %v526
          %710 = vmatpush.msra.mxu0 %v518
          %711 = vmatpush.msra.mxu0 %v510
          %712 = vmatpush.msra.mxu0 %v502
          %713 = vmatpush.msra.mxu0 %v494
          %714 = vmatpush.msra.mxu0 %v486
          %715 = vmatpush.msra.mxu0 %v478
          %716 = vmatpush.msra.mxu0 %v470
          %717 = vmatpush.msra.mxu0 %v462
          %718 = vmatpush.msra.mxu0 %v454
          %719 = vmatmul.f32.gmra.mxu0 %v561
          %v720 = vpop.f32.mrf.mxu0
          %v721 = vadd.f32 0.0, %v720
          %722 = vdwg.mxu0
          %s723 = sshra.s32 %s444, 3
          %s724 = sand.u32 %s444, 7
          %s725 = sshra.s32 %s444, 3
          %s726 = sand.u32 %s444, 7
          %s727 = smul.u32 %s723, 8
          %s728 = smul.u32 %s727, 8
          %s729 = sadd.s32 %s728, %s726
          %s730 = scalar_lea.vmem [#allocation2], %s729
          %v731 = vld [vmem:[%s730] ss:$8 sm:$0xf]
          %v732 = vld [vmem:[%s730] ss:$8 sm:$0xf0]
          %v733 = vor.u32 %v731, %v732
          %s734 = scalar_lea.vmem %s194, %s729
          %v735 = vld [vmem:[%s734] ss:$8 sm:$0xf]
          %v736 = vld [vmem:[%s734] ss:$8 sm:$0xf0]
          %v737 = vor.u32 %v735, %v736
          %v738 = vmul.f32 %v581, %v581
          %vm739 = vcmask 1040384
          %v740 = vsel %vm739, %v738, 0.0
          %741 = vadd.xlane.f32.xlu0 %v740
          %v742 = vpop.xlane.xlu0 %741
          %vm743 = vcmp.gt.f32.partialorder %v742, 1e-12
          %v744 = vsel %vm743, 1, 0
          %v745 = vcvt.s32.f32 %v744
          %v746 = vadd.f32 %v742, 1e-30
          %v747 = vrsqrt.pop %v746
          %v748 = vmul.f32 %v747, %v746
          %v749 = vmul.f32 %v748, %v747
          %v750 = vmul.f32 0.5, %v749
          %v751 = vsub.f32 1.5, %v750
          %v752 = vmul.f32 %v747, %v751
          %vm753 = vweird.f32 %v746
          %vm754 = vweird.f32 %v747
          %vm755 = vmor %vm753, %vm754
          %v756 = vsel %vm755, %v747, %v752
          %v757 = vmul.f32 %v745, %v756
          %v758 = vsub.f32 1.0, %v745
          %v759 = vmul.f32 %v758, %v733
          %v760 = vmul.f32 %v757, %v581
          %v761 = vsub.f32 %v759, %v760
          %v762 = vmul.f32 %v601, %v601
          %v763 = vsel %vm739, %v762, 0.0
          %764 = vadd.xlane.f32.xlu0 %v763
          %v765 = vpop.xlane.xlu0 %764
          %vm766 = vcmp.gt.f32.partialorder %v765, 1e-12
          %v767 = vsel %vm766, 1, 0
          %v768 = vcvt.s32.f32 %v767
          %v769 = vadd.f32 %v765, 1e-30
          %v770 = vrsqrt.pop %v769
          %v771 = vmul.f32 %v770, %v769
          %v772 = vmul.f32 %v771, %v770
          %v773 = vmul.f32 0.5, %v772
          %v774 = vsub.f32 1.5, %v773
          %v775 = vmul.f32 %v770, %v774
          %vm776 = vweird.f32 %v769
          %vm777 = vweird.f32 %v770
          %vm778 = vmor %vm776, %vm777
          %v779 = vsel %vm778, %v770, %v775
          %v780 = vmul.f32 %v768, %v779
          %v781 = vsub.f32 1.0, %v768
          %v783 = vperm.slane %v733, 1
          %v785 = vmul.f32 %v781, %v783
          %v786 = vmul.f32 %v780, %v601
          %v787 = vsub.f32 %v785, %v786
          %v788 = vmul.f32 %v621, %v621
          %v789 = vsel %vm739, %v788, 0.0
          %790 = vadd.xlane.f32.xlu0 %v789
          %v791 = vpop.xlane.xlu0 %790
          %vm792 = vcmp.gt.f32.partialorder %v791, 1e-12
          %v793 = vsel %vm792, 1, 0
          %v794 = vcvt.s32.f32 %v793
          %v795 = vadd.f32 %v791, 1e-30
          %v796 = vrsqrt.pop %v795
          %v797 = vmul.f32 %v796, %v795
          %v798 = vmul.f32 %v797, %v796
          %v799 = vmul.f32 0.5, %v798
          %v800 = vsub.f32 1.5, %v799
          %v801 = vmul.f32 %v796, %v800
          %vm802 = vweird.f32 %v795
          %vm803 = vweird.f32 %v796
          %vm804 = vmor %vm802, %vm803
          %v805 = vsel %vm804, %v796, %v801
          %v806 = vmul.f32 %v794, %v805
          %v807 = vsub.f32 1.0, %v794
          %v808 = vperm.slane %v733, 2
          %v810 = vmul.f32 %v807, %v808
          %v811 = vmul.f32 %v806, %v621
          %v812 = vsub.f32 %v810, %v811
          %v813 = vmul.f32 %v641, %v641
          %v814 = vsel %vm739, %v813, 0.0
          %815 = vadd.xlane.f32.xlu0 %v814
          %v816 = vpop.xlane.xlu0 %815
          %vm817 = vcmp.gt.f32.partialorder %v816, 1e-12
          %v818 = vsel %vm817, 1, 0
          %v819 = vcvt.s32.f32 %v818
          %v820 = vadd.f32 %v816, 1e-30
          %v821 = vrsqrt.pop %v820
          %v822 = vmul.f32 %v821, %v820
          %v823 = vmul.f32 %v822, %v821
          %v824 = vmul.f32 0.5, %v823
          %v825 = vsub.f32 1.5, %v824
          %v826 = vmul.f32 %v821, %v825
          %vm827 = vweird.f32 %v820
          %vm828 = vweird.f32 %v821
          %vm829 = vmor %vm827, %vm828
          %v830 = vsel %vm829, %v821, %v826
          %v831 = vmul.f32 %v819, %v830
          %v832 = vsub.f32 1.0, %v819
          %v833 = vperm.slane %v733, 3
          %v835 = vmul.f32 %v832, %v833
          %v836 = vmul.f32 %v831, %v641
          %v837 = vsub.f32 %v835, %v836
          %v838 = vmul.f32 %v661, %v661
          %v839 = vsel %vm739, %v838, 0.0
          %840 = vadd.xlane.f32.xlu0 %v839
          %v841 = vpop.xlane.xlu0 %840
          %vm842 = vcmp.gt.f32.partialorder %v841, 1e-12
          %v843 = vsel %vm842, 1, 0
          %v844 = vcvt.s32.f32 %v843
          %v845 = vadd.f32 %v841, 1e-30
          %v846 = vrsqrt.pop %v845
          %v847 = vmul.f32 %v846, %v845
          %v848 = vmul.f32 %v847, %v846
          %v849 = vmul.f32 0.5, %v848
          %v850 = vsub.f32 1.5, %v849
          %v851 = vmul.f32 %v846, %v850
          %vm852 = vweird.f32 %v845
          %vm853 = vweird.f32 %v846
          %vm854 = vmor %vm852, %vm853
          %v855 = vsel %vm854, %v846, %v851
          %v856 = vmul.f32 %v844, %v855
          %v857 = vsub.f32 1.0, %v844
          %v858 = vperm.slane %v733, 4
          %v860 = vmul.f32 %v857, %v858
          %v861 = vmul.f32 %v856, %v661
          %v862 = vsub.f32 %v860, %v861
          %v863 = vmul.f32 %v681, %v681
          %v864 = vsel %vm739, %v863, 0.0
          %865 = vadd.xlane.f32.xlu0 %v864
          %v866 = vpop.xlane.xlu0 %865
          %vm867 = vcmp.gt.f32.partialorder %v866, 1e-12
          %v868 = vsel %vm867, 1, 0
          %v869 = vcvt.s32.f32 %v868
          %v870 = vadd.f32 %v866, 1e-30
          %v871 = vrsqrt.pop %v870
          %v872 = vmul.f32 %v871, %v870
          %v873 = vmul.f32 %v872, %v871
          %v874 = vmul.f32 0.5, %v873
          %v875 = vsub.f32 1.5, %v874
          %v876 = vmul.f32 %v871, %v875
          %vm877 = vweird.f32 %v870
          %vm878 = vweird.f32 %v871
          %vm879 = vmor %vm877, %vm878
          %v880 = vsel %vm879, %v871, %v876
          %v881 = vmul.f32 %v869, %v880
          %v882 = vsub.f32 1.0, %v869
          %v883 = vperm.slane %v733, 5
          %v885 = vmul.f32 %v882, %v883
          %v886 = vmul.f32 %v881, %v681
          %v887 = vsub.f32 %v885, %v886
          %v888 = vmul.f32 %v701, %v701
          %v889 = vsel %vm739, %v888, 0.0
          %890 = vadd.xlane.f32.xlu0 %v889
          %v891 = vpop.xlane.xlu0 %890
          %vm892 = vcmp.gt.f32.partialorder %v891, 1e-12
          %v893 = vsel %vm892, 1, 0
          %v894 = vcvt.s32.f32 %v893
          %v895 = vadd.f32 %v891, 1e-30
          %v896 = vrsqrt.pop %v895
          %v897 = vmul.f32 %v896, %v895
          %v898 = vmul.f32 %v897, %v896
          %v899 = vmul.f32 0.5, %v898
          %v900 = vsub.f32 1.5, %v899
          %v901 = vmul.f32 %v896, %v900
          %vm902 = vweird.f32 %v895
          %vm903 = vweird.f32 %v896
          %vm904 = vmor %vm902, %vm903
          %v905 = vsel %vm904, %v896, %v901
          %v906 = vmul.f32 %v894, %v905
          %v907 = vsub.f32 1.0, %v894
          %v908 = vperm.slane %v733, 6
          %v910 = vmul.f32 %v907, %v908
          %v911 = vmul.f32 %v906, %v701
          %v912 = vsub.f32 %v910, %v911
          %v913 = vmul.f32 %v721, %v721
          %v914 = vsel %vm739, %v913, 0.0
          %915 = vadd.xlane.f32.xlu0 %v914
          %v916 = vpop.xlane.xlu0 %915
          %vm917 = vcmp.gt.f32.partialorder %v916, 1e-12
          %v918 = vsel %vm917, 1, 0
          %v919 = vcvt.s32.f32 %v918
          %v920 = vadd.f32 %v916, 1e-30
          %v921 = vrsqrt.pop %v920
          %v922 = vmul.f32 %v921, %v920
          %v923 = vmul.f32 %v922, %v921
          %v924 = vmul.f32 0.5, %v923
          %v925 = vsub.f32 1.5, %v924
          %v926 = vmul.f32 %v921, %v925
          %vm927 = vweird.f32 %v920
          %vm928 = vweird.f32 %v921
          %vm929 = vmor %vm927, %vm928
          %v930 = vsel %vm929, %v921, %v926
          %v931 = vmul.f32 %v919, %v930
          %v932 = vsub.f32 1.0, %v919
          %v933 = vperm.slane %v733, 7
          %v935 = vmul.f32 %v932, %v933
          %v936 = vmul.f32 %v931, %v721
          %v937 = vsub.f32 %v935, %v936
          %v938 = vperm.slane %v733, 0
          %v940 = vsub.f32 %v761, %v938
          %v941 = vsub.f32 %v787, %v783
          %v942 = vsub.f32 %v812, %v808
          %v943 = vsub.f32 %v837, %v833
          %v944 = vsub.f32 %v862, %v858
          %v945 = vsub.f32 %v887, %v883
          %v946 = vsub.f32 %v912, %v908
          %v947 = vsub.f32 %v937, %v933
          %v956 = vrot.slane %v941, 7
          %v957 = vrot.slane %v942, 6
          %v958 = vrot.slane %v943, 5
          %v959 = vrot.slane %v944, 4
          %v960 = vrot.slane %v945, 3
          %v961 = vrot.slane %v946, 2
          %v962 = vrot.slane %v947, 1
          %v963 = vsel %vm739, %v940, %v956
          %vm964 = vcmask 1042434
          %v965 = vsel %vm964, %v957, %v958
          %vm966 = vcmask 1041408
          %v967 = vsel %vm966, %v963, %v965
          %vm968 = vcmask 1044484
          %v969 = vsel %vm968, %v959, %v960
          %vm970 = vcmask 1046534
          %v971 = vsel %vm970, %v961, %v962
          %vm972 = vcmask 1045508
          %v973 = vsel %vm972, %v969, %v971
          %vm974 = vcmask 1043456
          %v975 = vsel %vm974, %v967, %v973
          %v977 = vmul.f32 %v737, %v975
          %v978 = vadd.f32 %v733, %v977
          %979 = vst [vmem:[%s730] ss:$8 sm:$0xf] %v978
          %980 = vst [vmem:[%s730] ss:$8 sm:$0xf0] %v978
          %s981 = sadd.s32 %s436, 1
          %s982 = sshra.s32 %s981, 7
          %s983 = sand.u32 %s981, 127
          %s984 = sadd.s32 %s982, %s23
          %s985 = smul.u32 %s984, 128
          %s986 = sshra.s32 %s981, 7
          %s987 = sand.u32 %s981, 127
          %s988 = sadd.s32 %s985, %s987
          %s989 = sld [smem:[#allocation4 + %s988]]
          %s990 = scalar_lea.vmem %s1, %s989
          %v991 = vld [vmem:[%s990] sm:$0x1]
          %v992 = vld [vmem:[#allocation2] sm:$0xff]
          %v993 = vld [vmem:[#allocation2 + $0x8] sm:$0xff]
          %v994 = vld [vmem:[#allocation2 + $0x10] sm:$0xff]
          %v995 = vld [vmem:[#allocation2 + $0x18] sm:$0xff]
          %v996 = vld [vmem:[#allocation2 + $0x20] sm:$0xff]
          %v997 = vld [vmem:[#allocation2 + $0x28] sm:$0xff]
          %v998 = vld [vmem:[#allocation2 + $0x30] sm:$0xff]
          %v999 = vld [vmem:[#allocation2 + $0x38] sm:$0xff]
          %v1000 = vld [vmem:[#allocation2 + $0x40] sm:$0xff]
          %v1001 = vld [vmem:[#allocation2 + $0x48] sm:$0xff]
          %v1002 = vld [vmem:[#allocation2 + $0x50] sm:$0xff]
          %v1003 = vld [vmem:[#allocation2 + $0x58] sm:$0xff]
          %v1004 = vld [vmem:[#allocation2 + $0x60] sm:$0xff]
          %v1005 = vld [vmem:[#allocation2 + $0x68] sm:$0xff]
          %v1006 = vld [vmem:[#allocation2 + $0x70] sm:$0xff]
          %v1007 = vld [vmem:[#allocation2 + $0x78] sm:$0xff]
          %v1008 = vld [vmem:[#allocation2 + $0x80] sm:$0xff]
          %v1009 = vld [vmem:[#allocation2 + $0x88] sm:$0xff]
          %v1010 = vld [vmem:[#allocation2 + $0x90] sm:$0xff]
          %v1011 = vld [vmem:[#allocation2 + $0x98] sm:$0xff]
          %v1012 = vld [vmem:[#allocation2 + $0xa0] sm:$0xff]
          %v1013 = vld [vmem:[#allocation2 + $0xa8] sm:$0xff]
          %v1014 = vld [vmem:[#allocation2 + $0xb0] sm:$0xff]
          %v1015 = vld [vmem:[#allocation2 + $0xb8] sm:$0xff]
          %v1016 = vld [vmem:[#allocation2 + $0xc0] sm:$0xff]
          %v1017 = vld [vmem:[#allocation2 + $0xc8] sm:$0xff]
          %v1018 = vld [vmem:[#allocation2 + $0xd0] sm:$0xff]
          %v1019 = vld [vmem:[#allocation2 + $0xd8] sm:$0xff]
          %v1020 = vld [vmem:[#allocation2 + $0xe0] sm:$0xff]
          %v1021 = vld [vmem:[#allocation2 + $0xe8] sm:$0xff]
          %v1022 = vld [vmem:[#allocation2 + $0xf0] sm:$0xff]
          %v1023 = vld [vmem:[#allocation2 + $0xf8] sm:$0xff]
          %v1024 = vld [vmem:[#allocation2 + $0x100] sm:$0xff]
          %v1025 = vld [vmem:[#allocation2 + $0x108] sm:$0xff]
          %v1026 = vld [vmem:[#allocation2 + $0x110] sm:$0xff]
          %v1027 = vld [vmem:[#allocation2 + $0x118] sm:$0xff]
          %v1028 = vld [vmem:[#allocation2 + $0x120] sm:$0xff]
          %v1029 = vld [vmem:[#allocation2 + $0x128] sm:$0xff]
          %v1030 = vld [vmem:[#allocation2 + $0x130] sm:$0xff]
          %v1031 = vld [vmem:[#allocation2 + $0x138] sm:$0xff]
          %v1032 = vld [vmem:[#allocation2 + $0x140] sm:$0xff]
          %v1033 = vld [vmem:[#allocation2 + $0x148] sm:$0xff]
          %v1034 = vld [vmem:[#allocation2 + $0x150] sm:$0xff]
          %v1035 = vld [vmem:[#allocation2 + $0x158] sm:$0xff]
          %v1036 = vld [vmem:[#allocation2 + $0x160] sm:$0xff]
          %v1037 = vld [vmem:[#allocation2 + $0x168] sm:$0xff]
          %v1038 = vld [vmem:[#allocation2 + $0x170] sm:$0xff]
          %v1039 = vld [vmem:[#allocation2 + $0x178] sm:$0xff]
          %v1040 = vld [vmem:[#allocation2 + $0x180] sm:$0xff]
          %v1041 = vld [vmem:[#allocation2 + $0x188] sm:$0xff]
          %v1042 = vld [vmem:[#allocation2 + $0x190] sm:$0xff]
          %v1043 = vld [vmem:[#allocation2 + $0x198] sm:$0xff]
          %v1044 = vld [vmem:[#allocation2 + $0x1a0] sm:$0xff]
          %v1045 = vld [vmem:[#allocation2 + $0x1a8] sm:$0xff]
          %v1046 = vld [vmem:[#allocation2 + $0x1b0] sm:$0xff]
          %v1047 = vld [vmem:[#allocation2 + $0x1b8] sm:$0xff]
          %v1048 = vld [vmem:[#allocation2 + $0x1c0] sm:$0xff]
          %v1049 = vld [vmem:[#allocation2 + $0x1c8] sm:$0xff]
          %v1050 = vld [vmem:[#allocation2 + $0x1d0] sm:$0xff]
          %v1051 = vld [vmem:[#allocation2 + $0x1d8] sm:$0xff]
          %v1052 = vld [vmem:[#allocation2 + $0x1e0] sm:$0xff]
          %v1053 = vld [vmem:[#allocation2 + $0x1e8] sm:$0xff]
          %v1054 = vld [vmem:[#allocation2 + $0x1f0] sm:$0xff]
          %v1055 = vld [vmem:[#allocation2 + $0x1f8] sm:$0xff]
          %v1056 = vld [vmem:[#allocation2 + $0x200] sm:$0xff]
          %v1057 = vld [vmem:[#allocation2 + $0x208] sm:$0xff]
          %v1058 = vld [vmem:[#allocation2 + $0x210] sm:$0xff]
          %v1059 = vld [vmem:[#allocation2 + $0x218] sm:$0xff]
          %v1060 = vld [vmem:[#allocation2 + $0x220] sm:$0xff]
          %v1061 = vld [vmem:[#allocation2 + $0x228] sm:$0xff]
          %v1062 = vld [vmem:[#allocation2 + $0x230] sm:$0xff]
          %v1063 = vld [vmem:[#allocation2 + $0x238] sm:$0xff]
          %v1064 = vld [vmem:[#allocation2 + $0x240] sm:$0xff]
          %v1065 = vld [vmem:[#allocation2 + $0x248] sm:$0xff]
          %v1066 = vld [vmem:[#allocation2 + $0x250] sm:$0xff]
          %v1067 = vld [vmem:[#allocation2 + $0x258] sm:$0xff]
          %v1068 = vld [vmem:[#allocation2 + $0x260] sm:$0xff]
          %v1069 = vld [vmem:[#allocation2 + $0x268] sm:$0xff]
          %v1070 = vld [vmem:[#allocation2 + $0x270] sm:$0xff]
          %v1071 = vld [vmem:[#allocation2 + $0x278] sm:$0xff]
          %v1072 = vld [vmem:[#allocation2 + $0x280] sm:$0xff]
          %v1073 = vld [vmem:[#allocation2 + $0x288] sm:$0xff]
          %v1074 = vld [vmem:[#allocation2 + $0x290] sm:$0xff]
          %v1075 = vld [vmem:[#allocation2 + $0x298] sm:$0xff]
          %v1076 = vld [vmem:[#allocation2 + $0x2a0] sm:$0xff]
          %v1077 = vld [vmem:[#allocation2 + $0x2a8] sm:$0xff]
          %v1078 = vld [vmem:[#allocation2 + $0x2b0] sm:$0xff]
          %v1079 = vld [vmem:[#allocation2 + $0x2b8] sm:$0xff]
          %v1080 = vld [vmem:[#allocation2 + $0x2c0] sm:$0xff]
          %v1081 = vld [vmem:[#allocation2 + $0x2c8] sm:$0xff]
          %v1082 = vld [vmem:[#allocation2 + $0x2d0] sm:$0xff]
          %v1083 = vld [vmem:[#allocation2 + $0x2d8] sm:$0xff]
          %v1084 = vld [vmem:[#allocation2 + $0x2e0] sm:$0xff]
          %v1085 = vld [vmem:[#allocation2 + $0x2e8] sm:$0xff]
          %v1086 = vld [vmem:[#allocation2 + $0x2f0] sm:$0xff]
          %v1087 = vld [vmem:[#allocation2 + $0x2f8] sm:$0xff]
          %v1088 = vld [vmem:[#allocation2 + $0x300] sm:$0xff]
          %v1089 = vld [vmem:[#allocation2 + $0x308] sm:$0xff]
          %v1090 = vld [vmem:[#allocation2 + $0x310] sm:$0xff]
          %v1091 = vld [vmem:[#allocation2 + $0x318] sm:$0xff]
          %v1092 = vld [vmem:[#allocation2 + $0x320] sm:$0xff]
          %v1093 = vld [vmem:[#allocation2 + $0x328] sm:$0xff]
          %v1094 = vld [vmem:[#allocation2 + $0x330] sm:$0xff]
          %v1095 = vld [vmem:[#allocation2 + $0x338] sm:$0xff]
          %v1096 = vld [vmem:[#allocation2 + $0x340] sm:$0xff]
          %v1097 = vld [vmem:[#allocation2 + $0x348] sm:$0xff]
          %v1098 = vld [vmem:[#allocation2 + $0x350] sm:$0xff]
          %v1099 = vld [vmem:[#allocation2 + $0x358] sm:$0xff]
          %v1100 = vld [vmem:[#allocation2 + $0x360] sm:$0xff]
          %v1101 = vld [vmem:[#allocation2 + $0x368] sm:$0xff]
          %v1102 = vld [vmem:[#allocation2 + $0x370] sm:$0xff]
          %v1103 = vld [vmem:[#allocation2 + $0x378] sm:$0xff]
          %v1105 = vsel %vm559, %v991, 0
          %1107 = vmatpush.msra.mxu0 0.0
          %1108 = vmatpush.msra.mxu0 0.0
          %1109 = vmatpush.msra.mxu0 %v1096
          %1110 = vmatpush.msra.mxu0 %v1088
          %1111 = vmatpush.msra.mxu0 %v1080
          %1112 = vmatpush.msra.mxu0 %v1072
          %1113 = vmatpush.msra.mxu0 %v1064
          %1114 = vmatpush.msra.mxu0 %v1056
          %1115 = vmatpush.msra.mxu0 %v1048
          %1116 = vmatpush.msra.mxu0 %v1040
          %1117 = vmatpush.msra.mxu0 %v1032
          %1118 = vmatpush.msra.mxu0 %v1024
          %1119 = vmatpush.msra.mxu0 %v1016
          %1120 = vmatpush.msra.mxu0 %v1008
          %1121 = vmatpush.msra.mxu0 %v1000
          %1122 = vmatpush.msra.mxu0 %v992
          %1123 = vmatmul.f32.gmra.mxu0 %v1105
          %v1124 = vpop.f32.mrf.mxu0
          %v1125 = vadd.f32 0.0, %v1124
          %1126 = vdwg.mxu0
          %1127 = vmatpush.msra.mxu0 0.0
          %1128 = vmatpush.msra.mxu0 0.0
          %1129 = vmatpush.msra.mxu0 %v1097
          %1130 = vmatpush.msra.mxu0 %v1089
          %1131 = vmatpush.msra.mxu0 %v1081
          %1132 = vmatpush.msra.mxu0 %v1073
          %1133 = vmatpush.msra.mxu0 %v1065
          %1134 = vmatpush.msra.mxu0 %v1057
          %1135 = vmatpush.msra.mxu0 %v1049
          %1136 = vmatpush.msra.mxu0 %v1041
          %1137 = vmatpush.msra.mxu0 %v1033
          %1138 = vmatpush.msra.mxu0 %v1025
          %1139 = vmatpush.msra.mxu0 %v1017
          %1140 = vmatpush.msra.mxu0 %v1009
          %1141 = vmatpush.msra.mxu0 %v1001
          %1142 = vmatpush.msra.mxu0 %v993
          %1143 = vmatmul.f32.gmra.mxu0 %v1105
          %v1144 = vpop.f32.mrf.mxu0
          %v1145 = vadd.f32 0.0, %v1144
          %1146 = vdwg.mxu0
          %1147 = vmatpush.msra.mxu0 0.0
          %1148 = vmatpush.msra.mxu0 0.0
          %1149 = vmatpush.msra.mxu0 %v1098
          %1150 = vmatpush.msra.mxu0 %v1090
          %1151 = vmatpush.msra.mxu0 %v1082
          %1152 = vmatpush.msra.mxu0 %v1074
          %1153 = vmatpush.msra.mxu0 %v1066
          %1154 = vmatpush.msra.mxu0 %v1058
          %1155 = vmatpush.msra.mxu0 %v1050
          %1156 = vmatpush.msra.mxu0 %v1042
          %1157 = vmatpush.msra.mxu0 %v1034
          %1158 = vmatpush.msra.mxu0 %v1026
          %1159 = vmatpush.msra.mxu0 %v1018
          %1160 = vmatpush.msra.mxu0 %v1010
          %1161 = vmatpush.msra.mxu0 %v1002
          %1162 = vmatpush.msra.mxu0 %v994
          %1163 = vmatmul.f32.gmra.mxu0 %v1105
          %v1164 = vpop.f32.mrf.mxu0
          %v1165 = vadd.f32 0.0, %v1164
          %1166 = vdwg.mxu0
          %1167 = vmatpush.msra.mxu0 0.0
          %1168 = vmatpush.msra.mxu0 0.0
          %1169 = vmatpush.msra.mxu0 %v1099
          %1170 = vmatpush.msra.mxu0 %v1091
          %1171 = vmatpush.msra.mxu0 %v1083
          %1172 = vmatpush.msra.mxu0 %v1075
          %1173 = vmatpush.msra.mxu0 %v1067
          %1174 = vmatpush.msra.mxu0 %v1059
          %1175 = vmatpush.msra.mxu0 %v1051
          %1176 = vmatpush.msra.mxu0 %v1043
          %1177 = vmatpush.msra.mxu0 %v1035
          %1178 = vmatpush.msra.mxu0 %v1027
          %1179 = vmatpush.msra.mxu0 %v1019
          %1180 = vmatpush.msra.mxu0 %v1011
          %1181 = vmatpush.msra.mxu0 %v1003
          %1182 = vmatpush.msra.mxu0 %v995
          %1183 = vmatmul.f32.gmra.mxu0 %v1105
          %v1184 = vpop.f32.mrf.mxu0
          %v1185 = vadd.f32 0.0, %v1184
          %1186 = vdwg.mxu0
          %1187 = vmatpush.msra.mxu0 0.0
          %1188 = vmatpush.msra.mxu0 0.0
          %1189 = vmatpush.msra.mxu0 %v1100
          %1190 = vmatpush.msra.mxu0 %v1092
          %1191 = vmatpush.msra.mxu0 %v1084
          %1192 = vmatpush.msra.mxu0 %v1076
          %1193 = vmatpush.msra.mxu0 %v1068
          %1194 = vmatpush.msra.mxu0 %v1060
          %1195 = vmatpush.msra.mxu0 %v1052
          %1196 = vmatpush.msra.mxu0 %v1044
          %1197 = vmatpush.msra.mxu0 %v1036
          %1198 = vmatpush.msra.mxu0 %v1028
          %1199 = vmatpush.msra.mxu0 %v1020
          %1200 = vmatpush.msra.mxu0 %v1012
          %1201 = vmatpush.msra.mxu0 %v1004
          %1202 = vmatpush.msra.mxu0 %v996
          %1203 = vmatmul.f32.gmra.mxu0 %v1105
          %v1204 = vpop.f32.mrf.mxu0
          %v1205 = vadd.f32 0.0, %v1204
          %1206 = vdwg.mxu0
          %1207 = vmatpush.msra.mxu0 0.0
          %1208 = vmatpush.msra.mxu0 0.0
          %1209 = vmatpush.msra.mxu0 %v1101
          %1210 = vmatpush.msra.mxu0 %v1093
          %1211 = vmatpush.msra.mxu0 %v1085
          %1212 = vmatpush.msra.mxu0 %v1077
          %1213 = vmatpush.msra.mxu0 %v1069
          %1214 = vmatpush.msra.mxu0 %v1061
          %1215 = vmatpush.msra.mxu0 %v1053
          %1216 = vmatpush.msra.mxu0 %v1045
          %1217 = vmatpush.msra.mxu0 %v1037
          %1218 = vmatpush.msra.mxu0 %v1029
          %1219 = vmatpush.msra.mxu0 %v1021
          %1220 = vmatpush.msra.mxu0 %v1013
          %1221 = vmatpush.msra.mxu0 %v1005
          %1222 = vmatpush.msra.mxu0 %v997
          %1223 = vmatmul.f32.gmra.mxu0 %v1105
          %v1224 = vpop.f32.mrf.mxu0
          %v1225 = vadd.f32 0.0, %v1224
          %1226 = vdwg.mxu0
          %1227 = vmatpush.msra.mxu0 0.0
          %1228 = vmatpush.msra.mxu0 0.0
          %1229 = vmatpush.msra.mxu0 %v1102
          %1230 = vmatpush.msra.mxu0 %v1094
          %1231 = vmatpush.msra.mxu0 %v1086
          %1232 = vmatpush.msra.mxu0 %v1078
          %1233 = vmatpush.msra.mxu0 %v1070
          %1234 = vmatpush.msra.mxu0 %v1062
          %1235 = vmatpush.msra.mxu0 %v1054
          %1236 = vmatpush.msra.mxu0 %v1046
          %1237 = vmatpush.msra.mxu0 %v1038
          %1238 = vmatpush.msra.mxu0 %v1030
          %1239 = vmatpush.msra.mxu0 %v1022
          %1240 = vmatpush.msra.mxu0 %v1014
          %1241 = vmatpush.msra.mxu0 %v1006
          %1242 = vmatpush.msra.mxu0 %v998
          %1243 = vmatmul.f32.gmra.mxu0 %v1105
          %v1244 = vpop.f32.mrf.mxu0
          %v1245 = vadd.f32 0.0, %v1244
          %1246 = vdwg.mxu0
          %1247 = vmatpush.msra.mxu0 0.0
          %1248 = vmatpush.msra.mxu0 0.0
          %1249 = vmatpush.msra.mxu0 %v1103
          %1250 = vmatpush.msra.mxu0 %v1095
          %1251 = vmatpush.msra.mxu0 %v1087
          %1252 = vmatpush.msra.mxu0 %v1079
          %1253 = vmatpush.msra.mxu0 %v1071
          %1254 = vmatpush.msra.mxu0 %v1063
          %1255 = vmatpush.msra.mxu0 %v1055
          %1256 = vmatpush.msra.mxu0 %v1047
          %1257 = vmatpush.msra.mxu0 %v1039
          %1258 = vmatpush.msra.mxu0 %v1031
          %1259 = vmatpush.msra.mxu0 %v1023
          %1260 = vmatpush.msra.mxu0 %v1015
          %1261 = vmatpush.msra.mxu0 %v1007
          %1262 = vmatpush.msra.mxu0 %v999
          %1263 = vmatmul.f32.gmra.mxu0 %v1105
          %v1264 = vpop.f32.mrf.mxu0
          %v1265 = vadd.f32 0.0, %v1264
          %1266 = vdwg.mxu0
          %s1267 = sshra.s32 %s989, 3
          %s1268 = sand.u32 %s989, 7
          %s1269 = sshra.s32 %s989, 3
          %s1270 = sand.u32 %s989, 7
          %s1271 = smul.u32 %s1267, 8
          %s1272 = smul.u32 %s1271, 8
          %s1273 = sadd.s32 %s1272, %s1270
          %s1274 = scalar_lea.vmem [#allocation2], %s1273
          %v1275 = vld [vmem:[%s1274] ss:$8 sm:$0xf]
          %v1276 = vld [vmem:[%s1274] ss:$8 sm:$0xf0]
          %v1277 = vor.u32 %v1275, %v1276
          %s1278 = scalar_lea.vmem %s194, %s1273
          %v1279 = vld [vmem:[%s1278] ss:$8 sm:$0xf]
          %v1280 = vld [vmem:[%s1278] ss:$8 sm:$0xf0]
          %v1281 = vor.u32 %v1279, %v1280
          %v1282 = vmul.f32 %v1125, %v1125
          %v1283 = vsel %vm739, %v1282, 0.0
          %1284 = vadd.xlane.f32.xlu0 %v1283
          %v1285 = vpop.xlane.xlu0 %1284
          %vm1286 = vcmp.gt.f32.partialorder %v1285, 1e-12
          %v1287 = vsel %vm1286, 1, 0
          %v1288 = vcvt.s32.f32 %v1287
          %v1289 = vadd.f32 %v1285, 1e-30
          %v1290 = vrsqrt.pop %v1289
          %v1291 = vmul.f32 %v1290, %v1289
          %v1292 = vmul.f32 %v1291, %v1290
          %v1293 = vmul.f32 0.5, %v1292
          %v1294 = vsub.f32 1.5, %v1293
          %v1295 = vmul.f32 %v1290, %v1294
          %vm1296 = vweird.f32 %v1289
          %vm1297 = vweird.f32 %v1290
          %vm1298 = vmor %vm1296, %vm1297
          %v1299 = vsel %vm1298, %v1290, %v1295
          %v1300 = vmul.f32 %v1288, %v1299
          %v1301 = vsub.f32 1.0, %v1288
          %v1302 = vmul.f32 %v1301, %v1277
          %v1303 = vmul.f32 %v1300, %v1125
          %v1304 = vsub.f32 %v1302, %v1303
          %v1305 = vmul.f32 %v1145, %v1145
          %v1306 = vsel %vm739, %v1305, 0.0
          %1307 = vadd.xlane.f32.xlu0 %v1306
          %v1308 = vpop.xlane.xlu0 %1307
          %vm1309 = vcmp.gt.f32.partialorder %v1308, 1e-12
          %v1310 = vsel %vm1309, 1, 0
          %v1311 = vcvt.s32.f32 %v1310
          %v1312 = vadd.f32 %v1308, 1e-30
          %v1313 = vrsqrt.pop %v1312
          %v1314 = vmul.f32 %v1313, %v1312
          %v1315 = vmul.f32 %v1314, %v1313
          %v1316 = vmul.f32 0.5, %v1315
          %v1317 = vsub.f32 1.5, %v1316
          %v1318 = vmul.f32 %v1313, %v1317
          %vm1319 = vweird.f32 %v1312
          %vm1320 = vweird.f32 %v1313
          %vm1321 = vmor %vm1319, %vm1320
          %v1322 = vsel %vm1321, %v1313, %v1318
          %v1323 = vmul.f32 %v1311, %v1322
          %v1324 = vsub.f32 1.0, %v1311
          %v1326 = vperm.slane %v1277, 1
          %v1328 = vmul.f32 %v1324, %v1326
          %v1329 = vmul.f32 %v1323, %v1145
          %v1330 = vsub.f32 %v1328, %v1329
          %v1331 = vmul.f32 %v1165, %v1165
          %v1332 = vsel %vm739, %v1331, 0.0
          %1333 = vadd.xlane.f32.xlu0 %v1332
          %v1334 = vpop.xlane.xlu0 %1333
          %vm1335 = vcmp.gt.f32.partialorder %v1334, 1e-12
          %v1336 = vsel %vm1335, 1, 0
          %v1337 = vcvt.s32.f32 %v1336
          %v1338 = vadd.f32 %v1334, 1e-30
          %v1339 = vrsqrt.pop %v1338
          %v1340 = vmul.f32 %v1339, %v1338
          %v1341 = vmul.f32 %v1340, %v1339
          %v1342 = vmul.f32 0.5, %v1341
          %v1343 = vsub.f32 1.5, %v1342
          %v1344 = vmul.f32 %v1339, %v1343
          %vm1345 = vweird.f32 %v1338
          %vm1346 = vweird.f32 %v1339
          %vm1347 = vmor %vm1345, %vm1346
          %v1348 = vsel %vm1347, %v1339, %v1344
          %v1349 = vmul.f32 %v1337, %v1348
          %v1350 = vsub.f32 1.0, %v1337
          %v1351 = vperm.slane %v1277, 2
          %v1353 = vmul.f32 %v1350, %v1351
          %v1354 = vmul.f32 %v1349, %v1165
          %v1355 = vsub.f32 %v1353, %v1354
          %v1356 = vmul.f32 %v1185, %v1185
          %v1357 = vsel %vm739, %v1356, 0.0
          %1358 = vadd.xlane.f32.xlu0 %v1357
          %v1359 = vpop.xlane.xlu0 %1358
          %vm1360 = vcmp.gt.f32.partialorder %v1359, 1e-12
          %v1361 = vsel %vm1360, 1, 0
          %v1362 = vcvt.s32.f32 %v1361
          %v1363 = vadd.f32 %v1359, 1e-30
          %v1364 = vrsqrt.pop %v1363
          %v1365 = vmul.f32 %v1364, %v1363
          %v1366 = vmul.f32 %v1365, %v1364
          %v1367 = vmul.f32 0.5, %v1366
          %v1368 = vsub.f32 1.5, %v1367
          %v1369 = vmul.f32 %v1364, %v1368
          %vm1370 = vweird.f32 %v1363
          %vm1371 = vweird.f32 %v1364
          %vm1372 = vmor %vm1370, %vm1371
          %v1373 = vsel %vm1372, %v1364, %v1369
          %v1374 = vmul.f32 %v1362, %v1373
          %v1375 = vsub.f32 1.0, %v1362
          %v1376 = vperm.slane %v1277, 3
          %v1378 = vmul.f32 %v1375, %v1376
          %v1379 = vmul.f32 %v1374, %v1185
          %v1380 = vsub.f32 %v1378, %v1379
          %v1381 = vmul.f32 %v1205, %v1205
          %v1382 = vsel %vm739, %v1381, 0.0
          %1383 = vadd.xlane.f32.xlu0 %v1382
          %v1384 = vpop.xlane.xlu0 %1383
          %vm1385 = vcmp.gt.f32.partialorder %v1384, 1e-12
          %v1386 = vsel %vm1385, 1, 0
          %v1387 = vcvt.s32.f32 %v1386
          %v1388 = vadd.f32 %v1384, 1e-30
          %v1389 = vrsqrt.pop %v1388
          %v1390 = vmul.f32 %v1389, %v1388
          %v1391 = vmul.f32 %v1390, %v1389
          %v1392 = vmul.f32 0.5, %v1391
          %v1393 = vsub.f32 1.5, %v1392
          %v1394 = vmul.f32 %v1389, %v1393
          %vm1395 = vweird.f32 %v1388
          %vm1396 = vweird.f32 %v1389
          %vm1397 = vmor %vm1395, %vm1396
          %v1398 = vsel %vm1397, %v1389, %v1394
          %v1399 = vmul.f32 %v1387, %v1398
          %v1400 = vsub.f32 1.0, %v1387
          %v1401 = vperm.slane %v1277, 4
          %v1403 = vmul.f32 %v1400, %v1401
          %v1404 = vmul.f32 %v1399, %v1205
          %v1405 = vsub.f32 %v1403, %v1404
          %v1406 = vmul.f32 %v1225, %v1225
          %v1407 = vsel %vm739, %v1406, 0.0
          %1408 = vadd.xlane.f32.xlu0 %v1407
          %v1409 = vpop.xlane.xlu0 %1408
          %vm1410 = vcmp.gt.f32.partialorder %v1409, 1e-12
          %v1411 = vsel %vm1410, 1, 0
          %v1412 = vcvt.s32.f32 %v1411
          %v1413 = vadd.f32 %v1409, 1e-30
          %v1414 = vrsqrt.pop %v1413
          %v1415 = vmul.f32 %v1414, %v1413
          %v1416 = vmul.f32 %v1415, %v1414
          %v1417 = vmul.f32 0.5, %v1416
          %v1418 = vsub.f32 1.5, %v1417
          %v1419 = vmul.f32 %v1414, %v1418
          %vm1420 = vweird.f32 %v1413
          %vm1421 = vweird.f32 %v1414
          %vm1422 = vmor %vm1420, %vm1421
          %v1423 = vsel %vm1422, %v1414, %v1419
          %v1424 = vmul.f32 %v1412, %v1423
          %v1425 = vsub.f32 1.0, %v1412
          %v1426 = vperm.slane %v1277, 5
          %v1428 = vmul.f32 %v1425, %v1426
          %v1429 = vmul.f32 %v1424, %v1225
          %v1430 = vsub.f32 %v1428, %v1429
          %v1431 = vmul.f32 %v1245, %v1245
          %v1432 = vsel %vm739, %v1431, 0.0
          %1433 = vadd.xlane.f32.xlu0 %v1432
          %v1434 = vpop.xlane.xlu0 %1433
          %vm1435 = vcmp.gt.f32.partialorder %v1434, 1e-12
          %v1436 = vsel %vm1435, 1, 0
          %v1437 = vcvt.s32.f32 %v1436
          %v1438 = vadd.f32 %v1434, 1e-30
          %v1439 = vrsqrt.pop %v1438
          %v1440 = vmul.f32 %v1439, %v1438
          %v1441 = vmul.f32 %v1440, %v1439
          %v1442 = vmul.f32 0.5, %v1441
          %v1443 = vsub.f32 1.5, %v1442
          %v1444 = vmul.f32 %v1439, %v1443
          %vm1445 = vweird.f32 %v1438
          %vm1446 = vweird.f32 %v1439
          %vm1447 = vmor %vm1445, %vm1446
          %v1448 = vsel %vm1447, %v1439, %v1444
          %v1449 = vmul.f32 %v1437, %v1448
          %v1450 = vsub.f32 1.0, %v1437
          %v1451 = vperm.slane %v1277, 6
          %v1453 = vmul.f32 %v1450, %v1451
          %v1454 = vmul.f32 %v1449, %v1245
          %v1455 = vsub.f32 %v1453, %v1454
          %v1456 = vmul.f32 %v1265, %v1265
          %v1457 = vsel %vm739, %v1456, 0.0
          %1458 = vadd.xlane.f32.xlu0 %v1457
          %v1459 = vpop.xlane.xlu0 %1458
          %vm1460 = vcmp.gt.f32.partialorder %v1459, 1e-12
          %v1461 = vsel %vm1460, 1, 0
          %v1462 = vcvt.s32.f32 %v1461
          %v1463 = vadd.f32 %v1459, 1e-30
          %v1464 = vrsqrt.pop %v1463
          %v1465 = vmul.f32 %v1464, %v1463
          %v1466 = vmul.f32 %v1465, %v1464
          %v1467 = vmul.f32 0.5, %v1466
          %v1468 = vsub.f32 1.5, %v1467
          %v1469 = vmul.f32 %v1464, %v1468
          %vm1470 = vweird.f32 %v1463
          %vm1471 = vweird.f32 %v1464
          %vm1472 = vmor %vm1470, %vm1471
          %v1473 = vsel %vm1472, %v1464, %v1469
          %v1474 = vmul.f32 %v1462, %v1473
          %v1475 = vsub.f32 1.0, %v1462
          %v1476 = vperm.slane %v1277, 7
          %v1478 = vmul.f32 %v1475, %v1476
          %v1479 = vmul.f32 %v1474, %v1265
          %v1480 = vsub.f32 %v1478, %v1479
          %v1481 = vperm.slane %v1277, 0
          %v1483 = vsub.f32 %v1304, %v1481
          %v1484 = vsub.f32 %v1330, %v1326
          %v1485 = vsub.f32 %v1355, %v1351
          %v1486 = vsub.f32 %v1380, %v1376
          %v1487 = vsub.f32 %v1405, %v1401
          %v1488 = vsub.f32 %v1430, %v1426
          %v1489 = vsub.f32 %v1455, %v1451
          %v1490 = vsub.f32 %v1480, %v1476
          %v1499 = vrot.slane %v1484, 7
          %v1500 = vrot.slane %v1485, 6
          %v1501 = vrot.slane %v1486, 5
          %v1502 = vrot.slane %v1487, 4
          %v1503 = vrot.slane %v1488, 3
          %v1504 = vrot.slane %v1489, 2
          %v1505 = vrot.slane %v1490, 1
          %v1506 = vsel %vm739, %v1483, %v1499
          %v1507 = vsel %vm964, %v1500, %v1501
          %v1508 = vsel %vm966, %v1506, %v1507
          %v1509 = vsel %vm968, %v1502, %v1503
          %v1510 = vsel %vm970, %v1504, %v1505
          %v1511 = vsel %vm972, %v1509, %v1510
          %v1512 = vsel %vm974, %v1508, %v1511
          %v1514 = vmul.f32 %v1281, %v1512
          %v1515 = vadd.f32 %v1277, %v1514
          %1516 = vst [vmem:[%s1274] ss:$8 sm:$0xf] %v1515
          %1517 = vst [vmem:[%s1274] ss:$8 sm:$0xf0] %v1515
        $region44: #{a_call__.2} parent=36 // loop_footer
          %s435 = sadd.s32 1, %s431
        $region45: #{a_call__.2} parent=36 // loop_footer_branch
          %430 = sbr.rel target = $region41
        $region46: #{a_call__.2} parent=36 // loop_exit
          _
      $region37: #{a_call__.2} parent=31 // loop_footer
        %s429 = sadd.s32 1, %s425
      $region38: #{a_call__.2} parent=31 // loop_footer_branch
        %424 = sbr.rel target = $region34
      $region39: #{a_call__.2} parent=31 // loop_exit
        _
      %v1518 = vld [vmem:[#allocation2] sm:$0xff]
      %v1519 = vld [vmem:[#allocation2 + $0x40] sm:$0xff]
      %v1520 = vld [vmem:[#allocation2 + $0x80] sm:$0xff]
      %v1521 = vld [vmem:[#allocation2 + $0xc0] sm:$0xff]
      %v1522 = vld [vmem:[#allocation2 + $0x100] sm:$0xff]
      %v1523 = vld [vmem:[#allocation2 + $0x140] sm:$0xff]
      %v1524 = vld [vmem:[#allocation2 + $0x180] sm:$0xff]
      %v1525 = vld [vmem:[#allocation2 + $0x1c0] sm:$0xff]
      %v1526 = vld [vmem:[#allocation2 + $0x200] sm:$0xff]
      %v1527 = vld [vmem:[#allocation2 + $0x240] sm:$0xff]
      %v1528 = vld [vmem:[#allocation2 + $0x280] sm:$0xff]
      %v1529 = vld [vmem:[#allocation2 + $0x2c0] sm:$0xff]
      %v1530 = vld [vmem:[#allocation2 + $0x300] sm:$0xff]
      %v1531 = vld [vmem:[#allocation2 + $0x340] sm:$0xff]
      %v1532 = vld [vmem:[#allocation2] ss:$0 sm:$0xff]
      %v1533 = vmul.f32 %v1518, %v1532
      %v1534 = vmul.f32 %v1519, %v1532
      %v1535 = vmul.f32 %v1520, %v1532
      %v1536 = vmul.f32 %v1521, %v1532
      %v1537 = vmul.f32 %v1522, %v1532
      %v1538 = vmul.f32 %v1523, %v1532
      %v1539 = vmul.f32 %v1524, %v1532
      %v1540 = vmul.f32 %v1525, %v1532
      %v1541 = vmul.f32 %v1526, %v1532
      %v1542 = vmul.f32 %v1527, %v1532
      %v1543 = vmul.f32 %v1528, %v1532
      %v1544 = vmul.f32 %v1529, %v1532
      %v1545 = vmul.f32 %v1530, %v1532
      %v1546 = vmul.f32 %v1531, %v1532
      %1547 = vadd.xlane.f32.xlu0 %v1533
      %v1548 = vpop.xlane.xlu0 %1547
      %1549 = vadd.xlane.f32.xlu0 %v1534
      %v1550 = vpop.xlane.xlu0 %1549
      %1551 = vadd.xlane.f32.xlu0 %v1535
      %v1552 = vpop.xlane.xlu0 %1551
      %1553 = vadd.xlane.f32.xlu0 %v1536
      %v1554 = vpop.xlane.xlu0 %1553
      %1555 = vadd.xlane.f32.xlu0 %v1537
      %v1556 = vpop.xlane.xlu0 %1555
      %1557 = vadd.xlane.f32.xlu0 %v1538
      %v1558 = vpop.xlane.xlu0 %1557
      %1559 = vadd.xlane.f32.xlu0 %v1539
      %v1560 = vpop.xlane.xlu0 %1559
      %1561 = vadd.xlane.f32.xlu0 %v1540
      %v1562 = vpop.xlane.xlu0 %1561
      %1563 = vadd.xlane.f32.xlu0 %v1541
      %v1564 = vpop.xlane.xlu0 %1563
      %1565 = vadd.xlane.f32.xlu0 %v1542
      %v1566 = vpop.xlane.xlu0 %1565
      %1567 = vadd.xlane.f32.xlu0 %v1543
      %v1568 = vpop.xlane.xlu0 %1567
      %1569 = vadd.xlane.f32.xlu0 %v1544
      %v1570 = vpop.xlane.xlu0 %1569
      %1571 = vadd.xlane.f32.xlu0 %v1545
      %v1572 = vpop.xlane.xlu0 %1571
      %1573 = vadd.xlane.f32.xlu0 %v1546
      %v1574 = vpop.xlane.xlu0 %1573
      %v1575 = vld [vmem:[#allocation2 + $0x8] sm:$0xff]
      %v1576 = vld [vmem:[#allocation2 + $0x48] sm:$0xff]
      %v1577 = vld [vmem:[#allocation2 + $0x88] sm:$0xff]
      %v1578 = vld [vmem:[#allocation2 + $0xc8] sm:$0xff]
      %v1579 = vld [vmem:[#allocation2 + $0x108] sm:$0xff]
      %v1580 = vld [vmem:[#allocation2 + $0x148] sm:$0xff]
      %v1581 = vld [vmem:[#allocation2 + $0x188] sm:$0xff]
      %v1582 = vld [vmem:[#allocation2 + $0x1c8] sm:$0xff]
      %v1583 = vld [vmem:[#allocation2 + $0x208] sm:$0xff]
      %v1584 = vld [vmem:[#allocation2 + $0x248] sm:$0xff]
      %v1585 = vld [vmem:[#allocation2 + $0x288] sm:$0xff]
      %v1586 = vld [vmem:[#allocation2 + $0x2c8] sm:$0xff]
      %v1587 = vld [vmem:[#allocation2 + $0x308] sm:$0xff]
      %v1588 = vld [vmem:[#allocation2 + $0x348] sm:$0xff]
      %v1589 = vld [vmem:[#allocation2 + $0x8] ss:$0 sm:$0xff]
      %v1590 = vmul.f32 %v1575, %v1589
      %v1591 = vmul.f32 %v1576, %v1589
      %v1592 = vmul.f32 %v1577, %v1589
      %v1593 = vmul.f32 %v1578, %v1589
      %v1594 = vmul.f32 %v1579, %v1589
      %v1595 = vmul.f32 %v1580, %v1589
      %v1596 = vmul.f32 %v1581, %v1589
      %v1597 = vmul.f32 %v1582, %v1589
      %v1598 = vmul.f32 %v1583, %v1589
      %v1599 = vmul.f32 %v1584, %v1589
      %v1600 = vmul.f32 %v1585, %v1589
      %v1601 = vmul.f32 %v1586, %v1589
      %v1602 = vmul.f32 %v1587, %v1589
      %v1603 = vmul.f32 %v1588, %v1589
      %1604 = vadd.xlane.f32.xlu0 %v1590
      %v1605 = vpop.xlane.xlu0 %1604
      %1606 = vadd.xlane.f32.xlu0 %v1591
      %v1607 = vpop.xlane.xlu0 %1606
      %1608 = vadd.xlane.f32.xlu0 %v1592
      %v1609 = vpop.xlane.xlu0 %1608
      %1610 = vadd.xlane.f32.xlu0 %v1593
      %v1611 = vpop.xlane.xlu0 %1610
      %1612 = vadd.xlane.f32.xlu0 %v1594
      %v1613 = vpop.xlane.xlu0 %1612
      %1614 = vadd.xlane.f32.xlu0 %v1595
      %v1615 = vpop.xlane.xlu0 %1614
      %1616 = vadd.xlane.f32.xlu0 %v1596
      %v1617 = vpop.xlane.xlu0 %1616
      %1618 = vadd.xlane.f32.xlu0 %v1597
      %v1619 = vpop.xlane.xlu0 %1618
      %1620 = vadd.xlane.f32.xlu0 %v1598
      %v1621 = vpop.xlane.xlu0 %1620
      %1622 = vadd.xlane.f32.xlu0 %v1599
      %v1623 = vpop.xlane.xlu0 %1622
      %1624 = vadd.xlane.f32.xlu0 %v1600
      %v1625 = vpop.xlane.xlu0 %1624
      %1626 = vadd.xlane.f32.xlu0 %v1601
      %v1627 = vpop.xlane.xlu0 %1626
      %1628 = vadd.xlane.f32.xlu0 %v1602
      %v1629 = vpop.xlane.xlu0 %1628
      %1630 = vadd.xlane.f32.xlu0 %v1603
      %v1631 = vpop.xlane.xlu0 %1630
      %v1632 = vld [vmem:[#allocation2 + $0x10] sm:$0xff]
      %v1633 = vld [vmem:[#allocation2 + $0x50] sm:$0xff]
      %v1634 = vld [vmem:[#allocation2 + $0x90] sm:$0xff]
      %v1635 = vld [vmem:[#allocation2 + $0xd0] sm:$0xff]
      %v1636 = vld [vmem:[#allocation2 + $0x110] sm:$0xff]
      %v1637 = vld [vmem:[#allocation2 + $0x150] sm:$0xff]
      %v1638 = vld [vmem:[#allocation2 + $0x190] sm:$0xff]
      %v1639 = vld [vmem:[#allocation2 + $0x1d0] sm:$0xff]
      %v1640 = vld [vmem:[#allocation2 + $0x210] sm:$0xff]
      %v1641 = vld [vmem:[#allocation2 + $0x250] sm:$0xff]
      %v1642 = vld [vmem:[#allocation2 + $0x290] sm:$0xff]
      %v1643 = vld [vmem:[#allocation2 + $0x2d0] sm:$0xff]
      %v1644 = vld [vmem:[#allocation2 + $0x310] sm:$0xff]
      %v1645 = vld [vmem:[#allocation2 + $0x350] sm:$0xff]
      %v1646 = vld [vmem:[#allocation2 + $0x10] ss:$0 sm:$0xff]
      %v1647 = vmul.f32 %v1632, %v1646
      %v1648 = vmul.f32 %v1633, %v1646
      %v1649 = vmul.f32 %v1634, %v1646
      %v1650 = vmul.f32 %v1635, %v1646
      %v1651 = vmul.f32 %v1636, %v1646
      %v1652 = vmul.f32 %v1637, %v1646
      %v1653 = vmul.f32 %v1638, %v1646
      %v1654 = vmul.f32 %v1639, %v1646
      %v1655 = vmul.f32 %v1640, %v1646
      %v1656 = vmul.f32 %v1641, %v1646
      %v1657 = vmul.f32 %v1642, %v1646
      %v1658 = vmul.f32 %v1643, %v1646
      %v1659 = vmul.f32 %v1644, %v1646
      %v1660 = vmul.f32 %v1645, %v1646
      %1661 = vadd.xlane.f32.xlu0 %v1647
      %v1662 = vpop.xlane.xlu0 %1661
      %1663 = vadd.xlane.f32.xlu0 %v1648
      %v1664 = vpop.xlane.xlu0 %1663
      %1665 = vadd.xlane.f32.xlu0 %v1649
      %v1666 = vpop.xlane.xlu0 %1665
      %1667 = vadd.xlane.f32.xlu0 %v1650
      %v1668 = vpop.xlane.xlu0 %1667
      %1669 = vadd.xlane.f32.xlu0 %v1651
      %v1670 = vpop.xlane.xlu0 %1669
      %1671 = vadd.xlane.f32.xlu0 %v1652
      %v1672 = vpop.xlane.xlu0 %1671
      %1673 = vadd.xlane.f32.xlu0 %v1653
      %v1674 = vpop.xlane.xlu0 %1673
      %1675 = vadd.xlane.f32.xlu0 %v1654
      %v1676 = vpop.xlane.xlu0 %1675
      %1677 = vadd.xlane.f32.xlu0 %v1655
      %v1678 = vpop.xlane.xlu0 %1677
      %1679 = vadd.xlane.f32.xlu0 %v1656
      %v1680 = vpop.xlane.xlu0 %1679
      %1681 = vadd.xlane.f32.xlu0 %v1657
      %v1682 = vpop.xlane.xlu0 %1681
      %1683 = vadd.xlane.f32.xlu0 %v1658
      %v1684 = vpop.xlane.xlu0 %1683
      %1685 = vadd.xlane.f32.xlu0 %v1659
      %v1686 = vpop.xlane.xlu0 %1685
      %1687 = vadd.xlane.f32.xlu0 %v1660
      %v1688 = vpop.xlane.xlu0 %1687
      %v1689 = vld [vmem:[#allocation2 + $0x18] sm:$0xff]
      %v1690 = vld [vmem:[#allocation2 + $0x58] sm:$0xff]
      %v1691 = vld [vmem:[#allocation2 + $0x98] sm:$0xff]
      %v1692 = vld [vmem:[#allocation2 + $0xd8] sm:$0xff]
      %v1693 = vld [vmem:[#allocation2 + $0x118] sm:$0xff]
      %v1694 = vld [vmem:[#allocation2 + $0x158] sm:$0xff]
      %v1695 = vld [vmem:[#allocation2 + $0x198] sm:$0xff]
      %v1696 = vld [vmem:[#allocation2 + $0x1d8] sm:$0xff]
      %v1697 = vld [vmem:[#allocation2 + $0x218] sm:$0xff]
      %v1698 = vld [vmem:[#allocation2 + $0x258] sm:$0xff]
      %v1699 = vld [vmem:[#allocation2 + $0x298] sm:$0xff]
      %v1700 = vld [vmem:[#allocation2 + $0x2d8] sm:$0xff]
      %v1701 = vld [vmem:[#allocation2 + $0x318] sm:$0xff]
      %v1702 = vld [vmem:[#allocation2 + $0x358] sm:$0xff]
      %v1703 = vld [vmem:[#allocation2 + $0x18] ss:$0 sm:$0xff]
      %v1704 = vmul.f32 %v1689, %v1703
      %v1705 = vmul.f32 %v1690, %v1703
      %v1706 = vmul.f32 %v1691, %v1703
      %v1707 = vmul.f32 %v1692, %v1703
      %v1708 = vmul.f32 %v1693, %v1703
      %v1709 = vmul.f32 %v1694, %v1703
      %v1710 = vmul.f32 %v1695, %v1703
      %v1711 = vmul.f32 %v1696, %v1703
      %v1712 = vmul.f32 %v1697, %v1703
      %v1713 = vmul.f32 %v1698, %v1703
      %v1714 = vmul.f32 %v1699, %v1703
      %v1715 = vmul.f32 %v1700, %v1703
      %v1716 = vmul.f32 %v1701, %v1703
      %v1717 = vmul.f32 %v1702, %v1703
      %1718 = vadd.xlane.f32.xlu0 %v1704
      %v1719 = vpop.xlane.xlu0 %1718
      %1720 = vadd.xlane.f32.xlu0 %v1705
      %v1721 = vpop.xlane.xlu0 %1720
      %1722 = vadd.xlane.f32.xlu0 %v1706
      %v1723 = vpop.xlane.xlu0 %1722
      %1724 = vadd.xlane.f32.xlu0 %v1707
      %v1725 = vpop.xlane.xlu0 %1724
      %1726 = vadd.xlane.f32.xlu0 %v1708
      %v1727 = vpop.xlane.xlu0 %1726
      %1728 = vadd.xlane.f32.xlu0 %v1709
      %v1729 = vpop.xlane.xlu0 %1728
      %1730 = vadd.xlane.f32.xlu0 %v1710
      %v1731 = vpop.xlane.xlu0 %1730
      %1732 = vadd.xlane.f32.xlu0 %v1711
      %v1733 = vpop.xlane.xlu0 %1732
      %1734 = vadd.xlane.f32.xlu0 %v1712
      %v1735 = vpop.xlane.xlu0 %1734
      %1736 = vadd.xlane.f32.xlu0 %v1713
      %v1737 = vpop.xlane.xlu0 %1736
      %1738 = vadd.xlane.f32.xlu0 %v1714
      %v1739 = vpop.xlane.xlu0 %1738
      %1740 = vadd.xlane.f32.xlu0 %v1715
      %v1741 = vpop.xlane.xlu0 %1740
      %1742 = vadd.xlane.f32.xlu0 %v1716
      %v1743 = vpop.xlane.xlu0 %1742
      %1744 = vadd.xlane.f32.xlu0 %v1717
      %v1745 = vpop.xlane.xlu0 %1744
      %v1746 = vld [vmem:[#allocation2 + $0x20] sm:$0xff]
      %v1747 = vld [vmem:[#allocation2 + $0x60] sm:$0xff]
      %v1748 = vld [vmem:[#allocation2 + $0xa0] sm:$0xff]
      %v1749 = vld [vmem:[#allocation2 + $0xe0] sm:$0xff]
      %v1750 = vld [vmem:[#allocation2 + $0x120] sm:$0xff]
      %v1751 = vld [vmem:[#allocation2 + $0x160] sm:$0xff]
      %v1752 = vld [vmem:[#allocation2 + $0x1a0] sm:$0xff]
      %v1753 = vld [vmem:[#allocation2 + $0x1e0] sm:$0xff]
      %v1754 = vld [vmem:[#allocation2 + $0x220] sm:$0xff]
      %v1755 = vld [vmem:[#allocation2 + $0x260] sm:$0xff]
      %v1756 = vld [vmem:[#allocation2 + $0x2a0] sm:$0xff]
      %v1757 = vld [vmem:[#allocation2 + $0x2e0] sm:$0xff]
      %v1758 = vld [vmem:[#allocation2 + $0x320] sm:$0xff]
      %v1759 = vld [vmem:[#allocation2 + $0x360] sm:$0xff]
      %v1760 = vld [vmem:[#allocation2 + $0x20] ss:$0 sm:$0xff]
      %v1761 = vmul.f32 %v1746, %v1760
      %v1762 = vmul.f32 %v1747, %v1760
      %v1763 = vmul.f32 %v1748, %v1760
      %v1764 = vmul.f32 %v1749, %v1760
      %v1765 = vmul.f32 %v1750, %v1760
      %v1766 = vmul.f32 %v1751, %v1760
      %v1767 = vmul.f32 %v1752, %v1760
      %v1768 = vmul.f32 %v1753, %v1760
      %v1769 = vmul.f32 %v1754, %v1760
      %v1770 = vmul.f32 %v1755, %v1760
      %v1771 = vmul.f32 %v1756, %v1760
      %v1772 = vmul.f32 %v1757, %v1760
      %v1773 = vmul.f32 %v1758, %v1760
      %v1774 = vmul.f32 %v1759, %v1760
      %1775 = vadd.xlane.f32.xlu0 %v1761
      %v1776 = vpop.xlane.xlu0 %1775
      %1777 = vadd.xlane.f32.xlu0 %v1762
      %v1778 = vpop.xlane.xlu0 %1777
      %1779 = vadd.xlane.f32.xlu0 %v1763
      %v1780 = vpop.xlane.xlu0 %1779
      %1781 = vadd.xlane.f32.xlu0 %v1764
      %v1782 = vpop.xlane.xlu0 %1781
      %1783 = vadd.xlane.f32.xlu0 %v1765
      %v1784 = vpop.xlane.xlu0 %1783
      %1785 = vadd.xlane.f32.xlu0 %v1766
      %v1786 = vpop.xlane.xlu0 %1785
      %1787 = vadd.xlane.f32.xlu0 %v1767
      %v1788 = vpop.xlane.xlu0 %1787
      %1789 = vadd.xlane.f32.xlu0 %v1768
      %v1790 = vpop.xlane.xlu0 %1789
      %1791 = vadd.xlane.f32.xlu0 %v1769
      %v1792 = vpop.xlane.xlu0 %1791
      %1793 = vadd.xlane.f32.xlu0 %v1770
      %v1794 = vpop.xlane.xlu0 %1793
      %1795 = vadd.xlane.f32.xlu0 %v1771
      %v1796 = vpop.xlane.xlu0 %1795
      %1797 = vadd.xlane.f32.xlu0 %v1772
      %v1798 = vpop.xlane.xlu0 %1797
      %1799 = vadd.xlane.f32.xlu0 %v1773
      %v1800 = vpop.xlane.xlu0 %1799
      %1801 = vadd.xlane.f32.xlu0 %v1774
      %v1802 = vpop.xlane.xlu0 %1801
      %v1803 = vld [vmem:[#allocation2 + $0x28] sm:$0xff]
      %v1804 = vld [vmem:[#allocation2 + $0x68] sm:$0xff]
      %v1805 = vld [vmem:[#allocation2 + $0xa8] sm:$0xff]
      %v1806 = vld [vmem:[#allocation2 + $0xe8] sm:$0xff]
      %v1807 = vld [vmem:[#allocation2 + $0x128] sm:$0xff]
      %v1808 = vld [vmem:[#allocation2 + $0x168] sm:$0xff]
      %v1809 = vld [vmem:[#allocation2 + $0x1a8] sm:$0xff]
      %v1810 = vld [vmem:[#allocation2 + $0x1e8] sm:$0xff]
      %v1811 = vld [vmem:[#allocation2 + $0x228] sm:$0xff]
      %v1812 = vld [vmem:[#allocation2 + $0x268] sm:$0xff]
      %v1813 = vld [vmem:[#allocation2 + $0x2a8] sm:$0xff]
      %v1814 = vld [vmem:[#allocation2 + $0x2e8] sm:$0xff]
      %v1815 = vld [vmem:[#allocation2 + $0x328] sm:$0xff]
      %v1816 = vld [vmem:[#allocation2 + $0x368] sm:$0xff]
      %v1817 = vld [vmem:[#allocation2 + $0x28] ss:$0 sm:$0xff]
      %v1818 = vmul.f32 %v1803, %v1817
      %v1819 = vmul.f32 %v1804, %v1817
      %v1820 = vmul.f32 %v1805, %v1817
      %v1821 = vmul.f32 %v1806, %v1817
      %v1822 = vmul.f32 %v1807, %v1817
      %v1823 = vmul.f32 %v1808, %v1817
      %v1824 = vmul.f32 %v1809, %v1817
      %v1825 = vmul.f32 %v1810, %v1817
      %v1826 = vmul.f32 %v1811, %v1817
      %v1827 = vmul.f32 %v1812, %v1817
      %v1828 = vmul.f32 %v1813, %v1817
      %v1829 = vmul.f32 %v1814, %v1817
      %v1830 = vmul.f32 %v1815, %v1817
      %v1831 = vmul.f32 %v1816, %v1817
      %1832 = vadd.xlane.f32.xlu0 %v1818
      %v1833 = vpop.xlane.xlu0 %1832
      %1834 = vadd.xlane.f32.xlu0 %v1819
      %v1835 = vpop.xlane.xlu0 %1834
      %1836 = vadd.xlane.f32.xlu0 %v1820
      %v1837 = vpop.xlane.xlu0 %1836
      %1838 = vadd.xlane.f32.xlu0 %v1821
      %v1839 = vpop.xlane.xlu0 %1838
      %1840 = vadd.xlane.f32.xlu0 %v1822
      %v1841 = vpop.xlane.xlu0 %1840
      %1842 = vadd.xlane.f32.xlu0 %v1823
      %v1843 = vpop.xlane.xlu0 %1842
      %1844 = vadd.xlane.f32.xlu0 %v1824
      %v1845 = vpop.xlane.xlu0 %1844
      %1846 = vadd.xlane.f32.xlu0 %v1825
      %v1847 = vpop.xlane.xlu0 %1846
      %1848 = vadd.xlane.f32.xlu0 %v1826
      %v1849 = vpop.xlane.xlu0 %1848
      %1850 = vadd.xlane.f32.xlu0 %v1827
      %v1851 = vpop.xlane.xlu0 %1850
      %1852 = vadd.xlane.f32.xlu0 %v1828
      %v1853 = vpop.xlane.xlu0 %1852
      %1854 = vadd.xlane.f32.xlu0 %v1829
      %v1855 = vpop.xlane.xlu0 %1854
      %1856 = vadd.xlane.f32.xlu0 %v1830
      %v1857 = vpop.xlane.xlu0 %1856
      %1858 = vadd.xlane.f32.xlu0 %v1831
      %v1859 = vpop.xlane.xlu0 %1858
      %v1860 = vld [vmem:[#allocation2 + $0x30] sm:$0xff]
      %v1861 = vld [vmem:[#allocation2 + $0x70] sm:$0xff]
      %v1862 = vld [vmem:[#allocation2 + $0xb0] sm:$0xff]
      %v1863 = vld [vmem:[#allocation2 + $0xf0] sm:$0xff]
      %v1864 = vld [vmem:[#allocation2 + $0x130] sm:$0xff]
      %v1865 = vld [vmem:[#allocation2 + $0x170] sm:$0xff]
      %v1866 = vld [vmem:[#allocation2 + $0x1b0] sm:$0xff]
      %v1867 = vld [vmem:[#allocation2 + $0x1f0] sm:$0xff]
      %v1868 = vld [vmem:[#allocation2 + $0x230] sm:$0xff]
      %v1869 = vld [vmem:[#allocation2 + $0x270] sm:$0xff]
      %v1870 = vld [vmem:[#allocation2 + $0x2b0] sm:$0xff]
      %v1871 = vld [vmem:[#allocation2 + $0x2f0] sm:$0xff]
      %v1872 = vld [vmem:[#allocation2 + $0x330] sm:$0xff]
      %v1873 = vld [vmem:[#allocation2 + $0x370] sm:$0xff]
      %v1874 = vld [vmem:[#allocation2 + $0x30] ss:$0 sm:$0xff]
      %v1875 = vmul.f32 %v1860, %v1874
      %v1876 = vmul.f32 %v1861, %v1874
      %v1877 = vmul.f32 %v1862, %v1874
      %v1878 = vmul.f32 %v1863, %v1874
      %v1879 = vmul.f32 %v1864, %v1874
      %v1880 = vmul.f32 %v1865, %v1874
      %v1881 = vmul.f32 %v1866, %v1874
      %v1882 = vmul.f32 %v1867, %v1874
      %v1883 = vmul.f32 %v1868, %v1874
      %v1884 = vmul.f32 %v1869, %v1874
      %v1885 = vmul.f32 %v1870, %v1874
      %v1886 = vmul.f32 %v1871, %v1874
      %v1887 = vmul.f32 %v1872, %v1874
      %v1888 = vmul.f32 %v1873, %v1874
      %1889 = vadd.xlane.f32.xlu0 %v1875
      %v1890 = vpop.xlane.xlu0 %1889
      %1891 = vadd.xlane.f32.xlu0 %v1876
      %v1892 = vpop.xlane.xlu0 %1891
      %1893 = vadd.xlane.f32.xlu0 %v1877
      %v1894 = vpop.xlane.xlu0 %1893
      %1895 = vadd.xlane.f32.xlu0 %v1878
      %v1896 = vpop.xlane.xlu0 %1895
      %1897 = vadd.xlane.f32.xlu0 %v1879
      %v1898 = vpop.xlane.xlu0 %1897
      %1899 = vadd.xlane.f32.xlu0 %v1880
      %v1900 = vpop.xlane.xlu0 %1899
      %1901 = vadd.xlane.f32.xlu0 %v1881
      %v1902 = vpop.xlane.xlu0 %1901
      %1903 = vadd.xlane.f32.xlu0 %v1882
      %v1904 = vpop.xlane.xlu0 %1903
      %1905 = vadd.xlane.f32.xlu0 %v1883
      %v1906 = vpop.xlane.xlu0 %1905
      %1907 = vadd.xlane.f32.xlu0 %v1884
      %v1908 = vpop.xlane.xlu0 %1907
      %1909 = vadd.xlane.f32.xlu0 %v1885
      %v1910 = vpop.xlane.xlu0 %1909
      %1911 = vadd.xlane.f32.xlu0 %v1886
      %v1912 = vpop.xlane.xlu0 %1911
      %1913 = vadd.xlane.f32.xlu0 %v1887
      %v1914 = vpop.xlane.xlu0 %1913
      %1915 = vadd.xlane.f32.xlu0 %v1888
      %v1916 = vpop.xlane.xlu0 %1915
      %v1917 = vld [vmem:[#allocation2 + $0x38] sm:$0xff]
      %v1918 = vld [vmem:[#allocation2 + $0x78] sm:$0xff]
      %v1919 = vld [vmem:[#allocation2 + $0xb8] sm:$0xff]
      %v1920 = vld [vmem:[#allocation2 + $0xf8] sm:$0xff]
      %v1921 = vld [vmem:[#allocation2 + $0x138] sm:$0xff]
      %v1922 = vld [vmem:[#allocation2 + $0x178] sm:$0xff]
      %v1923 = vld [vmem:[#allocation2 + $0x1b8] sm:$0xff]
      %v1924 = vld [vmem:[#allocation2 + $0x1f8] sm:$0xff]
      %v1925 = vld [vmem:[#allocation2 + $0x238] sm:$0xff]
      %v1926 = vld [vmem:[#allocation2 + $0x278] sm:$0xff]
      %v1927 = vld [vmem:[#allocation2 + $0x2b8] sm:$0xff]
      %v1928 = vld [vmem:[#allocation2 + $0x2f8] sm:$0xff]
      %v1929 = vld [vmem:[#allocation2 + $0x338] sm:$0xff]
      %v1930 = vld [vmem:[#allocation2 + $0x378] sm:$0xff]
      %v1931 = vld [vmem:[#allocation2 + $0x38] ss:$0 sm:$0xff]
      %v1932 = vmul.f32 %v1917, %v1931
      %v1933 = vmul.f32 %v1918, %v1931
      %v1934 = vmul.f32 %v1919, %v1931
      %v1935 = vmul.f32 %v1920, %v1931
      %v1936 = vmul.f32 %v1921, %v1931
      %v1937 = vmul.f32 %v1922, %v1931
      %v1938 = vmul.f32 %v1923, %v1931
      %v1939 = vmul.f32 %v1924, %v1931
      %v1940 = vmul.f32 %v1925, %v1931
      %v1941 = vmul.f32 %v1926, %v1931
      %v1942 = vmul.f32 %v1927, %v1931
      %v1943 = vmul.f32 %v1928, %v1931
      %v1944 = vmul.f32 %v1929, %v1931
      %v1945 = vmul.f32 %v1930, %v1931
      %1946 = vadd.xlane.f32.xlu0 %v1932
      %v1947 = vpop.xlane.xlu0 %1946
      %1948 = vadd.xlane.f32.xlu0 %v1933
      %v1949 = vpop.xlane.xlu0 %1948
      %1950 = vadd.xlane.f32.xlu0 %v1934
      %v1951 = vpop.xlane.xlu0 %1950
      %1952 = vadd.xlane.f32.xlu0 %v1935
      %v1953 = vpop.xlane.xlu0 %1952
      %1954 = vadd.xlane.f32.xlu0 %v1936
      %v1955 = vpop.xlane.xlu0 %1954
      %1956 = vadd.xlane.f32.xlu0 %v1937
      %v1957 = vpop.xlane.xlu0 %1956
      %1958 = vadd.xlane.f32.xlu0 %v1938
      %v1959 = vpop.xlane.xlu0 %1958
      %1960 = vadd.xlane.f32.xlu0 %v1939
      %v1961 = vpop.xlane.xlu0 %1960
      %1962 = vadd.xlane.f32.xlu0 %v1940
      %v1963 = vpop.xlane.xlu0 %1962
      %1964 = vadd.xlane.f32.xlu0 %v1941
      %v1965 = vpop.xlane.xlu0 %1964
      %1966 = vadd.xlane.f32.xlu0 %v1942
      %v1967 = vpop.xlane.xlu0 %1966
      %1968 = vadd.xlane.f32.xlu0 %v1943
      %v1969 = vpop.xlane.xlu0 %1968
      %1970 = vadd.xlane.f32.xlu0 %v1944
      %v1971 = vpop.xlane.xlu0 %1970
      %1972 = vadd.xlane.f32.xlu0 %v1945
      %v1973 = vpop.xlane.xlu0 %1972
      %vm1974 = vcmask 7168
      %v1975 = vsel %vm1974, %v1548, %v1605
      %v1976 = vsel %vm1974, %v1550, %v1607
      %v1977 = vsel %vm1974, %v1552, %v1609
      %v1978 = vsel %vm1974, %v1554, %v1611
      %v1979 = vsel %vm1974, %v1556, %v1613
      %v1980 = vsel %vm1974, %v1558, %v1615
      %v1981 = vsel %vm1974, %v1560, %v1617
      %v1982 = vsel %vm1974, %v1562, %v1619
      %v1983 = vsel %vm1974, %v1564, %v1621
      %v1984 = vsel %vm1974, %v1566, %v1623
      %v1985 = vsel %vm1974, %v1568, %v1625
      %v1986 = vsel %vm1974, %v1570, %v1627
      %v1987 = vsel %vm1974, %v1572, %v1629
      %v1988 = vsel %vm1974, %v1574, %v1631
      %vm1989 = vcmask 15360
      %v1990 = vsel %vm1989, %v1975, %v1662
      %v1991 = vsel %vm1989, %v1976, %v1664
      %v1992 = vsel %vm1989, %v1977, %v1666
      %v1993 = vsel %vm1989, %v1978, %v1668
      %v1994 = vsel %vm1989, %v1979, %v1670
      %v1995 = vsel %vm1989, %v1980, %v1672
      %v1996 = vsel %vm1989, %v1981, %v1674
      %v1997 = vsel %vm1989, %v1982, %v1676
      %v1998 = vsel %vm1989, %v1983, %v1678
      %v1999 = vsel %vm1989, %v1984, %v1680
      %v2000 = vsel %vm1989, %v1985, %v1682
      %v2001 = vsel %vm1989, %v1986, %v1684
      %v2002 = vsel %vm1989, %v1987, %v1686
      %v2003 = vsel %vm1989, %v1988, %v1688
      %vm2004 = vcmask 23552
      %v2005 = vsel %vm2004, %v1990, %v1719
      %v2006 = vsel %vm2004, %v1991, %v1721
      %v2007 = vsel %vm2004, %v1992, %v1723
      %v2008 = vsel %vm2004, %v1993, %v1725
      %v2009 = vsel %vm2004, %v1994, %v1727
      %v2010 = vsel %vm2004, %v1995, %v1729
      %v2011 = vsel %vm2004, %v1996, %v1731
      %v2012 = vsel %vm2004, %v1997, %v1733
      %v2013 = vsel %vm2004, %v1998, %v1735
      %v2014 = vsel %vm2004, %v1999, %v1737
      %v2015 = vsel %vm2004, %v2000, %v1739
      %v2016 = vsel %vm2004, %v2001, %v1741
      %v2017 = vsel %vm2004, %v2002, %v1743
      %v2018 = vsel %vm2004, %v2003, %v1745
      %vm2019 = vcmask 31744
      %v2020 = vsel %vm2019, %v2005, %v1776
      %v2021 = vsel %vm2019, %v2006, %v1778
      %v2022 = vsel %vm2019, %v2007, %v1780
      %v2023 = vsel %vm2019, %v2008, %v1782
      %v2024 = vsel %vm2019, %v2009, %v1784
      %v2025 = vsel %vm2019, %v2010, %v1786
      %v2026 = vsel %vm2019, %v2011, %v1788
      %v2027 = vsel %vm2019, %v2012, %v1790
      %v2028 = vsel %vm2019, %v2013, %v1792
      %v2029 = vsel %vm2019, %v2014, %v1794
      %v2030 = vsel %vm2019, %v2015, %v1796
      %v2031 = vsel %vm2019, %v2016, %v1798
      %v2032 = vsel %vm2019, %v2017, %v1800
      %v2033 = vsel %vm2019, %v2018, %v1802
      %vm2034 = vcmask 39936
      %v2035 = vsel %vm2034, %v2020, %v1833
      %v2036 = vsel %vm2034, %v2021, %v1835
      %v2037 = vsel %vm2034, %v2022, %v1837
      %v2038 = vsel %vm2034, %v2023, %v1839
      %v2039 = vsel %vm2034, %v2024, %v1841
      %v2040 = vsel %vm2034, %v2025, %v1843
      %v2041 = vsel %vm2034, %v2026, %v1845
      %v2042 = vsel %vm2034, %v2027, %v1847
      %v2043 = vsel %vm2034, %v2028, %v1849
      %v2044 = vsel %vm2034, %v2029, %v1851
      %v2045 = vsel %vm2034, %v2030, %v1853
      %v2046 = vsel %vm2034, %v2031, %v1855
      %v2047 = vsel %vm2034, %v2032, %v1857
      %v2048 = vsel %vm2034, %v2033, %v1859
      %vm2049 = vcmask 48128
      %v2050 = vsel %vm2049, %v2035, %v1890
      %v2051 = vsel %vm2049, %v2036, %v1892
      %v2052 = vsel %vm2049, %v2037, %v1894
      %v2053 = vsel %vm2049, %v2038, %v1896
      %v2054 = vsel %vm2049, %v2039, %v1898
      %v2055 = vsel %vm2049, %v2040, %v1900
      %v2056 = vsel %vm2049, %v2041, %v1902
      %v2057 = vsel %vm2049, %v2042, %v1904
      %v2058 = vsel %vm2049, %v2043, %v1906
      %v2059 = vsel %vm2049, %v2044, %v1908
      %v2060 = vsel %vm2049, %v2045, %v1910
      %v2061 = vsel %vm2049, %v2046, %v1912
      %v2062 = vsel %vm2049, %v2047, %v1914
      %v2063 = vsel %vm2049, %v2048, %v1916
      %vm2064 = vcmask 56320
      %v2065 = vsel %vm2064, %v2050, %v1947
      %v2066 = vsel %vm2064, %v2051, %v1949
      %v2067 = vsel %vm2064, %v2052, %v1951
      %v2068 = vsel %vm2064, %v2053, %v1953
      %v2069 = vsel %vm2064, %v2054, %v1955
      %v2070 = vsel %vm2064, %v2055, %v1957
      %v2071 = vsel %vm2064, %v2056, %v1959
      %v2072 = vsel %vm2064, %v2057, %v1961
      %v2073 = vsel %vm2064, %v2058, %v1963
      %v2074 = vsel %vm2064, %v2059, %v1965
      %v2075 = vsel %vm2064, %v2060, %v1967
      %v2076 = vsel %vm2064, %v2061, %v1969
      %v2077 = vsel %vm2064, %v2062, %v1971
      %v2078 = vsel %vm2064, %v2063, %v1973
      %vm2079 = vcmask 64512
      %2080 = vst.msk [vmem:[%s199] sm:$0xff] %vm2079, %v2065
      %2081 = vst.msk [vmem:[%s199 + $0x8] sm:$0xff] %vm2079, %v2066
      %2082 = vst.msk [vmem:[%s199 + $0x10] sm:$0xff] %vm2079, %v2067
      %2083 = vst.msk [vmem:[%s199 + $0x18] sm:$0xff] %vm2079, %v2068
      %2084 = vst.msk [vmem:[%s199 + $0x20] sm:$0xff] %vm2079, %v2069
      %2085 = vst.msk [vmem:[%s199 + $0x28] sm:$0xff] %vm2079, %v2070
      %2086 = vst.msk [vmem:[%s199 + $0x30] sm:$0xff] %vm2079, %v2071
      %2087 = vst.msk [vmem:[%s199 + $0x38] sm:$0xff] %vm2079, %v2072
      %2088 = vst.msk [vmem:[%s199 + $0x40] sm:$0xff] %vm2079, %v2073
      %2089 = vst.msk [vmem:[%s199 + $0x48] sm:$0xff] %vm2079, %v2074
      %2090 = vst.msk [vmem:[%s199 + $0x50] sm:$0xff] %vm2079, %v2075
      %2091 = vst.msk [vmem:[%s199 + $0x58] sm:$0xff] %vm2079, %v2076
      %2092 = vst.msk [vmem:[%s199 + $0x60] sm:$0xff] %vm2079, %v2077
      %2093 = vst.msk [vmem:[%s199 + $0x68] sm:$0xff] %vm2079, %v2078
      %p2094 = scmp.lt.s32.totalorder %s23, 3
      %s2095 = scalar_select %p2094, %s23, 3
      %s2096 = smul.addr %s2095, 14
      %s2097 = smul.addr %s2096, 8
      %s2098 = scalar_lea.vmem %s4, %s2097
      // Predicated region
      $region47: #{a_call__.2} parent=31 // pred_check
        %p2099 = pneg %p114
      $region48: #{a_call__.2} parent=31 // pred_check_branch
        %2101 = sbr.rel (%p2099) target = $region50
      $region49: #{a_call__.2} parent=31 // pred_region
        _
      $region50: #{a_call__.2} parent=31 // pred_fallthru
        _
    $region32: #{a_call__.2} parent=5 // pred_fallthru
      _
    %p2102 = scmp.le.s32.totalorder 2, %s18
    // Predicated region
    $region51: #{a_call__.2} parent=5 // pred_check
      %p2103 = pneg %p2102
    $region52: #{a_call__.2} parent=5 // pred_check_branch
      %2105 = sbr.rel (%p2103) target = $region54
    $region53: #{a_call__.2} parent=5 // pred_region
      %s2106 = ssub.s32 %s18, 2
      // Predicated region
      $region55: #{a_call__.2} parent=53 // pred_check
        %p2107 = pneg %p120
      $region56: #{a_call__.2} parent=53 // pred_check_branch
        %2109 = sbr.rel (%p2107) target = $region58
      $region57: #{a_call__.2} parent=53 // pred_region
        %p2110 = scmp.lt.s32.totalorder %s24, 3
        %s2111 = scalar_select %p2110, %s24, 3
        %s2112 = smul.addr %s2111, 14
        %s2113 = smul.addr %s2112, 8
        %s2114 = scalar_lea.vmem %s4, %s2113
      $region58: #{a_call__.2} parent=53 // pred_fallthru
        _
    $region54: #{a_call__.2} parent=5 // pred_fallthru
      _
  $region6: #{a_call__.2} parent=0 // loop_footer
    %s22 = sadd.s32 1, %s18
  $region7: #{a_call__.2} parent=0 // loop_footer_branch
    %17 = sbr.rel target = $region3
  $region8: #{a_call__.2} parent=0 // loop_exit
    _

// kernel: a_call__.3
$region0: #{a_call__.3}
  #allocation0 [shape = 'u32[]', space=smem, size = 0x4, offset = 0x4, fixed_abs, tag = 'smem constant byte address 0x4 - core index']
  #allocation1 [shape = 'u32[72,128]{1,0:T(1,128)}', space=vmem, size = 0x9000, scoped, tag = 'internal scratch']
  #allocation2 [shape = 'f32[136,1024]{1,0:T(8,128)}', space=vmem, size = 0x88000, scoped, tag = 'scratch operand']
  #allocation3 [shape = 's32[1]{0}', space=sflag, size = 0x4, scoped, tag = 'scoped memory for a_call__.3']
  #allocation4 [shape = 'u8[2048]{0}', space=smem, size = 0x800, scoped, tag = 'prefetched SMEM operand 0']
  %s0 = inlined_call_operand.vmem [shape: s32[4,100], index: 0, kind: input, shape index: {}]
  %s1 = inlined_call_operand.vmem [shape: f32[136,136], index: 1, kind: input, shape index: {}]
  %s2 = inlined_call_operand.vmem [shape: f32[4,136,1024], index: 2, kind: input, shape index: {}]
  %s3 = inlined_call_operand.vmem [shape: f32[4,136,1024], index: 3, kind: input, shape index: {}]
  %s4 = inlined_call_operand.vmem [shape: f32[4,136,8], index: 4, kind: output, shape index: {}]
  %s5 = sld [smem:[#allocation0]]
  $region59: #{a_call__.3} parent=0
    _
  %s7 = ssub.s32 1, %s5
  %s8 = scalar_select 0, %s7, %s5
  %s10 = sshll.u32 %s0, 4
  %s11 = int_to_ptr.vmem [resolvable:$true] %s10
  %13 = dma.vmem_to_smem %s11, 64, [#allocation4], [#allocation3]
  %15 = dma.done [#allocation3], 64
  %16 = sfence
  loop: start=0, step=1, limit=6
  $region2: #{a_call__.3} parent=0 // loop_pre_header
    _
  $region3: #{a_call__.3} parent=0 // loop_header
    %s18 = sphi 0, %s22
    %p19 = scmp.ge.s32.totalorder %s18, 6
    %s26 = sphi 0, %s26
    %s28 = sphi 0, %s26
    %s29 = sphi 0, %s28
    %s43 = sphi 0, %s29
    %s49 = sphi 0, %s51
    %s52 = sphi 0, %s49
    %s53 = sphi 0, %s52
    %s69 = sphi 0, %s53
    %s75 = sphi 0, %s77
    %s78 = sphi 0, %s75
    %s79 = sphi 0, %s78
    %s95 = sphi 0, %s79
    %s101 = sphi 0, %s103
    %s104 = sphi 0, %s101
    %s105 = sphi 0, %s104
    %s121 = sphi 0, %s105
  $region4: #{a_call__.3} parent=0 // loop_header_branch
    %21 = sbr.rel (%p19) target = $region8
  $region5: #{a_call__.3} parent=0 // loop_body
    %s23 = ssub.s32 %s18, 1
    %s24 = ssub.s32 %s18, 2
    %s25 = sadd.s32 %s18, 1
    %s27 = sadd.s32 %s26, 1
    %p30 = scmp.eq.s32.totalorder %s18, 3
    %p31 = scmp.ne.s32.totalorder %s26, %s28
    %p32 = scmp.eq.s32.totalorder %s18, 0
    %p33 = por %p31, %p32
    %p34 = scmp.ne.s32.totalorder %s26, %s28
    %p35 = scmp.eq.s32.totalorder %s23, 3
    %p36 = por %p34, %p35
    %p37 = scmp.ne.s32.totalorder %s28, %s29
    %p38 = scmp.eq.s32.totalorder %s23, 0
    %p39 = por %p37, %p38
    %p40 = scmp.ne.s32.totalorder %s28, %s29
    %p41 = scmp.eq.s32.totalorder %s24, 3
    %p42 = por %p40, %p41
    %p44 = scmp.ne.s32.totalorder %s29, %s43
    %p45 = scmp.eq.s32.totalorder %s24, 0
    %p46 = por %p44, %p45
    %s47 = ssub.s32 %s18, %s25
    %p48 = scmp.eq.s32.totalorder %s47, 0
    %s50 = sadd.s32 %s49, 1
    %s51 = scalar_select %p48, %s49, %s50
    %p54 = pneg %p48
    %p55 = scmp.eq.s32.totalorder %s18, 3
    %p56 = por %p54, %p55
    %p57 = scmp.ne.s32.totalorder %s49, %s52
    %p58 = scmp.eq.s32.totalorder %s18, 0
    %p59 = por %p57, %p58
    %p60 = scmp.ne.s32.totalorder %s49, %s52
    %p61 = scmp.eq.s32.totalorder %s23, 3
    %p62 = por %p60, %p61
    %p63 = scmp.ne.s32.totalorder %s52, %s53
    %p64 = scmp.eq.s32.totalorder %s23, 0
    %p65 = por %p63, %p64
    %p66 = scmp.ne.s32.totalorder %s52, %s53
    %p67 = scmp.eq.s32.totalorder %s24, 3
    %p68 = por %p66, %p67
    %p70 = scmp.ne.s32.totalorder %s53, %s69
    %p71 = scmp.eq.s32.totalorder %s24, 0
    %p72 = por %p70, %p71
    %s73 = ssub.s32 %s18, %s25
    %p74 = scmp.eq.s32.totalorder %s73, 0
    %s76 = sadd.s32 %s75, 1
    %s77 = scalar_select %p74, %s75, %s76
    %p80 = pneg %p74
    %p81 = scmp.eq.s32.totalorder %s18, 3
    %p82 = por %p80, %p81
    %p83 = scmp.ne.s32.totalorder %s75, %s78
    %p84 = scmp.eq.s32.totalorder %s18, 0
    %p85 = por %p83, %p84
    %p86 = scmp.ne.s32.totalorder %s75, %s78
    %p87 = scmp.eq.s32.totalorder %s23, 3
    %p88 = por %p86, %p87
    %p89 = scmp.ne.s32.totalorder %s78, %s79
    %p90 = scmp.eq.s32.totalorder %s23, 0
    %p91 = por %p89, %p90
    %p92 = scmp.ne.s32.totalorder %s78, %s79
    %p93 = scmp.eq.s32.totalorder %s24, 3
    %p94 = por %p92, %p93
    %p96 = scmp.ne.s32.totalorder %s79, %s95
    %p97 = scmp.eq.s32.totalorder %s24, 0
    %p98 = por %p96, %p97
    %s99 = ssub.s32 %s18, %s25
    %p100 = scmp.eq.s32.totalorder %s99, 0
    %s102 = sadd.s32 %s101, 1
    %s103 = scalar_select %p100, %s101, %s102
    %p106 = pneg %p100
    %p107 = scmp.eq.s32.totalorder %s18, 3
    %p108 = por %p106, %p107
    %p109 = scmp.ne.s32.totalorder %s101, %s104
    %p110 = scmp.eq.s32.totalorder %s18, 0
    %p111 = por %p109, %p110
    %p112 = scmp.ne.s32.totalorder %s101, %s104
    %p113 = scmp.eq.s32.totalorder %s23, 3
    %p114 = por %p112, %p113
    %p115 = scmp.ne.s32.totalorder %s104, %s105
    %p116 = scmp.eq.s32.totalorder %s23, 0
    %p117 = por %p115, %p116
    %p118 = scmp.ne.s32.totalorder %s104, %s105
    %p119 = scmp.eq.s32.totalorder %s24, 3
    %p120 = por %p118, %p119
    %p122 = scmp.ne.s32.totalorder %s105, %s121
    %p123 = scmp.eq.s32.totalorder %s24, 0
    %p124 = por %p122, %p123
    %p125 = scmp.le.s32.totalorder 1, %s18
    %p126 = scmp.lt.s32.totalorder %s18, 5
    %p127 = pnand %p125, %p126
    %p128 = pneg %p127
    // Predicated region
    $region9: #{a_call__.3} parent=5 // pred_check
      _
    $region10: #{a_call__.3} parent=5 // pred_check_branch
      %130 = sbr.rel (%p127) target = $region12
    $region11: #{a_call__.3} parent=5 // pred_region
      %s131 = ssub.s32 %s18, 1
      // Predicated region
      $region13: #{a_call__.3} parent=11 // pred_check
        %p132 = pneg %p39
      $region14: #{a_call__.3} parent=11 // pred_check_branch
        %134 = sbr.rel (%p132) target = $region16
      $region15: #{a_call__.3} parent=11 // pred_region
        _
      $region16: #{a_call__.3} parent=11 // pred_fallthru
        _
    $region12: #{a_call__.3} parent=5 // pred_fallthru
      _
    %p135 = scmp.lt.s32.totalorder %s18, 4
    // Predicated region
    $region17: #{a_call__.3} parent=5 // pred_check
      %p136 = pneg %p135
    $region18: #{a_call__.3} parent=5 // pred_check_branch
      %138 = sbr.rel (%p136) target = $region20
    $region19: #{a_call__.3} parent=5 // pred_region
      // Predicated region
      $region21: #{a_call__.3} parent=19 // pred_check
        %p139 = pneg %p59
      $region22: #{a_call__.3} parent=19 // pred_check_branch
        %141 = sbr.rel (%p139) target = $region24
      $region23: #{a_call__.3} parent=19 // pred_region
        %p142 = scmp.lt.s32.totalorder %s18, 3
        %s143 = scalar_select %p142, %s18, 3
        %s144 = smul.addr %s143, 136
        %s145 = smul.addr %s144, 8
        %s146 = scalar_lea.vmem %s2, %s145
      $region24: #{a_call__.3} parent=19 // pred_fallthru
        _
      // Predicated region
      $region25: #{a_call__.3} parent=19 // pred_check
        %p147 = pneg %p85
      $region26: #{a_call__.3} parent=19 // pred_check_branch
        %149 = sbr.rel (%p147) target = $region28
      $region27: #{a_call__.3} parent=19 // pred_region
        %p150 = scmp.lt.s32.totalorder %s18, 3
        %s151 = scalar_select %p150, %s18, 3
        %s152 = smul.addr %s151, 136
        %s153 = smul.addr %s152, 8
        %s154 = scalar_lea.vmem %s3, %s153
      $region28: #{a_call__.3} parent=19 // pred_fallthru
        _
    $region20: #{a_call__.3} parent=5 // pred_fallthru
      _
    %p155 = scmp.le.s32.totalorder 1, %s18
    %p156 = scmp.lt.s32.totalorder %s18, 5
    %p157 = pnand %p155, %p156
    %p158 = pneg %p157
    // Predicated region
    $region29: #{a_call__.3} parent=5 // pred_check
      _
    $region30: #{a_call__.3} parent=5 // pred_check_branch
      %160 = sbr.rel (%p157) target = $region32
    $region31: #{a_call__.3} parent=5 // pred_region
      %s161 = ssub.s32 %s18, 1
      %p162 = pneg %p39
      %p163 = pneg %p36
      %p164 = scmp.lt.s32.totalorder %s23, 3
      %s165 = scalar_select %p164, %s23, 3
      %s166 = smul.addr %s165, 136
      %s167 = smul.addr %s166, 8
      %s168 = scalar_lea.vmem %s2, %s167
      %p169 = pneg %p65
      %p170 = pneg %p62
      %p171 = scmp.lt.s32.totalorder %s23, 3
      %s172 = scalar_select %p171, %s23, 3
      %s173 = smul.addr %s172, 136
      %s174 = smul.addr %s173, 8
      %s175 = scalar_lea.vmem %s3, %s174
      %p176 = pneg %p91
      %p177 = pneg %p88
      %p178 = pneg %p117
      %p179 = pneg %p114
      %p180 = scmp.lt.s32.totalorder %s23, 3
      %s181 = scalar_select %p180, %s23, 3
      %s182 = smul.addr %s181, 17
      %s183 = smul.addr %s182, 8
      %s184 = scalar_lea.vmem %s4, %s183
      %p185 = scmp.lt.s32.totalorder %s23, 3
      %s186 = scalar_select %p185, %s23, 3
      %s187 = smul.addr %s186, 136
      %s188 = smul.addr %s187, 8
      %s189 = scalar_lea.vmem %s2, %s188
      %p190 = scmp.lt.s32.totalorder %s23, 3
      %s191 = scalar_select %p190, %s23, 3
      %s192 = smul.addr %s191, 136
      %s193 = smul.addr %s192, 8
      %s194 = scalar_lea.vmem %s3, %s193
      %p195 = scmp.lt.s32.totalorder %s23, 3
      %s196 = scalar_select %p195, %s23, 3
      %s197 = smul.addr %s196, 17
      %s198 = smul.addr %s197, 8
      %s199 = scalar_lea.vmem %s4, %s198
      %v200 = vld [vmem:[%s189] sm:$0xff]
      %v201 = vld [vmem:[%s189 + $0x8] sm:$0xff]
      %v202 = vld [vmem:[%s189 + $0x10] sm:$0xff]
      %v203 = vld [vmem:[%s189 + $0x18] sm:$0xff]
      %v204 = vld [vmem:[%s189 + $0x20] sm:$0xff]
      %v205 = vld [vmem:[%s189 + $0x28] sm:$0xff]
      %v206 = vld [vmem:[%s189 + $0x30] sm:$0xff]
      %v207 = vld [vmem:[%s189 + $0x38] sm:$0xff]
      %v208 = vld [vmem:[%s189 + $0x40] sm:$0xff]
      %v209 = vld [vmem:[%s189 + $0x48] sm:$0xff]
      %v210 = vld [vmem:[%s189 + $0x50] sm:$0xff]
      %v211 = vld [vmem:[%s189 + $0x58] sm:$0xff]
      %v212 = vld [vmem:[%s189 + $0x60] sm:$0xff]
      %v213 = vld [vmem:[%s189 + $0x68] sm:$0xff]
      %v214 = vld [vmem:[%s189 + $0x70] sm:$0xff]
      %v215 = vld [vmem:[%s189 + $0x78] sm:$0xff]
      %v216 = vld [vmem:[%s189 + $0x80] sm:$0xff]
      %v217 = vld [vmem:[%s189 + $0x88] sm:$0xff]
      %v218 = vld [vmem:[%s189 + $0x90] sm:$0xff]
      %v219 = vld [vmem:[%s189 + $0x98] sm:$0xff]
      %v220 = vld [vmem:[%s189 + $0xa0] sm:$0xff]
      %v221 = vld [vmem:[%s189 + $0xa8] sm:$0xff]
      %v222 = vld [vmem:[%s189 + $0xb0] sm:$0xff]
      %v223 = vld [vmem:[%s189 + $0xb8] sm:$0xff]
      %v224 = vld [vmem:[%s189 + $0xc0] sm:$0xff]
      %v225 = vld [vmem:[%s189 + $0xc8] sm:$0xff]
      %v226 = vld [vmem:[%s189 + $0xd0] sm:$0xff]
      %v227 = vld [vmem:[%s189 + $0xd8] sm:$0xff]
      %v228 = vld [vmem:[%s189 + $0xe0] sm:$0xff]
      %v229 = vld [vmem:[%s189 + $0xe8] sm:$0xff]
      %v230 = vld [vmem:[%s189 + $0xf0] sm:$0xff]
      %v231 = vld [vmem:[%s189 + $0xf8] sm:$0xff]
      %v232 = vld [vmem:[%s189 + $0x100] sm:$0xff]
      %v233 = vld [vmem:[%s189 + $0x108] sm:$0xff]
      %v234 = vld [vmem:[%s189 + $0x110] sm:$0xff]
      %v235 = vld [vmem:[%s189 + $0x118] sm:$0xff]
      %v236 = vld [vmem:[%s189 + $0x120] sm:$0xff]
      %v237 = vld [vmem:[%s189 + $0x128] sm:$0xff]
      %v238 = vld [vmem:[%s189 + $0x130] sm:$0xff]
      %v239 = vld [vmem:[%s189 + $0x138] sm:$0xff]
      %v240 = vld [vmem:[%s189 + $0x140] sm:$0xff]
      %v241 = vld [vmem:[%s189 + $0x148] sm:$0xff]
      %v242 = vld [vmem:[%s189 + $0x150] sm:$0xff]
      %v243 = vld [vmem:[%s189 + $0x158] sm:$0xff]
      %v244 = vld [vmem:[%s189 + $0x160] sm:$0xff]
      %v245 = vld [vmem:[%s189 + $0x168] sm:$0xff]
      %v246 = vld [vmem:[%s189 + $0x170] sm:$0xff]
      %v247 = vld [vmem:[%s189 + $0x178] sm:$0xff]
      %v248 = vld [vmem:[%s189 + $0x180] sm:$0xff]
      %v249 = vld [vmem:[%s189 + $0x188] sm:$0xff]
      %v250 = vld [vmem:[%s189 + $0x190] sm:$0xff]
      %v251 = vld [vmem:[%s189 + $0x198] sm:$0xff]
      %v252 = vld [vmem:[%s189 + $0x1a0] sm:$0xff]
      %v253 = vld [vmem:[%s189 + $0x1a8] sm:$0xff]
      %v254 = vld [vmem:[%s189 + $0x1b0] sm:$0xff]
      %v255 = vld [vmem:[%s189 + $0x1b8] sm:$0xff]
      %v256 = vld [vmem:[%s189 + $0x1c0] sm:$0xff]
      %v257 = vld [vmem:[%s189 + $0x1c8] sm:$0xff]
      %v258 = vld [vmem:[%s189 + $0x1d0] sm:$0xff]
      %v259 = vld [vmem:[%s189 + $0x1d8] sm:$0xff]
      %v260 = vld [vmem:[%s189 + $0x1e0] sm:$0xff]
      %v261 = vld [vmem:[%s189 + $0x1e8] sm:$0xff]
      %v262 = vld [vmem:[%s189 + $0x1f0] sm:$0xff]
      %v263 = vld [vmem:[%s189 + $0x1f8] sm:$0xff]
      %v264 = vld [vmem:[%s189 + $0x200] sm:$0xff]
      %v265 = vld [vmem:[%s189 + $0x208] sm:$0xff]
      %v266 = vld [vmem:[%s189 + $0x210] sm:$0xff]
      %v267 = vld [vmem:[%s189 + $0x218] sm:$0xff]
      %v268 = vld [vmem:[%s189 + $0x220] sm:$0xff]
      %v269 = vld [vmem:[%s189 + $0x228] sm:$0xff]
      %v270 = vld [vmem:[%s189 + $0x230] sm:$0xff]
      %v271 = vld [vmem:[%s189 + $0x238] sm:$0xff]
      %v272 = vld [vmem:[%s189 + $0x240] sm:$0xff]
      %v273 = vld [vmem:[%s189 + $0x248] sm:$0xff]
      %v274 = vld [vmem:[%s189 + $0x250] sm:$0xff]
      %v275 = vld [vmem:[%s189 + $0x258] sm:$0xff]
      %v276 = vld [vmem:[%s189 + $0x260] sm:$0xff]
      %v277 = vld [vmem:[%s189 + $0x268] sm:$0xff]
      %v278 = vld [vmem:[%s189 + $0x270] sm:$0xff]
      %v279 = vld [vmem:[%s189 + $0x278] sm:$0xff]
      %v280 = vld [vmem:[%s189 + $0x280] sm:$0xff]
      %v281 = vld [vmem:[%s189 + $0x288] sm:$0xff]
      %v282 = vld [vmem:[%s189 + $0x290] sm:$0xff]
      %v283 = vld [vmem:[%s189 + $0x298] sm:$0xff]
      %v284 = vld [vmem:[%s189 + $0x2a0] sm:$0xff]
      %v285 = vld [vmem:[%s189 + $0x2a8] sm:$0xff]
      %v286 = vld [vmem:[%s189 + $0x2b0] sm:$0xff]
      %v287 = vld [vmem:[%s189 + $0x2b8] sm:$0xff]
      %v288 = vld [vmem:[%s189 + $0x2c0] sm:$0xff]
      %v289 = vld [vmem:[%s189 + $0x2c8] sm:$0xff]
      %v290 = vld [vmem:[%s189 + $0x2d0] sm:$0xff]
      %v291 = vld [vmem:[%s189 + $0x2d8] sm:$0xff]
      %v292 = vld [vmem:[%s189 + $0x2e0] sm:$0xff]
      %v293 = vld [vmem:[%s189 + $0x2e8] sm:$0xff]
      %v294 = vld [vmem:[%s189 + $0x2f0] sm:$0xff]
      %v295 = vld [vmem:[%s189 + $0x2f8] sm:$0xff]
      %v296 = vld [vmem:[%s189 + $0x300] sm:$0xff]
      %v297 = vld [vmem:[%s189 + $0x308] sm:$0xff]
      %v298 = vld [vmem:[%s189 + $0x310] sm:$0xff]
      %v299 = vld [vmem:[%s189 + $0x318] sm:$0xff]
      %v300 = vld [vmem:[%s189 + $0x320] sm:$0xff]
      %v301 = vld [vmem:[%s189 + $0x328] sm:$0xff]
      %v302 = vld [vmem:[%s189 + $0x330] sm:$0xff]
      %v303 = vld [vmem:[%s189 + $0x338] sm:$0xff]
      %v304 = vld [vmem:[%s189 + $0x340] sm:$0xff]
      %v305 = vld [vmem:[%s189 + $0x348] sm:$0xff]
      %v306 = vld [vmem:[%s189 + $0x350] sm:$0xff]
      %v307 = vld [vmem:[%s189 + $0x358] sm:$0xff]
      %v308 = vld [vmem:[%s189 + $0x360] sm:$0xff]
      %v309 = vld [vmem:[%s189 + $0x368] sm:$0xff]
      %v310 = vld [vmem:[%s189 + $0x370] sm:$0xff]
      %v311 = vld [vmem:[%s189 + $0x378] sm:$0xff]
      %v312 = vld [vmem:[%s189 + $0x380] sm:$0xff]
      %v313 = vld [vmem:[%s189 + $0x388] sm:$0xff]
      %v314 = vld [vmem:[%s189 + $0x390] sm:$0xff]
      %v315 = vld [vmem:[%s189 + $0x398] sm:$0xff]
      %v316 = vld [vmem:[%s189 + $0x3a0] sm:$0xff]
      %v317 = vld [vmem:[%s189 + $0x3a8] sm:$0xff]
      %v318 = vld [vmem:[%s189 + $0x3b0] sm:$0xff]
      %v319 = vld [vmem:[%s189 + $0x3b8] sm:$0xff]
      %v320 = vld [vmem:[%s189 + $0x3c0] sm:$0xff]
      %v321 = vld [vmem:[%s189 + $0x3c8] sm:$0xff]
      %v322 = vld [vmem:[%s189 + $0x3d0] sm:$0xff]
      %v323 = vld [vmem:[%s189 + $0x3d8] sm:$0xff]
      %v324 = vld [vmem:[%s189 + $0x3e0] sm:$0xff]
      %v325 = vld [vmem:[%s189 + $0x3e8] sm:$0xff]
      %v326 = vld [vmem:[%s189 + $0x3f0] sm:$0xff]
      %v327 = vld [vmem:[%s189 + $0x3f8] sm:$0xff]
      %v328 = vld [vmem:[%s189 + $0x400] sm:$0xff]
      %v329 = vld [vmem:[%s189 + $0x408] sm:$0xff]
      %v330 = vld [vmem:[%s189 + $0x410] sm:$0xff]
      %v331 = vld [vmem:[%s189 + $0x418] sm:$0xff]
      %v332 = vld [vmem:[%s189 + $0x420] sm:$0xff]
      %v333 = vld [vmem:[%s189 + $0x428] sm:$0xff]
      %v334 = vld [vmem:[%s189 + $0x430] sm:$0xff]
      %v335 = vld [vmem:[%s189 + $0x438] sm:$0xff]
      %336 = vst [vmem:[#allocation2] sm:$0xff] %v200
      %337 = vst [vmem:[#allocation2 + $0x8] sm:$0xff] %v201
      %338 = vst [vmem:[#allocation2 + $0x10] sm:$0xff] %v202
      %339 = vst [vmem:[#allocation2 + $0x18] sm:$0xff] %v203
      %340 = vst [vmem:[#allocation2 + $0x20] sm:$0xff] %v204
      %341 = vst [vmem:[#allocation2 + $0x28] sm:$0xff] %v205
      %342 = vst [vmem:[#allocation2 + $0x30] sm:$0xff] %v206
      %343 = vst [vmem:[#allocation2 + $0x38] sm:$0xff] %v207
      %344 = vst [vmem:[#allocation2 + $0x40] sm:$0xff] %v208
      %345 = vst [vmem:[#allocation2 + $0x48] sm:$0xff] %v209
      %346 = vst [vmem:[#allocation2 + $0x50] sm:$0xff] %v210
      %347 = vst [vmem:[#allocation2 + $0x58] sm:$0xff] %v211
      %348 = vst [vmem:[#allocation2 + $0x60] sm:$0xff] %v212
      %349 = vst [vmem:[#allocation2 + $0x68] sm:$0xff] %v213
      %350 = vst [vmem:[#allocation2 + $0x70] sm:$0xff] %v214
      %351 = vst [vmem:[#allocation2 + $0x78] sm:$0xff] %v215
      %352 = vst [vmem:[#allocation2 + $0x80] sm:$0xff] %v216
      %353 = vst [vmem:[#allocation2 + $0x88] sm:$0xff] %v217
      %354 = vst [vmem:[#allocation2 + $0x90] sm:$0xff] %v218
      %355 = vst [vmem:[#allocation2 + $0x98] sm:$0xff] %v219
      %356 = vst [vmem:[#allocation2 + $0xa0] sm:$0xff] %v220
      %357 = vst [vmem:[#allocation2 + $0xa8] sm:$0xff] %v221
      %358 = vst [vmem:[#allocation2 + $0xb0] sm:$0xff] %v222
      %359 = vst [vmem:[#allocation2 + $0xb8] sm:$0xff] %v223
      %360 = vst [vmem:[#allocation2 + $0xc0] sm:$0xff] %v224
      %361 = vst [vmem:[#allocation2 + $0xc8] sm:$0xff] %v225
      %362 = vst [vmem:[#allocation2 + $0xd0] sm:$0xff] %v226
      %363 = vst [vmem:[#allocation2 + $0xd8] sm:$0xff] %v227
      %364 = vst [vmem:[#allocation2 + $0xe0] sm:$0xff] %v228
      %365 = vst [vmem:[#allocation2 + $0xe8] sm:$0xff] %v229
      %366 = vst [vmem:[#allocation2 + $0xf0] sm:$0xff] %v230
      %367 = vst [vmem:[#allocation2 + $0xf8] sm:$0xff] %v231
      %368 = vst [vmem:[#allocation2 + $0x100] sm:$0xff] %v232
      %369 = vst [vmem:[#allocation2 + $0x108] sm:$0xff] %v233
      %370 = vst [vmem:[#allocation2 + $0x110] sm:$0xff] %v234
      %371 = vst [vmem:[#allocation2 + $0x118] sm:$0xff] %v235
      %372 = vst [vmem:[#allocation2 + $0x120] sm:$0xff] %v236
      %373 = vst [vmem:[#allocation2 + $0x128] sm:$0xff] %v237
      %374 = vst [vmem:[#allocation2 + $0x130] sm:$0xff] %v238
      %375 = vst [vmem:[#allocation2 + $0x138] sm:$0xff] %v239
      %376 = vst [vmem:[#allocation2 + $0x140] sm:$0xff] %v240
      %377 = vst [vmem:[#allocation2 + $0x148] sm:$0xff] %v241
      %378 = vst [vmem:[#allocation2 + $0x150] sm:$0xff] %v242
      %379 = vst [vmem:[#allocation2 + $0x158] sm:$0xff] %v243
      %380 = vst [vmem:[#allocation2 + $0x160] sm:$0xff] %v244
      %381 = vst [vmem:[#allocation2 + $0x168] sm:$0xff] %v245
      %382 = vst [vmem:[#allocation2 + $0x170] sm:$0xff] %v246
      %383 = vst [vmem:[#allocation2 + $0x178] sm:$0xff] %v247
      %384 = vst [vmem:[#allocation2 + $0x180] sm:$0xff] %v248
      %385 = vst [vmem:[#allocation2 + $0x188] sm:$0xff] %v249
      %386 = vst [vmem:[#allocation2 + $0x190] sm:$0xff] %v250
      %387 = vst [vmem:[#allocation2 + $0x198] sm:$0xff] %v251
      %388 = vst [vmem:[#allocation2 + $0x1a0] sm:$0xff] %v252
      %389 = vst [vmem:[#allocation2 + $0x1a8] sm:$0xff] %v253
      %390 = vst [vmem:[#allocation2 + $0x1b0] sm:$0xff] %v254
      %391 = vst [vmem:[#allocation2 + $0x1b8] sm:$0xff] %v255
      %392 = vst [vmem:[#allocation2 + $0x1c0] sm:$0xff] %v256
      %393 = vst [vmem:[#allocation2 + $0x1c8] sm:$0xff] %v257
      %394 = vst [vmem:[#allocation2 + $0x1d0] sm:$0xff] %v258
      %395 = vst [vmem:[#allocation2 + $0x1d8] sm:$0xff] %v259
      %396 = vst [vmem:[#allocation2 + $0x1e0] sm:$0xff] %v260
      %397 = vst [vmem:[#allocation2 + $0x1e8] sm:$0xff] %v261
      %398 = vst [vmem:[#allocation2 + $0x1f0] sm:$0xff] %v262
      %399 = vst [vmem:[#allocation2 + $0x1f8] sm:$0xff] %v263
      %400 = vst [vmem:[#allocation2 + $0x200] sm:$0xff] %v264
      %401 = vst [vmem:[#allocation2 + $0x208] sm:$0xff] %v265
      %402 = vst [vmem:[#allocation2 + $0x210] sm:$0xff] %v266
      %403 = vst [vmem:[#allocation2 + $0x218] sm:$0xff] %v267
      %404 = vst [vmem:[#allocation2 + $0x220] sm:$0xff] %v268
      %405 = vst [vmem:[#allocation2 + $0x228] sm:$0xff] %v269
      %406 = vst [vmem:[#allocation2 + $0x230] sm:$0xff] %v270
      %407 = vst [vmem:[#allocation2 + $0x238] sm:$0xff] %v271
      %408 = vst [vmem:[#allocation2 + $0x240] sm:$0xff] %v272
      %409 = vst [vmem:[#allocation2 + $0x248] sm:$0xff] %v273
      %410 = vst [vmem:[#allocation2 + $0x250] sm:$0xff] %v274
      %411 = vst [vmem:[#allocation2 + $0x258] sm:$0xff] %v275
      %412 = vst [vmem:[#allocation2 + $0x260] sm:$0xff] %v276
      %413 = vst [vmem:[#allocation2 + $0x268] sm:$0xff] %v277
      %414 = vst [vmem:[#allocation2 + $0x270] sm:$0xff] %v278
      %415 = vst [vmem:[#allocation2 + $0x278] sm:$0xff] %v279
      %416 = vst [vmem:[#allocation2 + $0x280] sm:$0xff] %v280
      %417 = vst [vmem:[#allocation2 + $0x288] sm:$0xff] %v281
      %418 = vst [vmem:[#allocation2 + $0x290] sm:$0xff] %v282
      %419 = vst [vmem:[#allocation2 + $0x298] sm:$0xff] %v283
      %420 = vst [vmem:[#allocation2 + $0x2a0] sm:$0xff] %v284
      %421 = vst [vmem:[#allocation2 + $0x2a8] sm:$0xff] %v285
      %422 = vst [vmem:[#allocation2 + $0x2b0] sm:$0xff] %v286
      %423 = vst [vmem:[#allocation2 + $0x2b8] sm:$0xff] %v287
      %424 = vst [vmem:[#allocation2 + $0x2c0] sm:$0xff] %v288
      %425 = vst [vmem:[#allocation2 + $0x2c8] sm:$0xff] %v289
      %426 = vst [vmem:[#allocation2 + $0x2d0] sm:$0xff] %v290
      %427 = vst [vmem:[#allocation2 + $0x2d8] sm:$0xff] %v291
      %428 = vst [vmem:[#allocation2 + $0x2e0] sm:$0xff] %v292
      %429 = vst [vmem:[#allocation2 + $0x2e8] sm:$0xff] %v293
      %430 = vst [vmem:[#allocation2 + $0x2f0] sm:$0xff] %v294
      %431 = vst [vmem:[#allocation2 + $0x2f8] sm:$0xff] %v295
      %432 = vst [vmem:[#allocation2 + $0x300] sm:$0xff] %v296
      %433 = vst [vmem:[#allocation2 + $0x308] sm:$0xff] %v297
      %434 = vst [vmem:[#allocation2 + $0x310] sm:$0xff] %v298
      %435 = vst [vmem:[#allocation2 + $0x318] sm:$0xff] %v299
      %436 = vst [vmem:[#allocation2 + $0x320] sm:$0xff] %v300
      %437 = vst [vmem:[#allocation2 + $0x328] sm:$0xff] %v301
      %438 = vst [vmem:[#allocation2 + $0x330] sm:$0xff] %v302
      %439 = vst [vmem:[#allocation2 + $0x338] sm:$0xff] %v303
      %440 = vst [vmem:[#allocation2 + $0x340] sm:$0xff] %v304
      %441 = vst [vmem:[#allocation2 + $0x348] sm:$0xff] %v305
      %442 = vst [vmem:[#allocation2 + $0x350] sm:$0xff] %v306
      %443 = vst [vmem:[#allocation2 + $0x358] sm:$0xff] %v307
      %444 = vst [vmem:[#allocation2 + $0x360] sm:$0xff] %v308
      %445 = vst [vmem:[#allocation2 + $0x368] sm:$0xff] %v309
      %446 = vst [vmem:[#allocation2 + $0x370] sm:$0xff] %v310
      %447 = vst [vmem:[#allocation2 + $0x378] sm:$0xff] %v311
      %448 = vst [vmem:[#allocation2 + $0x380] sm:$0xff] %v312
      %449 = vst [vmem:[#allocation2 + $0x388] sm:$0xff] %v313
      %450 = vst [vmem:[#allocation2 + $0x390] sm:$0xff] %v314
      %451 = vst [vmem:[#allocation2 + $0x398] sm:$0xff] %v315
      %452 = vst [vmem:[#allocation2 + $0x3a0] sm:$0xff] %v316
      %453 = vst [vmem:[#allocation2 + $0x3a8] sm:$0xff] %v317
      %454 = vst [vmem:[#allocation2 + $0x3b0] sm:$0xff] %v318
      %455 = vst [vmem:[#allocation2 + $0x3b8] sm:$0xff] %v319
      %456 = vst [vmem:[#allocation2 + $0x3c0] sm:$0xff] %v320
      %457 = vst [vmem:[#allocation2 + $0x3c8] sm:$0xff] %v321
      %458 = vst [vmem:[#allocation2 + $0x3d0] sm:$0xff] %v322
      %459 = vst [vmem:[#allocation2 + $0x3d8] sm:$0xff] %v323
      %460 = vst [vmem:[#allocation2 + $0x3e0] sm:$0xff] %v324
      %461 = vst [vmem:[#allocation2 + $0x3e8] sm:$0xff] %v325
      %462 = vst [vmem:[#allocation2 + $0x3f0] sm:$0xff] %v326
      %463 = vst [vmem:[#allocation2 + $0x3f8] sm:$0xff] %v327
      %464 = vst [vmem:[#allocation2 + $0x400] sm:$0xff] %v328
      %465 = vst [vmem:[#allocation2 + $0x408] sm:$0xff] %v329
      %466 = vst [vmem:[#allocation2 + $0x410] sm:$0xff] %v330
      %467 = vst [vmem:[#allocation2 + $0x418] sm:$0xff] %v331
      %468 = vst [vmem:[#allocation2 + $0x420] sm:$0xff] %v332
      %469 = vst [vmem:[#allocation2 + $0x428] sm:$0xff] %v333
      %470 = vst [vmem:[#allocation2 + $0x430] sm:$0xff] %v334
      %471 = vst [vmem:[#allocation2 + $0x438] sm:$0xff] %v335
      loop: start=0, step=1, limit=16
      $region33: #{a_call__.3} parent=31 // loop_pre_header
        _
      $region34: #{a_call__.3} parent=31 // loop_header
        %s473 = sphi 0, %s477
        %p474 = scmp.ge.s32.totalorder %s473, 16
      $region35: #{a_call__.3} parent=31 // loop_header_branch
        %476 = sbr.rel (%p474) target = $region39
      $region36: #{a_call__.3} parent=31 // loop_body
        loop: start=0, step=1, limit=50
        $region40: #{a_call__.3} parent=36 // loop_pre_header
          _
        $region41: #{a_call__.3} parent=36 // loop_header
          %s479 = sphi 0, %s483
          %p480 = scmp.ge.s32.totalorder %s479, 50
        $region42: #{a_call__.3} parent=36 // loop_header_branch
          %482 = sbr.rel (%p480) target = $region46
        $region43: #{a_call__.3} parent=36 // loop_body
          %s484 = smul.u32 %s479, 2
          %s485 = sshra.s32 %s484, 7
          %s486 = sand.u32 %s484, 127
          %s487 = sadd.s32 %s485, %s23
          %s488 = smul.u32 %s487, 128
          %s489 = sshra.s32 %s484, 7
          %s490 = sand.u32 %s484, 127
          %s491 = sadd.s32 %s488, %s490
          %s492 = sld [smem:[#allocation4 + %s491]]
          %s493 = sshra.s32 %s492, 3
          %s494 = sand.u32 %s492, 7
          %s495 = sshra.s32 %s492, 3
          %s496 = sand.u32 %s492, 7
          %s497 = smul.u32 %s493, 2
          %s498 = smul.u32 %s497, 8
          %s499 = sadd.s32 %s498, %s496
          %s500 = scalar_lea.vmem %s1, %s499
          %v501 = vld [vmem:[%s500] ss:$8 sm:$0x3]
          %v502 = vld [vmem:[#allocation2] sm:$0xff]
          %v503 = vld [vmem:[#allocation2 + $0x8] sm:$0xff]
          %v504 = vld [vmem:[#allocation2 + $0x10] sm:$0xff]
          %v505 = vld [vmem:[#allocation2 + $0x18] sm:$0xff]
          %v506 = vld [vmem:[#allocation2 + $0x20] sm:$0xff]
          %v507 = vld [vmem:[#allocation2 + $0x28] sm:$0xff]
          %v508 = vld [vmem:[#allocation2 + $0x30] sm:$0xff]
          %v509 = vld [vmem:[#allocation2 + $0x38] sm:$0xff]
          %v510 = vld [vmem:[#allocation2 + $0x40] sm:$0xff]
          %v511 = vld [vmem:[#allocation2 + $0x48] sm:$0xff]
          %v512 = vld [vmem:[#allocation2 + $0x50] sm:$0xff]
          %v513 = vld [vmem:[#allocation2 + $0x58] sm:$0xff]
          %v514 = vld [vmem:[#allocation2 + $0x60] sm:$0xff]
          %v515 = vld [vmem:[#allocation2 + $0x68] sm:$0xff]
          %v516 = vld [vmem:[#allocation2 + $0x70] sm:$0xff]
          %v517 = vld [vmem:[#allocation2 + $0x78] sm:$0xff]
          %v518 = vld [vmem:[#allocation2 + $0x80] sm:$0xff]
          %v519 = vld [vmem:[#allocation2 + $0x88] sm:$0xff]
          %v520 = vld [vmem:[#allocation2 + $0x90] sm:$0xff]
          %v521 = vld [vmem:[#allocation2 + $0x98] sm:$0xff]
          %v522 = vld [vmem:[#allocation2 + $0xa0] sm:$0xff]
          %v523 = vld [vmem:[#allocation2 + $0xa8] sm:$0xff]
          %v524 = vld [vmem:[#allocation2 + $0xb0] sm:$0xff]
          %v525 = vld [vmem:[#allocation2 + $0xb8] sm:$0xff]
          %v526 = vld [vmem:[#allocation2 + $0xc0] sm:$0xff]
          %v527 = vld [vmem:[#allocation2 + $0xc8] sm:$0xff]
          %v528 = vld [vmem:[#allocation2 + $0xd0] sm:$0xff]
          %v529 = vld [vmem:[#allocation2 + $0xd8] sm:$0xff]
          %v530 = vld [vmem:[#allocation2 + $0xe0] sm:$0xff]
          %v531 = vld [vmem:[#allocation2 + $0xe8] sm:$0xff]
          %v532 = vld [vmem:[#allocation2 + $0xf0] sm:$0xff]
          %v533 = vld [vmem:[#allocation2 + $0xf8] sm:$0xff]
          %v534 = vld [vmem:[#allocation2 + $0x100] sm:$0xff]
          %v535 = vld [vmem:[#allocation2 + $0x108] sm:$0xff]
          %v536 = vld [vmem:[#allocation2 + $0x110] sm:$0xff]
          %v537 = vld [vmem:[#allocation2 + $0x118] sm:$0xff]
          %v538 = vld [vmem:[#allocation2 + $0x120] sm:$0xff]
          %v539 = vld [vmem:[#allocation2 + $0x128] sm:$0xff]
          %v540 = vld [vmem:[#allocation2 + $0x130] sm:$0xff]
          %v541 = vld [vmem:[#allocation2 + $0x138] sm:$0xff]
          %v542 = vld [vmem:[#allocation2 + $0x140] sm:$0xff]
          %v543 = vld [vmem:[#allocation2 + $0x148] sm:$0xff]
          %v544 = vld [vmem:[#allocation2 + $0x150] sm:$0xff]
          %v545 = vld [vmem:[#allocation2 + $0x158] sm:$0xff]
          %v546 = vld [vmem:[#allocation2 + $0x160] sm:$0xff]
          %v547 = vld [vmem:[#allocation2 + $0x168] sm:$0xff]
          %v548 = vld [vmem:[#allocation2 + $0x170] sm:$0xff]
          %v549 = vld [vmem:[#allocation2 + $0x178] sm:$0xff]
          %v550 = vld [vmem:[#allocation2 + $0x180] sm:$0xff]
          %v551 = vld [vmem:[#allocation2 + $0x188] sm:$0xff]
          %v552 = vld [vmem:[#allocation2 + $0x190] sm:$0xff]
          %v553 = vld [vmem:[#allocation2 + $0x198] sm:$0xff]
          %v554 = vld [vmem:[#allocation2 + $0x1a0] sm:$0xff]
          %v555 = vld [vmem:[#allocation2 + $0x1a8] sm:$0xff]
          %v556 = vld [vmem:[#allocation2 + $0x1b0] sm:$0xff]
          %v557 = vld [vmem:[#allocation2 + $0x1b8] sm:$0xff]
          %v558 = vld [vmem:[#allocation2 + $0x1c0] sm:$0xff]
          %v559 = vld [vmem:[#allocation2 + $0x1c8] sm:$0xff]
          %v560 = vld [vmem:[#allocation2 + $0x1d0] sm:$0xff]
          %v561 = vld [vmem:[#allocation2 + $0x1d8] sm:$0xff]
          %v562 = vld [vmem:[#allocation2 + $0x1e0] sm:$0xff]
          %v563 = vld [vmem:[#allocation2 + $0x1e8] sm:$0xff]
          %v564 = vld [vmem:[#allocation2 + $0x1f0] sm:$0xff]
          %v565 = vld [vmem:[#allocation2 + $0x1f8] sm:$0xff]
          %v566 = vld [vmem:[#allocation2 + $0x200] sm:$0xff]
          %v567 = vld [vmem:[#allocation2 + $0x208] sm:$0xff]
          %v568 = vld [vmem:[#allocation2 + $0x210] sm:$0xff]
          %v569 = vld [vmem:[#allocation2 + $0x218] sm:$0xff]
          %v570 = vld [vmem:[#allocation2 + $0x220] sm:$0xff]
          %v571 = vld [vmem:[#allocation2 + $0x228] sm:$0xff]
          %v572 = vld [vmem:[#allocation2 + $0x230] sm:$0xff]
          %v573 = vld [vmem:[#allocation2 + $0x238] sm:$0xff]
          %v574 = vld [vmem:[#allocation2 + $0x240] sm:$0xff]
          %v575 = vld [vmem:[#allocation2 + $0x248] sm:$0xff]
          %v576 = vld [vmem:[#allocation2 + $0x250] sm:$0xff]
          %v577 = vld [vmem:[#allocation2 + $0x258] sm:$0xff]
          %v578 = vld [vmem:[#allocation2 + $0x260] sm:$0xff]
          %v579 = vld [vmem:[#allocation2 + $0x268] sm:$0xff]
          %v580 = vld [vmem:[#allocation2 + $0x270] sm:$0xff]
          %v581 = vld [vmem:[#allocation2 + $0x278] sm:$0xff]
          %v582 = vld [vmem:[#allocation2 + $0x280] sm:$0xff]
          %v583 = vld [vmem:[#allocation2 + $0x288] sm:$0xff]
          %v584 = vld [vmem:[#allocation2 + $0x290] sm:$0xff]
          %v585 = vld [vmem:[#allocation2 + $0x298] sm:$0xff]
          %v586 = vld [vmem:[#allocation2 + $0x2a0] sm:$0xff]
          %v587 = vld [vmem:[#allocation2 + $0x2a8] sm:$0xff]
          %v588 = vld [vmem:[#allocation2 + $0x2b0] sm:$0xff]
          %v589 = vld [vmem:[#allocation2 + $0x2b8] sm:$0xff]
          %v590 = vld [vmem:[#allocation2 + $0x2c0] sm:$0xff]
          %v591 = vld [vmem:[#allocation2 + $0x2c8] sm:$0xff]
          %v592 = vld [vmem:[#allocation2 + $0x2d0] sm:$0xff]
          %v593 = vld [vmem:[#allocation2 + $0x2d8] sm:$0xff]
          %v594 = vld [vmem:[#allocation2 + $0x2e0] sm:$0xff]
          %v595 = vld [vmem:[#allocation2 + $0x2e8] sm:$0xff]
          %v596 = vld [vmem:[#allocation2 + $0x2f0] sm:$0xff]
          %v597 = vld [vmem:[#allocation2 + $0x2f8] sm:$0xff]
          %v598 = vld [vmem:[#allocation2 + $0x300] sm:$0xff]
          %v599 = vld [vmem:[#allocation2 + $0x308] sm:$0xff]
          %v600 = vld [vmem:[#allocation2 + $0x310] sm:$0xff]
          %v601 = vld [vmem:[#allocation2 + $0x318] sm:$0xff]
          %v602 = vld [vmem:[#allocation2 + $0x320] sm:$0xff]
          %v603 = vld [vmem:[#allocation2 + $0x328] sm:$0xff]
          %v604 = vld [vmem:[#allocation2 + $0x330] sm:$0xff]
          %v605 = vld [vmem:[#allocation2 + $0x338] sm:$0xff]
          %v606 = vld [vmem:[#allocation2 + $0x340] sm:$0xff]
          %v607 = vld [vmem:[#allocation2 + $0x348] sm:$0xff]
          %v608 = vld [vmem:[#allocation2 + $0x350] sm:$0xff]
          %v609 = vld [vmem:[#allocation2 + $0x358] sm:$0xff]
          %v610 = vld [vmem:[#allocation2 + $0x360] sm:$0xff]
          %v611 = vld [vmem:[#allocation2 + $0x368] sm:$0xff]
          %v612 = vld [vmem:[#allocation2 + $0x370] sm:$0xff]
          %v613 = vld [vmem:[#allocation2 + $0x378] sm:$0xff]
          %v614 = vld [vmem:[#allocation2 + $0x380] sm:$0xff]
          %v615 = vld [vmem:[#allocation2 + $0x388] sm:$0xff]
          %v616 = vld [vmem:[#allocation2 + $0x390] sm:$0xff]
          %v617 = vld [vmem:[#allocation2 + $0x398] sm:$0xff]
          %v618 = vld [vmem:[#allocation2 + $0x3a0] sm:$0xff]
          %v619 = vld [vmem:[#allocation2 + $0x3a8] sm:$0xff]
          %v620 = vld [vmem:[#allocation2 + $0x3b0] sm:$0xff]
          %v621 = vld [vmem:[#allocation2 + $0x3b8] sm:$0xff]
          %v622 = vld [vmem:[#allocation2 + $0x3c0] sm:$0xff]
          %v623 = vld [vmem:[#allocation2 + $0x3c8] sm:$0xff]
          %v624 = vld [vmem:[#allocation2 + $0x3d0] sm:$0xff]
          %v625 = vld [vmem:[#allocation2 + $0x3d8] sm:$0xff]
          %v626 = vld [vmem:[#allocation2 + $0x3e0] sm:$0xff]
          %v627 = vld [vmem:[#allocation2 + $0x3e8] sm:$0xff]
          %v628 = vld [vmem:[#allocation2 + $0x3f0] sm:$0xff]
          %v629 = vld [vmem:[#allocation2 + $0x3f8] sm:$0xff]
          %v630 = vld [vmem:[#allocation2 + $0x400] sm:$0xff]
          %v631 = vld [vmem:[#allocation2 + $0x408] sm:$0xff]
          %v632 = vld [vmem:[#allocation2 + $0x410] sm:$0xff]
          %v633 = vld [vmem:[#allocation2 + $0x418] sm:$0xff]
          %v634 = vld [vmem:[#allocation2 + $0x420] sm:$0xff]
          %v635 = vld [vmem:[#allocation2 + $0x428] sm:$0xff]
          %v636 = vld [vmem:[#allocation2 + $0x430] sm:$0xff]
          %v637 = vld [vmem:[#allocation2 + $0x438] sm:$0xff]
          %v639 = vperm.slane %v501, 0
          %v640 = vperm.slane %v501, 1
          %vm642 = vcmask 64512
          %v643 = vsel %vm642, %v640, 0
          %645 = vmatpush.msra.mxu0 %v622
          %646 = vmatpush.msra.mxu0 %v614
          %647 = vmatpush.msra.mxu0 %v606
          %648 = vmatpush.msra.mxu0 %v598
          %649 = vmatpush.msra.mxu0 %v590
          %650 = vmatpush.msra.mxu0 %v582
          %651 = vmatpush.msra.mxu0 %v574
          %652 = vmatpush.msra.mxu0 %v566
          %653 = vmatpush.msra.mxu0 %v558
          %654 = vmatpush.msra.mxu0 %v550
          %655 = vmatpush.msra.mxu0 %v542
          %656 = vmatpush.msra.mxu0 %v534
          %657 = vmatpush.msra.mxu0 %v526
          %658 = vmatpush.msra.mxu0 %v518
          %659 = vmatpush.msra.mxu0 %v510
          %660 = vmatpush.msra.mxu0 %v502
          %661 = vmatmul.f32.gmra.mxu0 %v639
          %v662 = vpop.f32.mrf.mxu0
          %v663 = vadd.f32 0.0, %v662
          %664 = vdwg.mxu0
          %665 = vmatpush.msra.mxu0 0.0
          %666 = vmatpush.msra.mxu0 0.0
          %667 = vmatpush.msra.mxu0 0.0
          %668 = vmatpush.msra.mxu0 0.0
          %669 = vmatpush.msra.mxu0 0.0
          %670 = vmatpush.msra.mxu0 0.0
          %671 = vmatpush.msra.mxu0 0.0
          %672 = vmatpush.msra.mxu0 0.0
          %673 = vmatpush.msra.mxu0 0.0
          %674 = vmatpush.msra.mxu0 0.0
          %675 = vmatpush.msra.mxu0 0.0
          %676 = vmatpush.msra.mxu0 0.0
          %677 = vmatpush.msra.mxu0 0.0
          %678 = vmatpush.msra.mxu0 0.0
          %679 = vmatpush.msra.mxu0 0.0
          %680 = vmatpush.msra.mxu0 %v630
          %681 = vmatmul.f32.gmra.mxu0 %v643
          %v682 = vpop.f32.mrf.mxu0
          %v683 = vadd.f32 %v663, %v682
          %684 = vdwg.mxu0
          %685 = vmatpush.msra.mxu0 %v623
          %686 = vmatpush.msra.mxu0 %v615
          %687 = vmatpush.msra.mxu0 %v607
          %688 = vmatpush.msra.mxu0 %v599
          %689 = vmatpush.msra.mxu0 %v591
          %690 = vmatpush.msra.mxu0 %v583
          %691 = vmatpush.msra.mxu0 %v575
          %692 = vmatpush.msra.mxu0 %v567
          %693 = vmatpush.msra.mxu0 %v559
          %694 = vmatpush.msra.mxu0 %v551
          %695 = vmatpush.msra.mxu0 %v543
          %696 = vmatpush.msra.mxu0 %v535
          %697 = vmatpush.msra.mxu0 %v527
          %698 = vmatpush.msra.mxu0 %v519
          %699 = vmatpush.msra.mxu0 %v511
          %700 = vmatpush.msra.mxu0 %v503
          %701 = vmatmul.f32.gmra.mxu0 %v639
          %v702 = vpop.f32.mrf.mxu0
          %v703 = vadd.f32 0.0, %v702
          %704 = vdwg.mxu0
          %705 = vmatpush.msra.mxu0 0.0
          %706 = vmatpush.msra.mxu0 0.0
          %707 = vmatpush.msra.mxu0 0.0
          %708 = vmatpush.msra.mxu0 0.0
          %709 = vmatpush.msra.mxu0 0.0
          %710 = vmatpush.msra.mxu0 0.0
          %711 = vmatpush.msra.mxu0 0.0
          %712 = vmatpush.msra.mxu0 0.0
          %713 = vmatpush.msra.mxu0 0.0
          %714 = vmatpush.msra.mxu0 0.0
          %715 = vmatpush.msra.mxu0 0.0
          %716 = vmatpush.msra.mxu0 0.0
          %717 = vmatpush.msra.mxu0 0.0
          %718 = vmatpush.msra.mxu0 0.0
          %719 = vmatpush.msra.mxu0 0.0
          %720 = vmatpush.msra.mxu0 %v631
          %721 = vmatmul.f32.gmra.mxu0 %v643
          %v722 = vpop.f32.mrf.mxu0
          %v723 = vadd.f32 %v703, %v722
          %724 = vdwg.mxu0
          %725 = vmatpush.msra.mxu0 %v624
          %726 = vmatpush.msra.mxu0 %v616
          %727 = vmatpush.msra.mxu0 %v608
          %728 = vmatpush.msra.mxu0 %v600
          %729 = vmatpush.msra.mxu0 %v592
          %730 = vmatpush.msra.mxu0 %v584
          %731 = vmatpush.msra.mxu0 %v576
          %732 = vmatpush.msra.mxu0 %v568
          %733 = vmatpush.msra.mxu0 %v560
          %734 = vmatpush.msra.mxu0 %v552
          %735 = vmatpush.msra.mxu0 %v544
          %736 = vmatpush.msra.mxu0 %v536
          %737 = vmatpush.msra.mxu0 %v528
          %738 = vmatpush.msra.mxu0 %v520
          %739 = vmatpush.msra.mxu0 %v512
          %740 = vmatpush.msra.mxu0 %v504
          %741 = vmatmul.f32.gmra.mxu0 %v639
          %v742 = vpop.f32.mrf.mxu0
          %v743 = vadd.f32 0.0, %v742
          %744 = vdwg.mxu0
          %745 = vmatpush.msra.mxu0 0.0
          %746 = vmatpush.msra.mxu0 0.0
          %747 = vmatpush.msra.mxu0 0.0
          %748 = vmatpush.msra.mxu0 0.0
          %749 = vmatpush.msra.mxu0 0.0
          %750 = vmatpush.msra.mxu0 0.0
          %751 = vmatpush.msra.mxu0 0.0
          %752 = vmatpush.msra.mxu0 0.0
          %753 = vmatpush.msra.mxu0 0.0
          %754 = vmatpush.msra.mxu0 0.0
          %755 = vmatpush.msra.mxu0 0.0
          %756 = vmatpush.msra.mxu0 0.0
          %757 = vmatpush.msra.mxu0 0.0
          %758 = vmatpush.msra.mxu0 0.0
          %759 = vmatpush.msra.mxu0 0.0
          %760 = vmatpush.msra.mxu0 %v632
          %761 = vmatmul.f32.gmra.mxu0 %v643
          %v762 = vpop.f32.mrf.mxu0
          %v763 = vadd.f32 %v743, %v762
          %764 = vdwg.mxu0
          %765 = vmatpush.msra.mxu0 %v625
          %766 = vmatpush.msra.mxu0 %v617
          %767 = vmatpush.msra.mxu0 %v609
          %768 = vmatpush.msra.mxu0 %v601
          %769 = vmatpush.msra.mxu0 %v593
          %770 = vmatpush.msra.mxu0 %v585
          %771 = vmatpush.msra.mxu0 %v577
          %772 = vmatpush.msra.mxu0 %v569
          %773 = vmatpush.msra.mxu0 %v561
          %774 = vmatpush.msra.mxu0 %v553
          %775 = vmatpush.msra.mxu0 %v545
          %776 = vmatpush.msra.mxu0 %v537
          %777 = vmatpush.msra.mxu0 %v529
          %778 = vmatpush.msra.mxu0 %v521
          %779 = vmatpush.msra.mxu0 %v513
          %780 = vmatpush.msra.mxu0 %v505
          %781 = vmatmul.f32.gmra.mxu0 %v639
          %v782 = vpop.f32.mrf.mxu0
          %v783 = vadd.f32 0.0, %v782
          %784 = vdwg.mxu0
          %785 = vmatpush.msra.mxu0 0.0
          %786 = vmatpush.msra.mxu0 0.0
          %787 = vmatpush.msra.mxu0 0.0
          %788 = vmatpush.msra.mxu0 0.0
          %789 = vmatpush.msra.mxu0 0.0
          %790 = vmatpush.msra.mxu0 0.0
          %791 = vmatpush.msra.mxu0 0.0
          %792 = vmatpush.msra.mxu0 0.0
          %793 = vmatpush.msra.mxu0 0.0
          %794 = vmatpush.msra.mxu0 0.0
          %795 = vmatpush.msra.mxu0 0.0
          %796 = vmatpush.msra.mxu0 0.0
          %797 = vmatpush.msra.mxu0 0.0
          %798 = vmatpush.msra.mxu0 0.0
          %799 = vmatpush.msra.mxu0 0.0
          %800 = vmatpush.msra.mxu0 %v633
          %801 = vmatmul.f32.gmra.mxu0 %v643
          %v802 = vpop.f32.mrf.mxu0
          %v803 = vadd.f32 %v783, %v802
          %804 = vdwg.mxu0
          %805 = vmatpush.msra.mxu0 %v626
          %806 = vmatpush.msra.mxu0 %v618
          %807 = vmatpush.msra.mxu0 %v610
          %808 = vmatpush.msra.mxu0 %v602
          %809 = vmatpush.msra.mxu0 %v594
          %810 = vmatpush.msra.mxu0 %v586
          %811 = vmatpush.msra.mxu0 %v578
          %812 = vmatpush.msra.mxu0 %v570
          %813 = vmatpush.msra.mxu0 %v562
          %814 = vmatpush.msra.mxu0 %v554
          %815 = vmatpush.msra.mxu0 %v546
          %816 = vmatpush.msra.mxu0 %v538
          %817 = vmatpush.msra.mxu0 %v530
          %818 = vmatpush.msra.mxu0 %v522
          %819 = vmatpush.msra.mxu0 %v514
          %820 = vmatpush.msra.mxu0 %v506
          %821 = vmatmul.f32.gmra.mxu0 %v639
          %v822 = vpop.f32.mrf.mxu0
          %v823 = vadd.f32 0.0, %v822
          %824 = vdwg.mxu0
          %825 = vmatpush.msra.mxu0 0.0
          %826 = vmatpush.msra.mxu0 0.0
          %827 = vmatpush.msra.mxu0 0.0
          %828 = vmatpush.msra.mxu0 0.0
          %829 = vmatpush.msra.mxu0 0.0
          %830 = vmatpush.msra.mxu0 0.0
          %831 = vmatpush.msra.mxu0 0.0
          %832 = vmatpush.msra.mxu0 0.0
          %833 = vmatpush.msra.mxu0 0.0
          %834 = vmatpush.msra.mxu0 0.0
          %835 = vmatpush.msra.mxu0 0.0
          %836 = vmatpush.msra.mxu0 0.0
          %837 = vmatpush.msra.mxu0 0.0
          %838 = vmatpush.msra.mxu0 0.0
          %839 = vmatpush.msra.mxu0 0.0
          %840 = vmatpush.msra.mxu0 %v634
          %841 = vmatmul.f32.gmra.mxu0 %v643
          %v842 = vpop.f32.mrf.mxu0
          %v843 = vadd.f32 %v823, %v842
          %844 = vdwg.mxu0
          %845 = vmatpush.msra.mxu0 %v627
          %846 = vmatpush.msra.mxu0 %v619
          %847 = vmatpush.msra.mxu0 %v611
          %848 = vmatpush.msra.mxu0 %v603
          %849 = vmatpush.msra.mxu0 %v595
          %850 = vmatpush.msra.mxu0 %v587
          %851 = vmatpush.msra.mxu0 %v579
          %852 = vmatpush.msra.mxu0 %v571
          %853 = vmatpush.msra.mxu0 %v563
          %854 = vmatpush.msra.mxu0 %v555
          %855 = vmatpush.msra.mxu0 %v547
          %856 = vmatpush.msra.mxu0 %v539
          %857 = vmatpush.msra.mxu0 %v531
          %858 = vmatpush.msra.mxu0 %v523
          %859 = vmatpush.msra.mxu0 %v515
          %860 = vmatpush.msra.mxu0 %v507
          %861 = vmatmul.f32.gmra.mxu0 %v639
          %v862 = vpop.f32.mrf.mxu0
          %v863 = vadd.f32 0.0, %v862
          %864 = vdwg.mxu0
          %865 = vmatpush.msra.mxu0 0.0
          %866 = vmatpush.msra.mxu0 0.0
          %867 = vmatpush.msra.mxu0 0.0
          %868 = vmatpush.msra.mxu0 0.0
          %869 = vmatpush.msra.mxu0 0.0
          %870 = vmatpush.msra.mxu0 0.0
          %871 = vmatpush.msra.mxu0 0.0
          %872 = vmatpush.msra.mxu0 0.0
          %873 = vmatpush.msra.mxu0 0.0
          %874 = vmatpush.msra.mxu0 0.0
          %875 = vmatpush.msra.mxu0 0.0
          %876 = vmatpush.msra.mxu0 0.0
          %877 = vmatpush.msra.mxu0 0.0
          %878 = vmatpush.msra.mxu0 0.0
          %879 = vmatpush.msra.mxu0 0.0
          %880 = vmatpush.msra.mxu0 %v635
          %881 = vmatmul.f32.gmra.mxu0 %v643
          %v882 = vpop.f32.mrf.mxu0
          %v883 = vadd.f32 %v863, %v882
          %884 = vdwg.mxu0
          %885 = vmatpush.msra.mxu0 %v628
          %886 = vmatpush.msra.mxu0 %v620
          %887 = vmatpush.msra.mxu0 %v612
          %888 = vmatpush.msra.mxu0 %v604
          %889 = vmatpush.msra.mxu0 %v596
          %890 = vmatpush.msra.mxu0 %v588
          %891 = vmatpush.msra.mxu0 %v580
          %892 = vmatpush.msra.mxu0 %v572
          %893 = vmatpush.msra.mxu0 %v564
          %894 = vmatpush.msra.mxu0 %v556
          %895 = vmatpush.msra.mxu0 %v548
          %896 = vmatpush.msra.mxu0 %v540
          %897 = vmatpush.msra.mxu0 %v532
          %898 = vmatpush.msra.mxu0 %v524
          %899 = vmatpush.msra.mxu0 %v516
          %900 = vmatpush.msra.mxu0 %v508
          %901 = vmatmul.f32.gmra.mxu0 %v639
          %v902 = vpop.f32.mrf.mxu0
          %v903 = vadd.f32 0.0, %v902
          %904 = vdwg.mxu0
          %905 = vmatpush.msra.mxu0 0.0
          %906 = vmatpush.msra.mxu0 0.0
          %907 = vmatpush.msra.mxu0 0.0
          %908 = vmatpush.msra.mxu0 0.0
          %909 = vmatpush.msra.mxu0 0.0
          %910 = vmatpush.msra.mxu0 0.0
          %911 = vmatpush.msra.mxu0 0.0
          %912 = vmatpush.msra.mxu0 0.0
          %913 = vmatpush.msra.mxu0 0.0
          %914 = vmatpush.msra.mxu0 0.0
          %915 = vmatpush.msra.mxu0 0.0
          %916 = vmatpush.msra.mxu0 0.0
          %917 = vmatpush.msra.mxu0 0.0
          %918 = vmatpush.msra.mxu0 0.0
          %919 = vmatpush.msra.mxu0 0.0
          %920 = vmatpush.msra.mxu0 %v636
          %921 = vmatmul.f32.gmra.mxu0 %v643
          %v922 = vpop.f32.mrf.mxu0
          %v923 = vadd.f32 %v903, %v922
          %924 = vdwg.mxu0
          %925 = vmatpush.msra.mxu0 %v629
          %926 = vmatpush.msra.mxu0 %v621
          %927 = vmatpush.msra.mxu0 %v613
          %928 = vmatpush.msra.mxu0 %v605
          %929 = vmatpush.msra.mxu0 %v597
          %930 = vmatpush.msra.mxu0 %v589
          %931 = vmatpush.msra.mxu0 %v581
          %932 = vmatpush.msra.mxu0 %v573
          %933 = vmatpush.msra.mxu0 %v565
          %934 = vmatpush.msra.mxu0 %v557
          %935 = vmatpush.msra.mxu0 %v549
          %936 = vmatpush.msra.mxu0 %v541
          %937 = vmatpush.msra.mxu0 %v533
          %938 = vmatpush.msra.mxu0 %v525
          %939 = vmatpush.msra.mxu0 %v517
          %940 = vmatpush.msra.mxu0 %v509
          %941 = vmatmul.f32.gmra.mxu0 %v639
          %v942 = vpop.f32.mrf.mxu0
          %v943 = vadd.f32 0.0, %v942
          %944 = vdwg.mxu0
          %945 = vmatpush.msra.mxu0 0.0
          %946 = vmatpush.msra.mxu0 0.0
          %947 = vmatpush.msra.mxu0 0.0
          %948 = vmatpush.msra.mxu0 0.0
          %949 = vmatpush.msra.mxu0 0.0
          %950 = vmatpush.msra.mxu0 0.0
          %951 = vmatpush.msra.mxu0 0.0
          %952 = vmatpush.msra.mxu0 0.0
          %953 = vmatpush.msra.mxu0 0.0
          %954 = vmatpush.msra.mxu0 0.0
          %955 = vmatpush.msra.mxu0 0.0
          %956 = vmatpush.msra.mxu0 0.0
          %957 = vmatpush.msra.mxu0 0.0
          %958 = vmatpush.msra.mxu0 0.0
          %959 = vmatpush.msra.mxu0 0.0
          %960 = vmatpush.msra.mxu0 %v637
          %961 = vmatmul.f32.gmra.mxu0 %v643
          %v962 = vpop.f32.mrf.mxu0
          %v963 = vadd.f32 %v943, %v962
          %964 = vdwg.mxu0
          %s965 = smul.u32 %s493, 8
          %s966 = smul.u32 %s965, 8
          %s967 = sadd.s32 %s966, %s496
          %s968 = scalar_lea.vmem [#allocation2], %s967
          %v969 = vld [vmem:[%s968] ss:$8 sm:$0xf]
          %v970 = vld [vmem:[%s968] ss:$8 sm:$0xf0]
          %v971 = vor.u32 %v969, %v970
          %s972 = scalar_lea.vmem %s194, %s967
          %v973 = vld [vmem:[%s972] ss:$8 sm:$0xf]
          %v974 = vld [vmem:[%s972] ss:$8 sm:$0xf0]
          %v975 = vor.u32 %v973, %v974
          %v976 = vmul.f32 %v683, %v683
          %vm977 = vcmask 1040384
          %v978 = vsel %vm977, %v976, 0.0
          %979 = vadd.xlane.f32.xlu0 %v978
          %v980 = vpop.xlane.xlu0 %979
          %vm981 = vcmp.gt.f32.partialorder %v980, 1e-12
          %v982 = vsel %vm981, 1, 0
          %v983 = vcvt.s32.f32 %v982
          %v984 = vadd.f32 %v980, 1e-30
          %v985 = vrsqrt.pop %v984
          %v986 = vmul.f32 %v985, %v984
          %v987 = vmul.f32 %v986, %v985
          %v988 = vmul.f32 0.5, %v987
          %v989 = vsub.f32 1.5, %v988
          %v990 = vmul.f32 %v985, %v989
          %vm991 = vweird.f32 %v984
          %vm992 = vweird.f32 %v985
          %vm993 = vmor %vm991, %vm992
          %v994 = vsel %vm993, %v985, %v990
          %v995 = vmul.f32 %v983, %v994
          %v996 = vsub.f32 1.0, %v983
          %v997 = vmul.f32 %v996, %v971
          %v998 = vmul.f32 %v995, %v683
          %v999 = vsub.f32 %v997, %v998
          %v1000 = vmul.f32 %v723, %v723
          %v1001 = vsel %vm977, %v1000, 0.0
          %1002 = vadd.xlane.f32.xlu0 %v1001
          %v1003 = vpop.xlane.xlu0 %1002
          %vm1004 = vcmp.gt.f32.partialorder %v1003, 1e-12
          %v1005 = vsel %vm1004, 1, 0
          %v1006 = vcvt.s32.f32 %v1005
          %v1007 = vadd.f32 %v1003, 1e-30
          %v1008 = vrsqrt.pop %v1007
          %v1009 = vmul.f32 %v1008, %v1007
          %v1010 = vmul.f32 %v1009, %v1008
          %v1011 = vmul.f32 0.5, %v1010
          %v1012 = vsub.f32 1.5, %v1011
          %v1013 = vmul.f32 %v1008, %v1012
          %vm1014 = vweird.f32 %v1007
          %vm1015 = vweird.f32 %v1008
          %vm1016 = vmor %vm1014, %vm1015
          %v1017 = vsel %vm1016, %v1008, %v1013
          %v1018 = vmul.f32 %v1006, %v1017
          %v1019 = vsub.f32 1.0, %v1006
          %v1021 = vperm.slane %v971, 1
          %v1023 = vmul.f32 %v1019, %v1021
          %v1024 = vmul.f32 %v1018, %v723
          %v1025 = vsub.f32 %v1023, %v1024
          %v1026 = vmul.f32 %v763, %v763
          %v1027 = vsel %vm977, %v1026, 0.0
          %1028 = vadd.xlane.f32.xlu0 %v1027
          %v1029 = vpop.xlane.xlu0 %1028
          %vm1030 = vcmp.gt.f32.partialorder %v1029, 1e-12
          %v1031 = vsel %vm1030, 1, 0
          %v1032 = vcvt.s32.f32 %v1031
          %v1033 = vadd.f32 %v1029, 1e-30
          %v1034 = vrsqrt.pop %v1033
          %v1035 = vmul.f32 %v1034, %v1033
          %v1036 = vmul.f32 %v1035, %v1034
          %v1037 = vmul.f32 0.5, %v1036
          %v1038 = vsub.f32 1.5, %v1037
          %v1039 = vmul.f32 %v1034, %v1038
          %vm1040 = vweird.f32 %v1033
          %vm1041 = vweird.f32 %v1034
          %vm1042 = vmor %vm1040, %vm1041
          %v1043 = vsel %vm1042, %v1034, %v1039
          %v1044 = vmul.f32 %v1032, %v1043
          %v1045 = vsub.f32 1.0, %v1032
          %v1046 = vperm.slane %v971, 2
          %v1048 = vmul.f32 %v1045, %v1046
          %v1049 = vmul.f32 %v1044, %v763
          %v1050 = vsub.f32 %v1048, %v1049
          %v1051 = vmul.f32 %v803, %v803
          %v1052 = vsel %vm977, %v1051, 0.0
          %1053 = vadd.xlane.f32.xlu0 %v1052
          %v1054 = vpop.xlane.xlu0 %1053
          %vm1055 = vcmp.gt.f32.partialorder %v1054, 1e-12
          %v1056 = vsel %vm1055, 1, 0
          %v1057 = vcvt.s32.f32 %v1056
          %v1058 = vadd.f32 %v1054, 1e-30
          %v1059 = vrsqrt.pop %v1058
          %v1060 = vmul.f32 %v1059, %v1058
          %v1061 = vmul.f32 %v1060, %v1059
          %v1062 = vmul.f32 0.5, %v1061
          %v1063 = vsub.f32 1.5, %v1062
          %v1064 = vmul.f32 %v1059, %v1063
          %vm1065 = vweird.f32 %v1058
          %vm1066 = vweird.f32 %v1059
          %vm1067 = vmor %vm1065, %vm1066
          %v1068 = vsel %vm1067, %v1059, %v1064
          %v1069 = vmul.f32 %v1057, %v1068
          %v1070 = vsub.f32 1.0, %v1057
          %v1071 = vperm.slane %v971, 3
          %v1073 = vmul.f32 %v1070, %v1071
          %v1074 = vmul.f32 %v1069, %v803
          %v1075 = vsub.f32 %v1073, %v1074
          %v1076 = vmul.f32 %v843, %v843
          %v1077 = vsel %vm977, %v1076, 0.0
          %1078 = vadd.xlane.f32.xlu0 %v1077
          %v1079 = vpop.xlane.xlu0 %1078
          %vm1080 = vcmp.gt.f32.partialorder %v1079, 1e-12
          %v1081 = vsel %vm1080, 1, 0
          %v1082 = vcvt.s32.f32 %v1081
          %v1083 = vadd.f32 %v1079, 1e-30
          %v1084 = vrsqrt.pop %v1083
          %v1085 = vmul.f32 %v1084, %v1083
          %v1086 = vmul.f32 %v1085, %v1084
          %v1087 = vmul.f32 0.5, %v1086
          %v1088 = vsub.f32 1.5, %v1087
          %v1089 = vmul.f32 %v1084, %v1088
          %vm1090 = vweird.f32 %v1083
          %vm1091 = vweird.f32 %v1084
          %vm1092 = vmor %vm1090, %vm1091
          %v1093 = vsel %vm1092, %v1084, %v1089
          %v1094 = vmul.f32 %v1082, %v1093
          %v1095 = vsub.f32 1.0, %v1082
          %v1096 = vperm.slane %v971, 4
          %v1098 = vmul.f32 %v1095, %v1096
          %v1099 = vmul.f32 %v1094, %v843
          %v1100 = vsub.f32 %v1098, %v1099
          %v1101 = vmul.f32 %v883, %v883
          %v1102 = vsel %vm977, %v1101, 0.0
          %1103 = vadd.xlane.f32.xlu0 %v1102
          %v1104 = vpop.xlane.xlu0 %1103
          %vm1105 = vcmp.gt.f32.partialorder %v1104, 1e-12
          %v1106 = vsel %vm1105, 1, 0
          %v1107 = vcvt.s32.f32 %v1106
          %v1108 = vadd.f32 %v1104, 1e-30
          %v1109 = vrsqrt.pop %v1108
          %v1110 = vmul.f32 %v1109, %v1108
          %v1111 = vmul.f32 %v1110, %v1109
          %v1112 = vmul.f32 0.5, %v1111
          %v1113 = vsub.f32 1.5, %v1112
          %v1114 = vmul.f32 %v1109, %v1113
          %vm1115 = vweird.f32 %v1108
          %vm1116 = vweird.f32 %v1109
          %vm1117 = vmor %vm1115, %vm1116
          %v1118 = vsel %vm1117, %v1109, %v1114
          %v1119 = vmul.f32 %v1107, %v1118
          %v1120 = vsub.f32 1.0, %v1107
          %v1121 = vperm.slane %v971, 5
          %v1123 = vmul.f32 %v1120, %v1121
          %v1124 = vmul.f32 %v1119, %v883
          %v1125 = vsub.f32 %v1123, %v1124
          %v1126 = vmul.f32 %v923, %v923
          %v1127 = vsel %vm977, %v1126, 0.0
          %1128 = vadd.xlane.f32.xlu0 %v1127
          %v1129 = vpop.xlane.xlu0 %1128
          %vm1130 = vcmp.gt.f32.partialorder %v1129, 1e-12
          %v1131 = vsel %vm1130, 1, 0
          %v1132 = vcvt.s32.f32 %v1131
          %v1133 = vadd.f32 %v1129, 1e-30
          %v1134 = vrsqrt.pop %v1133
          %v1135 = vmul.f32 %v1134, %v1133
          %v1136 = vmul.f32 %v1135, %v1134
          %v1137 = vmul.f32 0.5, %v1136
          %v1138 = vsub.f32 1.5, %v1137
          %v1139 = vmul.f32 %v1134, %v1138
          %vm1140 = vweird.f32 %v1133
          %vm1141 = vweird.f32 %v1134
          %vm1142 = vmor %vm1140, %vm1141
          %v1143 = vsel %vm1142, %v1134, %v1139
          %v1144 = vmul.f32 %v1132, %v1143
          %v1145 = vsub.f32 1.0, %v1132
          %v1146 = vperm.slane %v971, 6
          %v1148 = vmul.f32 %v1145, %v1146
          %v1149 = vmul.f32 %v1144, %v923
          %v1150 = vsub.f32 %v1148, %v1149
          %v1151 = vmul.f32 %v963, %v963
          %v1152 = vsel %vm977, %v1151, 0.0
          %1153 = vadd.xlane.f32.xlu0 %v1152
          %v1154 = vpop.xlane.xlu0 %1153
          %vm1155 = vcmp.gt.f32.partialorder %v1154, 1e-12
          %v1156 = vsel %vm1155, 1, 0
          %v1157 = vcvt.s32.f32 %v1156
          %v1158 = vadd.f32 %v1154, 1e-30
          %v1159 = vrsqrt.pop %v1158
          %v1160 = vmul.f32 %v1159, %v1158
          %v1161 = vmul.f32 %v1160, %v1159
          %v1162 = vmul.f32 0.5, %v1161
          %v1163 = vsub.f32 1.5, %v1162
          %v1164 = vmul.f32 %v1159, %v1163
          %vm1165 = vweird.f32 %v1158
          %vm1166 = vweird.f32 %v1159
          %vm1167 = vmor %vm1165, %vm1166
          %v1168 = vsel %vm1167, %v1159, %v1164
          %v1169 = vmul.f32 %v1157, %v1168
          %v1170 = vsub.f32 1.0, %v1157
          %v1171 = vperm.slane %v971, 7
          %v1173 = vmul.f32 %v1170, %v1171
          %v1174 = vmul.f32 %v1169, %v963
          %v1175 = vsub.f32 %v1173, %v1174
          %v1176 = vperm.slane %v971, 0
          %v1178 = vsub.f32 %v999, %v1176
          %v1179 = vsub.f32 %v1025, %v1021
          %v1180 = vsub.f32 %v1050, %v1046
          %v1181 = vsub.f32 %v1075, %v1071
          %v1182 = vsub.f32 %v1100, %v1096
          %v1183 = vsub.f32 %v1125, %v1121
          %v1184 = vsub.f32 %v1150, %v1146
          %v1185 = vsub.f32 %v1175, %v1171
          %v1194 = vrot.slane %v1179, 7
          %v1195 = vrot.slane %v1180, 6
          %v1196 = vrot.slane %v1181, 5
          %v1197 = vrot.slane %v1182, 4
          %v1198 = vrot.slane %v1183, 3
          %v1199 = vrot.slane %v1184, 2
          %v1200 = vrot.slane %v1185, 1
          %v1201 = vsel %vm977, %v1178, %v1194
          %vm1202 = vcmask 1042434
          %v1203 = vsel %vm1202, %v1195, %v1196
          %vm1204 = vcmask 1041408
          %v1205 = vsel %vm1204, %v1201, %v1203
          %vm1206 = vcmask 1044484
          %v1207 = vsel %vm1206, %v1197, %v1198
          %vm1208 = vcmask 1046534
          %v1209 = vsel %vm1208, %v1199, %v1200
          %vm1210 = vcmask 1045508
          %v1211 = vsel %vm1210, %v1207, %v1209
          %vm1212 = vcmask 1043456
          %v1213 = vsel %vm1212, %v1205, %v1211
          %v1215 = vmul.f32 %v975, %v1213
          %v1216 = vadd.f32 %v971, %v1215
          %1217 = vst [vmem:[%s968] ss:$8 sm:$0xf] %v1216
          %1218 = vst [vmem:[%s968] ss:$8 sm:$0xf0] %v1216
          %s1219 = sadd.s32 %s484, 1
          %s1220 = sshra.s32 %s1219, 7
          %s1221 = sand.u32 %s1219, 127
          %s1222 = sadd.s32 %s1220, %s23
          %s1223 = smul.u32 %s1222, 128
          %s1224 = sshra.s32 %s1219, 7
          %s1225 = sand.u32 %s1219, 127
          %s1226 = sadd.s32 %s1223, %s1225
          %s1227 = sld [smem:[#allocation4 + %s1226]]
          %s1228 = sshra.s32 %s1227, 3
          %s1229 = sand.u32 %s1227, 7
          %s1230 = sshra.s32 %s1227, 3
          %s1231 = sand.u32 %s1227, 7
          %s1232 = smul.u32 %s1228, 2
          %s1233 = smul.u32 %s1232, 8
          %s1234 = sadd.s32 %s1233, %s1231
          %s1235 = scalar_lea.vmem %s1, %s1234
          %v1236 = vld [vmem:[%s1235] ss:$8 sm:$0x3]
          %v1237 = vld [vmem:[#allocation2] sm:$0xff]
          %v1238 = vld [vmem:[#allocation2 + $0x8] sm:$0xff]
          %v1239 = vld [vmem:[#allocation2 + $0x10] sm:$0xff]
          %v1240 = vld [vmem:[#allocation2 + $0x18] sm:$0xff]
          %v1241 = vld [vmem:[#allocation2 + $0x20] sm:$0xff]
          %v1242 = vld [vmem:[#allocation2 + $0x28] sm:$0xff]
          %v1243 = vld [vmem:[#allocation2 + $0x30] sm:$0xff]
          %v1244 = vld [vmem:[#allocation2 + $0x38] sm:$0xff]
          %v1245 = vld [vmem:[#allocation2 + $0x40] sm:$0xff]
          %v1246 = vld [vmem:[#allocation2 + $0x48] sm:$0xff]
          %v1247 = vld [vmem:[#allocation2 + $0x50] sm:$0xff]
          %v1248 = vld [vmem:[#allocation2 + $0x58] sm:$0xff]
          %v1249 = vld [vmem:[#allocation2 + $0x60] sm:$0xff]
          %v1250 = vld [vmem:[#allocation2 + $0x68] sm:$0xff]
          %v1251 = vld [vmem:[#allocation2 + $0x70] sm:$0xff]
          %v1252 = vld [vmem:[#allocation2 + $0x78] sm:$0xff]
          %v1253 = vld [vmem:[#allocation2 + $0x80] sm:$0xff]
          %v1254 = vld [vmem:[#allocation2 + $0x88] sm:$0xff]
          %v1255 = vld [vmem:[#allocation2 + $0x90] sm:$0xff]
          %v1256 = vld [vmem:[#allocation2 + $0x98] sm:$0xff]
          %v1257 = vld [vmem:[#allocation2 + $0xa0] sm:$0xff]
          %v1258 = vld [vmem:[#allocation2 + $0xa8] sm:$0xff]
          %v1259 = vld [vmem:[#allocation2 + $0xb0] sm:$0xff]
          %v1260 = vld [vmem:[#allocation2 + $0xb8] sm:$0xff]
          %v1261 = vld [vmem:[#allocation2 + $0xc0] sm:$0xff]
          %v1262 = vld [vmem:[#allocation2 + $0xc8] sm:$0xff]
          %v1263 = vld [vmem:[#allocation2 + $0xd0] sm:$0xff]
          %v1264 = vld [vmem:[#allocation2 + $0xd8] sm:$0xff]
          %v1265 = vld [vmem:[#allocation2 + $0xe0] sm:$0xff]
          %v1266 = vld [vmem:[#allocation2 + $0xe8] sm:$0xff]
          %v1267 = vld [vmem:[#allocation2 + $0xf0] sm:$0xff]
          %v1268 = vld [vmem:[#allocation2 + $0xf8] sm:$0xff]
          %v1269 = vld [vmem:[#allocation2 + $0x100] sm:$0xff]
          %v1270 = vld [vmem:[#allocation2 + $0x108] sm:$0xff]
          %v1271 = vld [vmem:[#allocation2 + $0x110] sm:$0xff]
          %v1272 = vld [vmem:[#allocation2 + $0x118] sm:$0xff]
          %v1273 = vld [vmem:[#allocation2 + $0x120] sm:$0xff]
          %v1274 = vld [vmem:[#allocation2 + $0x128] sm:$0xff]
          %v1275 = vld [vmem:[#allocation2 + $0x130] sm:$0xff]
          %v1276 = vld [vmem:[#allocation2 + $0x138] sm:$0xff]
          %v1277 = vld [vmem:[#allocation2 + $0x140] sm:$0xff]
          %v1278 = vld [vmem:[#allocation2 + $0x148] sm:$0xff]
          %v1279 = vld [vmem:[#allocation2 + $0x150] sm:$0xff]
          %v1280 = vld [vmem:[#allocation2 + $0x158] sm:$0xff]
          %v1281 = vld [vmem:[#allocation2 + $0x160] sm:$0xff]
          %v1282 = vld [vmem:[#allocation2 + $0x168] sm:$0xff]
          %v1283 = vld [vmem:[#allocation2 + $0x170] sm:$0xff]
          %v1284 = vld [vmem:[#allocation2 + $0x178] sm:$0xff]
          %v1285 = vld [vmem:[#allocation2 + $0x180] sm:$0xff]
          %v1286 = vld [vmem:[#allocation2 + $0x188] sm:$0xff]
          %v1287 = vld [vmem:[#allocation2 + $0x190] sm:$0xff]
          %v1288 = vld [vmem:[#allocation2 + $0x198] sm:$0xff]
          %v1289 = vld [vmem:[#allocation2 + $0x1a0] sm:$0xff]
          %v1290 = vld [vmem:[#allocation2 + $0x1a8] sm:$0xff]
          %v1291 = vld [vmem:[#allocation2 + $0x1b0] sm:$0xff]
          %v1292 = vld [vmem:[#allocation2 + $0x1b8] sm:$0xff]
          %v1293 = vld [vmem:[#allocation2 + $0x1c0] sm:$0xff]
          %v1294 = vld [vmem:[#allocation2 + $0x1c8] sm:$0xff]
          %v1295 = vld [vmem:[#allocation2 + $0x1d0] sm:$0xff]
          %v1296 = vld [vmem:[#allocation2 + $0x1d8] sm:$0xff]
          %v1297 = vld [vmem:[#allocation2 + $0x1e0] sm:$0xff]
          %v1298 = vld [vmem:[#allocation2 + $0x1e8] sm:$0xff]
          %v1299 = vld [vmem:[#allocation2 + $0x1f0] sm:$0xff]
          %v1300 = vld [vmem:[#allocation2 + $0x1f8] sm:$0xff]
          %v1301 = vld [vmem:[#allocation2 + $0x200] sm:$0xff]
          %v1302 = vld [vmem:[#allocation2 + $0x208] sm:$0xff]
          %v1303 = vld [vmem:[#allocation2 + $0x210] sm:$0xff]
          %v1304 = vld [vmem:[#allocation2 + $0x218] sm:$0xff]
          %v1305 = vld [vmem:[#allocation2 + $0x220] sm:$0xff]
          %v1306 = vld [vmem:[#allocation2 + $0x228] sm:$0xff]
          %v1307 = vld [vmem:[#allocation2 + $0x230] sm:$0xff]
          %v1308 = vld [vmem:[#allocation2 + $0x238] sm:$0xff]
          %v1309 = vld [vmem:[#allocation2 + $0x240] sm:$0xff]
          %v1310 = vld [vmem:[#allocation2 + $0x248] sm:$0xff]
          %v1311 = vld [vmem:[#allocation2 + $0x250] sm:$0xff]
          %v1312 = vld [vmem:[#allocation2 + $0x258] sm:$0xff]
          %v1313 = vld [vmem:[#allocation2 + $0x260] sm:$0xff]
          %v1314 = vld [vmem:[#allocation2 + $0x268] sm:$0xff]
          %v1315 = vld [vmem:[#allocation2 + $0x270] sm:$0xff]
          %v1316 = vld [vmem:[#allocation2 + $0x278] sm:$0xff]
          %v1317 = vld [vmem:[#allocation2 + $0x280] sm:$0xff]
          %v1318 = vld [vmem:[#allocation2 + $0x288] sm:$0xff]
          %v1319 = vld [vmem:[#allocation2 + $0x290] sm:$0xff]
          %v1320 = vld [vmem:[#allocation2 + $0x298] sm:$0xff]
          %v1321 = vld [vmem:[#allocation2 + $0x2a0] sm:$0xff]
          %v1322 = vld [vmem:[#allocation2 + $0x2a8] sm:$0xff]
          %v1323 = vld [vmem:[#allocation2 + $0x2b0] sm:$0xff]
          %v1324 = vld [vmem:[#allocation2 + $0x2b8] sm:$0xff]
          %v1325 = vld [vmem:[#allocation2 + $0x2c0] sm:$0xff]
          %v1326 = vld [vmem:[#allocation2 + $0x2c8] sm:$0xff]
          %v1327 = vld [vmem:[#allocation2 + $0x2d0] sm:$0xff]
          %v1328 = vld [vmem:[#allocation2 + $0x2d8] sm:$0xff]
          %v1329 = vld [vmem:[#allocation2 + $0x2e0] sm:$0xff]
          %v1330 = vld [vmem:[#allocation2 + $0x2e8] sm:$0xff]
          %v1331 = vld [vmem:[#allocation2 + $0x2f0] sm:$0xff]
          %v1332 = vld [vmem:[#allocation2 + $0x2f8] sm:$0xff]
          %v1333 = vld [vmem:[#allocation2 + $0x300] sm:$0xff]
          %v1334 = vld [vmem:[#allocation2 + $0x308] sm:$0xff]
          %v1335 = vld [vmem:[#allocation2 + $0x310] sm:$0xff]
          %v1336 = vld [vmem:[#allocation2 + $0x318] sm:$0xff]
          %v1337 = vld [vmem:[#allocation2 + $0x320] sm:$0xff]
          %v1338 = vld [vmem:[#allocation2 + $0x328] sm:$0xff]
          %v1339 = vld [vmem:[#allocation2 + $0x330] sm:$0xff]
          %v1340 = vld [vmem:[#allocation2 + $0x338] sm:$0xff]
          %v1341 = vld [vmem:[#allocation2 + $0x340] sm:$0xff]
          %v1342 = vld [vmem:[#allocation2 + $0x348] sm:$0xff]
          %v1343 = vld [vmem:[#allocation2 + $0x350] sm:$0xff]
          %v1344 = vld [vmem:[#allocation2 + $0x358] sm:$0xff]
          %v1345 = vld [vmem:[#allocation2 + $0x360] sm:$0xff]
          %v1346 = vld [vmem:[#allocation2 + $0x368] sm:$0xff]
          %v1347 = vld [vmem:[#allocation2 + $0x370] sm:$0xff]
          %v1348 = vld [vmem:[#allocation2 + $0x378] sm:$0xff]
          %v1349 = vld [vmem:[#allocation2 + $0x380] sm:$0xff]
          %v1350 = vld [vmem:[#allocation2 + $0x388] sm:$0xff]
          %v1351 = vld [vmem:[#allocation2 + $0x390] sm:$0xff]
          %v1352 = vld [vmem:[#allocation2 + $0x398] sm:$0xff]
          %v1353 = vld [vmem:[#allocation2 + $0x3a0] sm:$0xff]
          %v1354 = vld [vmem:[#allocation2 + $0x3a8] sm:$0xff]
          %v1355 = vld [vmem:[#allocation2 + $0x3b0] sm:$0xff]
          %v1356 = vld [vmem:[#allocation2 + $0x3b8] sm:$0xff]
          %v1357 = vld [vmem:[#allocation2 + $0x3c0] sm:$0xff]
          %v1358 = vld [vmem:[#allocation2 + $0x3c8] sm:$0xff]
          %v1359 = vld [vmem:[#allocation2 + $0x3d0] sm:$0xff]
          %v1360 = vld [vmem:[#allocation2 + $0x3d8] sm:$0xff]
          %v1361 = vld [vmem:[#allocation2 + $0x3e0] sm:$0xff]
          %v1362 = vld [vmem:[#allocation2 + $0x3e8] sm:$0xff]
          %v1363 = vld [vmem:[#allocation2 + $0x3f0] sm:$0xff]
          %v1364 = vld [vmem:[#allocation2 + $0x3f8] sm:$0xff]
          %v1365 = vld [vmem:[#allocation2 + $0x400] sm:$0xff]
          %v1366 = vld [vmem:[#allocation2 + $0x408] sm:$0xff]
          %v1367 = vld [vmem:[#allocation2 + $0x410] sm:$0xff]
          %v1368 = vld [vmem:[#allocation2 + $0x418] sm:$0xff]
          %v1369 = vld [vmem:[#allocation2 + $0x420] sm:$0xff]
          %v1370 = vld [vmem:[#allocation2 + $0x428] sm:$0xff]
          %v1371 = vld [vmem:[#allocation2 + $0x430] sm:$0xff]
          %v1372 = vld [vmem:[#allocation2 + $0x438] sm:$0xff]
          %v1374 = vperm.slane %v1236, 0
          %v1375 = vperm.slane %v1236, 1
          %v1377 = vsel %vm642, %v1375, 0
          %1379 = vmatpush.msra.mxu0 %v1357
          %1380 = vmatpush.msra.mxu0 %v1349
          %1381 = vmatpush.msra.mxu0 %v1341
          %1382 = vmatpush.msra.mxu0 %v1333
          %1383 = vmatpush.msra.mxu0 %v1325
          %1384 = vmatpush.msra.mxu0 %v1317
          %1385 = vmatpush.msra.mxu0 %v1309
          %1386 = vmatpush.msra.mxu0 %v1301
          %1387 = vmatpush.msra.mxu0 %v1293
          %1388 = vmatpush.msra.mxu0 %v1285
          %1389 = vmatpush.msra.mxu0 %v1277
          %1390 = vmatpush.msra.mxu0 %v1269
          %1391 = vmatpush.msra.mxu0 %v1261
          %1392 = vmatpush.msra.mxu0 %v1253
          %1393 = vmatpush.msra.mxu0 %v1245
          %1394 = vmatpush.msra.mxu0 %v1237
          %1395 = vmatmul.f32.gmra.mxu0 %v1374
          %v1396 = vpop.f32.mrf.mxu0
          %v1397 = vadd.f32 0.0, %v1396
          %1398 = vdwg.mxu0
          %1399 = vmatpush.msra.mxu0 0.0
          %1400 = vmatpush.msra.mxu0 0.0
          %1401 = vmatpush.msra.mxu0 0.0
          %1402 = vmatpush.msra.mxu0 0.0
          %1403 = vmatpush.msra.mxu0 0.0
          %1404 = vmatpush.msra.mxu0 0.0
          %1405 = vmatpush.msra.mxu0 0.0
          %1406 = vmatpush.msra.mxu0 0.0
          %1407 = vmatpush.msra.mxu0 0.0
          %1408 = vmatpush.msra.mxu0 0.0
          %1409 = vmatpush.msra.mxu0 0.0
          %1410 = vmatpush.msra.mxu0 0.0
          %1411 = vmatpush.msra.mxu0 0.0
          %1412 = vmatpush.msra.mxu0 0.0
          %1413 = vmatpush.msra.mxu0 0.0
          %1414 = vmatpush.msra.mxu0 %v1365
          %1415 = vmatmul.f32.gmra.mxu0 %v1377
          %v1416 = vpop.f32.mrf.mxu0
          %v1417 = vadd.f32 %v1397, %v1416
          %1418 = vdwg.mxu0
          %1419 = vmatpush.msra.mxu0 %v1358
          %1420 = vmatpush.msra.mxu0 %v1350
          %1421 = vmatpush.msra.mxu0 %v1342
          %1422 = vmatpush.msra.mxu0 %v1334
          %1423 = vmatpush.msra.mxu0 %v1326
          %1424 = vmatpush.msra.mxu0 %v1318
          %1425 = vmatpush.msra.mxu0 %v1310
          %1426 = vmatpush.msra.mxu0 %v1302
          %1427 = vmatpush.msra.mxu0 %v1294
          %1428 = vmatpush.msra.mxu0 %v1286
          %1429 = vmatpush.msra.mxu0 %v1278
          %1430 = vmatpush.msra.mxu0 %v1270
          %1431 = vmatpush.msra.mxu0 %v1262
          %1432 = vmatpush.msra.mxu0 %v1254
          %1433 = vmatpush.msra.mxu0 %v1246
          %1434 = vmatpush.msra.mxu0 %v1238
          %1435 = vmatmul.f32.gmra.mxu0 %v1374
          %v1436 = vpop.f32.mrf.mxu0
          %v1437 = vadd.f32 0.0, %v1436
          %1438 = vdwg.mxu0
          %1439 = vmatpush.msra.mxu0 0.0
          %1440 = vmatpush.msra.mxu0 0.0
          %1441 = vmatpush.msra.mxu0 0.0
          %1442 = vmatpush.msra.mxu0 0.0
          %1443 = vmatpush.msra.mxu0 0.0
          %1444 = vmatpush.msra.mxu0 0.0
          %1445 = vmatpush.msra.mxu0 0.0
          %1446 = vmatpush.msra.mxu0 0.0
          %1447 = vmatpush.msra.mxu0 0.0
          %1448 = vmatpush.msra.mxu0 0.0
          %1449 = vmatpush.msra.mxu0 0.0
          %1450 = vmatpush.msra.mxu0 0.0
          %1451 = vmatpush.msra.mxu0 0.0
          %1452 = vmatpush.msra.mxu0 0.0
          %1453 = vmatpush.msra.mxu0 0.0
          %1454 = vmatpush.msra.mxu0 %v1366
          %1455 = vmatmul.f32.gmra.mxu0 %v1377
          %v1456 = vpop.f32.mrf.mxu0
          %v1457 = vadd.f32 %v1437, %v1456
          %1458 = vdwg.mxu0
          %1459 = vmatpush.msra.mxu0 %v1359
          %1460 = vmatpush.msra.mxu0 %v1351
          %1461 = vmatpush.msra.mxu0 %v1343
          %1462 = vmatpush.msra.mxu0 %v1335
          %1463 = vmatpush.msra.mxu0 %v1327
          %1464 = vmatpush.msra.mxu0 %v1319
          %1465 = vmatpush.msra.mxu0 %v1311
          %1466 = vmatpush.msra.mxu0 %v1303
          %1467 = vmatpush.msra.mxu0 %v1295
          %1468 = vmatpush.msra.mxu0 %v1287
          %1469 = vmatpush.msra.mxu0 %v1279
          %1470 = vmatpush.msra.mxu0 %v1271
          %1471 = vmatpush.msra.mxu0 %v1263
          %1472 = vmatpush.msra.mxu0 %v1255
          %1473 = vmatpush.msra.mxu0 %v1247
          %1474 = vmatpush.msra.mxu0 %v1239
          %1475 = vmatmul.f32.gmra.mxu0 %v1374
          %v1476 = vpop.f32.mrf.mxu0
          %v1477 = vadd.f32 0.0, %v1476
          %1478 = vdwg.mxu0
          %1479 = vmatpush.msra.mxu0 0.0
          %1480 = vmatpush.msra.mxu0 0.0
          %1481 = vmatpush.msra.mxu0 0.0
          %1482 = vmatpush.msra.mxu0 0.0
          %1483 = vmatpush.msra.mxu0 0.0
          %1484 = vmatpush.msra.mxu0 0.0
          %1485 = vmatpush.msra.mxu0 0.0
          %1486 = vmatpush.msra.mxu0 0.0
          %1487 = vmatpush.msra.mxu0 0.0
          %1488 = vmatpush.msra.mxu0 0.0
          %1489 = vmatpush.msra.mxu0 0.0
          %1490 = vmatpush.msra.mxu0 0.0
          %1491 = vmatpush.msra.mxu0 0.0
          %1492 = vmatpush.msra.mxu0 0.0
          %1493 = vmatpush.msra.mxu0 0.0
          %1494 = vmatpush.msra.mxu0 %v1367
          %1495 = vmatmul.f32.gmra.mxu0 %v1377
          %v1496 = vpop.f32.mrf.mxu0
          %v1497 = vadd.f32 %v1477, %v1496
          %1498 = vdwg.mxu0
          %1499 = vmatpush.msra.mxu0 %v1360
          %1500 = vmatpush.msra.mxu0 %v1352
          %1501 = vmatpush.msra.mxu0 %v1344
          %1502 = vmatpush.msra.mxu0 %v1336
          %1503 = vmatpush.msra.mxu0 %v1328
          %1504 = vmatpush.msra.mxu0 %v1320
          %1505 = vmatpush.msra.mxu0 %v1312
          %1506 = vmatpush.msra.mxu0 %v1304
          %1507 = vmatpush.msra.mxu0 %v1296
          %1508 = vmatpush.msra.mxu0 %v1288
          %1509 = vmatpush.msra.mxu0 %v1280
          %1510 = vmatpush.msra.mxu0 %v1272
          %1511 = vmatpush.msra.mxu0 %v1264
          %1512 = vmatpush.msra.mxu0 %v1256
          %1513 = vmatpush.msra.mxu0 %v1248
          %1514 = vmatpush.msra.mxu0 %v1240
          %1515 = vmatmul.f32.gmra.mxu0 %v1374
          %v1516 = vpop.f32.mrf.mxu0
          %v1517 = vadd.f32 0.0, %v1516
          %1518 = vdwg.mxu0
          %1519 = vmatpush.msra.mxu0 0.0
          %1520 = vmatpush.msra.mxu0 0.0
          %1521 = vmatpush.msra.mxu0 0.0
          %1522 = vmatpush.msra.mxu0 0.0
          %1523 = vmatpush.msra.mxu0 0.0
          %1524 = vmatpush.msra.mxu0 0.0
          %1525 = vmatpush.msra.mxu0 0.0
          %1526 = vmatpush.msra.mxu0 0.0
          %1527 = vmatpush.msra.mxu0 0.0
          %1528 = vmatpush.msra.mxu0 0.0
          %1529 = vmatpush.msra.mxu0 0.0
          %1530 = vmatpush.msra.mxu0 0.0
          %1531 = vmatpush.msra.mxu0 0.0
          %1532 = vmatpush.msra.mxu0 0.0
          %1533 = vmatpush.msra.mxu0 0.0
          %1534 = vmatpush.msra.mxu0 %v1368
          %1535 = vmatmul.f32.gmra.mxu0 %v1377
          %v1536 = vpop.f32.mrf.mxu0
          %v1537 = vadd.f32 %v1517, %v1536
          %1538 = vdwg.mxu0
          %1539 = vmatpush.msra.mxu0 %v1361
          %1540 = vmatpush.msra.mxu0 %v1353
          %1541 = vmatpush.msra.mxu0 %v1345
          %1542 = vmatpush.msra.mxu0 %v1337
          %1543 = vmatpush.msra.mxu0 %v1329
          %1544 = vmatpush.msra.mxu0 %v1321
          %1545 = vmatpush.msra.mxu0 %v1313
          %1546 = vmatpush.msra.mxu0 %v1305
          %1547 = vmatpush.msra.mxu0 %v1297
          %1548 = vmatpush.msra.mxu0 %v1289
          %1549 = vmatpush.msra.mxu0 %v1281
          %1550 = vmatpush.msra.mxu0 %v1273
          %1551 = vmatpush.msra.mxu0 %v1265
          %1552 = vmatpush.msra.mxu0 %v1257
          %1553 = vmatpush.msra.mxu0 %v1249
          %1554 = vmatpush.msra.mxu0 %v1241
          %1555 = vmatmul.f32.gmra.mxu0 %v1374
          %v1556 = vpop.f32.mrf.mxu0
          %v1557 = vadd.f32 0.0, %v1556
          %1558 = vdwg.mxu0
          %1559 = vmatpush.msra.mxu0 0.0
          %1560 = vmatpush.msra.mxu0 0.0
          %1561 = vmatpush.msra.mxu0 0.0
          %1562 = vmatpush.msra.mxu0 0.0
          %1563 = vmatpush.msra.mxu0 0.0
          %1564 = vmatpush.msra.mxu0 0.0
          %1565 = vmatpush.msra.mxu0 0.0
          %1566 = vmatpush.msra.mxu0 0.0
          %1567 = vmatpush.msra.mxu0 0.0
          %1568 = vmatpush.msra.mxu0 0.0
          %1569 = vmatpush.msra.mxu0 0.0
          %1570 = vmatpush.msra.mxu0 0.0
          %1571 = vmatpush.msra.mxu0 0.0
          %1572 = vmatpush.msra.mxu0 0.0
          %1573 = vmatpush.msra.mxu0 0.0
          %1574 = vmatpush.msra.mxu0 %v1369
          %1575 = vmatmul.f32.gmra.mxu0 %v1377
          %v1576 = vpop.f32.mrf.mxu0
          %v1577 = vadd.f32 %v1557, %v1576
          %1578 = vdwg.mxu0
          %1579 = vmatpush.msra.mxu0 %v1362
          %1580 = vmatpush.msra.mxu0 %v1354
          %1581 = vmatpush.msra.mxu0 %v1346
          %1582 = vmatpush.msra.mxu0 %v1338
          %1583 = vmatpush.msra.mxu0 %v1330
          %1584 = vmatpush.msra.mxu0 %v1322
          %1585 = vmatpush.msra.mxu0 %v1314
          %1586 = vmatpush.msra.mxu0 %v1306
          %1587 = vmatpush.msra.mxu0 %v1298
          %1588 = vmatpush.msra.mxu0 %v1290
          %1589 = vmatpush.msra.mxu0 %v1282
          %1590 = vmatpush.msra.mxu0 %v1274
          %1591 = vmatpush.msra.mxu0 %v1266
          %1592 = vmatpush.msra.mxu0 %v1258
          %1593 = vmatpush.msra.mxu0 %v1250
          %1594 = vmatpush.msra.mxu0 %v1242
          %1595 = vmatmul.f32.gmra.mxu0 %v1374
          %v1596 = vpop.f32.mrf.mxu0
          %v1597 = vadd.f32 0.0, %v1596
          %1598 = vdwg.mxu0
          %1599 = vmatpush.msra.mxu0 0.0
          %1600 = vmatpush.msra.mxu0 0.0
          %1601 = vmatpush.msra.mxu0 0.0
          %1602 = vmatpush.msra.mxu0 0.0
          %1603 = vmatpush.msra.mxu0 0.0
          %1604 = vmatpush.msra.mxu0 0.0
          %1605 = vmatpush.msra.mxu0 0.0
          %1606 = vmatpush.msra.mxu0 0.0
          %1607 = vmatpush.msra.mxu0 0.0
          %1608 = vmatpush.msra.mxu0 0.0
          %1609 = vmatpush.msra.mxu0 0.0
          %1610 = vmatpush.msra.mxu0 0.0
          %1611 = vmatpush.msra.mxu0 0.0
          %1612 = vmatpush.msra.mxu0 0.0
          %1613 = vmatpush.msra.mxu0 0.0
          %1614 = vmatpush.msra.mxu0 %v1370
          %1615 = vmatmul.f32.gmra.mxu0 %v1377
          %v1616 = vpop.f32.mrf.mxu0
          %v1617 = vadd.f32 %v1597, %v1616
          %1618 = vdwg.mxu0
          %1619 = vmatpush.msra.mxu0 %v1363
          %1620 = vmatpush.msra.mxu0 %v1355
          %1621 = vmatpush.msra.mxu0 %v1347
          %1622 = vmatpush.msra.mxu0 %v1339
          %1623 = vmatpush.msra.mxu0 %v1331
          %1624 = vmatpush.msra.mxu0 %v1323
          %1625 = vmatpush.msra.mxu0 %v1315
          %1626 = vmatpush.msra.mxu0 %v1307
          %1627 = vmatpush.msra.mxu0 %v1299
          %1628 = vmatpush.msra.mxu0 %v1291
          %1629 = vmatpush.msra.mxu0 %v1283
          %1630 = vmatpush.msra.mxu0 %v1275
          %1631 = vmatpush.msra.mxu0 %v1267
          %1632 = vmatpush.msra.mxu0 %v1259
          %1633 = vmatpush.msra.mxu0 %v1251
          %1634 = vmatpush.msra.mxu0 %v1243
          %1635 = vmatmul.f32.gmra.mxu0 %v1374
          %v1636 = vpop.f32.mrf.mxu0
          %v1637 = vadd.f32 0.0, %v1636
          %1638 = vdwg.mxu0
          %1639 = vmatpush.msra.mxu0 0.0
          %1640 = vmatpush.msra.mxu0 0.0
          %1641 = vmatpush.msra.mxu0 0.0
          %1642 = vmatpush.msra.mxu0 0.0
          %1643 = vmatpush.msra.mxu0 0.0
          %1644 = vmatpush.msra.mxu0 0.0
          %1645 = vmatpush.msra.mxu0 0.0
          %1646 = vmatpush.msra.mxu0 0.0
          %1647 = vmatpush.msra.mxu0 0.0
          %1648 = vmatpush.msra.mxu0 0.0
          %1649 = vmatpush.msra.mxu0 0.0
          %1650 = vmatpush.msra.mxu0 0.0
          %1651 = vmatpush.msra.mxu0 0.0
          %1652 = vmatpush.msra.mxu0 0.0
          %1653 = vmatpush.msra.mxu0 0.0
          %1654 = vmatpush.msra.mxu0 %v1371
          %1655 = vmatmul.f32.gmra.mxu0 %v1377
          %v1656 = vpop.f32.mrf.mxu0
          %v1657 = vadd.f32 %v1637, %v1656
          %1658 = vdwg.mxu0
          %1659 = vmatpush.msra.mxu0 %v1364
          %1660 = vmatpush.msra.mxu0 %v1356
          %1661 = vmatpush.msra.mxu0 %v1348
          %1662 = vmatpush.msra.mxu0 %v1340
          %1663 = vmatpush.msra.mxu0 %v1332
          %1664 = vmatpush.msra.mxu0 %v1324
          %1665 = vmatpush.msra.mxu0 %v1316
          %1666 = vmatpush.msra.mxu0 %v1308
          %1667 = vmatpush.msra.mxu0 %v1300
          %1668 = vmatpush.msra.mxu0 %v1292
          %1669 = vmatpush.msra.mxu0 %v1284
          %1670 = vmatpush.msra.mxu0 %v1276
          %1671 = vmatpush.msra.mxu0 %v1268
          %1672 = vmatpush.msra.mxu0 %v1260
          %1673 = vmatpush.msra.mxu0 %v1252
          %1674 = vmatpush.msra.mxu0 %v1244
          %1675 = vmatmul.f32.gmra.mxu0 %v1374
          %v1676 = vpop.f32.mrf.mxu0
          %v1677 = vadd.f32 0.0, %v1676
          %1678 = vdwg.mxu0
          %1679 = vmatpush.msra.mxu0 0.0
          %1680 = vmatpush.msra.mxu0 0.0
          %1681 = vmatpush.msra.mxu0 0.0
          %1682 = vmatpush.msra.mxu0 0.0
          %1683 = vmatpush.msra.mxu0 0.0
          %1684 = vmatpush.msra.mxu0 0.0
          %1685 = vmatpush.msra.mxu0 0.0
          %1686 = vmatpush.msra.mxu0 0.0
          %1687 = vmatpush.msra.mxu0 0.0
          %1688 = vmatpush.msra.mxu0 0.0
          %1689 = vmatpush.msra.mxu0 0.0
          %1690 = vmatpush.msra.mxu0 0.0
          %1691 = vmatpush.msra.mxu0 0.0
          %1692 = vmatpush.msra.mxu0 0.0
          %1693 = vmatpush.msra.mxu0 0.0
          %1694 = vmatpush.msra.mxu0 %v1372
          %1695 = vmatmul.f32.gmra.mxu0 %v1377
          %v1696 = vpop.f32.mrf.mxu0
          %v1697 = vadd.f32 %v1677, %v1696
          %1698 = vdwg.mxu0
          %s1699 = smul.u32 %s1228, 8
          %s1700 = smul.u32 %s1699, 8
          %s1701 = sadd.s32 %s1700, %s1231
          %s1702 = scalar_lea.vmem [#allocation2], %s1701
          %v1703 = vld [vmem:[%s1702] ss:$8 sm:$0xf]
          %v1704 = vld [vmem:[%s1702] ss:$8 sm:$0xf0]
          %v1705 = vor.u32 %v1703, %v1704
          %s1706 = scalar_lea.vmem %s194, %s1701
          %v1707 = vld [vmem:[%s1706] ss:$8 sm:$0xf]
          %v1708 = vld [vmem:[%s1706] ss:$8 sm:$0xf0]
          %v1709 = vor.u32 %v1707, %v1708
          %v1710 = vmul.f32 %v1417, %v1417
          %v1711 = vsel %vm977, %v1710, 0.0
          %1712 = vadd.xlane.f32.xlu0 %v1711
          %v1713 = vpop.xlane.xlu0 %1712
          %vm1714 = vcmp.gt.f32.partialorder %v1713, 1e-12
          %v1715 = vsel %vm1714, 1, 0
          %v1716 = vcvt.s32.f32 %v1715
          %v1717 = vadd.f32 %v1713, 1e-30
          %v1718 = vrsqrt.pop %v1717
          %v1719 = vmul.f32 %v1718, %v1717
          %v1720 = vmul.f32 %v1719, %v1718
          %v1721 = vmul.f32 0.5, %v1720
          %v1722 = vsub.f32 1.5, %v1721
          %v1723 = vmul.f32 %v1718, %v1722
          %vm1724 = vweird.f32 %v1717
          %vm1725 = vweird.f32 %v1718
          %vm1726 = vmor %vm1724, %vm1725
          %v1727 = vsel %vm1726, %v1718, %v1723
          %v1728 = vmul.f32 %v1716, %v1727
          %v1729 = vsub.f32 1.0, %v1716
          %v1730 = vmul.f32 %v1729, %v1705
          %v1731 = vmul.f32 %v1728, %v1417
          %v1732 = vsub.f32 %v1730, %v1731
          %v1733 = vmul.f32 %v1457, %v1457
          %v1734 = vsel %vm977, %v1733, 0.0
          %1735 = vadd.xlane.f32.xlu0 %v1734
          %v1736 = vpop.xlane.xlu0 %1735
          %vm1737 = vcmp.gt.f32.partialorder %v1736, 1e-12
          %v1738 = vsel %vm1737, 1, 0
          %v1739 = vcvt.s32.f32 %v1738
          %v1740 = vadd.f32 %v1736, 1e-30
          %v1741 = vrsqrt.pop %v1740
          %v1742 = vmul.f32 %v1741, %v1740
          %v1743 = vmul.f32 %v1742, %v1741
          %v1744 = vmul.f32 0.5, %v1743
          %v1745 = vsub.f32 1.5, %v1744
          %v1746 = vmul.f32 %v1741, %v1745
          %vm1747 = vweird.f32 %v1740
          %vm1748 = vweird.f32 %v1741
          %vm1749 = vmor %vm1747, %vm1748
          %v1750 = vsel %vm1749, %v1741, %v1746
          %v1751 = vmul.f32 %v1739, %v1750
          %v1752 = vsub.f32 1.0, %v1739
          %v1754 = vperm.slane %v1705, 1
          %v1756 = vmul.f32 %v1752, %v1754
          %v1757 = vmul.f32 %v1751, %v1457
          %v1758 = vsub.f32 %v1756, %v1757
          %v1759 = vmul.f32 %v1497, %v1497
          %v1760 = vsel %vm977, %v1759, 0.0
          %1761 = vadd.xlane.f32.xlu0 %v1760
          %v1762 = vpop.xlane.xlu0 %1761
          %vm1763 = vcmp.gt.f32.partialorder %v1762, 1e-12
          %v1764 = vsel %vm1763, 1, 0
          %v1765 = vcvt.s32.f32 %v1764
          %v1766 = vadd.f32 %v1762, 1e-30
          %v1767 = vrsqrt.pop %v1766
          %v1768 = vmul.f32 %v1767, %v1766
          %v1769 = vmul.f32 %v1768, %v1767
          %v1770 = vmul.f32 0.5, %v1769
          %v1771 = vsub.f32 1.5, %v1770
          %v1772 = vmul.f32 %v1767, %v1771
          %vm1773 = vweird.f32 %v1766
          %vm1774 = vweird.f32 %v1767
          %vm1775 = vmor %vm1773, %vm1774
          %v1776 = vsel %vm1775, %v1767, %v1772
          %v1777 = vmul.f32 %v1765, %v1776
          %v1778 = vsub.f32 1.0, %v1765
          %v1779 = vperm.slane %v1705, 2
          %v1781 = vmul.f32 %v1778, %v1779
          %v1782 = vmul.f32 %v1777, %v1497
          %v1783 = vsub.f32 %v1781, %v1782
          %v1784 = vmul.f32 %v1537, %v1537
          %v1785 = vsel %vm977, %v1784, 0.0
          %1786 = vadd.xlane.f32.xlu0 %v1785
          %v1787 = vpop.xlane.xlu0 %1786
          %vm1788 = vcmp.gt.f32.partialorder %v1787, 1e-12
          %v1789 = vsel %vm1788, 1, 0
          %v1790 = vcvt.s32.f32 %v1789
          %v1791 = vadd.f32 %v1787, 1e-30
          %v1792 = vrsqrt.pop %v1791
          %v1793 = vmul.f32 %v1792, %v1791
          %v1794 = vmul.f32 %v1793, %v1792
          %v1795 = vmul.f32 0.5, %v1794
          %v1796 = vsub.f32 1.5, %v1795
          %v1797 = vmul.f32 %v1792, %v1796
          %vm1798 = vweird.f32 %v1791
          %vm1799 = vweird.f32 %v1792
          %vm1800 = vmor %vm1798, %vm1799
          %v1801 = vsel %vm1800, %v1792, %v1797
          %v1802 = vmul.f32 %v1790, %v1801
          %v1803 = vsub.f32 1.0, %v1790
          %v1804 = vperm.slane %v1705, 3
          %v1806 = vmul.f32 %v1803, %v1804
          %v1807 = vmul.f32 %v1802, %v1537
          %v1808 = vsub.f32 %v1806, %v1807
          %v1809 = vmul.f32 %v1577, %v1577
          %v1810 = vsel %vm977, %v1809, 0.0
          %1811 = vadd.xlane.f32.xlu0 %v1810
          %v1812 = vpop.xlane.xlu0 %1811
          %vm1813 = vcmp.gt.f32.partialorder %v1812, 1e-12
          %v1814 = vsel %vm1813, 1, 0
          %v1815 = vcvt.s32.f32 %v1814
          %v1816 = vadd.f32 %v1812, 1e-30
          %v1817 = vrsqrt.pop %v1816
          %v1818 = vmul.f32 %v1817, %v1816
          %v1819 = vmul.f32 %v1818, %v1817
          %v1820 = vmul.f32 0.5, %v1819
          %v1821 = vsub.f32 1.5, %v1820
          %v1822 = vmul.f32 %v1817, %v1821
          %vm1823 = vweird.f32 %v1816
          %vm1824 = vweird.f32 %v1817
          %vm1825 = vmor %vm1823, %vm1824
          %v1826 = vsel %vm1825, %v1817, %v1822
          %v1827 = vmul.f32 %v1815, %v1826
          %v1828 = vsub.f32 1.0, %v1815
          %v1829 = vperm.slane %v1705, 4
          %v1831 = vmul.f32 %v1828, %v1829
          %v1832 = vmul.f32 %v1827, %v1577
          %v1833 = vsub.f32 %v1831, %v1832
          %v1834 = vmul.f32 %v1617, %v1617
          %v1835 = vsel %vm977, %v1834, 0.0
          %1836 = vadd.xlane.f32.xlu0 %v1835
          %v1837 = vpop.xlane.xlu0 %1836
          %vm1838 = vcmp.gt.f32.partialorder %v1837, 1e-12
          %v1839 = vsel %vm1838, 1, 0
          %v1840 = vcvt.s32.f32 %v1839
          %v1841 = vadd.f32 %v1837, 1e-30
          %v1842 = vrsqrt.pop %v1841
          %v1843 = vmul.f32 %v1842, %v1841
          %v1844 = vmul.f32 %v1843, %v1842
          %v1845 = vmul.f32 0.5, %v1844
          %v1846 = vsub.f32 1.5, %v1845
          %v1847 = vmul.f32 %v1842, %v1846
          %vm1848 = vweird.f32 %v1841
          %vm1849 = vweird.f32 %v1842
          %vm1850 = vmor %vm1848, %vm1849
          %v1851 = vsel %vm1850, %v1842, %v1847
          %v1852 = vmul.f32 %v1840, %v1851
          %v1853 = vsub.f32 1.0, %v1840
          %v1854 = vperm.slane %v1705, 5
          %v1856 = vmul.f32 %v1853, %v1854
          %v1857 = vmul.f32 %v1852, %v1617
          %v1858 = vsub.f32 %v1856, %v1857
          %v1859 = vmul.f32 %v1657, %v1657
          %v1860 = vsel %vm977, %v1859, 0.0
          %1861 = vadd.xlane.f32.xlu0 %v1860
          %v1862 = vpop.xlane.xlu0 %1861
          %vm1863 = vcmp.gt.f32.partialorder %v1862, 1e-12
          %v1864 = vsel %vm1863, 1, 0
          %v1865 = vcvt.s32.f32 %v1864
          %v1866 = vadd.f32 %v1862, 1e-30
          %v1867 = vrsqrt.pop %v1866
          %v1868 = vmul.f32 %v1867, %v1866
          %v1869 = vmul.f32 %v1868, %v1867
          %v1870 = vmul.f32 0.5, %v1869
          %v1871 = vsub.f32 1.5, %v1870
          %v1872 = vmul.f32 %v1867, %v1871
          %vm1873 = vweird.f32 %v1866
          %vm1874 = vweird.f32 %v1867
          %vm1875 = vmor %vm1873, %vm1874
          %v1876 = vsel %vm1875, %v1867, %v1872
          %v1877 = vmul.f32 %v1865, %v1876
          %v1878 = vsub.f32 1.0, %v1865
          %v1879 = vperm.slane %v1705, 6
          %v1881 = vmul.f32 %v1878, %v1879
          %v1882 = vmul.f32 %v1877, %v1657
          %v1883 = vsub.f32 %v1881, %v1882
          %v1884 = vmul.f32 %v1697, %v1697
          %v1885 = vsel %vm977, %v1884, 0.0
          %1886 = vadd.xlane.f32.xlu0 %v1885
          %v1887 = vpop.xlane.xlu0 %1886
          %vm1888 = vcmp.gt.f32.partialorder %v1887, 1e-12
          %v1889 = vsel %vm1888, 1, 0
          %v1890 = vcvt.s32.f32 %v1889
          %v1891 = vadd.f32 %v1887, 1e-30
          %v1892 = vrsqrt.pop %v1891
          %v1893 = vmul.f32 %v1892, %v1891
          %v1894 = vmul.f32 %v1893, %v1892
          %v1895 = vmul.f32 0.5, %v1894
          %v1896 = vsub.f32 1.5, %v1895
          %v1897 = vmul.f32 %v1892, %v1896
          %vm1898 = vweird.f32 %v1891
          %vm1899 = vweird.f32 %v1892
          %vm1900 = vmor %vm1898, %vm1899
          %v1901 = vsel %vm1900, %v1892, %v1897
          %v1902 = vmul.f32 %v1890, %v1901
          %v1903 = vsub.f32 1.0, %v1890
          %v1904 = vperm.slane %v1705, 7
          %v1906 = vmul.f32 %v1903, %v1904
          %v1907 = vmul.f32 %v1902, %v1697
          %v1908 = vsub.f32 %v1906, %v1907
          %v1909 = vperm.slane %v1705, 0
          %v1911 = vsub.f32 %v1732, %v1909
          %v1912 = vsub.f32 %v1758, %v1754
          %v1913 = vsub.f32 %v1783, %v1779
          %v1914 = vsub.f32 %v1808, %v1804
          %v1915 = vsub.f32 %v1833, %v1829
          %v1916 = vsub.f32 %v1858, %v1854
          %v1917 = vsub.f32 %v1883, %v1879
          %v1918 = vsub.f32 %v1908, %v1904
          %v1927 = vrot.slane %v1912, 7
          %v1928 = vrot.slane %v1913, 6
          %v1929 = vrot.slane %v1914, 5
          %v1930 = vrot.slane %v1915, 4
          %v1931 = vrot.slane %v1916, 3
          %v1932 = vrot.slane %v1917, 2
          %v1933 = vrot.slane %v1918, 1
          %v1934 = vsel %vm977, %v1911, %v1927
          %v1935 = vsel %vm1202, %v1928, %v1929
          %v1936 = vsel %vm1204, %v1934, %v1935
          %v1937 = vsel %vm1206, %v1930, %v1931
          %v1938 = vsel %vm1208, %v1932, %v1933
          %v1939 = vsel %vm1210, %v1937, %v1938
          %v1940 = vsel %vm1212, %v1936, %v1939
          %v1942 = vmul.f32 %v1709, %v1940
          %v1943 = vadd.f32 %v1705, %v1942
          %1944 = vst [vmem:[%s1702] ss:$8 sm:$0xf] %v1943
          %1945 = vst [vmem:[%s1702] ss:$8 sm:$0xf0] %v1943
        $region44: #{a_call__.3} parent=36 // loop_footer
          %s483 = sadd.s32 1, %s479
        $region45: #{a_call__.3} parent=36 // loop_footer_branch
          %478 = sbr.rel target = $region41
        $region46: #{a_call__.3} parent=36 // loop_exit
          _
      $region37: #{a_call__.3} parent=31 // loop_footer
        %s477 = sadd.s32 1, %s473
      $region38: #{a_call__.3} parent=31 // loop_footer_branch
        %472 = sbr.rel target = $region34
      $region39: #{a_call__.3} parent=31 // loop_exit
        _
      %v1946 = vld [vmem:[#allocation2] sm:$0xff]
      %v1947 = vld [vmem:[#allocation2 + $0x40] sm:$0xff]
      %v1948 = vld [vmem:[#allocation2 + $0x80] sm:$0xff]
      %v1949 = vld [vmem:[#allocation2 + $0xc0] sm:$0xff]
      %v1950 = vld [vmem:[#allocation2 + $0x100] sm:$0xff]
      %v1951 = vld [vmem:[#allocation2 + $0x140] sm:$0xff]
      %v1952 = vld [vmem:[#allocation2 + $0x180] sm:$0xff]
      %v1953 = vld [vmem:[#allocation2 + $0x1c0] sm:$0xff]
      %v1954 = vld [vmem:[#allocation2 + $0x200] sm:$0xff]
      %v1955 = vld [vmem:[#allocation2 + $0x240] sm:$0xff]
      %v1956 = vld [vmem:[#allocation2 + $0x280] sm:$0xff]
      %v1957 = vld [vmem:[#allocation2 + $0x2c0] sm:$0xff]
      %v1958 = vld [vmem:[#allocation2 + $0x300] sm:$0xff]
      %v1959 = vld [vmem:[#allocation2 + $0x340] sm:$0xff]
      %v1960 = vld [vmem:[#allocation2 + $0x380] sm:$0xff]
      %v1961 = vld [vmem:[#allocation2 + $0x3c0] sm:$0xff]
      %v1962 = vld [vmem:[#allocation2 + $0x400] sm:$0xff]
      %v1963 = vld [vmem:[#allocation2] ss:$0 sm:$0xff]
      %v1964 = vmul.f32 %v1946, %v1963
      %v1965 = vmul.f32 %v1947, %v1963
      %v1966 = vmul.f32 %v1948, %v1963
      %v1967 = vmul.f32 %v1949, %v1963
      %v1968 = vmul.f32 %v1950, %v1963
      %v1969 = vmul.f32 %v1951, %v1963
      %v1970 = vmul.f32 %v1952, %v1963
      %v1971 = vmul.f32 %v1953, %v1963
      %v1972 = vmul.f32 %v1954, %v1963
      %v1973 = vmul.f32 %v1955, %v1963
      %v1974 = vmul.f32 %v1956, %v1963
      %v1975 = vmul.f32 %v1957, %v1963
      %v1976 = vmul.f32 %v1958, %v1963
      %v1977 = vmul.f32 %v1959, %v1963
      %v1978 = vmul.f32 %v1960, %v1963
      %v1979 = vmul.f32 %v1961, %v1963
      %v1980 = vmul.f32 %v1962, %v1963
      %1981 = vadd.xlane.f32.xlu0 %v1964
      %v1982 = vpop.xlane.xlu0 %1981
      %1983 = vadd.xlane.f32.xlu0 %v1965
      %v1984 = vpop.xlane.xlu0 %1983
      %1985 = vadd.xlane.f32.xlu0 %v1966
      %v1986 = vpop.xlane.xlu0 %1985
      %1987 = vadd.xlane.f32.xlu0 %v1967
      %v1988 = vpop.xlane.xlu0 %1987
      %1989 = vadd.xlane.f32.xlu0 %v1968
      %v1990 = vpop.xlane.xlu0 %1989
      %1991 = vadd.xlane.f32.xlu0 %v1969
      %v1992 = vpop.xlane.xlu0 %1991
      %1993 = vadd.xlane.f32.xlu0 %v1970
      %v1994 = vpop.xlane.xlu0 %1993
      %1995 = vadd.xlane.f32.xlu0 %v1971
      %v1996 = vpop.xlane.xlu0 %1995
      %1997 = vadd.xlane.f32.xlu0 %v1972
      %v1998 = vpop.xlane.xlu0 %1997
      %1999 = vadd.xlane.f32.xlu0 %v1973
      %v2000 = vpop.xlane.xlu0 %1999
      %2001 = vadd.xlane.f32.xlu0 %v1974
      %v2002 = vpop.xlane.xlu0 %2001
      %2003 = vadd.xlane.f32.xlu0 %v1975
      %v2004 = vpop.xlane.xlu0 %2003
      %2005 = vadd.xlane.f32.xlu0 %v1976
      %v2006 = vpop.xlane.xlu0 %2005
      %2007 = vadd.xlane.f32.xlu0 %v1977
      %v2008 = vpop.xlane.xlu0 %2007
      %2009 = vadd.xlane.f32.xlu0 %v1978
      %v2010 = vpop.xlane.xlu0 %2009
      %2011 = vadd.xlane.f32.xlu0 %v1979
      %v2012 = vpop.xlane.xlu0 %2011
      %2013 = vadd.xlane.f32.xlu0 %v1980
      %v2014 = vpop.xlane.xlu0 %2013
      %v2015 = vld [vmem:[#allocation2 + $0x8] sm:$0xff]
      %v2016 = vld [vmem:[#allocation2 + $0x48] sm:$0xff]
      %v2017 = vld [vmem:[#allocation2 + $0x88] sm:$0xff]
      %v2018 = vld [vmem:[#allocation2 + $0xc8] sm:$0xff]
      %v2019 = vld [vmem:[#allocation2 + $0x108] sm:$0xff]
      %v2020 = vld [vmem:[#allocation2 + $0x148] sm:$0xff]
      %v2021 = vld [vmem:[#allocation2 + $0x188] sm:$0xff]
      %v2022 = vld [vmem:[#allocation2 + $0x1c8] sm:$0xff]
      %v2023 = vld [vmem:[#allocation2 + $0x208] sm:$0xff]
      %v2024 = vld [vmem:[#allocation2 + $0x248] sm:$0xff]
      %v2025 = vld [vmem:[#allocation2 + $0x288] sm:$0xff]
      %v2026 = vld [vmem:[#allocation2 + $0x2c8] sm:$0xff]
      %v2027 = vld [vmem:[#allocation2 + $0x308] sm:$0xff]
      %v2028 = vld [vmem:[#allocation2 + $0x348] sm:$0xff]
      %v2029 = vld [vmem:[#allocation2 + $0x388] sm:$0xff]
      %v2030 = vld [vmem:[#allocation2 + $0x3c8] sm:$0xff]
      %v2031 = vld [vmem:[#allocation2 + $0x408] sm:$0xff]
      %v2032 = vld [vmem:[#allocation2 + $0x8] ss:$0 sm:$0xff]
      %v2033 = vmul.f32 %v2015, %v2032
      %v2034 = vmul.f32 %v2016, %v2032
      %v2035 = vmul.f32 %v2017, %v2032
      %v2036 = vmul.f32 %v2018, %v2032
      %v2037 = vmul.f32 %v2019, %v2032
      %v2038 = vmul.f32 %v2020, %v2032
      %v2039 = vmul.f32 %v2021, %v2032
      %v2040 = vmul.f32 %v2022, %v2032
      %v2041 = vmul.f32 %v2023, %v2032
      %v2042 = vmul.f32 %v2024, %v2032
      %v2043 = vmul.f32 %v2025, %v2032
      %v2044 = vmul.f32 %v2026, %v2032
      %v2045 = vmul.f32 %v2027, %v2032
      %v2046 = vmul.f32 %v2028, %v2032
      %v2047 = vmul.f32 %v2029, %v2032
      %v2048 = vmul.f32 %v2030, %v2032
      %v2049 = vmul.f32 %v2031, %v2032
      %2050 = vadd.xlane.f32.xlu0 %v2033
      %v2051 = vpop.xlane.xlu0 %2050
      %2052 = vadd.xlane.f32.xlu0 %v2034
      %v2053 = vpop.xlane.xlu0 %2052
      %2054 = vadd.xlane.f32.xlu0 %v2035
      %v2055 = vpop.xlane.xlu0 %2054
      %2056 = vadd.xlane.f32.xlu0 %v2036
      %v2057 = vpop.xlane.xlu0 %2056
      %2058 = vadd.xlane.f32.xlu0 %v2037
      %v2059 = vpop.xlane.xlu0 %2058
      %2060 = vadd.xlane.f32.xlu0 %v2038
      %v2061 = vpop.xlane.xlu0 %2060
      %2062 = vadd.xlane.f32.xlu0 %v2039
      %v2063 = vpop.xlane.xlu0 %2062
      %2064 = vadd.xlane.f32.xlu0 %v2040
      %v2065 = vpop.xlane.xlu0 %2064
      %2066 = vadd.xlane.f32.xlu0 %v2041
      %v2067 = vpop.xlane.xlu0 %2066
      %2068 = vadd.xlane.f32.xlu0 %v2042
      %v2069 = vpop.xlane.xlu0 %2068
      %2070 = vadd.xlane.f32.xlu0 %v2043
      %v2071 = vpop.xlane.xlu0 %2070
      %2072 = vadd.xlane.f32.xlu0 %v2044
      %v2073 = vpop.xlane.xlu0 %2072
      %2074 = vadd.xlane.f32.xlu0 %v2045
      %v2075 = vpop.xlane.xlu0 %2074
      %2076 = vadd.xlane.f32.xlu0 %v2046
      %v2077 = vpop.xlane.xlu0 %2076
      %2078 = vadd.xlane.f32.xlu0 %v2047
      %v2079 = vpop.xlane.xlu0 %2078
      %2080 = vadd.xlane.f32.xlu0 %v2048
      %v2081 = vpop.xlane.xlu0 %2080
      %2082 = vadd.xlane.f32.xlu0 %v2049
      %v2083 = vpop.xlane.xlu0 %2082
      %v2084 = vld [vmem:[#allocation2 + $0x10] sm:$0xff]
      %v2085 = vld [vmem:[#allocation2 + $0x50] sm:$0xff]
      %v2086 = vld [vmem:[#allocation2 + $0x90] sm:$0xff]
      %v2087 = vld [vmem:[#allocation2 + $0xd0] sm:$0xff]
      %v2088 = vld [vmem:[#allocation2 + $0x110] sm:$0xff]
      %v2089 = vld [vmem:[#allocation2 + $0x150] sm:$0xff]
      %v2090 = vld [vmem:[#allocation2 + $0x190] sm:$0xff]
      %v2091 = vld [vmem:[#allocation2 + $0x1d0] sm:$0xff]
      %v2092 = vld [vmem:[#allocation2 + $0x210] sm:$0xff]
      %v2093 = vld [vmem:[#allocation2 + $0x250] sm:$0xff]
      %v2094 = vld [vmem:[#allocation2 + $0x290] sm:$0xff]
      %v2095 = vld [vmem:[#allocation2 + $0x2d0] sm:$0xff]
      %v2096 = vld [vmem:[#allocation2 + $0x310] sm:$0xff]
      %v2097 = vld [vmem:[#allocation2 + $0x350] sm:$0xff]
      %v2098 = vld [vmem:[#allocation2 + $0x390] sm:$0xff]
      %v2099 = vld [vmem:[#allocation2 + $0x3d0] sm:$0xff]
      %v2100 = vld [vmem:[#allocation2 + $0x410] sm:$0xff]
      %v2101 = vld [vmem:[#allocation2 + $0x10] ss:$0 sm:$0xff]
      %v2102 = vmul.f32 %v2084, %v2101
      %v2103 = vmul.f32 %v2085, %v2101
      %v2104 = vmul.f32 %v2086, %v2101
      %v2105 = vmul.f32 %v2087, %v2101
      %v2106 = vmul.f32 %v2088, %v2101
      %v2107 = vmul.f32 %v2089, %v2101
      %v2108 = vmul.f32 %v2090, %v2101
      %v2109 = vmul.f32 %v2091, %v2101
      %v2110 = vmul.f32 %v2092, %v2101
      %v2111 = vmul.f32 %v2093, %v2101
      %v2112 = vmul.f32 %v2094, %v2101
      %v2113 = vmul.f32 %v2095, %v2101
      %v2114 = vmul.f32 %v2096, %v2101
      %v2115 = vmul.f32 %v2097, %v2101
      %v2116 = vmul.f32 %v2098, %v2101
      %v2117 = vmul.f32 %v2099, %v2101
      %v2118 = vmul.f32 %v2100, %v2101
      %2119 = vadd.xlane.f32.xlu0 %v2102
      %v2120 = vpop.xlane.xlu0 %2119
      %2121 = vadd.xlane.f32.xlu0 %v2103
      %v2122 = vpop.xlane.xlu0 %2121
      %2123 = vadd.xlane.f32.xlu0 %v2104
      %v2124 = vpop.xlane.xlu0 %2123
      %2125 = vadd.xlane.f32.xlu0 %v2105
      %v2126 = vpop.xlane.xlu0 %2125
      %2127 = vadd.xlane.f32.xlu0 %v2106
      %v2128 = vpop.xlane.xlu0 %2127
      %2129 = vadd.xlane.f32.xlu0 %v2107
      %v2130 = vpop.xlane.xlu0 %2129
      %2131 = vadd.xlane.f32.xlu0 %v2108
      %v2132 = vpop.xlane.xlu0 %2131
      %2133 = vadd.xlane.f32.xlu0 %v2109
      %v2134 = vpop.xlane.xlu0 %2133
      %2135 = vadd.xlane.f32.xlu0 %v2110
      %v2136 = vpop.xlane.xlu0 %2135
      %2137 = vadd.xlane.f32.xlu0 %v2111
      %v2138 = vpop.xlane.xlu0 %2137
      %2139 = vadd.xlane.f32.xlu0 %v2112
      %v2140 = vpop.xlane.xlu0 %2139
      %2141 = vadd.xlane.f32.xlu0 %v2113
      %v2142 = vpop.xlane.xlu0 %2141
      %2143 = vadd.xlane.f32.xlu0 %v2114
      %v2144 = vpop.xlane.xlu0 %2143
      %2145 = vadd.xlane.f32.xlu0 %v2115
      %v2146 = vpop.xlane.xlu0 %2145
      %2147 = vadd.xlane.f32.xlu0 %v2116
      %v2148 = vpop.xlane.xlu0 %2147
      %2149 = vadd.xlane.f32.xlu0 %v2117
      %v2150 = vpop.xlane.xlu0 %2149
      %2151 = vadd.xlane.f32.xlu0 %v2118
      %v2152 = vpop.xlane.xlu0 %2151
      %v2153 = vld [vmem:[#allocation2 + $0x18] sm:$0xff]
      %v2154 = vld [vmem:[#allocation2 + $0x58] sm:$0xff]
      %v2155 = vld [vmem:[#allocation2 + $0x98] sm:$0xff]
      %v2156 = vld [vmem:[#allocation2 + $0xd8] sm:$0xff]
      %v2157 = vld [vmem:[#allocation2 + $0x118] sm:$0xff]
      %v2158 = vld [vmem:[#allocation2 + $0x158] sm:$0xff]
      %v2159 = vld [vmem:[#allocation2 + $0x198] sm:$0xff]
      %v2160 = vld [vmem:[#allocation2 + $0x1d8] sm:$0xff]
      %v2161 = vld [vmem:[#allocation2 + $0x218] sm:$0xff]
      %v2162 = vld [vmem:[#allocation2 + $0x258] sm:$0xff]
      %v2163 = vld [vmem:[#allocation2 + $0x298] sm:$0xff]
      %v2164 = vld [vmem:[#allocation2 + $0x2d8] sm:$0xff]
      %v2165 = vld [vmem:[#allocation2 + $0x318] sm:$0xff]
      %v2166 = vld [vmem:[#allocation2 + $0x358] sm:$0xff]
      %v2167 = vld [vmem:[#allocation2 + $0x398] sm:$0xff]
      %v2168 = vld [vmem:[#allocation2 + $0x3d8] sm:$0xff]
      %v2169 = vld [vmem:[#allocation2 + $0x418] sm:$0xff]
      %v2170 = vld [vmem:[#allocation2 + $0x18] ss:$0 sm:$0xff]
      %v2171 = vmul.f32 %v2153, %v2170
      %v2172 = vmul.f32 %v2154, %v2170
      %v2173 = vmul.f32 %v2155, %v2170
      %v2174 = vmul.f32 %v2156, %v2170
      %v2175 = vmul.f32 %v2157, %v2170
      %v2176 = vmul.f32 %v2158, %v2170
      %v2177 = vmul.f32 %v2159, %v2170
      %v2178 = vmul.f32 %v2160, %v2170
      %v2179 = vmul.f32 %v2161, %v2170
      %v2180 = vmul.f32 %v2162, %v2170
      %v2181 = vmul.f32 %v2163, %v2170
      %v2182 = vmul.f32 %v2164, %v2170
      %v2183 = vmul.f32 %v2165, %v2170
      %v2184 = vmul.f32 %v2166, %v2170
      %v2185 = vmul.f32 %v2167, %v2170
      %v2186 = vmul.f32 %v2168, %v2170
      %v2187 = vmul.f32 %v2169, %v2170
      %2188 = vadd.xlane.f32.xlu0 %v2171
      %v2189 = vpop.xlane.xlu0 %2188
      %2190 = vadd.xlane.f32.xlu0 %v2172
      %v2191 = vpop.xlane.xlu0 %2190
      %2192 = vadd.xlane.f32.xlu0 %v2173
      %v2193 = vpop.xlane.xlu0 %2192
      %2194 = vadd.xlane.f32.xlu0 %v2174
      %v2195 = vpop.xlane.xlu0 %2194
      %2196 = vadd.xlane.f32.xlu0 %v2175
      %v2197 = vpop.xlane.xlu0 %2196
      %2198 = vadd.xlane.f32.xlu0 %v2176
      %v2199 = vpop.xlane.xlu0 %2198
      %2200 = vadd.xlane.f32.xlu0 %v2177
      %v2201 = vpop.xlane.xlu0 %2200
      %2202 = vadd.xlane.f32.xlu0 %v2178
      %v2203 = vpop.xlane.xlu0 %2202
      %2204 = vadd.xlane.f32.xlu0 %v2179
      %v2205 = vpop.xlane.xlu0 %2204
      %2206 = vadd.xlane.f32.xlu0 %v2180
      %v2207 = vpop.xlane.xlu0 %2206
      %2208 = vadd.xlane.f32.xlu0 %v2181
      %v2209 = vpop.xlane.xlu0 %2208
      %2210 = vadd.xlane.f32.xlu0 %v2182
      %v2211 = vpop.xlane.xlu0 %2210
      %2212 = vadd.xlane.f32.xlu0 %v2183
      %v2213 = vpop.xlane.xlu0 %2212
      %2214 = vadd.xlane.f32.xlu0 %v2184
      %v2215 = vpop.xlane.xlu0 %2214
      %2216 = vadd.xlane.f32.xlu0 %v2185
      %v2217 = vpop.xlane.xlu0 %2216
      %2218 = vadd.xlane.f32.xlu0 %v2186
      %v2219 = vpop.xlane.xlu0 %2218
      %2220 = vadd.xlane.f32.xlu0 %v2187
      %v2221 = vpop.xlane.xlu0 %2220
      %v2222 = vld [vmem:[#allocation2 + $0x20] sm:$0xff]
      %v2223 = vld [vmem:[#allocation2 + $0x60] sm:$0xff]
      %v2224 = vld [vmem:[#allocation2 + $0xa0] sm:$0xff]
      %v2225 = vld [vmem:[#allocation2 + $0xe0] sm:$0xff]
      %v2226 = vld [vmem:[#allocation2 + $0x120] sm:$0xff]
      %v2227 = vld [vmem:[#allocation2 + $0x160] sm:$0xff]
      %v2228 = vld [vmem:[#allocation2 + $0x1a0] sm:$0xff]
      %v2229 = vld [vmem:[#allocation2 + $0x1e0] sm:$0xff]
      %v2230 = vld [vmem:[#allocation2 + $0x220] sm:$0xff]
      %v2231 = vld [vmem:[#allocation2 + $0x260] sm:$0xff]
      %v2232 = vld [vmem:[#allocation2 + $0x2a0] sm:$0xff]
      %v2233 = vld [vmem:[#allocation2 + $0x2e0] sm:$0xff]
      %v2234 = vld [vmem:[#allocation2 + $0x320] sm:$0xff]
      %v2235 = vld [vmem:[#allocation2 + $0x360] sm:$0xff]
      %v2236 = vld [vmem:[#allocation2 + $0x3a0] sm:$0xff]
      %v2237 = vld [vmem:[#allocation2 + $0x3e0] sm:$0xff]
      %v2238 = vld [vmem:[#allocation2 + $0x420] sm:$0xff]
      %v2239 = vld [vmem:[#allocation2 + $0x20] ss:$0 sm:$0xff]
      %v2240 = vmul.f32 %v2222, %v2239
      %v2241 = vmul.f32 %v2223, %v2239
      %v2242 = vmul.f32 %v2224, %v2239
      %v2243 = vmul.f32 %v2225, %v2239
      %v2244 = vmul.f32 %v2226, %v2239
      %v2245 = vmul.f32 %v2227, %v2239
      %v2246 = vmul.f32 %v2228, %v2239
      %v2247 = vmul.f32 %v2229, %v2239
      %v2248 = vmul.f32 %v2230, %v2239
      %v2249 = vmul.f32 %v2231, %v2239
      %v2250 = vmul.f32 %v2232, %v2239
      %v2251 = vmul.f32 %v2233, %v2239
      %v2252 = vmul.f32 %v2234, %v2239
      %v2253 = vmul.f32 %v2235, %v2239
      %v2254 = vmul.f32 %v2236, %v2239
      %v2255 = vmul.f32 %v2237, %v2239
      %v2256 = vmul.f32 %v2238, %v2239
      %2257 = vadd.xlane.f32.xlu0 %v2240
      %v2258 = vpop.xlane.xlu0 %2257
      %2259 = vadd.xlane.f32.xlu0 %v2241
      %v2260 = vpop.xlane.xlu0 %2259
      %2261 = vadd.xlane.f32.xlu0 %v2242
      %v2262 = vpop.xlane.xlu0 %2261
      %2263 = vadd.xlane.f32.xlu0 %v2243
      %v2264 = vpop.xlane.xlu0 %2263
      %2265 = vadd.xlane.f32.xlu0 %v2244
      %v2266 = vpop.xlane.xlu0 %2265
      %2267 = vadd.xlane.f32.xlu0 %v2245
      %v2268 = vpop.xlane.xlu0 %2267
      %2269 = vadd.xlane.f32.xlu0 %v2246
      %v2270 = vpop.xlane.xlu0 %2269
      %2271 = vadd.xlane.f32.xlu0 %v2247
      %v2272 = vpop.xlane.xlu0 %2271
      %2273 = vadd.xlane.f32.xlu0 %v2248
      %v2274 = vpop.xlane.xlu0 %2273
      %2275 = vadd.xlane.f32.xlu0 %v2249
      %v2276 = vpop.xlane.xlu0 %2275
      %2277 = vadd.xlane.f32.xlu0 %v2250
      %v2278 = vpop.xlane.xlu0 %2277
      %2279 = vadd.xlane.f32.xlu0 %v2251
      %v2280 = vpop.xlane.xlu0 %2279
      %2281 = vadd.xlane.f32.xlu0 %v2252
      %v2282 = vpop.xlane.xlu0 %2281
      %2283 = vadd.xlane.f32.xlu0 %v2253
      %v2284 = vpop.xlane.xlu0 %2283
      %2285 = vadd.xlane.f32.xlu0 %v2254
      %v2286 = vpop.xlane.xlu0 %2285
      %2287 = vadd.xlane.f32.xlu0 %v2255
      %v2288 = vpop.xlane.xlu0 %2287
      %2289 = vadd.xlane.f32.xlu0 %v2256
      %v2290 = vpop.xlane.xlu0 %2289
      %v2291 = vld [vmem:[#allocation2 + $0x28] sm:$0xff]
      %v2292 = vld [vmem:[#allocation2 + $0x68] sm:$0xff]
      %v2293 = vld [vmem:[#allocation2 + $0xa8] sm:$0xff]
      %v2294 = vld [vmem:[#allocation2 + $0xe8] sm:$0xff]
      %v2295 = vld [vmem:[#allocation2 + $0x128] sm:$0xff]
      %v2296 = vld [vmem:[#allocation2 + $0x168] sm:$0xff]
      %v2297 = vld [vmem:[#allocation2 + $0x1a8] sm:$0xff]
      %v2298 = vld [vmem:[#allocation2 + $0x1e8] sm:$0xff]
      %v2299 = vld [vmem:[#allocation2 + $0x228] sm:$0xff]
      %v2300 = vld [vmem:[#allocation2 + $0x268] sm:$0xff]
      %v2301 = vld [vmem:[#allocation2 + $0x2a8] sm:$0xff]
      %v2302 = vld [vmem:[#allocation2 + $0x2e8] sm:$0xff]
      %v2303 = vld [vmem:[#allocation2 + $0x328] sm:$0xff]
      %v2304 = vld [vmem:[#allocation2 + $0x368] sm:$0xff]
      %v2305 = vld [vmem:[#allocation2 + $0x3a8] sm:$0xff]
      %v2306 = vld [vmem:[#allocation2 + $0x3e8] sm:$0xff]
      %v2307 = vld [vmem:[#allocation2 + $0x428] sm:$0xff]
      %v2308 = vld [vmem:[#allocation2 + $0x28] ss:$0 sm:$0xff]
      %v2309 = vmul.f32 %v2291, %v2308
      %v2310 = vmul.f32 %v2292, %v2308
      %v2311 = vmul.f32 %v2293, %v2308
      %v2312 = vmul.f32 %v2294, %v2308
      %v2313 = vmul.f32 %v2295, %v2308
      %v2314 = vmul.f32 %v2296, %v2308
      %v2315 = vmul.f32 %v2297, %v2308
      %v2316 = vmul.f32 %v2298, %v2308
      %v2317 = vmul.f32 %v2299, %v2308
      %v2318 = vmul.f32 %v2300, %v2308
      %v2319 = vmul.f32 %v2301, %v2308
      %v2320 = vmul.f32 %v2302, %v2308
      %v2321 = vmul.f32 %v2303, %v2308
      %v2322 = vmul.f32 %v2304, %v2308
      %v2323 = vmul.f32 %v2305, %v2308
      %v2324 = vmul.f32 %v2306, %v2308
      %v2325 = vmul.f32 %v2307, %v2308
      %2326 = vadd.xlane.f32.xlu0 %v2309
      %v2327 = vpop.xlane.xlu0 %2326
      %2328 = vadd.xlane.f32.xlu0 %v2310
      %v2329 = vpop.xlane.xlu0 %2328
      %2330 = vadd.xlane.f32.xlu0 %v2311
      %v2331 = vpop.xlane.xlu0 %2330
      %2332 = vadd.xlane.f32.xlu0 %v2312
      %v2333 = vpop.xlane.xlu0 %2332
      %2334 = vadd.xlane.f32.xlu0 %v2313
      %v2335 = vpop.xlane.xlu0 %2334
      %2336 = vadd.xlane.f32.xlu0 %v2314
      %v2337 = vpop.xlane.xlu0 %2336
      %2338 = vadd.xlane.f32.xlu0 %v2315
      %v2339 = vpop.xlane.xlu0 %2338
      %2340 = vadd.xlane.f32.xlu0 %v2316
      %v2341 = vpop.xlane.xlu0 %2340
      %2342 = vadd.xlane.f32.xlu0 %v2317
      %v2343 = vpop.xlane.xlu0 %2342
      %2344 = vadd.xlane.f32.xlu0 %v2318
      %v2345 = vpop.xlane.xlu0 %2344
      %2346 = vadd.xlane.f32.xlu0 %v2319
      %v2347 = vpop.xlane.xlu0 %2346
      %2348 = vadd.xlane.f32.xlu0 %v2320
      %v2349 = vpop.xlane.xlu0 %2348
      %2350 = vadd.xlane.f32.xlu0 %v2321
      %v2351 = vpop.xlane.xlu0 %2350
      %2352 = vadd.xlane.f32.xlu0 %v2322
      %v2353 = vpop.xlane.xlu0 %2352
      %2354 = vadd.xlane.f32.xlu0 %v2323
      %v2355 = vpop.xlane.xlu0 %2354
      %2356 = vadd.xlane.f32.xlu0 %v2324
      %v2357 = vpop.xlane.xlu0 %2356
      %2358 = vadd.xlane.f32.xlu0 %v2325
      %v2359 = vpop.xlane.xlu0 %2358
      %v2360 = vld [vmem:[#allocation2 + $0x30] sm:$0xff]
      %v2361 = vld [vmem:[#allocation2 + $0x70] sm:$0xff]
      %v2362 = vld [vmem:[#allocation2 + $0xb0] sm:$0xff]
      %v2363 = vld [vmem:[#allocation2 + $0xf0] sm:$0xff]
      %v2364 = vld [vmem:[#allocation2 + $0x130] sm:$0xff]
      %v2365 = vld [vmem:[#allocation2 + $0x170] sm:$0xff]
      %v2366 = vld [vmem:[#allocation2 + $0x1b0] sm:$0xff]
      %v2367 = vld [vmem:[#allocation2 + $0x1f0] sm:$0xff]
      %v2368 = vld [vmem:[#allocation2 + $0x230] sm:$0xff]
      %v2369 = vld [vmem:[#allocation2 + $0x270] sm:$0xff]
      %v2370 = vld [vmem:[#allocation2 + $0x2b0] sm:$0xff]
      %v2371 = vld [vmem:[#allocation2 + $0x2f0] sm:$0xff]
      %v2372 = vld [vmem:[#allocation2 + $0x330] sm:$0xff]
      %v2373 = vld [vmem:[#allocation2 + $0x370] sm:$0xff]
      %v2374 = vld [vmem:[#allocation2 + $0x3b0] sm:$0xff]
      %v2375 = vld [vmem:[#allocation2 + $0x3f0] sm:$0xff]
      %v2376 = vld [vmem:[#allocation2 + $0x430] sm:$0xff]
      %v2377 = vld [vmem:[#allocation2 + $0x30] ss:$0 sm:$0xff]
      %v2378 = vmul.f32 %v2360, %v2377
      %v2379 = vmul.f32 %v2361, %v2377
      %v2380 = vmul.f32 %v2362, %v2377
      %v2381 = vmul.f32 %v2363, %v2377
      %v2382 = vmul.f32 %v2364, %v2377
      %v2383 = vmul.f32 %v2365, %v2377
      %v2384 = vmul.f32 %v2366, %v2377
      %v2385 = vmul.f32 %v2367, %v2377
      %v2386 = vmul.f32 %v2368, %v2377
      %v2387 = vmul.f32 %v2369, %v2377
      %v2388 = vmul.f32 %v2370, %v2377
      %v2389 = vmul.f32 %v2371, %v2377
      %v2390 = vmul.f32 %v2372, %v2377
      %v2391 = vmul.f32 %v2373, %v2377
      %v2392 = vmul.f32 %v2374, %v2377
      %v2393 = vmul.f32 %v2375, %v2377
      %v2394 = vmul.f32 %v2376, %v2377
      %2395 = vadd.xlane.f32.xlu0 %v2378
      %v2396 = vpop.xlane.xlu0 %2395
      %2397 = vadd.xlane.f32.xlu0 %v2379
      %v2398 = vpop.xlane.xlu0 %2397
      %2399 = vadd.xlane.f32.xlu0 %v2380
      %v2400 = vpop.xlane.xlu0 %2399
      %2401 = vadd.xlane.f32.xlu0 %v2381
      %v2402 = vpop.xlane.xlu0 %2401
      %2403 = vadd.xlane.f32.xlu0 %v2382
      %v2404 = vpop.xlane.xlu0 %2403
      %2405 = vadd.xlane.f32.xlu0 %v2383
      %v2406 = vpop.xlane.xlu0 %2405
      %2407 = vadd.xlane.f32.xlu0 %v2384
      %v2408 = vpop.xlane.xlu0 %2407
      %2409 = vadd.xlane.f32.xlu0 %v2385
      %v2410 = vpop.xlane.xlu0 %2409
      %2411 = vadd.xlane.f32.xlu0 %v2386
      %v2412 = vpop.xlane.xlu0 %2411
      %2413 = vadd.xlane.f32.xlu0 %v2387
      %v2414 = vpop.xlane.xlu0 %2413
      %2415 = vadd.xlane.f32.xlu0 %v2388
      %v2416 = vpop.xlane.xlu0 %2415
      %2417 = vadd.xlane.f32.xlu0 %v2389
      %v2418 = vpop.xlane.xlu0 %2417
      %2419 = vadd.xlane.f32.xlu0 %v2390
      %v2420 = vpop.xlane.xlu0 %2419
      %2421 = vadd.xlane.f32.xlu0 %v2391
      %v2422 = vpop.xlane.xlu0 %2421
      %2423 = vadd.xlane.f32.xlu0 %v2392
      %v2424 = vpop.xlane.xlu0 %2423
      %2425 = vadd.xlane.f32.xlu0 %v2393
      %v2426 = vpop.xlane.xlu0 %2425
      %2427 = vadd.xlane.f32.xlu0 %v2394
      %v2428 = vpop.xlane.xlu0 %2427
      %v2429 = vld [vmem:[#allocation2 + $0x38] sm:$0xff]
      %v2430 = vld [vmem:[#allocation2 + $0x78] sm:$0xff]
      %v2431 = vld [vmem:[#allocation2 + $0xb8] sm:$0xff]
      %v2432 = vld [vmem:[#allocation2 + $0xf8] sm:$0xff]
      %v2433 = vld [vmem:[#allocation2 + $0x138] sm:$0xff]
      %v2434 = vld [vmem:[#allocation2 + $0x178] sm:$0xff]
      %v2435 = vld [vmem:[#allocation2 + $0x1b8] sm:$0xff]
      %v2436 = vld [vmem:[#allocation2 + $0x1f8] sm:$0xff]
      %v2437 = vld [vmem:[#allocation2 + $0x238] sm:$0xff]
      %v2438 = vld [vmem:[#allocation2 + $0x278] sm:$0xff]
      %v2439 = vld [vmem:[#allocation2 + $0x2b8] sm:$0xff]
      %v2440 = vld [vmem:[#allocation2 + $0x2f8] sm:$0xff]
      %v2441 = vld [vmem:[#allocation2 + $0x338] sm:$0xff]
      %v2442 = vld [vmem:[#allocation2 + $0x378] sm:$0xff]
      %v2443 = vld [vmem:[#allocation2 + $0x3b8] sm:$0xff]
      %v2444 = vld [vmem:[#allocation2 + $0x3f8] sm:$0xff]
      %v2445 = vld [vmem:[#allocation2 + $0x438] sm:$0xff]
      %v2446 = vld [vmem:[#allocation2 + $0x38] ss:$0 sm:$0xff]
      %v2447 = vmul.f32 %v2429, %v2446
      %v2448 = vmul.f32 %v2430, %v2446
      %v2449 = vmul.f32 %v2431, %v2446
      %v2450 = vmul.f32 %v2432, %v2446
      %v2451 = vmul.f32 %v2433, %v2446
      %v2452 = vmul.f32 %v2434, %v2446
      %v2453 = vmul.f32 %v2435, %v2446
      %v2454 = vmul.f32 %v2436, %v2446
      %v2455 = vmul.f32 %v2437, %v2446
      %v2456 = vmul.f32 %v2438, %v2446
      %v2457 = vmul.f32 %v2439, %v2446
      %v2458 = vmul.f32 %v2440, %v2446
      %v2459 = vmul.f32 %v2441, %v2446
      %v2460 = vmul.f32 %v2442, %v2446
      %v2461 = vmul.f32 %v2443, %v2446
      %v2462 = vmul.f32 %v2444, %v2446
      %v2463 = vmul.f32 %v2445, %v2446
      %2464 = vadd.xlane.f32.xlu0 %v2447
      %v2465 = vpop.xlane.xlu0 %2464
      %2466 = vadd.xlane.f32.xlu0 %v2448
      %v2467 = vpop.xlane.xlu0 %2466
      %2468 = vadd.xlane.f32.xlu0 %v2449
      %v2469 = vpop.xlane.xlu0 %2468
      %2470 = vadd.xlane.f32.xlu0 %v2450
      %v2471 = vpop.xlane.xlu0 %2470
      %2472 = vadd.xlane.f32.xlu0 %v2451
      %v2473 = vpop.xlane.xlu0 %2472
      %2474 = vadd.xlane.f32.xlu0 %v2452
      %v2475 = vpop.xlane.xlu0 %2474
      %2476 = vadd.xlane.f32.xlu0 %v2453
      %v2477 = vpop.xlane.xlu0 %2476
      %2478 = vadd.xlane.f32.xlu0 %v2454
      %v2479 = vpop.xlane.xlu0 %2478
      %2480 = vadd.xlane.f32.xlu0 %v2455
      %v2481 = vpop.xlane.xlu0 %2480
      %2482 = vadd.xlane.f32.xlu0 %v2456
      %v2483 = vpop.xlane.xlu0 %2482
      %2484 = vadd.xlane.f32.xlu0 %v2457
      %v2485 = vpop.xlane.xlu0 %2484
      %2486 = vadd.xlane.f32.xlu0 %v2458
      %v2487 = vpop.xlane.xlu0 %2486
      %2488 = vadd.xlane.f32.xlu0 %v2459
      %v2489 = vpop.xlane.xlu0 %2488
      %2490 = vadd.xlane.f32.xlu0 %v2460
      %v2491 = vpop.xlane.xlu0 %2490
      %2492 = vadd.xlane.f32.xlu0 %v2461
      %v2493 = vpop.xlane.xlu0 %2492
      %2494 = vadd.xlane.f32.xlu0 %v2462
      %v2495 = vpop.xlane.xlu0 %2494
      %2496 = vadd.xlane.f32.xlu0 %v2463
      %v2497 = vpop.xlane.xlu0 %2496
      %vm2498 = vcmask 7168
      %v2499 = vsel %vm2498, %v1982, %v2051
      %v2500 = vsel %vm2498, %v1984, %v2053
      %v2501 = vsel %vm2498, %v1986, %v2055
      %v2502 = vsel %vm2498, %v1988, %v2057
      %v2503 = vsel %vm2498, %v1990, %v2059
      %v2504 = vsel %vm2498, %v1992, %v2061
      %v2505 = vsel %vm2498, %v1994, %v2063
      %v2506 = vsel %vm2498, %v1996, %v2065
      %v2507 = vsel %vm2498, %v1998, %v2067
      %v2508 = vsel %vm2498, %v2000, %v2069
      %v2509 = vsel %vm2498, %v2002, %v2071
      %v2510 = vsel %vm2498, %v2004, %v2073
      %v2511 = vsel %vm2498, %v2006, %v2075
      %v2512 = vsel %vm2498, %v2008, %v2077
      %v2513 = vsel %vm2498, %v2010, %v2079
      %v2514 = vsel %vm2498, %v2012, %v2081
      %v2515 = vsel %vm2498, %v2014, %v2083
      %vm2516 = vcmask 15360
      %v2517 = vsel %vm2516, %v2499, %v2120
      %v2518 = vsel %vm2516, %v2500, %v2122
      %v2519 = vsel %vm2516, %v2501, %v2124
      %v2520 = vsel %vm2516, %v2502, %v2126
      %v2521 = vsel %vm2516, %v2503, %v2128
      %v2522 = vsel %vm2516, %v2504, %v2130
      %v2523 = vsel %vm2516, %v2505, %v2132
      %v2524 = vsel %vm2516, %v2506, %v2134
      %v2525 = vsel %vm2516, %v2507, %v2136
      %v2526 = vsel %vm2516, %v2508, %v2138
      %v2527 = vsel %vm2516, %v2509, %v2140
      %v2528 = vsel %vm2516, %v2510, %v2142
      %v2529 = vsel %vm2516, %v2511, %v2144
      %v2530 = vsel %vm2516, %v2512, %v2146
      %v2531 = vsel %vm2516, %v2513, %v2148
      %v2532 = vsel %vm2516, %v2514, %v2150
      %v2533 = vsel %vm2516, %v2515, %v2152
      %vm2534 = vcmask 23552
      %v2535 = vsel %vm2534, %v2517, %v2189
      %v2536 = vsel %vm2534, %v2518, %v2191
      %v2537 = vsel %vm2534, %v2519, %v2193
      %v2538 = vsel %vm2534, %v2520, %v2195
      %v2539 = vsel %vm2534, %v2521, %v2197
      %v2540 = vsel %vm2534, %v2522, %v2199
      %v2541 = vsel %vm2534, %v2523, %v2201
      %v2542 = vsel %vm2534, %v2524, %v2203
      %v2543 = vsel %vm2534, %v2525, %v2205
      %v2544 = vsel %vm2534, %v2526, %v2207
      %v2545 = vsel %vm2534, %v2527, %v2209
      %v2546 = vsel %vm2534, %v2528, %v2211
      %v2547 = vsel %vm2534, %v2529, %v2213
      %v2548 = vsel %vm2534, %v2530, %v2215
      %v2549 = vsel %vm2534, %v2531, %v2217
      %v2550 = vsel %vm2534, %v2532, %v2219
      %v2551 = vsel %vm2534, %v2533, %v2221
      %vm2552 = vcmask 31744
      %v2553 = vsel %vm2552, %v2535, %v2258
      %v2554 = vsel %vm2552, %v2536, %v2260
      %v2555 = vsel %vm2552, %v2537, %v2262
      %v2556 = vsel %vm2552, %v2538, %v2264
      %v2557 = vsel %vm2552, %v2539, %v2266
      %v2558 = vsel %vm2552, %v2540, %v2268
      %v2559 = vsel %vm2552, %v2541, %v2270
      %v2560 = vsel %vm2552, %v2542, %v2272
      %v2561 = vsel %vm2552, %v2543, %v2274
      %v2562 = vsel %vm2552, %v2544, %v2276
      %v2563 = vsel %vm2552, %v2545, %v2278
      %v2564 = vsel %vm2552, %v2546, %v2280
      %v2565 = vsel %vm2552, %v2547, %v2282
      %v2566 = vsel %vm2552, %v2548, %v2284
      %v2567 = vsel %vm2552, %v2549, %v2286
      %v2568 = vsel %vm2552, %v2550, %v2288
      %v2569 = vsel %vm2552, %v2551, %v2290
      %vm2570 = vcmask 39936
      %v2571 = vsel %vm2570, %v2553, %v2327
      %v2572 = vsel %vm2570, %v2554, %v2329
      %v2573 = vsel %vm2570, %v2555, %v2331
      %v2574 = vsel %vm2570, %v2556, %v2333
      %v2575 = vsel %vm2570, %v2557, %v2335
      %v2576 = vsel %vm2570, %v2558, %v2337
      %v2577 = vsel %vm2570, %v2559, %v2339
      %v2578 = vsel %vm2570, %v2560, %v2341
      %v2579 = vsel %vm2570, %v2561, %v2343
      %v2580 = vsel %vm2570, %v2562, %v2345
      %v2581 = vsel %vm2570, %v2563, %v2347
      %v2582 = vsel %vm2570, %v2564, %v2349
      %v2583 = vsel %vm2570, %v2565, %v2351
      %v2584 = vsel %vm2570, %v2566, %v2353
      %v2585 = vsel %vm2570, %v2567, %v2355
      %v2586 = vsel %vm2570, %v2568, %v2357
      %v2587 = vsel %vm2570, %v2569, %v2359
      %vm2588 = vcmask 48128
      %v2589 = vsel %vm2588, %v2571, %v2396
      %v2590 = vsel %vm2588, %v2572, %v2398
      %v2591 = vsel %vm2588, %v2573, %v2400
      %v2592 = vsel %vm2588, %v2574, %v2402
      %v2593 = vsel %vm2588, %v2575, %v2404
      %v2594 = vsel %vm2588, %v2576, %v2406
      %v2595 = vsel %vm2588, %v2577, %v2408
      %v2596 = vsel %vm2588, %v2578, %v2410
      %v2597 = vsel %vm2588, %v2579, %v2412
      %v2598 = vsel %vm2588, %v2580, %v2414
      %v2599 = vsel %vm2588, %v2581, %v2416
      %v2600 = vsel %vm2588, %v2582, %v2418
      %v2601 = vsel %vm2588, %v2583, %v2420
      %v2602 = vsel %vm2588, %v2584, %v2422
      %v2603 = vsel %vm2588, %v2585, %v2424
      %v2604 = vsel %vm2588, %v2586, %v2426
      %v2605 = vsel %vm2588, %v2587, %v2428
      %vm2606 = vcmask 56320
      %v2607 = vsel %vm2606, %v2589, %v2465
      %v2608 = vsel %vm2606, %v2590, %v2467
      %v2609 = vsel %vm2606, %v2591, %v2469
      %v2610 = vsel %vm2606, %v2592, %v2471
      %v2611 = vsel %vm2606, %v2593, %v2473
      %v2612 = vsel %vm2606, %v2594, %v2475
      %v2613 = vsel %vm2606, %v2595, %v2477
      %v2614 = vsel %vm2606, %v2596, %v2479
      %v2615 = vsel %vm2606, %v2597, %v2481
      %v2616 = vsel %vm2606, %v2598, %v2483
      %v2617 = vsel %vm2606, %v2599, %v2485
      %v2618 = vsel %vm2606, %v2600, %v2487
      %v2619 = vsel %vm2606, %v2601, %v2489
      %v2620 = vsel %vm2606, %v2602, %v2491
      %v2621 = vsel %vm2606, %v2603, %v2493
      %v2622 = vsel %vm2606, %v2604, %v2495
      %v2623 = vsel %vm2606, %v2605, %v2497
      %vm2624 = vcmask 64512
      %2625 = vst.msk [vmem:[%s199] sm:$0xff] %vm2624, %v2607
      %2626 = vst.msk [vmem:[%s199 + $0x8] sm:$0xff] %vm2624, %v2608
      %2627 = vst.msk [vmem:[%s199 + $0x10] sm:$0xff] %vm2624, %v2609
      %2628 = vst.msk [vmem:[%s199 + $0x18] sm:$0xff] %vm2624, %v2610
      %2629 = vst.msk [vmem:[%s199 + $0x20] sm:$0xff] %vm2624, %v2611
      %2630 = vst.msk [vmem:[%s199 + $0x28] sm:$0xff] %vm2624, %v2612
      %2631 = vst.msk [vmem:[%s199 + $0x30] sm:$0xff] %vm2624, %v2613
      %2632 = vst.msk [vmem:[%s199 + $0x38] sm:$0xff] %vm2624, %v2614
      %2633 = vst.msk [vmem:[%s199 + $0x40] sm:$0xff] %vm2624, %v2615
      %2634 = vst.msk [vmem:[%s199 + $0x48] sm:$0xff] %vm2624, %v2616
      %2635 = vst.msk [vmem:[%s199 + $0x50] sm:$0xff] %vm2624, %v2617
      %2636 = vst.msk [vmem:[%s199 + $0x58] sm:$0xff] %vm2624, %v2618
      %2637 = vst.msk [vmem:[%s199 + $0x60] sm:$0xff] %vm2624, %v2619
      %2638 = vst.msk [vmem:[%s199 + $0x68] sm:$0xff] %vm2624, %v2620
      %2639 = vst.msk [vmem:[%s199 + $0x70] sm:$0xff] %vm2624, %v2621
      %2640 = vst.msk [vmem:[%s199 + $0x78] sm:$0xff] %vm2624, %v2622
      %2641 = vst.msk [vmem:[%s199 + $0x80] sm:$0xff] %vm2624, %v2623
      %p2642 = scmp.lt.s32.totalorder %s23, 3
      %s2643 = scalar_select %p2642, %s23, 3
      %s2644 = smul.addr %s2643, 17
      %s2645 = smul.addr %s2644, 8
      %s2646 = scalar_lea.vmem %s4, %s2645
      // Predicated region
      $region47: #{a_call__.3} parent=31 // pred_check
        %p2647 = pneg %p114
      $region48: #{a_call__.3} parent=31 // pred_check_branch
        %2649 = sbr.rel (%p2647) target = $region50
      $region49: #{a_call__.3} parent=31 // pred_region
        _
      $region50: #{a_call__.3} parent=31 // pred_fallthru
        _
    $region32: #{a_call__.3} parent=5 // pred_fallthru
      _
    %p2650 = scmp.le.s32.totalorder 2, %s18
    // Predicated region
    $region51: #{a_call__.3} parent=5 // pred_check
      %p2651 = pneg %p2650
    $region52: #{a_call__.3} parent=5 // pred_check_branch
      %2653 = sbr.rel (%p2651) target = $region54
    $region53: #{a_call__.3} parent=5 // pred_region
      %s2654 = ssub.s32 %s18, 2
      // Predicated region
      $region55: #{a_call__.3} parent=53 // pred_check
        %p2655 = pneg %p120
      $region56: #{a_call__.3} parent=53 // pred_check_branch
        %2657 = sbr.rel (%p2655) target = $region58
      $region57: #{a_call__.3} parent=53 // pred_region
        %p2658 = scmp.lt.s32.totalorder %s24, 3
        %s2659 = scalar_select %p2658, %s24, 3
        %s2660 = smul.addr %s2659, 17
        %s2661 = smul.addr %s2660, 8
        %s2662 = scalar_lea.vmem %s4, %s2661
      $region58: #{a_call__.3} parent=53 // pred_fallthru
        _
    $region54: #{a_call__.3} parent=5 // pred_fallthru
      _
  $region6: #{a_call__.3} parent=0 // loop_footer
    %s22 = sadd.s32 1, %s18
  $region7: #{a_call__.3} parent=0 // loop_footer_branch
    %17 = sbr.rel target = $region3
  $region8: #{a_call__.3} parent=0 // loop_exit
    _

</llo_original>
